<compile_context>
chip_gen: v6e
topology: v6e:2x2x1
jax: 0.10.0
libtpu: 0.0.40
codegen_flags: <defaults>
</compile_context>

<pallas_src>
import jax
import jax.numpy as jnp
import numpy as np
from jax.experimental import pallas as pl
from jax.experimental.pallas import tpu as pltpu  # noqa: F401  (TPU backend)

# ---------------- model config (small, TPU-friendly) ----------------
RNN_TYPE = "LSTM"
NTOKEN = 256
NINP = 32
NHID = 32
NLAYERS = 2

LANE = 128   # f32 lanes per vreg; gate blocks / h / c are padded to this width


# ---------------------------------------------------------------------------
# Fused Pallas kernel: embedding + all LSTM layers + decoder, one invocation,
# no grid (everything, weights included, is ~1.8 MB of VMEM).
# ---------------------------------------------------------------------------
def _make_fused_kernel(seq, batch, nhid, nlayers, ntoken):
    P = LANE
    f32 = jnp.float32

    def kernel(*refs):
        # inputs : tok, h0, c0, m0emb, w_hh0_pad, b0_pad,
        #          [w_stack_l, b_pad_l] for l = 1..nlayers-1, dec_w_pad, dec_b
        # outputs: out2d (batch, seq*ntoken), h_n, c_n
        tok_ref, h0_ref, c0_ref = refs[0], refs[1], refs[2]
        m0_ref, whh0_ref, b0_ref = refs[3], refs[4], refs[5]
        pos = 6
        upper = []
        for _ in range(nlayers - 1):
            upper.append((refs[pos], refs[pos + 1]))
            pos += 2
        decw_ref, decb_ref = refs[pos], refs[pos + 1]
        out_ref, hn_ref, cn_ref = refs[pos + 2], refs[pos + 3], refs[pos + 4]

        zpad = jnp.zeros((batch, P - nhid), f32)

        def load_state(ref, l):
            # (batch, nhid) -> (batch, P) with padded lanes exactly zero
            return jnp.concatenate([ref[l], zpad], axis=1)

        h = [load_state(h0_ref, l) for l in range(nlayers)]
        c = [load_state(c0_ref, l) for l in range(nlayers)]

        # Hoisted broadcasts / constants (JAX does not CSE broadcast_in_dim).
        iota_v = jax.lax.broadcasted_iota(jnp.int32, (batch, ntoken), 1)
        biases = [jnp.broadcast_to(b0_ref[...], (batch, 4 * P))]
        for l in range(1, nlayers):
            biases.append(jnp.broadcast_to(upper[l - 1][1][...], (batch, 4 * P)))
        dec_b = jnp.broadcast_to(decb_ref[...], (batch, ntoken))

        def lstm_gates(g, c_prev):
            # PyTorch gate order [i | f | g | o]; each slice is one full vreg.
            i_g = jax.nn.sigmoid(g[:, 0 * P:1 * P])
            f_g = jax.nn.sigmoid(g[:, 1 * P:2 * P])
            g_g = jnp.tanh(g[:, 2 * P:3 * P])
            o_g = jax.nn.sigmoid(g[:, 3 * P:4 * P])
            c_new = f_g * c_prev + i_g * g_g
            h_new = o_g * jnp.tanh(c_new)
            return h_new, c_new

        # prev_out[l] = layer l's output from the previous wavefront step,
        # i.e. exactly the timestep layer l+1 needs next.
        prev_out = [None] * nlayers

        # Wavefront over (time x layer): at step s, layer l handles t = s - l.
        for s in range(seq + nlayers - 1):
            # Iterate layers top-down so prev_out[l-1] is read before layer l-1
            # overwrites it with its step-s output.
            for l in range(nlayers - 1, -1, -1):
                t = s - l
                if t < 0 or t >= seq:
                    continue
                if l == 0:
                    # Embedding + layer-0 input projection as a one-hot matmul
                    # against precomputed enc_w @ W_ih0^T; depends only on the
                    # tokens, so it stays off the recurrent critical chain.
                    tok_col = tok_ref[:, t:t + 1]                      # (B,1) i32
                    onehot = (tok_col == iota_v).astype(f32)           # (B,ntoken)
                    gx = jnp.dot(onehot, m0_ref[...],
                                 preferred_element_type=f32) + biases[0]
                    g = gx + jnp.dot(h[0], whh0_ref[...],
                                     preferred_element_type=f32)
                else:
                    wstk_ref = upper[l - 1][0]
                    lhs = jnp.concatenate([prev_out[l - 1], h[l]], axis=1)  # (B,2P)
                    g = jnp.dot(lhs, wstk_ref[...],
                                preferred_element_type=f32) + biases[l]
                h_new, c_new = lstm_gates(g, c[l])
                h[l], c[l] = h_new, c_new
                prev_out[l] = h_new
                if l == nlayers - 1:
                    # Decoder for this timestep; lane-aligned 256-wide store.
                    dec = jnp.dot(h_new, decw_ref[...],
                                  preferred_element_type=f32) + dec_b
                    out_ref[:, t * ntoken:(t + 1) * ntoken] = dec

        # Final hidden / cell states written exactly once per layer.
        for l in range(nlayers):
            hn_ref[l] = h[l][:, :nhid]
            cn_ref[l] = c[l][:, :nhid]

    return kernel


def rnn_fused(tokens, h0, c0, prepped):
    nlayers, batch, nhid = h0.shape
    seq = tokens.shape[1]
    ntoken = prepped["dec_w_pad"].shape[1]

    inputs = [tokens, h0, c0,
              prepped["m0emb"], prepped["w_hh0_pad"], prepped["b0_pad"]]
    for l in range(1, nlayers):
        inputs += [prepped["w_stack"][l - 1], prepped["b_pad"][l - 1]]
    inputs += [prepped["dec_w_pad"], prepped["dec_b_pad"]]

    kernel = _make_fused_kernel(seq, batch, nhid, nlayers, ntoken)
    return pl.pallas_call(
        kernel,
        out_shape=(jax.ShapeDtypeStruct((batch, seq * ntoken), jnp.float32),
                   jax.ShapeDtypeStruct((nlayers, batch, nhid), jnp.float32),
                   jax.ShapeDtypeStruct((nlayers, batch, nhid), jnp.float32)),
    )(*inputs)


# ---------------------------------------------------------------------------
# Parameter init (deterministic, mirrors the PyTorch module's shapes/init)
# ---------------------------------------------------------------------------
def init_params(key):
    keys = jax.random.split(key, 2 + 4 * NLAYERS)
    initrange = 0.1
    enc_w = jax.random.uniform(keys[0], (NTOKEN, NINP), jnp.float32,
                               -initrange, initrange)
    dec_w = jax.random.uniform(keys[1], (NTOKEN, NHID), jnp.float32,
                               -initrange, initrange)
    dec_b = jnp.zeros((NTOKEN,), jnp.float32)
    stdv = 1.0 / float(np.sqrt(NHID))
    lstm = []
    kidx = 2
    for layer in range(NLAYERS):
        in_dim = NINP if layer == 0 else NHID
        w_ih = jax.random.uniform(keys[kidx], (4 * NHID, in_dim), jnp.float32,
                                  -stdv, stdv); kidx += 1
        w_hh = jax.random.uniform(keys[kidx], (4 * NHID, NHID), jnp.float32,
                                  -stdv, stdv); kidx += 1
        b_ih = jax.random.uniform(keys[kidx], (4 * NHID,), jnp.float32,
                                  -stdv, stdv); kidx += 1
        b_hh = jax.random.uniform(keys[kidx], (4 * NHID,), jnp.float32,
                                  -stdv, stdv); kidx += 1
        lstm.append(dict(w_ih=w_ih, w_hh=w_hh, b_ih=b_ih, b_hh=b_hh))
    return dict(enc_w=enc_w, dec_w=dec_w, dec_b=dec_b, lstm=lstm)


def prepare_params(params):
    """One-time transform to the kernel's padded, MXU-friendly layout.

    Gate g of each weight/bias lives at lanes [g*128, g*128+NHID); all other
    columns are zero, so padded lanes of the gates (and hence of h/c) stay 0.
    """
    P = LANE
    hp = jax.lax.Precision.HIGHEST

    def pad_gate_cols(w):                    # (rows, 4*NHID) -> (rows, 4*P)
        rows = w.shape[0]
        out = jnp.zeros((rows, 4 * P), jnp.float32)
        for g in range(4):
            out = out.at[:, g * P:g * P + NHID].set(w[:, g * NHID:(g + 1) * NHID])
        return out

    def pad_rows(w, rows_to):                # zero-pad contraction dim
        return jnp.zeros((rows_to, w.shape[1]), jnp.float32).at[:w.shape[0]].set(w)

    lstm = params["lstm"]

    # Layer 0: fuse the embedding table into the input projection.
    p0 = lstm[0]
    m0emb = pad_gate_cols(jnp.dot(params["enc_w"], p0["w_ih"].T, precision=hp))
    w_hh0_pad = pad_rows(pad_gate_cols(p0["w_hh"].T), P)                 # (P, 4P)
    b0_pad = pad_gate_cols((p0["b_ih"] + p0["b_hh"]).reshape(1, 4 * NHID))

    # Layers >= 1: stacked [W_ih; W_hh] for the fused [x_t | h_{t-1}] matmul.
    w_stack, b_pad = [], []
    for l in range(1, NLAYERS):
        p = lstm[l]
        w_ih_pad = pad_rows(pad_gate_cols(p["w_ih"].T), P)               # (P, 4P)
        w_hh_pad = pad_rows(pad_gate_cols(p["w_hh"].T), P)               # (P, 4P)
        w_stack.append(jnp.concatenate([w_ih_pad, w_hh_pad], axis=0))    # (2P, 4P)
        b_pad.append(pad_gate_cols((p["b_ih"] + p["b_hh"]).reshape(1, 4 * NHID)))

    dec_w_pad = pad_rows(params["dec_w"].T, P)                           # (P, ntoken)
    dec_b_pad = params["dec_b"].reshape(1, NTOKEN)
    return dict(m0emb=m0emb, w_hh0_pad=w_hh0_pad, b0_pad=b0_pad,
                w_stack=w_stack, b_pad=b_pad,
                dec_w_pad=dec_w_pad, dec_b_pad=dec_b_pad)


# ---------------------------------------------------------------------------
# Forward pass: everything (embedding, LSTM stack, decoder, layout) in ONE
# fused Pallas kernel; the only wrapper op is a bitcast-reshape under jit.
# Note: kernel matmuls use the TPU's default f32 matmul precision (not
# bit-exact f32); pass HIGHEST inside the kernel if closer parity is needed.
# ---------------------------------------------------------------------------
@jax.jit
def rnn_forward(prepped, tokens, hidden):
    h0_all, c0_all = hidden                                  # (nlayers, B, H)
    batch, seq = tokens.shape
    out2d, h_n, c_n = rnn_fused(tokens, h0_all, c0_all, prepped)
    decoded = out2d.reshape(batch, seq, NTOKEN)              # free bitcast
    return decoded, (h_n, c_n)


# pure-JAX reference (for correctness check)
def rnn_forward_ref(params, tokens, hidden):
    h_all, c_all = hidden
    emb = jnp.take(params["enc_w"], tokens, axis=0)
    x = jnp.transpose(emb, (1, 0, 2))
    seq = x.shape[0]
    hn_list, cn_list = [], []
    for layer in range(NLAYERS):
        p = params["lstm"][layer]
        h, c = h_all[layer], c_all[layer]
        b = p["b_ih"] + p["b_hh"]
        outs = []
        for t in range(seq):
            gates = x[t] @ p["w_ih"].T + h @ p["w_hh"].T + b
            i_g, f_g, g_g, o_g = jnp.split(gates, 4, axis=-1)
            i_g = jax.nn.sigmoid(i_g)
            f_g = jax.nn.sigmoid(f_g)
            g_g = jnp.tanh(g_g)
            o_g = jax.nn.sigmoid(o_g)
            c = f_g * c + i_g * g_g
            h = o_g * jnp.tanh(c)
            outs.append(h)
        x = jnp.stack(outs, axis=0)
        hn_list.append(h)
        cn_list.append(c)
    decoded = jnp.einsum("sbh,vh->sbv", x, params["dec_w"]) + params["dec_b"]
    decoded = jnp.transpose(decoded, (1, 0, 2))
    return decoded, (jnp.stack(hn_list, 0), jnp.stack(cn_list, 0))


if __name__ == "__main__":
    key = jax.random.PRNGKey(0)
    pkey, tkey, hkey, ckey = jax.random.split(key, 4)
    params = init_params(pkey)
    prepped = prepare_params(params)

    batch, seq = 8, 8
    tokens = jax.random.randint(tkey, (batch, seq), 0, NTOKEN, dtype=jnp.int32)
    # init_hidden() gives zeros; use small non-zero hidden to exercise h0/c0 path
    h0 = 0.1 * jax.random.normal(hkey, (NLAYERS, batch, NHID), jnp.float32)
    c0 = 0.1 * jax.random.normal(ckey, (NLAYERS, batch, NHID), jnp.float32)

    decoded, (h_n, c_n) = rnn_forward(prepped, tokens, (h0, c0))
    jax.block_until_ready((decoded, h_n, c_n))

    dec_ref, (h_ref, c_ref) = rnn_forward_ref(params, tokens, (h0, c0))
    assert decoded.shape == (batch, seq, NTOKEN)
    assert h_n.shape == (NLAYERS, batch, NHID) and c_n.shape == (NLAYERS, batch, NHID)
    assert np.allclose(np.asarray(decoded), np.asarray(dec_ref), atol=5e-3, rtol=5e-3)
    assert np.allclose(np.asarray(h_n), np.asarray(h_ref), atol=5e-3, rtol=5e-3)
    assert np.allclose(np.asarray(c_n), np.asarray(c_ref), atol=5e-3, rtol=5e-3)

    print("KERNEL_OK")
</pallas_src>

<mosaic_0001>
module attributes {stable_mosaic.version = 11 : i64} {
  func.func @kernel(%arg0: memref<8x8xi32, #tpu.memory_space<vmem>>, %arg1: memref<2x8x32xf32, #tpu.memory_space<vmem>>, %arg2: memref<2x8x32xf32, #tpu.memory_space<vmem>>, %arg3: memref<256x512xf32, #tpu.memory_space<vmem>>, %arg4: memref<128x512xf32, #tpu.memory_space<vmem>>, %arg5: memref<1x512xf32, #tpu.memory_space<vmem>>, %arg6: memref<256x512xf32, #tpu.memory_space<vmem>>, %arg7: memref<1x512xf32, #tpu.memory_space<vmem>>, %arg8: memref<128x256xf32, #tpu.memory_space<vmem>>, %arg9: memref<1x256xf32, #tpu.memory_space<vmem>>, %arg10: memref<8x2048xf32, #tpu.memory_space<vmem>>, %arg11: memref<2x8x32xf32, #tpu.memory_space<vmem>>, %arg12: memref<2x8x32xf32, #tpu.memory_space<vmem>>) attributes {dimension_semantics = [], scalar_prefetch = 0 : i64, scratch_operands = 0 : i64, tpu.core_type = #tpu.core_type<tc>} {
    %cst = arith.constant 0.000000e+00 : f32
    %0 = vector.broadcast %cst : f32 to vector<8x96xf32>
    %c0 = arith.constant 0 : index
    %c0_0 = arith.constant 0 : index
    %c0_1 = arith.constant 0 : index
    %1 = vector.load %arg1[%c0, %c0_0, %c0_1] : memref<2x8x32xf32, #tpu.memory_space<vmem>>, vector<1x8x32xf32>
    %2 = vector.shape_cast %1 : vector<1x8x32xf32> to vector<8x32xf32>
    %3 = tpu.concatenate %2, %0 in 1 : vector<8x32xf32>, vector<8x96xf32> -> vector<8x128xf32>
    %c1 = arith.constant 1 : index
    %c0_2 = arith.constant 0 : index
    %c0_3 = arith.constant 0 : index
    %4 = vector.load %arg1[%c1, %c0_2, %c0_3] : memref<2x8x32xf32, #tpu.memory_space<vmem>>, vector<1x8x32xf32>
    %5 = vector.shape_cast %4 : vector<1x8x32xf32> to vector<8x32xf32>
    %6 = tpu.concatenate %5, %0 in 1 : vector<8x32xf32>, vector<8x96xf32> -> vector<8x128xf32>
    %c0_4 = arith.constant 0 : index
    %c0_5 = arith.constant 0 : index
    %c0_6 = arith.constant 0 : index
    %7 = vector.load %arg2[%c0_4, %c0_5, %c0_6] : memref<2x8x32xf32, #tpu.memory_space<vmem>>, vector<1x8x32xf32>
    %8 = vector.shape_cast %7 : vector<1x8x32xf32> to vector<8x32xf32>
    %9 = tpu.concatenate %8, %0 in 1 : vector<8x32xf32>, vector<8x96xf32> -> vector<8x128xf32>
    %c1_7 = arith.constant 1 : index
    %c0_8 = arith.constant 0 : index
    %c0_9 = arith.constant 0 : index
    %10 = vector.load %arg2[%c1_7, %c0_8, %c0_9] : memref<2x8x32xf32, #tpu.memory_space<vmem>>, vector<1x8x32xf32>
    %11 = vector.shape_cast %10 : vector<1x8x32xf32> to vector<8x32xf32>
    %12 = tpu.concatenate %11, %0 in 1 : vector<8x32xf32>, vector<8x96xf32> -> vector<8x128xf32>
    %13 = tpu.iota {dimensions = array<i32: 1>} : vector<8x256xi32>
    %c0_10 = arith.constant 0 : index
    %c0_11 = arith.constant 0 : index
    %14 = vector.load %arg5[%c0_10, %c0_11] : memref<1x512xf32, #tpu.memory_space<vmem>>, vector<1x512xf32>
    %15 = vector.shape_cast %14 : vector<1x512xf32> to vector<1x512xf32>
    %16 = vector.broadcast %15 : vector<1x512xf32> to vector<8x512xf32>
    %c0_12 = arith.constant 0 : index
    %c0_13 = arith.constant 0 : index
    %17 = vector.load %arg7[%c0_12, %c0_13] : memref<1x512xf32, #tpu.memory_space<vmem>>, vector<1x512xf32>
    %18 = vector.shape_cast %17 : vector<1x512xf32> to vector<1x512xf32>
    %19 = vector.broadcast %18 : vector<1x512xf32> to vector<8x512xf32>
    %c0_14 = arith.constant 0 : index
    %c0_15 = arith.constant 0 : index
    %20 = vector.load %arg9[%c0_14, %c0_15] : memref<1x256xf32, #tpu.memory_space<vmem>>, vector<1x256xf32>
    %21 = vector.shape_cast %20 : vector<1x256xf32> to vector<1x256xf32>
    %22 = vector.broadcast %21 : vector<1x256xf32> to vector<8x256xf32>
    %c0_16 = arith.constant 0 : index
    %c0_17 = arith.constant 0 : index
    %23 = vector.load %arg0[%c0_16, %c0_17] : memref<8x8xi32, #tpu.memory_space<vmem>>, vector<8x1xi32>
    %24 = vector.broadcast %23 : vector<8x1xi32> to vector<8x256xi32>
    %25 = arith.cmpi eq, %24, %13 : vector<8x256xi32>
    %26 = arith.extui %25 : vector<8x256xi1> to vector<8x256xi32>
    %27 = arith.sitofp %26 : vector<8x256xi32> to vector<8x256xf32>
    %c0_18 = arith.constant 0 : index
    %c0_19 = arith.constant 0 : index
    %28 = vector.load %arg3[%c0_18, %c0_19] : memref<256x512xf32, #tpu.memory_space<vmem>>, vector<256x512xf32>
    %cst_20 = arith.constant dense<0.000000e+00> : vector<8x512xf32>
    %29 = tpu.matmul %27, %28, %cst_20 {dimension_numbers = #tpu.dot_dimension_numbers<[1], [0], [0], [1], [0, 0, 1, 1], [], []>} : vector<8x256xf32>, vector<256x512xf32>, vector<8x512xf32> -> vector<8x512xf32>
    %30 = arith.addf %29, %16 : vector<8x512xf32>
    %c0_21 = arith.constant 0 : index
    %c0_22 = arith.constant 0 : index
    %31 = vector.load %arg4[%c0_21, %c0_22] : memref<128x512xf32, #tpu.memory_space<vmem>>, vector<128x512xf32>
    %cst_23 = arith.constant dense<0.000000e+00> : vector<8x512xf32>
    %32 = tpu.matmul %3, %31, %cst_23 {dimension_numbers = #tpu.dot_dimension_numbers<[1], [0], [0], [1], [0, 0, 1, 1], [], []>} : vector<8x128xf32>, vector<128x512xf32>, vector<8x512xf32> -> vector<8x512xf32>
    %33 = arith.addf %30, %32 : vector<8x512xf32>
    %34 = vector.extract_strided_slice %33 {offsets = [0, 0], sizes = [8, 128], strides = [1, 1]} : vector<8x512xf32> to vector<8x128xf32>
    %35 = arith.negf %34 : vector<8x128xf32>
    %36 = math.exp %35 : vector<8x128xf32>
    %cst_24 = arith.constant 1.000000e+00 : f32
    %37 = vector.broadcast %cst_24 : f32 to vector<8x128xf32>
    %38 = arith.addf %37, %36 : vector<8x128xf32>
    %39 = arith.divf %37, %38 : vector<8x128xf32>
    %40 = vector.extract_strided_slice %33 {offsets = [0, 128], sizes = [8, 128], strides = [1, 1]} : vector<8x512xf32> to vector<8x128xf32>
    %41 = arith.negf %40 : vector<8x128xf32>
    %42 = math.exp %41 : vector<8x128xf32>
    %cst_25 = arith.constant 1.000000e+00 : f32
    %43 = vector.broadcast %cst_25 : f32 to vector<8x128xf32>
    %44 = arith.addf %43, %42 : vector<8x128xf32>
    %45 = arith.divf %43, %44 : vector<8x128xf32>
    %46 = vector.extract_strided_slice %33 {offsets = [0, 256], sizes = [8, 128], strides = [1, 1]} : vector<8x512xf32> to vector<8x128xf32>
    %47 = math.tanh %46 : vector<8x128xf32>
    %48 = vector.extract_strided_slice %33 {offsets = [0, 384], sizes = [8, 128], strides = [1, 1]} : vector<8x512xf32> to vector<8x128xf32>
    %49 = arith.negf %48 : vector<8x128xf32>
    %50 = math.exp %49 : vector<8x128xf32>
    %cst_26 = arith.constant 1.000000e+00 : f32
    %51 = vector.broadcast %cst_26 : f32 to vector<8x128xf32>
    %52 = arith.addf %51, %50 : vector<8x128xf32>
    %53 = arith.divf %51, %52 : vector<8x128xf32>
    %54 = arith.mulf %45, %9 : vector<8x128xf32>
    %55 = arith.mulf %39, %47 : vector<8x128xf32>
    %56 = arith.addf %54, %55 : vector<8x128xf32>
    %57 = math.tanh %56 : vector<8x128xf32>
    %58 = arith.mulf %53, %57 : vector<8x128xf32>
    %59 = tpu.concatenate %58, %6 in 1 : vector<8x128xf32>, vector<8x128xf32> -> vector<8x256xf32>
    %c0_27 = arith.constant 0 : index
    %c0_28 = arith.constant 0 : index
    %60 = vector.load %arg6[%c0_27, %c0_28] : memref<256x512xf32, #tpu.memory_space<vmem>>, vector<256x512xf32>
    %cst_29 = arith.constant dense<0.000000e+00> : vector<8x512xf32>
    %61 = tpu.matmul %59, %60, %cst_29 {dimension_numbers = #tpu.dot_dimension_numbers<[1], [0], [0], [1], [0, 0, 1, 1], [], []>} : vector<8x256xf32>, vector<256x512xf32>, vector<8x512xf32> -> vector<8x512xf32>
    %62 = arith.addf %61, %19 : vector<8x512xf32>
    %63 = vector.extract_strided_slice %62 {offsets = [0, 0], sizes = [8, 128], strides = [1, 1]} : vector<8x512xf32> to vector<8x128xf32>
    %64 = arith.negf %63 : vector<8x128xf32>
    %65 = math.exp %64 : vector<8x128xf32>
    %cst_30 = arith.constant 1.000000e+00 : f32
    %66 = vector.broadcast %cst_30 : f32 to vector<8x128xf32>
    %67 = arith.addf %66, %65 : vector<8x128xf32>
    %68 = arith.divf %66, %67 : vector<8x128xf32>
    %69 = vector.extract_strided_slice %62 {offsets = [0, 128], sizes = [8, 128], strides = [1, 1]} : vector<8x512xf32> to vector<8x128xf32>
    %70 = arith.negf %69 : vector<8x128xf32>
    %71 = math.exp %70 : vector<8x128xf32>
    %cst_31 = arith.constant 1.000000e+00 : f32
    %72 = vector.broadcast %cst_31 : f32 to vector<8x128xf32>
    %73 = arith.addf %72, %71 : vector<8x128xf32>
    %74 = arith.divf %72, %73 : vector<8x128xf32>
    %75 = vector.extract_strided_slice %62 {offsets = [0, 256], sizes = [8, 128], strides = [1, 1]} : vector<8x512xf32> to vector<8x128xf32>
    %76 = math.tanh %75 : vector<8x128xf32>
    %77 = vector.extract_strided_slice %62 {offsets = [0, 384], sizes = [8, 128], strides = [1, 1]} : vector<8x512xf32> to vector<8x128xf32>
    %78 = arith.negf %77 : vector<8x128xf32>
    %79 = math.exp %78 : vector<8x128xf32>
    %cst_32 = arith.constant 1.000000e+00 : f32
    %80 = vector.broadcast %cst_32 : f32 to vector<8x128xf32>
    %81 = arith.addf %80, %79 : vector<8x128xf32>
    %82 = arith.divf %80, %81 : vector<8x128xf32>
    %83 = arith.mulf %74, %12 : vector<8x128xf32>
    %84 = arith.mulf %68, %76 : vector<8x128xf32>
    %85 = arith.addf %83, %84 : vector<8x128xf32>
    %86 = math.tanh %85 : vector<8x128xf32>
    %87 = arith.mulf %82, %86 : vector<8x128xf32>
    %c0_33 = arith.constant 0 : index
    %c0_34 = arith.constant 0 : index
    %88 = vector.load %arg8[%c0_33, %c0_34] : memref<128x256xf32, #tpu.memory_space<vmem>>, vector<128x256xf32>
    %cst_35 = arith.constant dense<0.000000e+00> : vector<8x256xf32>
    %89 = tpu.matmul %87, %88, %cst_35 {dimension_numbers = #tpu.dot_dimension_numbers<[1], [0], [0], [1], [0, 0, 1, 1], [], []>} : vector<8x128xf32>, vector<128x256xf32>, vector<8x256xf32> -> vector<8x256xf32>
    %90 = arith.addf %89, %22 : vector<8x256xf32>
    %c0_36 = arith.constant 0 : index
    %c0_37 = arith.constant 0 : index
    %91 = vector.load %arg10[%c0_36, %c0_37] : memref<8x2048xf32, #tpu.memory_space<vmem>>, vector<8x256xf32>
    tpu.vector_store %arg10[%c0_36, %c0_37], %90 {strides = array<i32>} : memref<8x2048xf32, #tpu.memory_space<vmem>>, vector<8x256xf32>,
    %c0_38 = arith.constant 0 : index
    %c1_39 = arith.constant 1 : index
    %92 = vector.load %arg0[%c0_38, %c1_39] : memref<8x8xi32, #tpu.memory_space<vmem>>, vector<8x1xi32>
    %93 = vector.broadcast %92 : vector<8x1xi32> to vector<8x256xi32>
    %94 = arith.cmpi eq, %93, %13 : vector<8x256xi32>
    %95 = arith.extui %94 : vector<8x256xi1> to vector<8x256xi32>
    %96 = arith.sitofp %95 : vector<8x256xi32> to vector<8x256xf32>
    %c0_40 = arith.constant 0 : index
    %c0_41 = arith.constant 0 : index
    %97 = vector.load %arg3[%c0_40, %c0_41] : memref<256x512xf32, #tpu.memory_space<vmem>>, vector<256x512xf32>
    %cst_42 = arith.constant dense<0.000000e+00> : vector<8x512xf32>
    %98 = tpu.matmul %96, %97, %cst_42 {dimension_numbers = #tpu.dot_dimension_numbers<[1], [0], [0], [1], [0, 0, 1, 1], [], []>} : vector<8x256xf32>, vector<256x512xf32>, vector<8x512xf32> -> vector<8x512xf32>
    %99 = arith.addf %98, %16 : vector<8x512xf32>
    %c0_43 = arith.constant 0 : index
    %c0_44 = arith.constant 0 : index
    %100 = vector.load %arg4[%c0_43, %c0_44] : memref<128x512xf32, #tpu.memory_space<vmem>>, vector<128x512xf32>
    %cst_45 = arith.constant dense<0.000000e+00> : vector<8x512xf32>
    %101 = tpu.matmul %58, %100, %cst_45 {dimension_numbers = #tpu.dot_dimension_numbers<[1], [0], [0], [1], [0, 0, 1, 1], [], []>} : vector<8x128xf32>, vector<128x512xf32>, vector<8x512xf32> -> vector<8x512xf32>
    %102 = arith.addf %99, %101 : vector<8x512xf32>
    %103 = vector.extract_strided_slice %102 {offsets = [0, 0], sizes = [8, 128], strides = [1, 1]} : vector<8x512xf32> to vector<8x128xf32>
    %104 = arith.negf %103 : vector<8x128xf32>
    %105 = math.exp %104 : vector<8x128xf32>
    %cst_46 = arith.constant 1.000000e+00 : f32
    %106 = vector.broadcast %cst_46 : f32 to vector<8x128xf32>
    %107 = arith.addf %106, %105 : vector<8x128xf32>
    %108 = arith.divf %106, %107 : vector<8x128xf32>
    %109 = vector.extract_strided_slice %102 {offsets = [0, 128], sizes = [8, 128], strides = [1, 1]} : vector<8x512xf32> to vector<8x128xf32>
    %110 = arith.negf %109 : vector<8x128xf32>
    %111 = math.exp %110 : vector<8x128xf32>
    %cst_47 = arith.constant 1.000000e+00 : f32
    %112 = vector.broadcast %cst_47 : f32 to vector<8x128xf32>
    %113 = arith.addf %112, %111 : vector<8x128xf32>
    %114 = arith.divf %112, %113 : vector<8x128xf32>
    %115 = vector.extract_strided_slice %102 {offsets = [0, 256], sizes = [8, 128], strides = [1, 1]} : vector<8x512xf32> to vector<8x128xf32>
    %116 = math.tanh %115 : vector<8x128xf32>
    %117 = vector.extract_strided_slice %102 {offsets = [0, 384], sizes = [8, 128], strides = [1, 1]} : vector<8x512xf32> to vector<8x128xf32>
    %118 = arith.negf %117 : vector<8x128xf32>
    %119 = math.exp %118 : vector<8x128xf32>
    %cst_48 = arith.constant 1.000000e+00 : f32
    %120 = vector.broadcast %cst_48 : f32 to vector<8x128xf32>
    %121 = arith.addf %120, %119 : vector<8x128xf32>
    %122 = arith.divf %120, %121 : vector<8x128xf32>
    %123 = arith.mulf %114, %56 : vector<8x128xf32>
    %124 = arith.mulf %108, %116 : vector<8x128xf32>
    %125 = arith.addf %123, %124 : vector<8x128xf32>
    %126 = math.tanh %125 : vector<8x128xf32>
    %127 = arith.mulf %122, %126 : vector<8x128xf32>
    %128 = tpu.concatenate %127, %87 in 1 : vector<8x128xf32>, vector<8x128xf32> -> vector<8x256xf32>
    %c0_49 = arith.constant 0 : index
    %c0_50 = arith.constant 0 : index
    %129 = vector.load %arg6[%c0_49, %c0_50] : memref<256x512xf32, #tpu.memory_space<vmem>>, vector<256x512xf32>
    %cst_51 = arith.constant dense<0.000000e+00> : vector<8x512xf32>
    %130 = tpu.matmul %128, %129, %cst_51 {dimension_numbers = #tpu.dot_dimension_numbers<[1], [0], [0], [1], [0, 0, 1, 1], [], []>} : vector<8x256xf32>, vector<256x512xf32>, vector<8x512xf32> -> vector<8x512xf32>
    %131 = arith.addf %130, %19 : vector<8x512xf32>
    %132 = vector.extract_strided_slice %131 {offsets = [0, 0], sizes = [8, 128], strides = [1, 1]} : vector<8x512xf32> to vector<8x128xf32>
    %133 = arith.negf %132 : vector<8x128xf32>
    %134 = math.exp %133 : vector<8x128xf32>
    %cst_52 = arith.constant 1.000000e+00 : f32
    %135 = vector.broadcast %cst_52 : f32 to vector<8x128xf32>
    %136 = arith.addf %135, %134 : vector<8x128xf32>
    %137 = arith.divf %135, %136 : vector<8x128xf32>
    %138 = vector.extract_strided_slice %131 {offsets = [0, 128], sizes = [8, 128], strides = [1, 1]} : vector<8x512xf32> to vector<8x128xf32>
    %139 = arith.negf %138 : vector<8x128xf32>
    %140 = math.exp %139 : vector<8x128xf32>
    %cst_53 = arith.constant 1.000000e+00 : f32
    %141 = vector.broadcast %cst_53 : f32 to vector<8x128xf32>
    %142 = arith.addf %141, %140 : vector<8x128xf32>
    %143 = arith.divf %141, %142 : vector<8x128xf32>
    %144 = vector.extract_strided_slice %131 {offsets = [0, 256], sizes = [8, 128], strides = [1, 1]} : vector<8x512xf32> to vector<8x128xf32>
    %145 = math.tanh %144 : vector<8x128xf32>
    %146 = vector.extract_strided_slice %131 {offsets = [0, 384], sizes = [8, 128], strides = [1, 1]} : vector<8x512xf32> to vector<8x128xf32>
    %147 = arith.negf %146 : vector<8x128xf32>
    %148 = math.exp %147 : vector<8x128xf32>
    %cst_54 = arith.constant 1.000000e+00 : f32
    %149 = vector.broadcast %cst_54 : f32 to vector<8x128xf32>
    %150 = arith.addf %149, %148 : vector<8x128xf32>
    %151 = arith.divf %149, %150 : vector<8x128xf32>
    %152 = arith.mulf %143, %85 : vector<8x128xf32>
    %153 = arith.mulf %137, %145 : vector<8x128xf32>
    %154 = arith.addf %152, %153 : vector<8x128xf32>
    %155 = math.tanh %154 : vector<8x128xf32>
    %156 = arith.mulf %151, %155 : vector<8x128xf32>
    %c0_55 = arith.constant 0 : index
    %c0_56 = arith.constant 0 : index
    %157 = vector.load %arg8[%c0_55, %c0_56] : memref<128x256xf32, #tpu.memory_space<vmem>>, vector<128x256xf32>
    %cst_57 = arith.constant dense<0.000000e+00> : vector<8x256xf32>
    %158 = tpu.matmul %156, %157, %cst_57 {dimension_numbers = #tpu.dot_dimension_numbers<[1], [0], [0], [1], [0, 0, 1, 1], [], []>} : vector<8x128xf32>, vector<128x256xf32>, vector<8x256xf32> -> vector<8x256xf32>
    %159 = arith.addf %158, %22 : vector<8x256xf32>
    %c0_58 = arith.constant 0 : index
    %c256 = arith.constant 256 : index
    %160 = vector.load %arg10[%c0_58, %c256] : memref<8x2048xf32, #tpu.memory_space<vmem>>, vector<8x256xf32>
    tpu.vector_store %arg10[%c0_58, %c256], %159 {strides = array<i32>} : memref<8x2048xf32, #tpu.memory_space<vmem>>, vector<8x256xf32>,
    %c0_59 = arith.constant 0 : index
    %c2 = arith.constant 2 : index
    %161 = vector.load %arg0[%c0_59, %c2] : memref<8x8xi32, #tpu.memory_space<vmem>>, vector<8x1xi32>
    %162 = vector.broadcast %161 : vector<8x1xi32> to vector<8x256xi32>
    %163 = arith.cmpi eq, %162, %13 : vector<8x256xi32>
    %164 = arith.extui %163 : vector<8x256xi1> to vector<8x256xi32>
    %165 = arith.sitofp %164 : vector<8x256xi32> to vector<8x256xf32>
    %c0_60 = arith.constant 0 : index
    %c0_61 = arith.constant 0 : index
    %166 = vector.load %arg3[%c0_60, %c0_61] : memref<256x512xf32, #tpu.memory_space<vmem>>, vector<256x512xf32>
    %cst_62 = arith.constant dense<0.000000e+00> : vector<8x512xf32>
    %167 = tpu.matmul %165, %166, %cst_62 {dimension_numbers = #tpu.dot_dimension_numbers<[1], [0], [0], [1], [0, 0, 1, 1], [], []>} : vector<8x256xf32>, vector<256x512xf32>, vector<8x512xf32> -> vector<8x512xf32>
    %168 = arith.addf %167, %16 : vector<8x512xf32>
    %c0_63 = arith.constant 0 : index
    %c0_64 = arith.constant 0 : index
    %169 = vector.load %arg4[%c0_63, %c0_64] : memref<128x512xf32, #tpu.memory_space<vmem>>, vector<128x512xf32>
    %cst_65 = arith.constant dense<0.000000e+00> : vector<8x512xf32>
    %170 = tpu.matmul %127, %169, %cst_65 {dimension_numbers = #tpu.dot_dimension_numbers<[1], [0], [0], [1], [0, 0, 1, 1], [], []>} : vector<8x128xf32>, vector<128x512xf32>, vector<8x512xf32> -> vector<8x512xf32>
    %171 = arith.addf %168, %170 : vector<8x512xf32>
    %172 = vector.extract_strided_slice %171 {offsets = [0, 0], sizes = [8, 128], strides = [1, 1]} : vector<8x512xf32> to vector<8x128xf32>
    %173 = arith.negf %172 : vector<8x128xf32>
    %174 = math.exp %173 : vector<8x128xf32>
    %cst_66 = arith.constant 1.000000e+00 : f32
    %175 = vector.broadcast %cst_66 : f32 to vector<8x128xf32>
    %176 = arith.addf %175, %174 : vector<8x128xf32>
    %177 = arith.divf %175, %176 : vector<8x128xf32>
    %178 = vector.extract_strided_slice %171 {offsets = [0, 128], sizes = [8, 128], strides = [1, 1]} : vector<8x512xf32> to vector<8x128xf32>
    %179 = arith.negf %178 : vector<8x128xf32>
    %180 = math.exp %179 : vector<8x128xf32>
    %cst_67 = arith.constant 1.000000e+00 : f32
    %181 = vector.broadcast %cst_67 : f32 to vector<8x128xf32>
    %182 = arith.addf %181, %180 : vector<8x128xf32>
    %183 = arith.divf %181, %182 : vector<8x128xf32>
    %184 = vector.extract_strided_slice %171 {offsets = [0, 256], sizes = [8, 128], strides = [1, 1]} : vector<8x512xf32> to vector<8x128xf32>
    %185 = math.tanh %184 : vector<8x128xf32>
    %186 = vector.extract_strided_slice %171 {offsets = [0, 384], sizes = [8, 128], strides = [1, 1]} : vector<8x512xf32> to vector<8x128xf32>
    %187 = arith.negf %186 : vector<8x128xf32>
    %188 = math.exp %187 : vector<8x128xf32>
    %cst_68 = arith.constant 1.000000e+00 : f32
    %189 = vector.broadcast %cst_68 : f32 to vector<8x128xf32>
    %190 = arith.addf %189, %188 : vector<8x128xf32>
    %191 = arith.divf %189, %190 : vector<8x128xf32>
    %192 = arith.mulf %183, %125 : vector<8x128xf32>
    %193 = arith.mulf %177, %185 : vector<8x128xf32>
    %194 = arith.addf %192, %193 : vector<8x128xf32>
    %195 = math.tanh %194 : vector<8x128xf32>
    %196 = arith.mulf %191, %195 : vector<8x128xf32>
    %197 = tpu.concatenate %196, %156 in 1 : vector<8x128xf32>, vector<8x128xf32> -> vector<8x256xf32>
    %c0_69 = arith.constant 0 : index
    %c0_70 = arith.constant 0 : index
    %198 = vector.load %arg6[%c0_69, %c0_70] : memref<256x512xf32, #tpu.memory_space<vmem>>, vector<256x512xf32>
    %cst_71 = arith.constant dense<0.000000e+00> : vector<8x512xf32>
    %199 = tpu.matmul %197, %198, %cst_71 {dimension_numbers = #tpu.dot_dimension_numbers<[1], [0], [0], [1], [0, 0, 1, 1], [], []>} : vector<8x256xf32>, vector<256x512xf32>, vector<8x512xf32> -> vector<8x512xf32>
    %200 = arith.addf %199, %19 : vector<8x512xf32>
    %201 = vector.extract_strided_slice %200 {offsets = [0, 0], sizes = [8, 128], strides = [1, 1]} : vector<8x512xf32> to vector<8x128xf32>
    %202 = arith.negf %201 : vector<8x128xf32>
    %203 = math.exp %202 : vector<8x128xf32>
    %cst_72 = arith.constant 1.000000e+00 : f32
    %204 = vector.broadcast %cst_72 : f32 to vector<8x128xf32>
    %205 = arith.addf %204, %203 : vector<8x128xf32>
    %206 = arith.divf %204, %205 : vector<8x128xf32>
    %207 = vector.extract_strided_slice %200 {offsets = [0, 128], sizes = [8, 128], strides = [1, 1]} : vector<8x512xf32> to vector<8x128xf32>
    %208 = arith.negf %207 : vector<8x128xf32>
    %209 = math.exp %208 : vector<8x128xf32>
    %cst_73 = arith.constant 1.000000e+00 : f32
    %210 = vector.broadcast %cst_73 : f32 to vector<8x128xf32>
    %211 = arith.addf %210, %209 : vector<8x128xf32>
    %212 = arith.divf %210, %211 : vector<8x128xf32>
    %213 = vector.extract_strided_slice %200 {offsets = [0, 256], sizes = [8, 128], strides = [1, 1]} : vector<8x512xf32> to vector<8x128xf32>
    %214 = math.tanh %213 : vector<8x128xf32>
    %215 = vector.extract_strided_slice %200 {offsets = [0, 384], sizes = [8, 128], strides = [1, 1]} : vector<8x512xf32> to vector<8x128xf32>
    %216 = arith.negf %215 : vector<8x128xf32>
    %217 = math.exp %216 : vector<8x128xf32>
    %cst_74 = arith.constant 1.000000e+00 : f32
    %218 = vector.broadcast %cst_74 : f32 to vector<8x128xf32>
    %219 = arith.addf %218, %217 : vector<8x128xf32>
    %220 = arith.divf %218, %219 : vector<8x128xf32>
    %221 = arith.mulf %212, %154 : vector<8x128xf32>
    %222 = arith.mulf %206, %214 : vector<8x128xf32>
    %223 = arith.addf %221, %222 : vector<8x128xf32>
    %224 = math.tanh %223 : vector<8x128xf32>
    %225 = arith.mulf %220, %224 : vector<8x128xf32>
    %c0_75 = arith.constant 0 : index
    %c0_76 = arith.constant 0 : index
    %226 = vector.load %arg8[%c0_75, %c0_76] : memref<128x256xf32, #tpu.memory_space<vmem>>, vector<128x256xf32>
    %cst_77 = arith.constant dense<0.000000e+00> : vector<8x256xf32>
    %227 = tpu.matmul %225, %226, %cst_77 {dimension_numbers = #tpu.dot_dimension_numbers<[1], [0], [0], [1], [0, 0, 1, 1], [], []>} : vector<8x128xf32>, vector<128x256xf32>, vector<8x256xf32> -> vector<8x256xf32>
    %228 = arith.addf %227, %22 : vector<8x256xf32>
    %c0_78 = arith.constant 0 : index
    %c512 = arith.constant 512 : index
    %229 = vector.load %arg10[%c0_78, %c512] : memref<8x2048xf32, #tpu.memory_space<vmem>>, vector<8x256xf32>
    tpu.vector_store %arg10[%c0_78, %c512], %228 {strides = array<i32>} : memref<8x2048xf32, #tpu.memory_space<vmem>>, vector<8x256xf32>,
    %c0_79 = arith.constant 0 : index
    %c3 = arith.constant 3 : index
    %230 = vector.load %arg0[%c0_79, %c3] : memref<8x8xi32, #tpu.memory_space<vmem>>, vector<8x1xi32>
    %231 = vector.broadcast %230 : vector<8x1xi32> to vector<8x256xi32>
    %232 = arith.cmpi eq, %231, %13 : vector<8x256xi32>
    %233 = arith.extui %232 : vector<8x256xi1> to vector<8x256xi32>
    %234 = arith.sitofp %233 : vector<8x256xi32> to vector<8x256xf32>
    %c0_80 = arith.constant 0 : index
    %c0_81 = arith.constant 0 : index
    %235 = vector.load %arg3[%c0_80, %c0_81] : memref<256x512xf32, #tpu.memory_space<vmem>>, vector<256x512xf32>
    %cst_82 = arith.constant dense<0.000000e+00> : vector<8x512xf32>
    %236 = tpu.matmul %234, %235, %cst_82 {dimension_numbers = #tpu.dot_dimension_numbers<[1], [0], [0], [1], [0, 0, 1, 1], [], []>} : vector<8x256xf32>, vector<256x512xf32>, vector<8x512xf32> -> vector<8x512xf32>
    %237 = arith.addf %236, %16 : vector<8x512xf32>
    %c0_83 = arith.constant 0 : index
    %c0_84 = arith.constant 0 : index
    %238 = vector.load %arg4[%c0_83, %c0_84] : memref<128x512xf32, #tpu.memory_space<vmem>>, vector<128x512xf32>
    %cst_85 = arith.constant dense<0.000000e+00> : vector<8x512xf32>
    %239 = tpu.matmul %196, %238, %cst_85 {dimension_numbers = #tpu.dot_dimension_numbers<[1], [0], [0], [1], [0, 0, 1, 1], [], []>} : vector<8x128xf32>, vector<128x512xf32>, vector<8x512xf32> -> vector<8x512xf32>
    %240 = arith.addf %237, %239 : vector<8x512xf32>
    %241 = vector.extract_strided_slice %240 {offsets = [0, 0], sizes = [8, 128], strides = [1, 1]} : vector<8x512xf32> to vector<8x128xf32>
    %242 = arith.negf %241 : vector<8x128xf32>
    %243 = math.exp %242 : vector<8x128xf32>
    %cst_86 = arith.constant 1.000000e+00 : f32
    %244 = vector.broadcast %cst_86 : f32 to vector<8x128xf32>
    %245 = arith.addf %244, %243 : vector<8x128xf32>
    %246 = arith.divf %244, %245 : vector<8x128xf32>
    %247 = vector.extract_strided_slice %240 {offsets = [0, 128], sizes = [8, 128], strides = [1, 1]} : vector<8x512xf32> to vector<8x128xf32>
    %248 = arith.negf %247 : vector<8x128xf32>
    %249 = math.exp %248 : vector<8x128xf32>
    %cst_87 = arith.constant 1.000000e+00 : f32
    %250 = vector.broadcast %cst_87 : f32 to vector<8x128xf32>
    %251 = arith.addf %250, %249 : vector<8x128xf32>
    %252 = arith.divf %250, %251 : vector<8x128xf32>
    %253 = vector.extract_strided_slice %240 {offsets = [0, 256], sizes = [8, 128], strides = [1, 1]} : vector<8x512xf32> to vector<8x128xf32>
    %254 = math.tanh %253 : vector<8x128xf32>
    %255 = vector.extract_strided_slice %240 {offsets = [0, 384], sizes = [8, 128], strides = [1, 1]} : vector<8x512xf32> to vector<8x128xf32>
    %256 = arith.negf %255 : vector<8x128xf32>
    %257 = math.exp %256 : vector<8x128xf32>
    %cst_88 = arith.constant 1.000000e+00 : f32
    %258 = vector.broadcast %cst_88 : f32 to vector<8x128xf32>
    %259 = arith.addf %258, %257 : vector<8x128xf32>
    %260 = arith.divf %258, %259 : vector<8x128xf32>
    %261 = arith.mulf %252, %194 : vector<8x128xf32>
    %262 = arith.mulf %246, %254 : vector<8x128xf32>
    %263 = arith.addf %261, %262 : vector<8x128xf32>
    %264 = math.tanh %263 : vector<8x128xf32>
    %265 = arith.mulf %260, %264 : vector<8x128xf32>
    %266 = tpu.concatenate %265, %225 in 1 : vector<8x128xf32>, vector<8x128xf32> -> vector<8x256xf32>
    %c0_89 = arith.constant 0 : index
    %c0_90 = arith.constant 0 : index
    %267 = vector.load %arg6[%c0_89, %c0_90] : memref<256x512xf32, #tpu.memory_space<vmem>>, vector<256x512xf32>
    %cst_91 = arith.constant dense<0.000000e+00> : vector<8x512xf32>
    %268 = tpu.matmul %266, %267, %cst_91 {dimension_numbers = #tpu.dot_dimension_numbers<[1], [0], [0], [1], [0, 0, 1, 1], [], []>} : vector<8x256xf32>, vector<256x512xf32>, vector<8x512xf32> -> vector<8x512xf32>
    %269 = arith.addf %268, %19 : vector<8x512xf32>
    %270 = vector.extract_strided_slice %269 {offsets = [0, 0], sizes = [8, 128], strides = [1, 1]} : vector<8x512xf32> to vector<8x128xf32>
    %271 = arith.negf %270 : vector<8x128xf32>
    %272 = math.exp %271 : vector<8x128xf32>
    %cst_92 = arith.constant 1.000000e+00 : f32
    %273 = vector.broadcast %cst_92 : f32 to vector<8x128xf32>
    %274 = arith.addf %273, %272 : vector<8x128xf32>
    %275 = arith.divf %273, %274 : vector<8x128xf32>
    %276 = vector.extract_strided_slice %269 {offsets = [0, 128], sizes = [8, 128], strides = [1, 1]} : vector<8x512xf32> to vector<8x128xf32>
    %277 = arith.negf %276 : vector<8x128xf32>
    %278 = math.exp %277 : vector<8x128xf32>
    %cst_93 = arith.constant 1.000000e+00 : f32
    %279 = vector.broadcast %cst_93 : f32 to vector<8x128xf32>
    %280 = arith.addf %279, %278 : vector<8x128xf32>
    %281 = arith.divf %279, %280 : vector<8x128xf32>
    %282 = vector.extract_strided_slice %269 {offsets = [0, 256], sizes = [8, 128], strides = [1, 1]} : vector<8x512xf32> to vector<8x128xf32>
    %283 = math.tanh %282 : vector<8x128xf32>
    %284 = vector.extract_strided_slice %269 {offsets = [0, 384], sizes = [8, 128], strides = [1, 1]} : vector<8x512xf32> to vector<8x128xf32>
    %285 = arith.negf %284 : vector<8x128xf32>
    %286 = math.exp %285 : vector<8x128xf32>
    %cst_94 = arith.constant 1.000000e+00 : f32
    %287 = vector.broadcast %cst_94 : f32 to vector<8x128xf32>
    %288 = arith.addf %287, %286 : vector<8x128xf32>
    %289 = arith.divf %287, %288 : vector<8x128xf32>
    %290 = arith.mulf %281, %223 : vector<8x128xf32>
    %291 = arith.mulf %275, %283 : vector<8x128xf32>
    %292 = arith.addf %290, %291 : vector<8x128xf32>
    %293 = math.tanh %292 : vector<8x128xf32>
    %294 = arith.mulf %289, %293 : vector<8x128xf32>
    %c0_95 = arith.constant 0 : index
    %c0_96 = arith.constant 0 : index
    %295 = vector.load %arg8[%c0_95, %c0_96] : memref<128x256xf32, #tpu.memory_space<vmem>>, vector<128x256xf32>
    %cst_97 = arith.constant dense<0.000000e+00> : vector<8x256xf32>
    %296 = tpu.matmul %294, %295, %cst_97 {dimension_numbers = #tpu.dot_dimension_numbers<[1], [0], [0], [1], [0, 0, 1, 1], [], []>} : vector<8x128xf32>, vector<128x256xf32>, vector<8x256xf32> -> vector<8x256xf32>
    %297 = arith.addf %296, %22 : vector<8x256xf32>
    %c0_98 = arith.constant 0 : index
    %c768 = arith.constant 768 : index
    %298 = vector.load %arg10[%c0_98, %c768] : memref<8x2048xf32, #tpu.memory_space<vmem>>, vector<8x256xf32>
    tpu.vector_store %arg10[%c0_98, %c768], %297 {strides = array<i32>} : memref<8x2048xf32, #tpu.memory_space<vmem>>, vector<8x256xf32>,
    %c0_99 = arith.constant 0 : index
    %c4 = arith.constant 4 : index
    %299 = vector.load %arg0[%c0_99, %c4] : memref<8x8xi32, #tpu.memory_space<vmem>>, vector<8x1xi32>
    %300 = vector.broadcast %299 : vector<8x1xi32> to vector<8x256xi32>
    %301 = arith.cmpi eq, %300, %13 : vector<8x256xi32>
    %302 = arith.extui %301 : vector<8x256xi1> to vector<8x256xi32>
    %303 = arith.sitofp %302 : vector<8x256xi32> to vector<8x256xf32>
    %c0_100 = arith.constant 0 : index
    %c0_101 = arith.constant 0 : index
    %304 = vector.load %arg3[%c0_100, %c0_101] : memref<256x512xf32, #tpu.memory_space<vmem>>, vector<256x512xf32>
    %cst_102 = arith.constant dense<0.000000e+00> : vector<8x512xf32>
    %305 = tpu.matmul %303, %304, %cst_102 {dimension_numbers = #tpu.dot_dimension_numbers<[1], [0], [0], [1], [0, 0, 1, 1], [], []>} : vector<8x256xf32>, vector<256x512xf32>, vector<8x512xf32> -> vector<8x512xf32>
    %306 = arith.addf %305, %16 : vector<8x512xf32>
    %c0_103 = arith.constant 0 : index
    %c0_104 = arith.constant 0 : index
    %307 = vector.load %arg4[%c0_103, %c0_104] : memref<128x512xf32, #tpu.memory_space<vmem>>, vector<128x512xf32>
    %cst_105 = arith.constant dense<0.000000e+00> : vector<8x512xf32>
    %308 = tpu.matmul %265, %307, %cst_105 {dimension_numbers = #tpu.dot_dimension_numbers<[1], [0], [0], [1], [0, 0, 1, 1], [], []>} : vector<8x128xf32>, vector<128x512xf32>, vector<8x512xf32> -> vector<8x512xf32>
    %309 = arith.addf %306, %308 : vector<8x512xf32>
    %310 = vector.extract_strided_slice %309 {offsets = [0, 0], sizes = [8, 128], strides = [1, 1]} : vector<8x512xf32> to vector<8x128xf32>
    %311 = arith.negf %310 : vector<8x128xf32>
    %312 = math.exp %311 : vector<8x128xf32>
    %cst_106 = arith.constant 1.000000e+00 : f32
    %313 = vector.broadcast %cst_106 : f32 to vector<8x128xf32>
    %314 = arith.addf %313, %312 : vector<8x128xf32>
    %315 = arith.divf %313, %314 : vector<8x128xf32>
    %316 = vector.extract_strided_slice %309 {offsets = [0, 128], sizes = [8, 128], strides = [1, 1]} : vector<8x512xf32> to vector<8x128xf32>
    %317 = arith.negf %316 : vector<8x128xf32>
    %318 = math.exp %317 : vector<8x128xf32>
    %cst_107 = arith.constant 1.000000e+00 : f32
    %319 = vector.broadcast %cst_107 : f32 to vector<8x128xf32>
    %320 = arith.addf %319, %318 : vector<8x128xf32>
    %321 = arith.divf %319, %320 : vector<8x128xf32>
    %322 = vector.extract_strided_slice %309 {offsets = [0, 256], sizes = [8, 128], strides = [1, 1]} : vector<8x512xf32> to vector<8x128xf32>
    %323 = math.tanh %322 : vector<8x128xf32>
    %324 = vector.extract_strided_slice %309 {offsets = [0, 384], sizes = [8, 128], strides = [1, 1]} : vector<8x512xf32> to vector<8x128xf32>
    %325 = arith.negf %324 : vector<8x128xf32>
    %326 = math.exp %325 : vector<8x128xf32>
    %cst_108 = arith.constant 1.000000e+00 : f32
    %327 = vector.broadcast %cst_108 : f32 to vector<8x128xf32>
    %328 = arith.addf %327, %326 : vector<8x128xf32>
    %329 = arith.divf %327, %328 : vector<8x128xf32>
    %330 = arith.mulf %321, %263 : vector<8x128xf32>
    %331 = arith.mulf %315, %323 : vector<8x128xf32>
    %332 = arith.addf %330, %331 : vector<8x128xf32>
    %333 = math.tanh %332 : vector<8x128xf32>
    %334 = arith.mulf %329, %333 : vector<8x128xf32>
    %335 = tpu.concatenate %334, %294 in 1 : vector<8x128xf32>, vector<8x128xf32> -> vector<8x256xf32>
    %c0_109 = arith.constant 0 : index
    %c0_110 = arith.constant 0 : index
    %336 = vector.load %arg6[%c0_109, %c0_110] : memref<256x512xf32, #tpu.memory_space<vmem>>, vector<256x512xf32>
    %cst_111 = arith.constant dense<0.000000e+00> : vector<8x512xf32>
    %337 = tpu.matmul %335, %336, %cst_111 {dimension_numbers = #tpu.dot_dimension_numbers<[1], [0], [0], [1], [0, 0, 1, 1], [], []>} : vector<8x256xf32>, vector<256x512xf32>, vector<8x512xf32> -> vector<8x512xf32>
    %338 = arith.addf %337, %19 : vector<8x512xf32>
    %339 = vector.extract_strided_slice %338 {offsets = [0, 0], sizes = [8, 128], strides = [1, 1]} : vector<8x512xf32> to vector<8x128xf32>
    %340 = arith.negf %339 : vector<8x128xf32>
    %341 = math.exp %340 : vector<8x128xf32>
    %cst_112 = arith.constant 1.000000e+00 : f32
    %342 = vector.broadcast %cst_112 : f32 to vector<8x128xf32>
    %343 = arith.addf %342, %341 : vector<8x128xf32>
    %344 = arith.divf %342, %343 : vector<8x128xf32>
    %345 = vector.extract_strided_slice %338 {offsets = [0, 128], sizes = [8, 128], strides = [1, 1]} : vector<8x512xf32> to vector<8x128xf32>
    %346 = arith.negf %345 : vector<8x128xf32>
    %347 = math.exp %346 : vector<8x128xf32>
    %cst_113 = arith.constant 1.000000e+00 : f32
    %348 = vector.broadcast %cst_113 : f32 to vector<8x128xf32>
    %349 = arith.addf %348, %347 : vector<8x128xf32>
    %350 = arith.divf %348, %349 : vector<8x128xf32>
    %351 = vector.extract_strided_slice %338 {offsets = [0, 256], sizes = [8, 128], strides = [1, 1]} : vector<8x512xf32> to vector<8x128xf32>
    %352 = math.tanh %351 : vector<8x128xf32>
    %353 = vector.extract_strided_slice %338 {offsets = [0, 384], sizes = [8, 128], strides = [1, 1]} : vector<8x512xf32> to vector<8x128xf32>
    %354 = arith.negf %353 : vector<8x128xf32>
    %355 = math.exp %354 : vector<8x128xf32>
    %cst_114 = arith.constant 1.000000e+00 : f32
    %356 = vector.broadcast %cst_114 : f32 to vector<8x128xf32>
    %357 = arith.addf %356, %355 : vector<8x128xf32>
    %358 = arith.divf %356, %357 : vector<8x128xf32>
    %359 = arith.mulf %350, %292 : vector<8x128xf32>
    %360 = arith.mulf %344, %352 : vector<8x128xf32>
    %361 = arith.addf %359, %360 : vector<8x128xf32>
    %362 = math.tanh %361 : vector<8x128xf32>
    %363 = arith.mulf %358, %362 : vector<8x128xf32>
    %c0_115 = arith.constant 0 : index
    %c0_116 = arith.constant 0 : index
    %364 = vector.load %arg8[%c0_115, %c0_116] : memref<128x256xf32, #tpu.memory_space<vmem>>, vector<128x256xf32>
    %cst_117 = arith.constant dense<0.000000e+00> : vector<8x256xf32>
    %365 = tpu.matmul %363, %364, %cst_117 {dimension_numbers = #tpu.dot_dimension_numbers<[1], [0], [0], [1], [0, 0, 1, 1], [], []>} : vector<8x128xf32>, vector<128x256xf32>, vector<8x256xf32> -> vector<8x256xf32>
    %366 = arith.addf %365, %22 : vector<8x256xf32>
    %c0_118 = arith.constant 0 : index
    %c1024 = arith.constant 1024 : index
    %367 = vector.load %arg10[%c0_118, %c1024] : memref<8x2048xf32, #tpu.memory_space<vmem>>, vector<8x256xf32>
    tpu.vector_store %arg10[%c0_118, %c1024], %366 {strides = array<i32>} : memref<8x2048xf32, #tpu.memory_space<vmem>>, vector<8x256xf32>,
    %c0_119 = arith.constant 0 : index
    %c5 = arith.constant 5 : index
    %368 = vector.load %arg0[%c0_119, %c5] : memref<8x8xi32, #tpu.memory_space<vmem>>, vector<8x1xi32>
    %369 = vector.broadcast %368 : vector<8x1xi32> to vector<8x256xi32>
    %370 = arith.cmpi eq, %369, %13 : vector<8x256xi32>
    %371 = arith.extui %370 : vector<8x256xi1> to vector<8x256xi32>
    %372 = arith.sitofp %371 : vector<8x256xi32> to vector<8x256xf32>
    %c0_120 = arith.constant 0 : index
    %c0_121 = arith.constant 0 : index
    %373 = vector.load %arg3[%c0_120, %c0_121] : memref<256x512xf32, #tpu.memory_space<vmem>>, vector<256x512xf32>
    %cst_122 = arith.constant dense<0.000000e+00> : vector<8x512xf32>
    %374 = tpu.matmul %372, %373, %cst_122 {dimension_numbers = #tpu.dot_dimension_numbers<[1], [0], [0], [1], [0, 0, 1, 1], [], []>} : vector<8x256xf32>, vector<256x512xf32>, vector<8x512xf32> -> vector<8x512xf32>
    %375 = arith.addf %374, %16 : vector<8x512xf32>
    %c0_123 = arith.constant 0 : index
    %c0_124 = arith.constant 0 : index
    %376 = vector.load %arg4[%c0_123, %c0_124] : memref<128x512xf32, #tpu.memory_space<vmem>>, vector<128x512xf32>
    %cst_125 = arith.constant dense<0.000000e+00> : vector<8x512xf32>
    %377 = tpu.matmul %334, %376, %cst_125 {dimension_numbers = #tpu.dot_dimension_numbers<[1], [0], [0], [1], [0, 0, 1, 1], [], []>} : vector<8x128xf32>, vector<128x512xf32>, vector<8x512xf32> -> vector<8x512xf32>
    %378 = arith.addf %375, %377 : vector<8x512xf32>
    %379 = vector.extract_strided_slice %378 {offsets = [0, 0], sizes = [8, 128], strides = [1, 1]} : vector<8x512xf32> to vector<8x128xf32>
    %380 = arith.negf %379 : vector<8x128xf32>
    %381 = math.exp %380 : vector<8x128xf32>
    %cst_126 = arith.constant 1.000000e+00 : f32
    %382 = vector.broadcast %cst_126 : f32 to vector<8x128xf32>
    %383 = arith.addf %382, %381 : vector<8x128xf32>
    %384 = arith.divf %382, %383 : vector<8x128xf32>
    %385 = vector.extract_strided_slice %378 {offsets = [0, 128], sizes = [8, 128], strides = [1, 1]} : vector<8x512xf32> to vector<8x128xf32>
    %386 = arith.negf %385 : vector<8x128xf32>
    %387 = math.exp %386 : vector<8x128xf32>
    %cst_127 = arith.constant 1.000000e+00 : f32
    %388 = vector.broadcast %cst_127 : f32 to vector<8x128xf32>
    %389 = arith.addf %388, %387 : vector<8x128xf32>
    %390 = arith.divf %388, %389 : vector<8x128xf32>
    %391 = vector.extract_strided_slice %378 {offsets = [0, 256], sizes = [8, 128], strides = [1, 1]} : vector<8x512xf32> to vector<8x128xf32>
    %392 = math.tanh %391 : vector<8x128xf32>
    %393 = vector.extract_strided_slice %378 {offsets = [0, 384], sizes = [8, 128], strides = [1, 1]} : vector<8x512xf32> to vector<8x128xf32>
    %394 = arith.negf %393 : vector<8x128xf32>
    %395 = math.exp %394 : vector<8x128xf32>
    %cst_128 = arith.constant 1.000000e+00 : f32
    %396 = vector.broadcast %cst_128 : f32 to vector<8x128xf32>
    %397 = arith.addf %396, %395 : vector<8x128xf32>
    %398 = arith.divf %396, %397 : vector<8x128xf32>
    %399 = arith.mulf %390, %332 : vector<8x128xf32>
    %400 = arith.mulf %384, %392 : vector<8x128xf32>
    %401 = arith.addf %399, %400 : vector<8x128xf32>
    %402 = math.tanh %401 : vector<8x128xf32>
    %403 = arith.mulf %398, %402 : vector<8x128xf32>
    %404 = tpu.concatenate %403, %363 in 1 : vector<8x128xf32>, vector<8x128xf32> -> vector<8x256xf32>
    %c0_129 = arith.constant 0 : index
    %c0_130 = arith.constant 0 : index
    %405 = vector.load %arg6[%c0_129, %c0_130] : memref<256x512xf32, #tpu.memory_space<vmem>>, vector<256x512xf32>
    %cst_131 = arith.constant dense<0.000000e+00> : vector<8x512xf32>
    %406 = tpu.matmul %404, %405, %cst_131 {dimension_numbers = #tpu.dot_dimension_numbers<[1], [0], [0], [1], [0, 0, 1, 1], [], []>} : vector<8x256xf32>, vector<256x512xf32>, vector<8x512xf32> -> vector<8x512xf32>
    %407 = arith.addf %406, %19 : vector<8x512xf32>
    %408 = vector.extract_strided_slice %407 {offsets = [0, 0], sizes = [8, 128], strides = [1, 1]} : vector<8x512xf32> to vector<8x128xf32>
    %409 = arith.negf %408 : vector<8x128xf32>
    %410 = math.exp %409 : vector<8x128xf32>
    %cst_132 = arith.constant 1.000000e+00 : f32
    %411 = vector.broadcast %cst_132 : f32 to vector<8x128xf32>
    %412 = arith.addf %411, %410 : vector<8x128xf32>
    %413 = arith.divf %411, %412 : vector<8x128xf32>
    %414 = vector.extract_strided_slice %407 {offsets = [0, 128], sizes = [8, 128], strides = [1, 1]} : vector<8x512xf32> to vector<8x128xf32>
    %415 = arith.negf %414 : vector<8x128xf32>
    %416 = math.exp %415 : vector<8x128xf32>
    %cst_133 = arith.constant 1.000000e+00 : f32
    %417 = vector.broadcast %cst_133 : f32 to vector<8x128xf32>
    %418 = arith.addf %417, %416 : vector<8x128xf32>
    %419 = arith.divf %417, %418 : vector<8x128xf32>
    %420 = vector.extract_strided_slice %407 {offsets = [0, 256], sizes = [8, 128], strides = [1, 1]} : vector<8x512xf32> to vector<8x128xf32>
    %421 = math.tanh %420 : vector<8x128xf32>
    %422 = vector.extract_strided_slice %407 {offsets = [0, 384], sizes = [8, 128], strides = [1, 1]} : vector<8x512xf32> to vector<8x128xf32>
    %423 = arith.negf %422 : vector<8x128xf32>
    %424 = math.exp %423 : vector<8x128xf32>
    %cst_134 = arith.constant 1.000000e+00 : f32
    %425 = vector.broadcast %cst_134 : f32 to vector<8x128xf32>
    %426 = arith.addf %425, %424 : vector<8x128xf32>
    %427 = arith.divf %425, %426 : vector<8x128xf32>
    %428 = arith.mulf %419, %361 : vector<8x128xf32>
    %429 = arith.mulf %413, %421 : vector<8x128xf32>
    %430 = arith.addf %428, %429 : vector<8x128xf32>
    %431 = math.tanh %430 : vector<8x128xf32>
    %432 = arith.mulf %427, %431 : vector<8x128xf32>
    %c0_135 = arith.constant 0 : index
    %c0_136 = arith.constant 0 : index
    %433 = vector.load %arg8[%c0_135, %c0_136] : memref<128x256xf32, #tpu.memory_space<vmem>>, vector<128x256xf32>
    %cst_137 = arith.constant dense<0.000000e+00> : vector<8x256xf32>
    %434 = tpu.matmul %432, %433, %cst_137 {dimension_numbers = #tpu.dot_dimension_numbers<[1], [0], [0], [1], [0, 0, 1, 1], [], []>} : vector<8x128xf32>, vector<128x256xf32>, vector<8x256xf32> -> vector<8x256xf32>
    %435 = arith.addf %434, %22 : vector<8x256xf32>
    %c0_138 = arith.constant 0 : index
    %c1280 = arith.constant 1280 : index
    %436 = vector.load %arg10[%c0_138, %c1280] : memref<8x2048xf32, #tpu.memory_space<vmem>>, vector<8x256xf32>
    tpu.vector_store %arg10[%c0_138, %c1280], %435 {strides = array<i32>} : memref<8x2048xf32, #tpu.memory_space<vmem>>, vector<8x256xf32>,
    %c0_139 = arith.constant 0 : index
    %c6 = arith.constant 6 : index
    %437 = vector.load %arg0[%c0_139, %c6] : memref<8x8xi32, #tpu.memory_space<vmem>>, vector<8x1xi32>
    %438 = vector.broadcast %437 : vector<8x1xi32> to vector<8x256xi32>
    %439 = arith.cmpi eq, %438, %13 : vector<8x256xi32>
    %440 = arith.extui %439 : vector<8x256xi1> to vector<8x256xi32>
    %441 = arith.sitofp %440 : vector<8x256xi32> to vector<8x256xf32>
    %c0_140 = arith.constant 0 : index
    %c0_141 = arith.constant 0 : index
    %442 = vector.load %arg3[%c0_140, %c0_141] : memref<256x512xf32, #tpu.memory_space<vmem>>, vector<256x512xf32>
    %cst_142 = arith.constant dense<0.000000e+00> : vector<8x512xf32>
    %443 = tpu.matmul %441, %442, %cst_142 {dimension_numbers = #tpu.dot_dimension_numbers<[1], [0], [0], [1], [0, 0, 1, 1], [], []>} : vector<8x256xf32>, vector<256x512xf32>, vector<8x512xf32> -> vector<8x512xf32>
    %444 = arith.addf %443, %16 : vector<8x512xf32>
    %c0_143 = arith.constant 0 : index
    %c0_144 = arith.constant 0 : index
    %445 = vector.load %arg4[%c0_143, %c0_144] : memref<128x512xf32, #tpu.memory_space<vmem>>, vector<128x512xf32>
    %cst_145 = arith.constant dense<0.000000e+00> : vector<8x512xf32>
    %446 = tpu.matmul %403, %445, %cst_145 {dimension_numbers = #tpu.dot_dimension_numbers<[1], [0], [0], [1], [0, 0, 1, 1], [], []>} : vector<8x128xf32>, vector<128x512xf32>, vector<8x512xf32> -> vector<8x512xf32>
    %447 = arith.addf %444, %446 : vector<8x512xf32>
    %448 = vector.extract_strided_slice %447 {offsets = [0, 0], sizes = [8, 128], strides = [1, 1]} : vector<8x512xf32> to vector<8x128xf32>
    %449 = arith.negf %448 : vector<8x128xf32>
    %450 = math.exp %449 : vector<8x128xf32>
    %cst_146 = arith.constant 1.000000e+00 : f32
    %451 = vector.broadcast %cst_146 : f32 to vector<8x128xf32>
    %452 = arith.addf %451, %450 : vector<8x128xf32>
    %453 = arith.divf %451, %452 : vector<8x128xf32>
    %454 = vector.extract_strided_slice %447 {offsets = [0, 128], sizes = [8, 128], strides = [1, 1]} : vector<8x512xf32> to vector<8x128xf32>
    %455 = arith.negf %454 : vector<8x128xf32>
    %456 = math.exp %455 : vector<8x128xf32>
    %cst_147 = arith.constant 1.000000e+00 : f32
    %457 = vector.broadcast %cst_147 : f32 to vector<8x128xf32>
    %458 = arith.addf %457, %456 : vector<8x128xf32>
    %459 = arith.divf %457, %458 : vector<8x128xf32>
    %460 = vector.extract_strided_slice %447 {offsets = [0, 256], sizes = [8, 128], strides = [1, 1]} : vector<8x512xf32> to vector<8x128xf32>
    %461 = math.tanh %460 : vector<8x128xf32>
    %462 = vector.extract_strided_slice %447 {offsets = [0, 384], sizes = [8, 128], strides = [1, 1]} : vector<8x512xf32> to vector<8x128xf32>
    %463 = arith.negf %462 : vector<8x128xf32>
    %464 = math.exp %463 : vector<8x128xf32>
    %cst_148 = arith.constant 1.000000e+00 : f32
    %465 = vector.broadcast %cst_148 : f32 to vector<8x128xf32>
    %466 = arith.addf %465, %464 : vector<8x128xf32>
    %467 = arith.divf %465, %466 : vector<8x128xf32>
    %468 = arith.mulf %459, %401 : vector<8x128xf32>
    %469 = arith.mulf %453, %461 : vector<8x128xf32>
    %470 = arith.addf %468, %469 : vector<8x128xf32>
    %471 = math.tanh %470 : vector<8x128xf32>
    %472 = arith.mulf %467, %471 : vector<8x128xf32>
    %473 = tpu.concatenate %472, %432 in 1 : vector<8x128xf32>, vector<8x128xf32> -> vector<8x256xf32>
    %c0_149 = arith.constant 0 : index
    %c0_150 = arith.constant 0 : index
    %474 = vector.load %arg6[%c0_149, %c0_150] : memref<256x512xf32, #tpu.memory_space<vmem>>, vector<256x512xf32>
    %cst_151 = arith.constant dense<0.000000e+00> : vector<8x512xf32>
    %475 = tpu.matmul %473, %474, %cst_151 {dimension_numbers = #tpu.dot_dimension_numbers<[1], [0], [0], [1], [0, 0, 1, 1], [], []>} : vector<8x256xf32>, vector<256x512xf32>, vector<8x512xf32> -> vector<8x512xf32>
    %476 = arith.addf %475, %19 : vector<8x512xf32>
    %477 = vector.extract_strided_slice %476 {offsets = [0, 0], sizes = [8, 128], strides = [1, 1]} : vector<8x512xf32> to vector<8x128xf32>
    %478 = arith.negf %477 : vector<8x128xf32>
    %479 = math.exp %478 : vector<8x128xf32>
    %cst_152 = arith.constant 1.000000e+00 : f32
    %480 = vector.broadcast %cst_152 : f32 to vector<8x128xf32>
    %481 = arith.addf %480, %479 : vector<8x128xf32>
    %482 = arith.divf %480, %481 : vector<8x128xf32>
    %483 = vector.extract_strided_slice %476 {offsets = [0, 128], sizes = [8, 128], strides = [1, 1]} : vector<8x512xf32> to vector<8x128xf32>
    %484 = arith.negf %483 : vector<8x128xf32>
    %485 = math.exp %484 : vector<8x128xf32>
    %cst_153 = arith.constant 1.000000e+00 : f32
    %486 = vector.broadcast %cst_153 : f32 to vector<8x128xf32>
    %487 = arith.addf %486, %485 : vector<8x128xf32>
    %488 = arith.divf %486, %487 : vector<8x128xf32>
    %489 = vector.extract_strided_slice %476 {offsets = [0, 256], sizes = [8, 128], strides = [1, 1]} : vector<8x512xf32> to vector<8x128xf32>
    %490 = math.tanh %489 : vector<8x128xf32>
    %491 = vector.extract_strided_slice %476 {offsets = [0, 384], sizes = [8, 128], strides = [1, 1]} : vector<8x512xf32> to vector<8x128xf32>
    %492 = arith.negf %491 : vector<8x128xf32>
    %493 = math.exp %492 : vector<8x128xf32>
    %cst_154 = arith.constant 1.000000e+00 : f32
    %494 = vector.broadcast %cst_154 : f32 to vector<8x128xf32>
    %495 = arith.addf %494, %493 : vector<8x128xf32>
    %496 = arith.divf %494, %495 : vector<8x128xf32>
    %497 = arith.mulf %488, %430 : vector<8x128xf32>
    %498 = arith.mulf %482, %490 : vector<8x128xf32>
    %499 = arith.addf %497, %498 : vector<8x128xf32>
    %500 = math.tanh %499 : vector<8x128xf32>
    %501 = arith.mulf %496, %500 : vector<8x128xf32>
    %c0_155 = arith.constant 0 : index
    %c0_156 = arith.constant 0 : index
    %502 = vector.load %arg8[%c0_155, %c0_156] : memref<128x256xf32, #tpu.memory_space<vmem>>, vector<128x256xf32>
    %cst_157 = arith.constant dense<0.000000e+00> : vector<8x256xf32>
    %503 = tpu.matmul %501, %502, %cst_157 {dimension_numbers = #tpu.dot_dimension_numbers<[1], [0], [0], [1], [0, 0, 1, 1], [], []>} : vector<8x128xf32>, vector<128x256xf32>, vector<8x256xf32> -> vector<8x256xf32>
    %504 = arith.addf %503, %22 : vector<8x256xf32>
    %c0_158 = arith.constant 0 : index
    %c1536 = arith.constant 1536 : index
    %505 = vector.load %arg10[%c0_158, %c1536] : memref<8x2048xf32, #tpu.memory_space<vmem>>, vector<8x256xf32>
    tpu.vector_store %arg10[%c0_158, %c1536], %504 {strides = array<i32>} : memref<8x2048xf32, #tpu.memory_space<vmem>>, vector<8x256xf32>,
    %c0_159 = arith.constant 0 : index
    %c7 = arith.constant 7 : index
    %506 = vector.load %arg0[%c0_159, %c7] : memref<8x8xi32, #tpu.memory_space<vmem>>, vector<8x1xi32>
    %507 = vector.broadcast %506 : vector<8x1xi32> to vector<8x256xi32>
    %508 = arith.cmpi eq, %507, %13 : vector<8x256xi32>
    %509 = arith.extui %508 : vector<8x256xi1> to vector<8x256xi32>
    %510 = arith.sitofp %509 : vector<8x256xi32> to vector<8x256xf32>
    %c0_160 = arith.constant 0 : index
    %c0_161 = arith.constant 0 : index
    %511 = vector.load %arg3[%c0_160, %c0_161] : memref<256x512xf32, #tpu.memory_space<vmem>>, vector<256x512xf32>
    %cst_162 = arith.constant dense<0.000000e+00> : vector<8x512xf32>
    %512 = tpu.matmul %510, %511, %cst_162 {dimension_numbers = #tpu.dot_dimension_numbers<[1], [0], [0], [1], [0, 0, 1, 1], [], []>} : vector<8x256xf32>, vector<256x512xf32>, vector<8x512xf32> -> vector<8x512xf32>
    %513 = arith.addf %512, %16 : vector<8x512xf32>
    %c0_163 = arith.constant 0 : index
    %c0_164 = arith.constant 0 : index
    %514 = vector.load %arg4[%c0_163, %c0_164] : memref<128x512xf32, #tpu.memory_space<vmem>>, vector<128x512xf32>
    %cst_165 = arith.constant dense<0.000000e+00> : vector<8x512xf32>
    %515 = tpu.matmul %472, %514, %cst_165 {dimension_numbers = #tpu.dot_dimension_numbers<[1], [0], [0], [1], [0, 0, 1, 1], [], []>} : vector<8x128xf32>, vector<128x512xf32>, vector<8x512xf32> -> vector<8x512xf32>
    %516 = arith.addf %513, %515 : vector<8x512xf32>
    %517 = vector.extract_strided_slice %516 {offsets = [0, 0], sizes = [8, 128], strides = [1, 1]} : vector<8x512xf32> to vector<8x128xf32>
    %518 = arith.negf %517 : vector<8x128xf32>
    %519 = math.exp %518 : vector<8x128xf32>
    %cst_166 = arith.constant 1.000000e+00 : f32
    %520 = vector.broadcast %cst_166 : f32 to vector<8x128xf32>
    %521 = arith.addf %520, %519 : vector<8x128xf32>
    %522 = arith.divf %520, %521 : vector<8x128xf32>
    %523 = vector.extract_strided_slice %516 {offsets = [0, 128], sizes = [8, 128], strides = [1, 1]} : vector<8x512xf32> to vector<8x128xf32>
    %524 = arith.negf %523 : vector<8x128xf32>
    %525 = math.exp %524 : vector<8x128xf32>
    %cst_167 = arith.constant 1.000000e+00 : f32
    %526 = vector.broadcast %cst_167 : f32 to vector<8x128xf32>
    %527 = arith.addf %526, %525 : vector<8x128xf32>
    %528 = arith.divf %526, %527 : vector<8x128xf32>
    %529 = vector.extract_strided_slice %516 {offsets = [0, 256], sizes = [8, 128], strides = [1, 1]} : vector<8x512xf32> to vector<8x128xf32>
    %530 = math.tanh %529 : vector<8x128xf32>
    %531 = vector.extract_strided_slice %516 {offsets = [0, 384], sizes = [8, 128], strides = [1, 1]} : vector<8x512xf32> to vector<8x128xf32>
    %532 = arith.negf %531 : vector<8x128xf32>
    %533 = math.exp %532 : vector<8x128xf32>
    %cst_168 = arith.constant 1.000000e+00 : f32
    %534 = vector.broadcast %cst_168 : f32 to vector<8x128xf32>
    %535 = arith.addf %534, %533 : vector<8x128xf32>
    %536 = arith.divf %534, %535 : vector<8x128xf32>
    %537 = arith.mulf %528, %470 : vector<8x128xf32>
    %538 = arith.mulf %522, %530 : vector<8x128xf32>
    %539 = arith.addf %537, %538 : vector<8x128xf32>
    %540 = math.tanh %539 : vector<8x128xf32>
    %541 = arith.mulf %536, %540 : vector<8x128xf32>
    %542 = tpu.concatenate %541, %501 in 1 : vector<8x128xf32>, vector<8x128xf32> -> vector<8x256xf32>
    %c0_169 = arith.constant 0 : index
    %c0_170 = arith.constant 0 : index
    %543 = vector.load %arg6[%c0_169, %c0_170] : memref<256x512xf32, #tpu.memory_space<vmem>>, vector<256x512xf32>
    %cst_171 = arith.constant dense<0.000000e+00> : vector<8x512xf32>
    %544 = tpu.matmul %542, %543, %cst_171 {dimension_numbers = #tpu.dot_dimension_numbers<[1], [0], [0], [1], [0, 0, 1, 1], [], []>} : vector<8x256xf32>, vector<256x512xf32>, vector<8x512xf32> -> vector<8x512xf32>
    %545 = arith.addf %544, %19 : vector<8x512xf32>
    %546 = vector.extract_strided_slice %545 {offsets = [0, 0], sizes = [8, 128], strides = [1, 1]} : vector<8x512xf32> to vector<8x128xf32>
    %547 = arith.negf %546 : vector<8x128xf32>
    %548 = math.exp %547 : vector<8x128xf32>
    %cst_172 = arith.constant 1.000000e+00 : f32
    %549 = vector.broadcast %cst_172 : f32 to vector<8x128xf32>
    %550 = arith.addf %549, %548 : vector<8x128xf32>
    %551 = arith.divf %549, %550 : vector<8x128xf32>
    %552 = vector.extract_strided_slice %545 {offsets = [0, 128], sizes = [8, 128], strides = [1, 1]} : vector<8x512xf32> to vector<8x128xf32>
    %553 = arith.negf %552 : vector<8x128xf32>
    %554 = math.exp %553 : vector<8x128xf32>
    %cst_173 = arith.constant 1.000000e+00 : f32
    %555 = vector.broadcast %cst_173 : f32 to vector<8x128xf32>
    %556 = arith.addf %555, %554 : vector<8x128xf32>
    %557 = arith.divf %555, %556 : vector<8x128xf32>
    %558 = vector.extract_strided_slice %545 {offsets = [0, 256], sizes = [8, 128], strides = [1, 1]} : vector<8x512xf32> to vector<8x128xf32>
    %559 = math.tanh %558 : vector<8x128xf32>
    %560 = vector.extract_strided_slice %545 {offsets = [0, 384], sizes = [8, 128], strides = [1, 1]} : vector<8x512xf32> to vector<8x128xf32>
    %561 = arith.negf %560 : vector<8x128xf32>
    %562 = math.exp %561 : vector<8x128xf32>
    %cst_174 = arith.constant 1.000000e+00 : f32
    %563 = vector.broadcast %cst_174 : f32 to vector<8x128xf32>
    %564 = arith.addf %563, %562 : vector<8x128xf32>
    %565 = arith.divf %563, %564 : vector<8x128xf32>
    %566 = arith.mulf %557, %499 : vector<8x128xf32>
    %567 = arith.mulf %551, %559 : vector<8x128xf32>
    %568 = arith.addf %566, %567 : vector<8x128xf32>
    %569 = math.tanh %568 : vector<8x128xf32>
    %570 = arith.mulf %565, %569 : vector<8x128xf32>
    %c0_175 = arith.constant 0 : index
    %c0_176 = arith.constant 0 : index
    %571 = vector.load %arg8[%c0_175, %c0_176] : memref<128x256xf32, #tpu.memory_space<vmem>>, vector<128x256xf32>
    %cst_177 = arith.constant dense<0.000000e+00> : vector<8x256xf32>
    %572 = tpu.matmul %570, %571, %cst_177 {dimension_numbers = #tpu.dot_dimension_numbers<[1], [0], [0], [1], [0, 0, 1, 1], [], []>} : vector<8x128xf32>, vector<128x256xf32>, vector<8x256xf32> -> vector<8x256xf32>
    %573 = arith.addf %572, %22 : vector<8x256xf32>
    %c0_178 = arith.constant 0 : index
    %c1792 = arith.constant 1792 : index
    %574 = vector.load %arg10[%c0_178, %c1792] : memref<8x2048xf32, #tpu.memory_space<vmem>>, vector<8x256xf32>
    tpu.vector_store %arg10[%c0_178, %c1792], %573 {strides = array<i32>} : memref<8x2048xf32, #tpu.memory_space<vmem>>, vector<8x256xf32>,
    %575 = vector.extract_strided_slice %541 {offsets = [0, 0], sizes = [8, 32], strides = [1, 1]} : vector<8x128xf32> to vector<8x32xf32>
    %c0_179 = arith.constant 0 : index
    %c0_180 = arith.constant 0 : index
    %c0_181 = arith.constant 0 : index
    %576 = vector.load %arg11[%c0_179, %c0_180, %c0_181] : memref<2x8x32xf32, #tpu.memory_space<vmem>>, vector<1x8x32xf32>
    %577 = vector.shape_cast %576 : vector<1x8x32xf32> to vector<8x32xf32>
    %578 = vector.shape_cast %575 : vector<8x32xf32> to vector<1x8x32xf32>
    tpu.vector_store %arg11[%c0_179, %c0_180, %c0_181], %578 {strides = array<i32>} : memref<2x8x32xf32, #tpu.memory_space<vmem>>, vector<1x8x32xf32>,
    %579 = vector.extract_strided_slice %539 {offsets = [0, 0], sizes = [8, 32], strides = [1, 1]} : vector<8x128xf32> to vector<8x32xf32>
    %c0_182 = arith.constant 0 : index
    %c0_183 = arith.constant 0 : index
    %c0_184 = arith.constant 0 : index
    %580 = vector.load %arg12[%c0_182, %c0_183, %c0_184] : memref<2x8x32xf32, #tpu.memory_space<vmem>>, vector<1x8x32xf32>
    %581 = vector.shape_cast %580 : vector<1x8x32xf32> to vector<8x32xf32>
    %582 = vector.shape_cast %579 : vector<8x32xf32> to vector<1x8x32xf32>
    tpu.vector_store %arg12[%c0_182, %c0_183, %c0_184], %582 {strides = array<i32>} : memref<2x8x32xf32, #tpu.memory_space<vmem>>, vector<1x8x32xf32>,
    %583 = vector.extract_strided_slice %570 {offsets = [0, 0], sizes = [8, 32], strides = [1, 1]} : vector<8x128xf32> to vector<8x32xf32>
    %c1_185 = arith.constant 1 : index
    %c0_186 = arith.constant 0 : index
    %c0_187 = arith.constant 0 : index
    %584 = vector.load %arg11[%c1_185, %c0_186, %c0_187] : memref<2x8x32xf32, #tpu.memory_space<vmem>>, vector<1x8x32xf32>
    %585 = vector.shape_cast %584 : vector<1x8x32xf32> to vector<8x32xf32>
    %586 = vector.shape_cast %583 : vector<8x32xf32> to vector<1x8x32xf32>
    tpu.vector_store %arg11[%c1_185, %c0_186, %c0_187], %586 {strides = array<i32>} : memref<2x8x32xf32, #tpu.memory_space<vmem>>, vector<1x8x32xf32>,
    %587 = vector.extract_strided_slice %568 {offsets = [0, 0], sizes = [8, 32], strides = [1, 1]} : vector<8x128xf32> to vector<8x32xf32>
    %c1_188 = arith.constant 1 : index
    %c0_189 = arith.constant 0 : index
    %c0_190 = arith.constant 0 : index
    %588 = vector.load %arg12[%c1_188, %c0_189, %c0_190] : memref<2x8x32xf32, #tpu.memory_space<vmem>>, vector<1x8x32xf32>
    %589 = vector.shape_cast %588 : vector<1x8x32xf32> to vector<8x32xf32>
    %590 = vector.shape_cast %587 : vector<8x32xf32> to vector<1x8x32xf32>
    tpu.vector_store %arg12[%c1_188, %c0_189, %c0_190], %590 {strides = array<i32>} : memref<2x8x32xf32, #tpu.memory_space<vmem>>, vector<1x8x32xf32>,
    return
  }
}

</mosaic_0001>

<llo_original>
// kernel: rnn_forward.1
$region0: #{rnn_forward.1}
  #allocation0 [shape = 'u32[]', space=smem, size = 0x4, offset = 0x4, fixed_abs, tag = 'smem constant byte address 0x4 - core index']
  #allocation1 [shape = 'u32[144,128]{1,0:T(1,128)}', space=vmem, size = 0x12000, scoped, tag = 'internal scratch']
  %s0 = inlined_call_operand.hbm [shape: s32[8,8], index: 0, kind: input, shape index: {}]
  %s1 = inlined_call_operand.hbm [shape: f32[2,8,32], index: 1, kind: input, shape index: {}]
  %s2 = inlined_call_operand.vmem [shape: f32[2,8,32], index: 2, kind: input, shape index: {}]
  %s3 = inlined_call_operand.hbm [shape: f32[256,512], index: 3, kind: input, shape index: {}]
  %s4 = inlined_call_operand.hbm [shape: f32[128,512], index: 4, kind: input, shape index: {}]
  %s5 = inlined_call_operand.hbm [shape: f32[1,512], index: 5, kind: input, shape index: {}]
  %s6 = inlined_call_operand.hbm [shape: f32[256,512], index: 6, kind: input, shape index: {}]
  %s7 = inlined_call_operand.hbm [shape: f32[1,512], index: 7, kind: input, shape index: {}]
  %s8 = inlined_call_operand.hbm [shape: f32[128,256], index: 8, kind: input, shape index: {}]
  %s9 = inlined_call_operand.hbm [shape: f32[1,256], index: 9, kind: input, shape index: {}]
  %s10 = inlined_call_operand.vmem [shape: f32[8,2048], index: 10, kind: output, shape index: {0}]
  %s11 = inlined_call_operand.hbm [shape: f32[2,8,32], index: 11, kind: output, shape index: {1}]
  %s12 = inlined_call_operand.hbm [shape: f32[2,8,32], index: 12, kind: output, shape index: {2}]
  %13 = xla_tuple %s10, %s11, %s12
  %s14 = sld [smem:[#allocation0]]
  $region102: #{rnn_forward.1} parent=0
    _
  %s16 = ssub.s32 1, %s14
  %s17 = scalar_select 0, %s16, %s14
  $region1: #{rnn_forward.1} parent=0
    #allocation2 [shape = 'u8[4096]{0}', space=vmem, size = 0x1000, scoped, tag = 'input window, operand 0, single buffered']
    #allocation3 [shape = 's32[1]{0}', space=sflag, size = 0x4, scoped, tag = 'scoped memory for rnn_forward.1']
    #allocation4 [shape = 's32[1]{0}', space=sflag, size = 0x4, scoped, tag = 'scoped memory for rnn_forward.1']
    #allocation5 [shape = 'u8[8192]{0}', space=vmem, size = 0x2000, scoped, tag = 'input window, operand 1, single buffered']
    #allocation6 [shape = 's32[1]{0}', space=sflag, size = 0x4, scoped, tag = 'scoped memory for rnn_forward.1']
    #allocation7 [shape = 'u8[524288]{0}', space=vmem, size = 0x80000, scoped, tag = 'input window, operand 3, single buffered']
    #allocation8 [shape = 'u8[262144]{0}', space=vmem, size = 0x40000, scoped, tag = 'input window, operand 4, single buffered']
    #allocation9 [shape = 's32[1]{0}', space=sflag, size = 0x4, scoped, tag = 'scoped memory for rnn_forward.1']
    #allocation10 [shape = 'u8[2048]{0}', space=vmem, size = 0x800, scoped, tag = 'input window, operand 5, single buffered']
    #allocation11 [shape = 'u8[524288]{0}', space=vmem, size = 0x80000, scoped, tag = 'input window, operand 6, single buffered']
    #allocation12 [shape = 's32[1]{0}', space=sflag, size = 0x4, scoped, tag = 'scoped memory for rnn_forward.1']
    #allocation13 [shape = 'u8[2048]{0}', space=vmem, size = 0x800, scoped, tag = 'input window, operand 7, single buffered']
    #allocation14 [shape = 'u8[131072]{0}', space=vmem, size = 0x20000, scoped, tag = 'input window, operand 8, single buffered']
    #allocation15 [shape = 's32[1]{0}', space=sflag, size = 0x4, scoped, tag = 'scoped memory for rnn_forward.1']
    #allocation16 [shape = 'u8[1024]{0}', space=vmem, size = 0x400, scoped, tag = 'input window, operand 9, single buffered']
    #allocation17 [shape = 'u8[8192]{0}', space=vmem, size = 0x2000, scoped, tag = 'output window, operand 1, single buffered']
    #allocation18 [shape = 'u8[8192]{0}', space=vmem, size = 0x2000, scoped, tag = 'output window, operand 2, single buffered']
    #allocation19 [shape = 's32[1]{0}', space=sflag, size = 0x4, scoped, tag = 'scoped memory for rnn_forward.1']
    %18 = vsyncpa [#allocation3], 0
    %19 = vsyncpa [#allocation6], 0
    %20 = vsyncpa [#allocation9], 0
    %21 = vsyncpa [#allocation12], 0
    %22 = vsyncpa [#allocation15], 0
    %23 = vsyncpa [#allocation4], 0
    %24 = vsyncpa [#allocation19], 0
    // Predicated region
    $region2: #{rnn_forward.1} parent=1 // pred_check
      _
    $region3: #{rnn_forward.1} parent=1 // pred_check_branch
      %26 = sbr.rel (0) target = $region5
    $region4: #{rnn_forward.1} parent=1 // pred_region
      %s28 = ssub.s32 128, 128
      %29 = vsyncadd [#allocation3], %s28
      %s31 = sshll.u32 [#allocation2], 4
      %s32 = int_to_ptr.vmem [resolvable:$true] %s31
      %34 = dma.hbm_to_vmem [thread:$0]  %s0, 128, %s32, [#allocation3]
    $region5: #{rnn_forward.1} parent=1 // pred_fallthru
      _
    // Predicated region
    $region6: #{rnn_forward.1} parent=1 // pred_check
      _
    $region7: #{rnn_forward.1} parent=1 // pred_check_branch
      %36 = sbr.rel (0) target = $region9
    $region8: #{rnn_forward.1} parent=1 // pred_region
      %s38 = ssub.s32 256, 256
      %39 = vsyncadd [#allocation6], %s38
      %s40 = sshll.u32 [#allocation5], 4
      %s41 = int_to_ptr.vmem [resolvable:$true] %s40
      %46 = dma.hbm_to_vmem [thread:$0]  %s1, 256, %s41, [#allocation6], 128, 128, 8
    $region9: #{rnn_forward.1} parent=1 // pred_fallthru
      _
    // Predicated region
    $region10: #{rnn_forward.1} parent=1 // pred_check
      _
    $region11: #{rnn_forward.1} parent=1 // pred_check_branch
      %48 = sbr.rel (0) target = $region13
    $region12: #{rnn_forward.1} parent=1 // pred_region
      _
    $region13: #{rnn_forward.1} parent=1 // pred_fallthru
      _
    // Predicated region
    $region14: #{rnn_forward.1} parent=1 // pred_check
      _
    $region15: #{rnn_forward.1} parent=1 // pred_check_branch
      %50 = sbr.rel (0) target = $region17
    $region16: #{rnn_forward.1} parent=1 // pred_region
      %s52 = ssub.s32 16384, 16384
      %53 = vsyncadd [#allocation6], %s52
      %s54 = sshll.u32 [#allocation7], 4
      %s55 = int_to_ptr.vmem [resolvable:$true] %s54
      %60 = dma.hbm_to_vmem [thread:$0]  %s3, 16384, %s55, [#allocation6], 512, 512, 32
    $region17: #{rnn_forward.1} parent=1 // pred_fallthru
      _
    // Predicated region
    $region18: #{rnn_forward.1} parent=1 // pred_check
      _
    $region19: #{rnn_forward.1} parent=1 // pred_check_branch
      %62 = sbr.rel (0) target = $region21
    $region20: #{rnn_forward.1} parent=1 // pred_region
      %s64 = ssub.s32 8192, 8192
      %65 = vsyncadd [#allocation9], %s64
      %s66 = sshll.u32 [#allocation8], 4
      %s67 = int_to_ptr.vmem [resolvable:$true] %s66
      %72 = dma.hbm_to_vmem [thread:$0]  %s4, 8192, %s67, [#allocation9], 512, 512, 32
    $region21: #{rnn_forward.1} parent=1 // pred_fallthru
      _
    // Predicated region
    $region22: #{rnn_forward.1} parent=1 // pred_check
      _
    $region23: #{rnn_forward.1} parent=1 // pred_check_branch
      %74 = sbr.rel (0) target = $region25
    $region24: #{rnn_forward.1} parent=1 // pred_region
      %s76 = ssub.s32 64, 64
      %77 = vsyncadd [#allocation9], %s76
      %s79 = sshll.u32 [#allocation10], 4
      %s80 = int_to_ptr.vmem [resolvable:$true] %s79
      %82 = dma.hbm_to_vmem [thread:$0]  %s5, 64, %s80, [#allocation9]
    $region25: #{rnn_forward.1} parent=1 // pred_fallthru
      _
    // Predicated region
    $region26: #{rnn_forward.1} parent=1 // pred_check
      _
    $region27: #{rnn_forward.1} parent=1 // pred_check_branch
      %84 = sbr.rel (0) target = $region29
    $region28: #{rnn_forward.1} parent=1 // pred_region
      %s86 = ssub.s32 16384, 16384
      %87 = vsyncadd [#allocation12], %s86
      %s88 = sshll.u32 [#allocation11], 4
      %s89 = int_to_ptr.vmem [resolvable:$true] %s88
      %94 = dma.hbm_to_vmem [thread:$0]  %s6, 16384, %s89, [#allocation12], 512, 512, 32
    $region29: #{rnn_forward.1} parent=1 // pred_fallthru
      _
    // Predicated region
    $region30: #{rnn_forward.1} parent=1 // pred_check
      _
    $region31: #{rnn_forward.1} parent=1 // pred_check_branch
      %96 = sbr.rel (0) target = $region33
    $region32: #{rnn_forward.1} parent=1 // pred_region
      %s98 = ssub.s32 64, 64
      %99 = vsyncadd [#allocation12], %s98
      %s101 = sshll.u32 [#allocation13], 4
      %s102 = int_to_ptr.vmem [resolvable:$true] %s101
      %104 = dma.hbm_to_vmem [thread:$0]  %s7, 64, %s102, [#allocation12]
    $region33: #{rnn_forward.1} parent=1 // pred_fallthru
      _
    // Predicated region
    $region34: #{rnn_forward.1} parent=1 // pred_check
      _
    $region35: #{rnn_forward.1} parent=1 // pred_check_branch
      %106 = sbr.rel (0) target = $region37
    $region36: #{rnn_forward.1} parent=1 // pred_region
      %s108 = ssub.s32 4096, 4096
      %109 = vsyncadd [#allocation15], %s108
      %s110 = sshll.u32 [#allocation14], 4
      %s111 = int_to_ptr.vmem [resolvable:$true] %s110
      %116 = dma.hbm_to_vmem [thread:$0]  %s8, 4096, %s111, [#allocation15], 256, 256, 16
    $region37: #{rnn_forward.1} parent=1 // pred_fallthru
      _
    // Predicated region
    $region38: #{rnn_forward.1} parent=1 // pred_check
      _
    $region39: #{rnn_forward.1} parent=1 // pred_check_branch
      %118 = sbr.rel (0) target = $region41
    $region40: #{rnn_forward.1} parent=1 // pred_region
      %s120 = ssub.s32 32, 32
      %121 = vsyncadd [#allocation15], %s120
      %s123 = sshll.u32 [#allocation16], 4
      %s124 = int_to_ptr.vmem [resolvable:$true] %s123
      %126 = dma.hbm_to_vmem [thread:$0]  %s9, 32, %s124, [#allocation15]
    $region41: #{rnn_forward.1} parent=1 // pred_fallthru
      _
    // Predicated region
    $region42: #{rnn_forward.1} parent=1 // pred_check
      _
    $region43: #{rnn_forward.1} parent=1 // pred_check_branch
      %128 = sbr.rel (0) target = $region45
    $region44: #{rnn_forward.1} parent=1 // pred_region
      %129 = dma.done [#allocation3], 128
    $region45: #{rnn_forward.1} parent=1 // pred_fallthru
      _
    // Predicated region
    $region46: #{rnn_forward.1} parent=1 // pred_check
      _
    $region47: #{rnn_forward.1} parent=1 // pred_check_branch
      %131 = sbr.rel (0) target = $region49
    $region48: #{rnn_forward.1} parent=1 // pred_region
      %132 = dma.done [#allocation6], 256
    $region49: #{rnn_forward.1} parent=1 // pred_fallthru
      _
    // Predicated region
    $region50: #{rnn_forward.1} parent=1 // pred_check
      _
    $region51: #{rnn_forward.1} parent=1 // pred_check_branch
      %134 = sbr.rel (0) target = $region53
    $region52: #{rnn_forward.1} parent=1 // pred_region
      %135 = dma.done [#allocation6], 16384
    $region53: #{rnn_forward.1} parent=1 // pred_fallthru
      _
    // Predicated region
    $region54: #{rnn_forward.1} parent=1 // pred_check
      _
    $region55: #{rnn_forward.1} parent=1 // pred_check_branch
      %137 = sbr.rel (0) target = $region57
    $region56: #{rnn_forward.1} parent=1 // pred_region
      %138 = dma.done [#allocation9], 8192
    $region57: #{rnn_forward.1} parent=1 // pred_fallthru
      _
    // Predicated region
    $region58: #{rnn_forward.1} parent=1 // pred_check
      _
    $region59: #{rnn_forward.1} parent=1 // pred_check_branch
      %140 = sbr.rel (0) target = $region61
    $region60: #{rnn_forward.1} parent=1 // pred_region
      %141 = dma.done [#allocation9], 64
    $region61: #{rnn_forward.1} parent=1 // pred_fallthru
      _
    // Predicated region
    $region62: #{rnn_forward.1} parent=1 // pred_check
      _
    $region63: #{rnn_forward.1} parent=1 // pred_check_branch
      %143 = sbr.rel (0) target = $region65
    $region64: #{rnn_forward.1} parent=1 // pred_region
      %144 = dma.done [#allocation12], 16384
    $region65: #{rnn_forward.1} parent=1 // pred_fallthru
      _
    // Predicated region
    $region66: #{rnn_forward.1} parent=1 // pred_check
      _
    $region67: #{rnn_forward.1} parent=1 // pred_check_branch
      %146 = sbr.rel (0) target = $region69
    $region68: #{rnn_forward.1} parent=1 // pred_region
      %147 = dma.done [#allocation12], 64
    $region69: #{rnn_forward.1} parent=1 // pred_fallthru
      _
    // Predicated region
    $region70: #{rnn_forward.1} parent=1 // pred_check
      _
    $region71: #{rnn_forward.1} parent=1 // pred_check_branch
      %149 = sbr.rel (0) target = $region73
    $region72: #{rnn_forward.1} parent=1 // pred_region
      %150 = dma.done [#allocation15], 4096
    $region73: #{rnn_forward.1} parent=1 // pred_fallthru
      _
    // Predicated region
    $region74: #{rnn_forward.1} parent=1 // pred_check
      _
    $region75: #{rnn_forward.1} parent=1 // pred_check_branch
      %152 = sbr.rel (0) target = $region77
    $region76: #{rnn_forward.1} parent=1 // pred_region
      %153 = dma.done [#allocation15], 32
    $region77: #{rnn_forward.1} parent=1 // pred_fallthru
      _
    %v154 = vld [vmem:[#allocation5] sm:$0xff]
    %vm155 = vcmask 261120
    %v156 = vsel %vm155, %v154, 0.0
    %s157 = scalar_lea.vmem [#allocation5], 8
    %v158 = vld [vmem:[%s157] sm:$0xff]
    %v159 = vsel %vm155, %v158, 0.0
    %v160 = vld [vmem:[%s2] sm:$0xff]
    %v161 = vsel %vm155, %v160, 0.0
    %s162 = scalar_lea.vmem %s2, 8
    %v163 = vld [vmem:[%s162] sm:$0xff]
    %v164 = vsel %vm155, %v163, 0.0
    %v165 = vlaneseq
    %v166 = vand.u32 %v165, 127
    %v167 = vadd.s32 %v166, 128
    %v168 = vld [vmem:[#allocation10] sm:$0xf]
    %v170 = vlaneseq
    %v171 = vshrl.u32 %v170, 7
    %v172 = vsub.s32 0, %v171
    %v173 = vrot.slane %v168, %v172
    %v174 = vlaneseq
    %v175 = vshrl.u32 %v174, 7
    %v176 = vsub.s32 1, %v175
    %v177 = vrot.slane %v168, %v176
    %v178 = vlaneseq
    %v179 = vshrl.u32 %v178, 7
    %v180 = vsub.s32 2, %v179
    %v181 = vrot.slane %v168, %v180
    %v182 = vlaneseq
    %v183 = vshrl.u32 %v182, 7
    %v184 = vsub.s32 3, %v183
    %v185 = vrot.slane %v168, %v184
    %v190 = vld [vmem:[#allocation13] sm:$0xf]
    %v192 = vlaneseq
    %v193 = vshrl.u32 %v192, 7
    %v194 = vsub.s32 0, %v193
    %v195 = vrot.slane %v190, %v194
    %v196 = vlaneseq
    %v197 = vshrl.u32 %v196, 7
    %v198 = vsub.s32 1, %v197
    %v199 = vrot.slane %v190, %v198
    %v200 = vlaneseq
    %v201 = vshrl.u32 %v200, 7
    %v202 = vsub.s32 2, %v201
    %v203 = vrot.slane %v190, %v202
    %v204 = vlaneseq
    %v205 = vshrl.u32 %v204, 7
    %v206 = vsub.s32 3, %v205
    %v207 = vrot.slane %v190, %v206
    %v212 = vld [vmem:[#allocation16] sm:$0x3]
    %v214 = vlaneseq
    %v215 = vshrl.u32 %v214, 7
    %v216 = vsub.s32 0, %v215
    %v217 = vrot.slane %v212, %v216
    %v218 = vlaneseq
    %v219 = vshrl.u32 %v218, 7
    %v220 = vsub.s32 1, %v219
    %v221 = vrot.slane %v212, %v220
    %v224 = vld [vmem:[#allocation2] sm:$0xff]
    %225 = vset.pattern.permute.xlu0 0
    %226 = vperm.xlu0 %225, %v224
    %v227 = vpop.permute.xlu0 %226
    %vm228 = vcmp.eq.s32.totalorder %v227, %v166
    %vm229 = vcmp.eq.s32.totalorder %v227, %v167
    %v230 = vsel %vm228, 1, 0
    %v231 = vsel %vm229, 1, 0
    %v232 = vcvt.s32.f32 %v230
    %v233 = vcvt.s32.f32 %v231
    %v234 = vld [vmem:[#allocation7] sm:$0xff]
    %v235 = vld [vmem:[#allocation7 + $0x8] sm:$0xff]
    %v236 = vld [vmem:[#allocation7 + $0x10] sm:$0xff]
    %v237 = vld [vmem:[#allocation7 + $0x18] sm:$0xff]
    %v238 = vld [vmem:[#allocation7 + $0x20] sm:$0xff]
    %v239 = vld [vmem:[#allocation7 + $0x28] sm:$0xff]
    %v240 = vld [vmem:[#allocation7 + $0x30] sm:$0xff]
    %v241 = vld [vmem:[#allocation7 + $0x38] sm:$0xff]
    %v242 = vld [vmem:[#allocation7 + $0x40] sm:$0xff]
    %v243 = vld [vmem:[#allocation7 + $0x48] sm:$0xff]
    %v244 = vld [vmem:[#allocation7 + $0x50] sm:$0xff]
    %v245 = vld [vmem:[#allocation7 + $0x58] sm:$0xff]
    %v246 = vld [vmem:[#allocation7 + $0x60] sm:$0xff]
    %v247 = vld [vmem:[#allocation7 + $0x68] sm:$0xff]
    %v248 = vld [vmem:[#allocation7 + $0x70] sm:$0xff]
    %v249 = vld [vmem:[#allocation7 + $0x78] sm:$0xff]
    %v250 = vld [vmem:[#allocation7 + $0x80] sm:$0xff]
    %v251 = vld [vmem:[#allocation7 + $0x88] sm:$0xff]
    %v252 = vld [vmem:[#allocation7 + $0x90] sm:$0xff]
    %v253 = vld [vmem:[#allocation7 + $0x98] sm:$0xff]
    %v254 = vld [vmem:[#allocation7 + $0xa0] sm:$0xff]
    %v255 = vld [vmem:[#allocation7 + $0xa8] sm:$0xff]
    %v256 = vld [vmem:[#allocation7 + $0xb0] sm:$0xff]
    %v257 = vld [vmem:[#allocation7 + $0xb8] sm:$0xff]
    %v258 = vld [vmem:[#allocation7 + $0xc0] sm:$0xff]
    %v259 = vld [vmem:[#allocation7 + $0xc8] sm:$0xff]
    %v260 = vld [vmem:[#allocation7 + $0xd0] sm:$0xff]
    %v261 = vld [vmem:[#allocation7 + $0xd8] sm:$0xff]
    %v262 = vld [vmem:[#allocation7 + $0xe0] sm:$0xff]
    %v263 = vld [vmem:[#allocation7 + $0xe8] sm:$0xff]
    %v264 = vld [vmem:[#allocation7 + $0xf0] sm:$0xff]
    %v265 = vld [vmem:[#allocation7 + $0xf8] sm:$0xff]
    %v266 = vld [vmem:[#allocation7 + $0x100] sm:$0xff]
    %v267 = vld [vmem:[#allocation7 + $0x108] sm:$0xff]
    %v268 = vld [vmem:[#allocation7 + $0x110] sm:$0xff]
    %v269 = vld [vmem:[#allocation7 + $0x118] sm:$0xff]
    %v270 = vld [vmem:[#allocation7 + $0x120] sm:$0xff]
    %v271 = vld [vmem:[#allocation7 + $0x128] sm:$0xff]
    %v272 = vld [vmem:[#allocation7 + $0x130] sm:$0xff]
    %v273 = vld [vmem:[#allocation7 + $0x138] sm:$0xff]
    %v274 = vld [vmem:[#allocation7 + $0x140] sm:$0xff]
    %v275 = vld [vmem:[#allocation7 + $0x148] sm:$0xff]
    %v276 = vld [vmem:[#allocation7 + $0x150] sm:$0xff]
    %v277 = vld [vmem:[#allocation7 + $0x158] sm:$0xff]
    %v278 = vld [vmem:[#allocation7 + $0x160] sm:$0xff]
    %v279 = vld [vmem:[#allocation7 + $0x168] sm:$0xff]
    %v280 = vld [vmem:[#allocation7 + $0x170] sm:$0xff]
    %v281 = vld [vmem:[#allocation7 + $0x178] sm:$0xff]
    %v282 = vld [vmem:[#allocation7 + $0x180] sm:$0xff]
    %v283 = vld [vmem:[#allocation7 + $0x188] sm:$0xff]
    %v284 = vld [vmem:[#allocation7 + $0x190] sm:$0xff]
    %v285 = vld [vmem:[#allocation7 + $0x198] sm:$0xff]
    %v286 = vld [vmem:[#allocation7 + $0x1a0] sm:$0xff]
    %v287 = vld [vmem:[#allocation7 + $0x1a8] sm:$0xff]
    %v288 = vld [vmem:[#allocation7 + $0x1b0] sm:$0xff]
    %v289 = vld [vmem:[#allocation7 + $0x1b8] sm:$0xff]
    %v290 = vld [vmem:[#allocation7 + $0x1c0] sm:$0xff]
    %v291 = vld [vmem:[#allocation7 + $0x1c8] sm:$0xff]
    %v292 = vld [vmem:[#allocation7 + $0x1d0] sm:$0xff]
    %v293 = vld [vmem:[#allocation7 + $0x1d8] sm:$0xff]
    %v294 = vld [vmem:[#allocation7 + $0x1e0] sm:$0xff]
    %v295 = vld [vmem:[#allocation7 + $0x1e8] sm:$0xff]
    %v296 = vld [vmem:[#allocation7 + $0x1f0] sm:$0xff]
    %v297 = vld [vmem:[#allocation7 + $0x1f8] sm:$0xff]
    %v298 = vld [vmem:[#allocation7 + $0x200] sm:$0xff]
    %v299 = vld [vmem:[#allocation7 + $0x208] sm:$0xff]
    %v300 = vld [vmem:[#allocation7 + $0x210] sm:$0xff]
    %v301 = vld [vmem:[#allocation7 + $0x218] sm:$0xff]
    %v302 = vld [vmem:[#allocation7 + $0x220] sm:$0xff]
    %v303 = vld [vmem:[#allocation7 + $0x228] sm:$0xff]
    %v304 = vld [vmem:[#allocation7 + $0x230] sm:$0xff]
    %v305 = vld [vmem:[#allocation7 + $0x238] sm:$0xff]
    %v306 = vld [vmem:[#allocation7 + $0x240] sm:$0xff]
    %v307 = vld [vmem:[#allocation7 + $0x248] sm:$0xff]
    %v308 = vld [vmem:[#allocation7 + $0x250] sm:$0xff]
    %v309 = vld [vmem:[#allocation7 + $0x258] sm:$0xff]
    %v310 = vld [vmem:[#allocation7 + $0x260] sm:$0xff]
    %v311 = vld [vmem:[#allocation7 + $0x268] sm:$0xff]
    %v312 = vld [vmem:[#allocation7 + $0x270] sm:$0xff]
    %v313 = vld [vmem:[#allocation7 + $0x278] sm:$0xff]
    %v314 = vld [vmem:[#allocation7 + $0x280] sm:$0xff]
    %v315 = vld [vmem:[#allocation7 + $0x288] sm:$0xff]
    %v316 = vld [vmem:[#allocation7 + $0x290] sm:$0xff]
    %v317 = vld [vmem:[#allocation7 + $0x298] sm:$0xff]
    %v318 = vld [vmem:[#allocation7 + $0x2a0] sm:$0xff]
    %v319 = vld [vmem:[#allocation7 + $0x2a8] sm:$0xff]
    %v320 = vld [vmem:[#allocation7 + $0x2b0] sm:$0xff]
    %v321 = vld [vmem:[#allocation7 + $0x2b8] sm:$0xff]
    %v322 = vld [vmem:[#allocation7 + $0x2c0] sm:$0xff]
    %v323 = vld [vmem:[#allocation7 + $0x2c8] sm:$0xff]
    %v324 = vld [vmem:[#allocation7 + $0x2d0] sm:$0xff]
    %v325 = vld [vmem:[#allocation7 + $0x2d8] sm:$0xff]
    %v326 = vld [vmem:[#allocation7 + $0x2e0] sm:$0xff]
    %v327 = vld [vmem:[#allocation7 + $0x2e8] sm:$0xff]
    %v328 = vld [vmem:[#allocation7 + $0x2f0] sm:$0xff]
    %v329 = vld [vmem:[#allocation7 + $0x2f8] sm:$0xff]
    %v330 = vld [vmem:[#allocation7 + $0x300] sm:$0xff]
    %v331 = vld [vmem:[#allocation7 + $0x308] sm:$0xff]
    %v332 = vld [vmem:[#allocation7 + $0x310] sm:$0xff]
    %v333 = vld [vmem:[#allocation7 + $0x318] sm:$0xff]
    %v334 = vld [vmem:[#allocation7 + $0x320] sm:$0xff]
    %v335 = vld [vmem:[#allocation7 + $0x328] sm:$0xff]
    %v336 = vld [vmem:[#allocation7 + $0x330] sm:$0xff]
    %v337 = vld [vmem:[#allocation7 + $0x338] sm:$0xff]
    %v338 = vld [vmem:[#allocation7 + $0x340] sm:$0xff]
    %v339 = vld [vmem:[#allocation7 + $0x348] sm:$0xff]
    %v340 = vld [vmem:[#allocation7 + $0x350] sm:$0xff]
    %v341 = vld [vmem:[#allocation7 + $0x358] sm:$0xff]
    %v342 = vld [vmem:[#allocation7 + $0x360] sm:$0xff]
    %v343 = vld [vmem:[#allocation7 + $0x368] sm:$0xff]
    %v344 = vld [vmem:[#allocation7 + $0x370] sm:$0xff]
    %v345 = vld [vmem:[#allocation7 + $0x378] sm:$0xff]
    %v346 = vld [vmem:[#allocation7 + $0x380] sm:$0xff]
    %v347 = vld [vmem:[#allocation7 + $0x388] sm:$0xff]
    %v348 = vld [vmem:[#allocation7 + $0x390] sm:$0xff]
    %v349 = vld [vmem:[#allocation7 + $0x398] sm:$0xff]
    %v350 = vld [vmem:[#allocation7 + $0x3a0] sm:$0xff]
    %v351 = vld [vmem:[#allocation7 + $0x3a8] sm:$0xff]
    %v352 = vld [vmem:[#allocation7 + $0x3b0] sm:$0xff]
    %v353 = vld [vmem:[#allocation7 + $0x3b8] sm:$0xff]
    %v354 = vld [vmem:[#allocation7 + $0x3c0] sm:$0xff]
    %v355 = vld [vmem:[#allocation7 + $0x3c8] sm:$0xff]
    %v356 = vld [vmem:[#allocation7 + $0x3d0] sm:$0xff]
    %v357 = vld [vmem:[#allocation7 + $0x3d8] sm:$0xff]
    %v358 = vld [vmem:[#allocation7 + $0x3e0] sm:$0xff]
    %v359 = vld [vmem:[#allocation7 + $0x3e8] sm:$0xff]
    %v360 = vld [vmem:[#allocation7 + $0x3f0] sm:$0xff]
    %v361 = vld [vmem:[#allocation7 + $0x3f8] sm:$0xff]
    %362 = vmatprep.subr.mxu0 %v295
    %363 = vmatpush1.msra.mxu0 %v294
    %364 = vmatprep.subr.mxu0 %v291
    %365 = vmatpush1.msra.mxu0 %v290
    %366 = vmatprep.subr.mxu0 %v287
    %367 = vmatpush1.msra.mxu0 %v286
    %368 = vmatprep.subr.mxu0 %v283
    %369 = vmatpush1.msra.mxu0 %v282
    %370 = vmatprep.subr.mxu0 %v279
    %371 = vmatpush1.msra.mxu0 %v278
    %372 = vmatprep.subr.mxu0 %v275
    %373 = vmatpush1.msra.mxu0 %v274
    %374 = vmatprep.subr.mxu0 %v271
    %375 = vmatpush1.msra.mxu0 %v270
    %376 = vmatprep.subr.mxu0 %v267
    %377 = vmatpush1.msra.mxu0 %v266
    %378 = vmatprep.subr.mxu0 %v263
    %379 = vmatpush1.msra.mxu0 %v262
    %380 = vmatprep.subr.mxu0 %v259
    %381 = vmatpush1.msra.mxu0 %v258
    %382 = vmatprep.subr.mxu0 %v255
    %383 = vmatpush1.msra.mxu0 %v254
    %384 = vmatprep.subr.mxu0 %v251
    %385 = vmatpush1.msra.mxu0 %v250
    %386 = vmatprep.subr.mxu0 %v247
    %387 = vmatpush1.msra.mxu0 %v246
    %388 = vmatprep.subr.mxu0 %v243
    %389 = vmatpush1.msra.mxu0 %v242
    %390 = vmatprep.subr.mxu0 %v239
    %391 = vmatpush1.msra.mxu0 %v238
    %392 = vmatprep.subr.mxu0 %v235
    %393 = vmatpush1.msra.mxu0 %v234
    %394 = vmatprep.subr.mxu0 %v359
    %395 = vmatpush2.msra.mxu0 %v358
    %396 = vmatprep.subr.mxu0 %v355
    %397 = vmatpush2.msra.mxu0 %v354
    %398 = vmatprep.subr.mxu0 %v351
    %399 = vmatpush2.msra.mxu0 %v350
    %400 = vmatprep.subr.mxu0 %v347
    %401 = vmatpush2.msra.mxu0 %v346
    %402 = vmatprep.subr.mxu0 %v343
    %403 = vmatpush2.msra.mxu0 %v342
    %404 = vmatprep.subr.mxu0 %v339
    %405 = vmatpush2.msra.mxu0 %v338
    %406 = vmatprep.subr.mxu0 %v335
    %407 = vmatpush2.msra.mxu0 %v334
    %408 = vmatprep.subr.mxu0 %v331
    %409 = vmatpush2.msra.mxu0 %v330
    %410 = vmatprep.subr.mxu0 %v327
    %411 = vmatpush2.msra.mxu0 %v326
    %412 = vmatprep.subr.mxu0 %v323
    %413 = vmatpush2.msra.mxu0 %v322
    %414 = vmatprep.subr.mxu0 %v319
    %415 = vmatpush2.msra.mxu0 %v318
    %416 = vmatprep.subr.mxu0 %v315
    %417 = vmatpush2.msra.mxu0 %v314
    %418 = vmatprep.subr.mxu0 %v311
    %419 = vmatpush2.msra.mxu0 %v310
    %420 = vmatprep.subr.mxu0 %v307
    %421 = vmatpush2.msra.mxu0 %v306
    %422 = vmatprep.subr.mxu0 %v303
    %423 = vmatpush2.msra.mxu0 %v302
    %424 = vmatprep.subr.mxu0 %v299
    %425 = vmatpush2.msra.mxu0 %v298
    %426 = vmatprep.mubr.f32.mxu0 %v233
    %427 = vmatmul.mubr.f32.gmra.mxu0 %v232
    %v428 = vpop.f32.mrf.mxu0
    %v429 = vadd.f32 %v173, %v428
    %v430 = vpop.f32.mrf.mxu0
    %v431 = vadd.f32 %v177, %v430
    %432 = vdwg.mxu0
    %433 = vmatprep.subr.mxu0 %v297
    %434 = vmatpush1.msra.mxu0 %v296
    %435 = vmatprep.subr.mxu0 %v293
    %436 = vmatpush1.msra.mxu0 %v292
    %437 = vmatprep.subr.mxu0 %v289
    %438 = vmatpush1.msra.mxu0 %v288
    %439 = vmatprep.subr.mxu0 %v285
    %440 = vmatpush1.msra.mxu0 %v284
    %441 = vmatprep.subr.mxu0 %v281
    %442 = vmatpush1.msra.mxu0 %v280
    %443 = vmatprep.subr.mxu0 %v277
    %444 = vmatpush1.msra.mxu0 %v276
    %445 = vmatprep.subr.mxu0 %v273
    %446 = vmatpush1.msra.mxu0 %v272
    %447 = vmatprep.subr.mxu0 %v269
    %448 = vmatpush1.msra.mxu0 %v268
    %449 = vmatprep.subr.mxu0 %v265
    %450 = vmatpush1.msra.mxu0 %v264
    %451 = vmatprep.subr.mxu0 %v261
    %452 = vmatpush1.msra.mxu0 %v260
    %453 = vmatprep.subr.mxu0 %v257
    %454 = vmatpush1.msra.mxu0 %v256
    %455 = vmatprep.subr.mxu0 %v253
    %456 = vmatpush1.msra.mxu0 %v252
    %457 = vmatprep.subr.mxu0 %v249
    %458 = vmatpush1.msra.mxu0 %v248
    %459 = vmatprep.subr.mxu0 %v245
    %460 = vmatpush1.msra.mxu0 %v244
    %461 = vmatprep.subr.mxu0 %v241
    %462 = vmatpush1.msra.mxu0 %v240
    %463 = vmatprep.subr.mxu0 %v237
    %464 = vmatpush1.msra.mxu0 %v236
    %465 = vmatprep.subr.mxu0 %v361
    %466 = vmatpush2.msra.mxu0 %v360
    %467 = vmatprep.subr.mxu0 %v357
    %468 = vmatpush2.msra.mxu0 %v356
    %469 = vmatprep.subr.mxu0 %v353
    %470 = vmatpush2.msra.mxu0 %v352
    %471 = vmatprep.subr.mxu0 %v349
    %472 = vmatpush2.msra.mxu0 %v348
    %473 = vmatprep.subr.mxu0 %v345
    %474 = vmatpush2.msra.mxu0 %v344
    %475 = vmatprep.subr.mxu0 %v341
    %476 = vmatpush2.msra.mxu0 %v340
    %477 = vmatprep.subr.mxu0 %v337
    %478 = vmatpush2.msra.mxu0 %v336
    %479 = vmatprep.subr.mxu0 %v333
    %480 = vmatpush2.msra.mxu0 %v332
    %481 = vmatprep.subr.mxu0 %v329
    %482 = vmatpush2.msra.mxu0 %v328
    %483 = vmatprep.subr.mxu0 %v325
    %484 = vmatpush2.msra.mxu0 %v324
    %485 = vmatprep.subr.mxu0 %v321
    %486 = vmatpush2.msra.mxu0 %v320
    %487 = vmatprep.subr.mxu0 %v317
    %488 = vmatpush2.msra.mxu0 %v316
    %489 = vmatprep.subr.mxu0 %v313
    %490 = vmatpush2.msra.mxu0 %v312
    %491 = vmatprep.subr.mxu0 %v309
    %492 = vmatpush2.msra.mxu0 %v308
    %493 = vmatprep.subr.mxu0 %v305
    %494 = vmatpush2.msra.mxu0 %v304
    %495 = vmatprep.subr.mxu0 %v301
    %496 = vmatpush2.msra.mxu0 %v300
    %497 = vmatprep.mubr.f32.mxu0 %v233
    %498 = vmatmul.mubr.f32.gmra.mxu0 %v232
    %v499 = vpop.f32.mrf.mxu0
    %v500 = vadd.f32 %v181, %v499
    %v501 = vpop.f32.mrf.mxu0
    %v502 = vadd.f32 %v185, %v501
    %503 = vdwg.mxu0
    %v504 = vld [vmem:[#allocation8] sm:$0xff]
    %v505 = vld [vmem:[#allocation8 + $0x8] sm:$0xff]
    %v506 = vld [vmem:[#allocation8 + $0x10] sm:$0xff]
    %v507 = vld [vmem:[#allocation8 + $0x18] sm:$0xff]
    %v508 = vld [vmem:[#allocation8 + $0x20] sm:$0xff]
    %v509 = vld [vmem:[#allocation8 + $0x28] sm:$0xff]
    %v510 = vld [vmem:[#allocation8 + $0x30] sm:$0xff]
    %v511 = vld [vmem:[#allocation8 + $0x38] sm:$0xff]
    %v512 = vld [vmem:[#allocation8 + $0x40] sm:$0xff]
    %v513 = vld [vmem:[#allocation8 + $0x48] sm:$0xff]
    %v514 = vld [vmem:[#allocation8 + $0x50] sm:$0xff]
    %v515 = vld [vmem:[#allocation8 + $0x58] sm:$0xff]
    %v516 = vld [vmem:[#allocation8 + $0x60] sm:$0xff]
    %v517 = vld [vmem:[#allocation8 + $0x68] sm:$0xff]
    %v518 = vld [vmem:[#allocation8 + $0x70] sm:$0xff]
    %v519 = vld [vmem:[#allocation8 + $0x78] sm:$0xff]
    %v520 = vld [vmem:[#allocation8 + $0x80] sm:$0xff]
    %v521 = vld [vmem:[#allocation8 + $0x88] sm:$0xff]
    %v522 = vld [vmem:[#allocation8 + $0x90] sm:$0xff]
    %v523 = vld [vmem:[#allocation8 + $0x98] sm:$0xff]
    %v524 = vld [vmem:[#allocation8 + $0xa0] sm:$0xff]
    %v525 = vld [vmem:[#allocation8 + $0xa8] sm:$0xff]
    %v526 = vld [vmem:[#allocation8 + $0xb0] sm:$0xff]
    %v527 = vld [vmem:[#allocation8 + $0xb8] sm:$0xff]
    %v528 = vld [vmem:[#allocation8 + $0xc0] sm:$0xff]
    %v529 = vld [vmem:[#allocation8 + $0xc8] sm:$0xff]
    %v530 = vld [vmem:[#allocation8 + $0xd0] sm:$0xff]
    %v531 = vld [vmem:[#allocation8 + $0xd8] sm:$0xff]
    %v532 = vld [vmem:[#allocation8 + $0xe0] sm:$0xff]
    %v533 = vld [vmem:[#allocation8 + $0xe8] sm:$0xff]
    %v534 = vld [vmem:[#allocation8 + $0xf0] sm:$0xff]
    %v535 = vld [vmem:[#allocation8 + $0xf8] sm:$0xff]
    %v536 = vld [vmem:[#allocation8 + $0x100] sm:$0xff]
    %v537 = vld [vmem:[#allocation8 + $0x108] sm:$0xff]
    %v538 = vld [vmem:[#allocation8 + $0x110] sm:$0xff]
    %v539 = vld [vmem:[#allocation8 + $0x118] sm:$0xff]
    %v540 = vld [vmem:[#allocation8 + $0x120] sm:$0xff]
    %v541 = vld [vmem:[#allocation8 + $0x128] sm:$0xff]
    %v542 = vld [vmem:[#allocation8 + $0x130] sm:$0xff]
    %v543 = vld [vmem:[#allocation8 + $0x138] sm:$0xff]
    %v544 = vld [vmem:[#allocation8 + $0x140] sm:$0xff]
    %v545 = vld [vmem:[#allocation8 + $0x148] sm:$0xff]
    %v546 = vld [vmem:[#allocation8 + $0x150] sm:$0xff]
    %v547 = vld [vmem:[#allocation8 + $0x158] sm:$0xff]
    %v548 = vld [vmem:[#allocation8 + $0x160] sm:$0xff]
    %v549 = vld [vmem:[#allocation8 + $0x168] sm:$0xff]
    %v550 = vld [vmem:[#allocation8 + $0x170] sm:$0xff]
    %v551 = vld [vmem:[#allocation8 + $0x178] sm:$0xff]
    %v552 = vld [vmem:[#allocation8 + $0x180] sm:$0xff]
    %v553 = vld [vmem:[#allocation8 + $0x188] sm:$0xff]
    %v554 = vld [vmem:[#allocation8 + $0x190] sm:$0xff]
    %v555 = vld [vmem:[#allocation8 + $0x198] sm:$0xff]
    %v556 = vld [vmem:[#allocation8 + $0x1a0] sm:$0xff]
    %v557 = vld [vmem:[#allocation8 + $0x1a8] sm:$0xff]
    %v558 = vld [vmem:[#allocation8 + $0x1b0] sm:$0xff]
    %v559 = vld [vmem:[#allocation8 + $0x1b8] sm:$0xff]
    %v560 = vld [vmem:[#allocation8 + $0x1c0] sm:$0xff]
    %v561 = vld [vmem:[#allocation8 + $0x1c8] sm:$0xff]
    %v562 = vld [vmem:[#allocation8 + $0x1d0] sm:$0xff]
    %v563 = vld [vmem:[#allocation8 + $0x1d8] sm:$0xff]
    %v564 = vld [vmem:[#allocation8 + $0x1e0] sm:$0xff]
    %v565 = vld [vmem:[#allocation8 + $0x1e8] sm:$0xff]
    %v566 = vld [vmem:[#allocation8 + $0x1f0] sm:$0xff]
    %v567 = vld [vmem:[#allocation8 + $0x1f8] sm:$0xff]
    %568 = vmatprep.subr.mxu0 %v565
    %569 = vmatpush1.msra.mxu0 %v564
    %570 = vmatprep.subr.mxu0 %v561
    %571 = vmatpush1.msra.mxu0 %v560
    %572 = vmatprep.subr.mxu0 %v557
    %573 = vmatpush1.msra.mxu0 %v556
    %574 = vmatprep.subr.mxu0 %v553
    %575 = vmatpush1.msra.mxu0 %v552
    %576 = vmatprep.subr.mxu0 %v549
    %577 = vmatpush1.msra.mxu0 %v548
    %578 = vmatprep.subr.mxu0 %v545
    %579 = vmatpush1.msra.mxu0 %v544
    %580 = vmatprep.subr.mxu0 %v541
    %581 = vmatpush1.msra.mxu0 %v540
    %582 = vmatprep.subr.mxu0 %v537
    %583 = vmatpush1.msra.mxu0 %v536
    %584 = vmatprep.subr.mxu0 %v533
    %585 = vmatpush1.msra.mxu0 %v532
    %586 = vmatprep.subr.mxu0 %v529
    %587 = vmatpush1.msra.mxu0 %v528
    %588 = vmatprep.subr.mxu0 %v525
    %589 = vmatpush1.msra.mxu0 %v524
    %590 = vmatprep.subr.mxu0 %v521
    %591 = vmatpush1.msra.mxu0 %v520
    %592 = vmatprep.subr.mxu0 %v517
    %593 = vmatpush1.msra.mxu0 %v516
    %594 = vmatprep.subr.mxu0 %v513
    %595 = vmatpush1.msra.mxu0 %v512
    %596 = vmatprep.subr.mxu0 %v509
    %597 = vmatpush1.msra.mxu0 %v508
    %598 = vmatprep.subr.mxu0 %v505
    %599 = vmatpush1.msra.mxu0 %v504
    %600 = vmatprep.subr.mxu0 0.0
    %601 = vmatpush2.msra.mxu0 0.0
    %602 = vmatprep.subr.mxu0 0.0
    %603 = vmatpush2.msra.mxu0 0.0
    %604 = vmatprep.subr.mxu0 0.0
    %605 = vmatpush2.msra.mxu0 0.0
    %606 = vmatprep.subr.mxu0 0.0
    %607 = vmatpush2.msra.mxu0 0.0
    %608 = vmatprep.subr.mxu0 0.0
    %609 = vmatpush2.msra.mxu0 0.0
    %610 = vmatprep.subr.mxu0 0.0
    %611 = vmatpush2.msra.mxu0 0.0
    %612 = vmatprep.subr.mxu0 0.0
    %613 = vmatpush2.msra.mxu0 0.0
    %614 = vmatprep.subr.mxu0 0.0
    %615 = vmatpush2.msra.mxu0 0.0
    %616 = vmatprep.subr.mxu0 0.0
    %617 = vmatpush2.msra.mxu0 0.0
    %618 = vmatprep.subr.mxu0 0.0
    %619 = vmatpush2.msra.mxu0 0.0
    %620 = vmatprep.subr.mxu0 0.0
    %621 = vmatpush2.msra.mxu0 0.0
    %622 = vmatprep.subr.mxu0 0.0
    %623 = vmatpush2.msra.mxu0 0.0
    %624 = vmatprep.subr.mxu0 0.0
    %625 = vmatpush2.msra.mxu0 0.0
    %626 = vmatprep.subr.mxu0 0.0
    %627 = vmatpush2.msra.mxu0 0.0
    %628 = vmatprep.subr.mxu0 0.0
    %629 = vmatpush2.msra.mxu0 0.0
    %630 = vmatprep.subr.mxu0 0.0
    %631 = vmatpush2.msra.mxu0 0.0
    %632 = vmatprep.mubr.f32.mxu0 0.0
    %633 = vmatmul.mubr.f32.gmra.mxu0 %v156
    %v634 = vpop.f32.mrf.mxu0
    %v635 = vadd.f32 0.0, %v634
    %v636 = vpop.f32.mrf.mxu0
    %v637 = vadd.f32 0.0, %v636
    %638 = vdwg.mxu0
    %639 = vmatprep.subr.mxu0 %v567
    %640 = vmatpush1.msra.mxu0 %v566
    %641 = vmatprep.subr.mxu0 %v563
    %642 = vmatpush1.msra.mxu0 %v562
    %643 = vmatprep.subr.mxu0 %v559
    %644 = vmatpush1.msra.mxu0 %v558
    %645 = vmatprep.subr.mxu0 %v555
    %646 = vmatpush1.msra.mxu0 %v554
    %647 = vmatprep.subr.mxu0 %v551
    %648 = vmatpush1.msra.mxu0 %v550
    %649 = vmatprep.subr.mxu0 %v547
    %650 = vmatpush1.msra.mxu0 %v546
    %651 = vmatprep.subr.mxu0 %v543
    %652 = vmatpush1.msra.mxu0 %v542
    %653 = vmatprep.subr.mxu0 %v539
    %654 = vmatpush1.msra.mxu0 %v538
    %655 = vmatprep.subr.mxu0 %v535
    %656 = vmatpush1.msra.mxu0 %v534
    %657 = vmatprep.subr.mxu0 %v531
    %658 = vmatpush1.msra.mxu0 %v530
    %659 = vmatprep.subr.mxu0 %v527
    %660 = vmatpush1.msra.mxu0 %v526
    %661 = vmatprep.subr.mxu0 %v523
    %662 = vmatpush1.msra.mxu0 %v522
    %663 = vmatprep.subr.mxu0 %v519
    %664 = vmatpush1.msra.mxu0 %v518
    %665 = vmatprep.subr.mxu0 %v515
    %666 = vmatpush1.msra.mxu0 %v514
    %667 = vmatprep.subr.mxu0 %v511
    %668 = vmatpush1.msra.mxu0 %v510
    %669 = vmatprep.subr.mxu0 %v507
    %670 = vmatpush1.msra.mxu0 %v506
    %671 = vmatprep.subr.mxu0 0.0
    %672 = vmatpush2.msra.mxu0 0.0
    %673 = vmatprep.subr.mxu0 0.0
    %674 = vmatpush2.msra.mxu0 0.0
    %675 = vmatprep.subr.mxu0 0.0
    %676 = vmatpush2.msra.mxu0 0.0
    %677 = vmatprep.subr.mxu0 0.0
    %678 = vmatpush2.msra.mxu0 0.0
    %679 = vmatprep.subr.mxu0 0.0
    %680 = vmatpush2.msra.mxu0 0.0
    %681 = vmatprep.subr.mxu0 0.0
    %682 = vmatpush2.msra.mxu0 0.0
    %683 = vmatprep.subr.mxu0 0.0
    %684 = vmatpush2.msra.mxu0 0.0
    %685 = vmatprep.subr.mxu0 0.0
    %686 = vmatpush2.msra.mxu0 0.0
    %687 = vmatprep.subr.mxu0 0.0
    %688 = vmatpush2.msra.mxu0 0.0
    %689 = vmatprep.subr.mxu0 0.0
    %690 = vmatpush2.msra.mxu0 0.0
    %691 = vmatprep.subr.mxu0 0.0
    %692 = vmatpush2.msra.mxu0 0.0
    %693 = vmatprep.subr.mxu0 0.0
    %694 = vmatpush2.msra.mxu0 0.0
    %695 = vmatprep.subr.mxu0 0.0
    %696 = vmatpush2.msra.mxu0 0.0
    %697 = vmatprep.subr.mxu0 0.0
    %698 = vmatpush2.msra.mxu0 0.0
    %699 = vmatprep.subr.mxu0 0.0
    %700 = vmatpush2.msra.mxu0 0.0
    %701 = vmatprep.subr.mxu0 0.0
    %702 = vmatpush2.msra.mxu0 0.0
    %703 = vmatprep.mubr.f32.mxu0 0.0
    %704 = vmatmul.mubr.f32.gmra.mxu0 %v156
    %v705 = vpop.f32.mrf.mxu0
    %v706 = vadd.f32 0.0, %v705
    %v707 = vpop.f32.mrf.mxu0
    %v708 = vadd.f32 0.0, %v707
    %709 = vdwg.mxu0
    %v710 = vadd.f32 %v429, %v635
    %v711 = vadd.f32 %v431, %v637
    %v712 = vadd.f32 %v500, %v706
    %v713 = vadd.f32 %v502, %v708
    %v714 = vxor.u32 %v710, 2147483648
    %v715 = vmul.f32 %v714, 1.442695
    %v716 = vpow.pop %v715
    %v717 = vadd.f32 %v716, 1.0
    %v718 = vrcp.pop %v717
    %v719 = vmul.f32 1.0, %v718
    %v720 = vxor.u32 %v711, 2147483648
    %v721 = vmul.f32 %v720, 1.442695
    %v722 = vpow.pop %v721
    %v723 = vadd.f32 %v722, 1.0
    %v724 = vrcp.pop %v723
    %v725 = vmul.f32 1.0, %v724
    %v726 = vtanh.pop %v712
    %v727 = vxor.u32 %v713, 2147483648
    %v728 = vmul.f32 %v727, 1.442695
    %v729 = vpow.pop %v728
    %v730 = vadd.f32 %v729, 1.0
    %v731 = vrcp.pop %v730
    %v732 = vmul.f32 1.0, %v731
    %v733 = vmul.f32 %v725, %v161
    %v734 = vmul.f32 %v719, %v726
    %v735 = vadd.f32 %v733, %v734
    %v736 = vtanh.pop %v735
    %v737 = vmul.f32 %v732, %v736
    %v738 = vld [vmem:[#allocation11] sm:$0xff]
    %v739 = vld [vmem:[#allocation11 + $0x8] sm:$0xff]
    %v740 = vld [vmem:[#allocation11 + $0x10] sm:$0xff]
    %v741 = vld [vmem:[#allocation11 + $0x18] sm:$0xff]
    %v742 = vld [vmem:[#allocation11 + $0x20] sm:$0xff]
    %v743 = vld [vmem:[#allocation11 + $0x28] sm:$0xff]
    %v744 = vld [vmem:[#allocation11 + $0x30] sm:$0xff]
    %v745 = vld [vmem:[#allocation11 + $0x38] sm:$0xff]
    %v746 = vld [vmem:[#allocation11 + $0x40] sm:$0xff]
    %v747 = vld [vmem:[#allocation11 + $0x48] sm:$0xff]
    %v748 = vld [vmem:[#allocation11 + $0x50] sm:$0xff]
    %v749 = vld [vmem:[#allocation11 + $0x58] sm:$0xff]
    %v750 = vld [vmem:[#allocation11 + $0x60] sm:$0xff]
    %v751 = vld [vmem:[#allocation11 + $0x68] sm:$0xff]
    %v752 = vld [vmem:[#allocation11 + $0x70] sm:$0xff]
    %v753 = vld [vmem:[#allocation11 + $0x78] sm:$0xff]
    %v754 = vld [vmem:[#allocation11 + $0x80] sm:$0xff]
    %v755 = vld [vmem:[#allocation11 + $0x88] sm:$0xff]
    %v756 = vld [vmem:[#allocation11 + $0x90] sm:$0xff]
    %v757 = vld [vmem:[#allocation11 + $0x98] sm:$0xff]
    %v758 = vld [vmem:[#allocation11 + $0xa0] sm:$0xff]
    %v759 = vld [vmem:[#allocation11 + $0xa8] sm:$0xff]
    %v760 = vld [vmem:[#allocation11 + $0xb0] sm:$0xff]
    %v761 = vld [vmem:[#allocation11 + $0xb8] sm:$0xff]
    %v762 = vld [vmem:[#allocation11 + $0xc0] sm:$0xff]
    %v763 = vld [vmem:[#allocation11 + $0xc8] sm:$0xff]
    %v764 = vld [vmem:[#allocation11 + $0xd0] sm:$0xff]
    %v765 = vld [vmem:[#allocation11 + $0xd8] sm:$0xff]
    %v766 = vld [vmem:[#allocation11 + $0xe0] sm:$0xff]
    %v767 = vld [vmem:[#allocation11 + $0xe8] sm:$0xff]
    %v768 = vld [vmem:[#allocation11 + $0xf0] sm:$0xff]
    %v769 = vld [vmem:[#allocation11 + $0xf8] sm:$0xff]
    %v770 = vld [vmem:[#allocation11 + $0x100] sm:$0xff]
    %v771 = vld [vmem:[#allocation11 + $0x108] sm:$0xff]
    %v772 = vld [vmem:[#allocation11 + $0x110] sm:$0xff]
    %v773 = vld [vmem:[#allocation11 + $0x118] sm:$0xff]
    %v774 = vld [vmem:[#allocation11 + $0x120] sm:$0xff]
    %v775 = vld [vmem:[#allocation11 + $0x128] sm:$0xff]
    %v776 = vld [vmem:[#allocation11 + $0x130] sm:$0xff]
    %v777 = vld [vmem:[#allocation11 + $0x138] sm:$0xff]
    %v778 = vld [vmem:[#allocation11 + $0x140] sm:$0xff]
    %v779 = vld [vmem:[#allocation11 + $0x148] sm:$0xff]
    %v780 = vld [vmem:[#allocation11 + $0x150] sm:$0xff]
    %v781 = vld [vmem:[#allocation11 + $0x158] sm:$0xff]
    %v782 = vld [vmem:[#allocation11 + $0x160] sm:$0xff]
    %v783 = vld [vmem:[#allocation11 + $0x168] sm:$0xff]
    %v784 = vld [vmem:[#allocation11 + $0x170] sm:$0xff]
    %v785 = vld [vmem:[#allocation11 + $0x178] sm:$0xff]
    %v786 = vld [vmem:[#allocation11 + $0x180] sm:$0xff]
    %v787 = vld [vmem:[#allocation11 + $0x188] sm:$0xff]
    %v788 = vld [vmem:[#allocation11 + $0x190] sm:$0xff]
    %v789 = vld [vmem:[#allocation11 + $0x198] sm:$0xff]
    %v790 = vld [vmem:[#allocation11 + $0x1a0] sm:$0xff]
    %v791 = vld [vmem:[#allocation11 + $0x1a8] sm:$0xff]
    %v792 = vld [vmem:[#allocation11 + $0x1b0] sm:$0xff]
    %v793 = vld [vmem:[#allocation11 + $0x1b8] sm:$0xff]
    %v794 = vld [vmem:[#allocation11 + $0x1c0] sm:$0xff]
    %v795 = vld [vmem:[#allocation11 + $0x1c8] sm:$0xff]
    %v796 = vld [vmem:[#allocation11 + $0x1d0] sm:$0xff]
    %v797 = vld [vmem:[#allocation11 + $0x1d8] sm:$0xff]
    %v798 = vld [vmem:[#allocation11 + $0x1e0] sm:$0xff]
    %v799 = vld [vmem:[#allocation11 + $0x1e8] sm:$0xff]
    %v800 = vld [vmem:[#allocation11 + $0x1f0] sm:$0xff]
    %v801 = vld [vmem:[#allocation11 + $0x1f8] sm:$0xff]
    %v802 = vld [vmem:[#allocation11 + $0x200] sm:$0xff]
    %v803 = vld [vmem:[#allocation11 + $0x208] sm:$0xff]
    %v804 = vld [vmem:[#allocation11 + $0x210] sm:$0xff]
    %v805 = vld [vmem:[#allocation11 + $0x218] sm:$0xff]
    %v806 = vld [vmem:[#allocation11 + $0x220] sm:$0xff]
    %v807 = vld [vmem:[#allocation11 + $0x228] sm:$0xff]
    %v808 = vld [vmem:[#allocation11 + $0x230] sm:$0xff]
    %v809 = vld [vmem:[#allocation11 + $0x238] sm:$0xff]
    %v810 = vld [vmem:[#allocation11 + $0x240] sm:$0xff]
    %v811 = vld [vmem:[#allocation11 + $0x248] sm:$0xff]
    %v812 = vld [vmem:[#allocation11 + $0x250] sm:$0xff]
    %v813 = vld [vmem:[#allocation11 + $0x258] sm:$0xff]
    %v814 = vld [vmem:[#allocation11 + $0x260] sm:$0xff]
    %v815 = vld [vmem:[#allocation11 + $0x268] sm:$0xff]
    %v816 = vld [vmem:[#allocation11 + $0x270] sm:$0xff]
    %v817 = vld [vmem:[#allocation11 + $0x278] sm:$0xff]
    %v818 = vld [vmem:[#allocation11 + $0x280] sm:$0xff]
    %v819 = vld [vmem:[#allocation11 + $0x288] sm:$0xff]
    %v820 = vld [vmem:[#allocation11 + $0x290] sm:$0xff]
    %v821 = vld [vmem:[#allocation11 + $0x298] sm:$0xff]
    %v822 = vld [vmem:[#allocation11 + $0x2a0] sm:$0xff]
    %v823 = vld [vmem:[#allocation11 + $0x2a8] sm:$0xff]
    %v824 = vld [vmem:[#allocation11 + $0x2b0] sm:$0xff]
    %v825 = vld [vmem:[#allocation11 + $0x2b8] sm:$0xff]
    %v826 = vld [vmem:[#allocation11 + $0x2c0] sm:$0xff]
    %v827 = vld [vmem:[#allocation11 + $0x2c8] sm:$0xff]
    %v828 = vld [vmem:[#allocation11 + $0x2d0] sm:$0xff]
    %v829 = vld [vmem:[#allocation11 + $0x2d8] sm:$0xff]
    %v830 = vld [vmem:[#allocation11 + $0x2e0] sm:$0xff]
    %v831 = vld [vmem:[#allocation11 + $0x2e8] sm:$0xff]
    %v832 = vld [vmem:[#allocation11 + $0x2f0] sm:$0xff]
    %v833 = vld [vmem:[#allocation11 + $0x2f8] sm:$0xff]
    %v834 = vld [vmem:[#allocation11 + $0x300] sm:$0xff]
    %v835 = vld [vmem:[#allocation11 + $0x308] sm:$0xff]
    %v836 = vld [vmem:[#allocation11 + $0x310] sm:$0xff]
    %v837 = vld [vmem:[#allocation11 + $0x318] sm:$0xff]
    %v838 = vld [vmem:[#allocation11 + $0x320] sm:$0xff]
    %v839 = vld [vmem:[#allocation11 + $0x328] sm:$0xff]
    %v840 = vld [vmem:[#allocation11 + $0x330] sm:$0xff]
    %v841 = vld [vmem:[#allocation11 + $0x338] sm:$0xff]
    %v842 = vld [vmem:[#allocation11 + $0x340] sm:$0xff]
    %v843 = vld [vmem:[#allocation11 + $0x348] sm:$0xff]
    %v844 = vld [vmem:[#allocation11 + $0x350] sm:$0xff]
    %v845 = vld [vmem:[#allocation11 + $0x358] sm:$0xff]
    %v846 = vld [vmem:[#allocation11 + $0x360] sm:$0xff]
    %v847 = vld [vmem:[#allocation11 + $0x368] sm:$0xff]
    %v848 = vld [vmem:[#allocation11 + $0x370] sm:$0xff]
    %v849 = vld [vmem:[#allocation11 + $0x378] sm:$0xff]
    %v850 = vld [vmem:[#allocation11 + $0x380] sm:$0xff]
    %v851 = vld [vmem:[#allocation11 + $0x388] sm:$0xff]
    %v852 = vld [vmem:[#allocation11 + $0x390] sm:$0xff]
    %v853 = vld [vmem:[#allocation11 + $0x398] sm:$0xff]
    %v854 = vld [vmem:[#allocation11 + $0x3a0] sm:$0xff]
    %v855 = vld [vmem:[#allocation11 + $0x3a8] sm:$0xff]
    %v856 = vld [vmem:[#allocation11 + $0x3b0] sm:$0xff]
    %v857 = vld [vmem:[#allocation11 + $0x3b8] sm:$0xff]
    %v858 = vld [vmem:[#allocation11 + $0x3c0] sm:$0xff]
    %v859 = vld [vmem:[#allocation11 + $0x3c8] sm:$0xff]
    %v860 = vld [vmem:[#allocation11 + $0x3d0] sm:$0xff]
    %v861 = vld [vmem:[#allocation11 + $0x3d8] sm:$0xff]
    %v862 = vld [vmem:[#allocation11 + $0x3e0] sm:$0xff]
    %v863 = vld [vmem:[#allocation11 + $0x3e8] sm:$0xff]
    %v864 = vld [vmem:[#allocation11 + $0x3f0] sm:$0xff]
    %v865 = vld [vmem:[#allocation11 + $0x3f8] sm:$0xff]
    %866 = vmatprep.subr.mxu0 %v799
    %867 = vmatpush1.msra.mxu0 %v798
    %868 = vmatprep.subr.mxu0 %v795
    %869 = vmatpush1.msra.mxu0 %v794
    %870 = vmatprep.subr.mxu0 %v791
    %871 = vmatpush1.msra.mxu0 %v790
    %872 = vmatprep.subr.mxu0 %v787
    %873 = vmatpush1.msra.mxu0 %v786
    %874 = vmatprep.subr.mxu0 %v783
    %875 = vmatpush1.msra.mxu0 %v782
    %876 = vmatprep.subr.mxu0 %v779
    %877 = vmatpush1.msra.mxu0 %v778
    %878 = vmatprep.subr.mxu0 %v775
    %879 = vmatpush1.msra.mxu0 %v774
    %880 = vmatprep.subr.mxu0 %v771
    %881 = vmatpush1.msra.mxu0 %v770
    %882 = vmatprep.subr.mxu0 %v767
    %883 = vmatpush1.msra.mxu0 %v766
    %884 = vmatprep.subr.mxu0 %v763
    %885 = vmatpush1.msra.mxu0 %v762
    %886 = vmatprep.subr.mxu0 %v759
    %887 = vmatpush1.msra.mxu0 %v758
    %888 = vmatprep.subr.mxu0 %v755
    %889 = vmatpush1.msra.mxu0 %v754
    %890 = vmatprep.subr.mxu0 %v751
    %891 = vmatpush1.msra.mxu0 %v750
    %892 = vmatprep.subr.mxu0 %v747
    %893 = vmatpush1.msra.mxu0 %v746
    %894 = vmatprep.subr.mxu0 %v743
    %895 = vmatpush1.msra.mxu0 %v742
    %896 = vmatprep.subr.mxu0 %v739
    %897 = vmatpush1.msra.mxu0 %v738
    %898 = vmatprep.subr.mxu0 %v863
    %899 = vmatpush2.msra.mxu0 %v862
    %900 = vmatprep.subr.mxu0 %v859
    %901 = vmatpush2.msra.mxu0 %v858
    %902 = vmatprep.subr.mxu0 %v855
    %903 = vmatpush2.msra.mxu0 %v854
    %904 = vmatprep.subr.mxu0 %v851
    %905 = vmatpush2.msra.mxu0 %v850
    %906 = vmatprep.subr.mxu0 %v847
    %907 = vmatpush2.msra.mxu0 %v846
    %908 = vmatprep.subr.mxu0 %v843
    %909 = vmatpush2.msra.mxu0 %v842
    %910 = vmatprep.subr.mxu0 %v839
    %911 = vmatpush2.msra.mxu0 %v838
    %912 = vmatprep.subr.mxu0 %v835
    %913 = vmatpush2.msra.mxu0 %v834
    %914 = vmatprep.subr.mxu0 %v831
    %915 = vmatpush2.msra.mxu0 %v830
    %916 = vmatprep.subr.mxu0 %v827
    %917 = vmatpush2.msra.mxu0 %v826
    %918 = vmatprep.subr.mxu0 %v823
    %919 = vmatpush2.msra.mxu0 %v822
    %920 = vmatprep.subr.mxu0 %v819
    %921 = vmatpush2.msra.mxu0 %v818
    %922 = vmatprep.subr.mxu0 %v815
    %923 = vmatpush2.msra.mxu0 %v814
    %924 = vmatprep.subr.mxu0 %v811
    %925 = vmatpush2.msra.mxu0 %v810
    %926 = vmatprep.subr.mxu0 %v807
    %927 = vmatpush2.msra.mxu0 %v806
    %928 = vmatprep.subr.mxu0 %v803
    %929 = vmatpush2.msra.mxu0 %v802
    %930 = vmatprep.mubr.f32.mxu0 %v159
    %931 = vmatmul.mubr.f32.gmra.mxu0 %v737
    %v932 = vpop.f32.mrf.mxu0
    %v933 = vadd.f32 %v195, %v932
    %v934 = vpop.f32.mrf.mxu0
    %v935 = vadd.f32 %v199, %v934
    %936 = vdwg.mxu0
    %937 = vmatprep.subr.mxu0 %v801
    %938 = vmatpush1.msra.mxu0 %v800
    %939 = vmatprep.subr.mxu0 %v797
    %940 = vmatpush1.msra.mxu0 %v796
    %941 = vmatprep.subr.mxu0 %v793
    %942 = vmatpush1.msra.mxu0 %v792
    %943 = vmatprep.subr.mxu0 %v789
    %944 = vmatpush1.msra.mxu0 %v788
    %945 = vmatprep.subr.mxu0 %v785
    %946 = vmatpush1.msra.mxu0 %v784
    %947 = vmatprep.subr.mxu0 %v781
    %948 = vmatpush1.msra.mxu0 %v780
    %949 = vmatprep.subr.mxu0 %v777
    %950 = vmatpush1.msra.mxu0 %v776
    %951 = vmatprep.subr.mxu0 %v773
    %952 = vmatpush1.msra.mxu0 %v772
    %953 = vmatprep.subr.mxu0 %v769
    %954 = vmatpush1.msra.mxu0 %v768
    %955 = vmatprep.subr.mxu0 %v765
    %956 = vmatpush1.msra.mxu0 %v764
    %957 = vmatprep.subr.mxu0 %v761
    %958 = vmatpush1.msra.mxu0 %v760
    %959 = vmatprep.subr.mxu0 %v757
    %960 = vmatpush1.msra.mxu0 %v756
    %961 = vmatprep.subr.mxu0 %v753
    %962 = vmatpush1.msra.mxu0 %v752
    %963 = vmatprep.subr.mxu0 %v749
    %964 = vmatpush1.msra.mxu0 %v748
    %965 = vmatprep.subr.mxu0 %v745
    %966 = vmatpush1.msra.mxu0 %v744
    %967 = vmatprep.subr.mxu0 %v741
    %968 = vmatpush1.msra.mxu0 %v740
    %969 = vmatprep.subr.mxu0 %v865
    %970 = vmatpush2.msra.mxu0 %v864
    %971 = vmatprep.subr.mxu0 %v861
    %972 = vmatpush2.msra.mxu0 %v860
    %973 = vmatprep.subr.mxu0 %v857
    %974 = vmatpush2.msra.mxu0 %v856
    %975 = vmatprep.subr.mxu0 %v853
    %976 = vmatpush2.msra.mxu0 %v852
    %977 = vmatprep.subr.mxu0 %v849
    %978 = vmatpush2.msra.mxu0 %v848
    %979 = vmatprep.subr.mxu0 %v845
    %980 = vmatpush2.msra.mxu0 %v844
    %981 = vmatprep.subr.mxu0 %v841
    %982 = vmatpush2.msra.mxu0 %v840
    %983 = vmatprep.subr.mxu0 %v837
    %984 = vmatpush2.msra.mxu0 %v836
    %985 = vmatprep.subr.mxu0 %v833
    %986 = vmatpush2.msra.mxu0 %v832
    %987 = vmatprep.subr.mxu0 %v829
    %988 = vmatpush2.msra.mxu0 %v828
    %989 = vmatprep.subr.mxu0 %v825
    %990 = vmatpush2.msra.mxu0 %v824
    %991 = vmatprep.subr.mxu0 %v821
    %992 = vmatpush2.msra.mxu0 %v820
    %993 = vmatprep.subr.mxu0 %v817
    %994 = vmatpush2.msra.mxu0 %v816
    %995 = vmatprep.subr.mxu0 %v813
    %996 = vmatpush2.msra.mxu0 %v812
    %997 = vmatprep.subr.mxu0 %v809
    %998 = vmatpush2.msra.mxu0 %v808
    %999 = vmatprep.subr.mxu0 %v805
    %1000 = vmatpush2.msra.mxu0 %v804
    %1001 = vmatprep.mubr.f32.mxu0 %v159
    %1002 = vmatmul.mubr.f32.gmra.mxu0 %v737
    %v1003 = vpop.f32.mrf.mxu0
    %v1004 = vadd.f32 %v203, %v1003
    %v1005 = vpop.f32.mrf.mxu0
    %v1006 = vadd.f32 %v207, %v1005
    %1007 = vdwg.mxu0
    %v1008 = vxor.u32 %v933, 2147483648
    %v1009 = vmul.f32 %v1008, 1.442695
    %v1010 = vpow.pop %v1009
    %v1011 = vadd.f32 %v1010, 1.0
    %v1012 = vrcp.pop %v1011
    %v1013 = vmul.f32 1.0, %v1012
    %v1014 = vxor.u32 %v935, 2147483648
    %v1015 = vmul.f32 %v1014, 1.442695
    %v1016 = vpow.pop %v1015
    %v1017 = vadd.f32 %v1016, 1.0
    %v1018 = vrcp.pop %v1017
    %v1019 = vmul.f32 1.0, %v1018
    %v1020 = vtanh.pop %v1004
    %v1021 = vxor.u32 %v1006, 2147483648
    %v1022 = vmul.f32 %v1021, 1.442695
    %v1023 = vpow.pop %v1022
    %v1024 = vadd.f32 %v1023, 1.0
    %v1025 = vrcp.pop %v1024
    %v1026 = vmul.f32 1.0, %v1025
    %v1027 = vmul.f32 %v1019, %v164
    %v1028 = vmul.f32 %v1013, %v1020
    %v1029 = vadd.f32 %v1027, %v1028
    %v1030 = vtanh.pop %v1029
    %v1031 = vmul.f32 %v1026, %v1030
    %v1032 = vld [vmem:[#allocation14] sm:$0xff]
    %v1033 = vld [vmem:[#allocation14 + $0x8] sm:$0xff]
    %v1034 = vld [vmem:[#allocation14 + $0x10] sm:$0xff]
    %v1035 = vld [vmem:[#allocation14 + $0x18] sm:$0xff]
    %v1036 = vld [vmem:[#allocation14 + $0x20] sm:$0xff]
    %v1037 = vld [vmem:[#allocation14 + $0x28] sm:$0xff]
    %v1038 = vld [vmem:[#allocation14 + $0x30] sm:$0xff]
    %v1039 = vld [vmem:[#allocation14 + $0x38] sm:$0xff]
    %v1040 = vld [vmem:[#allocation14 + $0x40] sm:$0xff]
    %v1041 = vld [vmem:[#allocation14 + $0x48] sm:$0xff]
    %v1042 = vld [vmem:[#allocation14 + $0x50] sm:$0xff]
    %v1043 = vld [vmem:[#allocation14 + $0x58] sm:$0xff]
    %v1044 = vld [vmem:[#allocation14 + $0x60] sm:$0xff]
    %v1045 = vld [vmem:[#allocation14 + $0x68] sm:$0xff]
    %v1046 = vld [vmem:[#allocation14 + $0x70] sm:$0xff]
    %v1047 = vld [vmem:[#allocation14 + $0x78] sm:$0xff]
    %v1048 = vld [vmem:[#allocation14 + $0x80] sm:$0xff]
    %v1049 = vld [vmem:[#allocation14 + $0x88] sm:$0xff]
    %v1050 = vld [vmem:[#allocation14 + $0x90] sm:$0xff]
    %v1051 = vld [vmem:[#allocation14 + $0x98] sm:$0xff]
    %v1052 = vld [vmem:[#allocation14 + $0xa0] sm:$0xff]
    %v1053 = vld [vmem:[#allocation14 + $0xa8] sm:$0xff]
    %v1054 = vld [vmem:[#allocation14 + $0xb0] sm:$0xff]
    %v1055 = vld [vmem:[#allocation14 + $0xb8] sm:$0xff]
    %v1056 = vld [vmem:[#allocation14 + $0xc0] sm:$0xff]
    %v1057 = vld [vmem:[#allocation14 + $0xc8] sm:$0xff]
    %v1058 = vld [vmem:[#allocation14 + $0xd0] sm:$0xff]
    %v1059 = vld [vmem:[#allocation14 + $0xd8] sm:$0xff]
    %v1060 = vld [vmem:[#allocation14 + $0xe0] sm:$0xff]
    %v1061 = vld [vmem:[#allocation14 + $0xe8] sm:$0xff]
    %v1062 = vld [vmem:[#allocation14 + $0xf0] sm:$0xff]
    %v1063 = vld [vmem:[#allocation14 + $0xf8] sm:$0xff]
    %1064 = vmatprep.subr.mxu0 %v1063
    %1065 = vmatpush1.msra.mxu0 %v1062
    %1066 = vmatprep.subr.mxu0 %v1061
    %1067 = vmatpush1.msra.mxu0 %v1060
    %1068 = vmatprep.subr.mxu0 %v1059
    %1069 = vmatpush1.msra.mxu0 %v1058
    %1070 = vmatprep.subr.mxu0 %v1057
    %1071 = vmatpush1.msra.mxu0 %v1056
    %1072 = vmatprep.subr.mxu0 %v1055
    %1073 = vmatpush1.msra.mxu0 %v1054
    %1074 = vmatprep.subr.mxu0 %v1053
    %1075 = vmatpush1.msra.mxu0 %v1052
    %1076 = vmatprep.subr.mxu0 %v1051
    %1077 = vmatpush1.msra.mxu0 %v1050
    %1078 = vmatprep.subr.mxu0 %v1049
    %1079 = vmatpush1.msra.mxu0 %v1048
    %1080 = vmatprep.subr.mxu0 %v1047
    %1081 = vmatpush1.msra.mxu0 %v1046
    %1082 = vmatprep.subr.mxu0 %v1045
    %1083 = vmatpush1.msra.mxu0 %v1044
    %1084 = vmatprep.subr.mxu0 %v1043
    %1085 = vmatpush1.msra.mxu0 %v1042
    %1086 = vmatprep.subr.mxu0 %v1041
    %1087 = vmatpush1.msra.mxu0 %v1040
    %1088 = vmatprep.subr.mxu0 %v1039
    %1089 = vmatpush1.msra.mxu0 %v1038
    %1090 = vmatprep.subr.mxu0 %v1037
    %1091 = vmatpush1.msra.mxu0 %v1036
    %1092 = vmatprep.subr.mxu0 %v1035
    %1093 = vmatpush1.msra.mxu0 %v1034
    %1094 = vmatprep.subr.mxu0 %v1033
    %1095 = vmatpush1.msra.mxu0 %v1032
    %1096 = vmatprep.subr.mxu0 0.0
    %1097 = vmatpush2.msra.mxu0 0.0
    %1098 = vmatprep.subr.mxu0 0.0
    %1099 = vmatpush2.msra.mxu0 0.0
    %1100 = vmatprep.subr.mxu0 0.0
    %1101 = vmatpush2.msra.mxu0 0.0
    %1102 = vmatprep.subr.mxu0 0.0
    %1103 = vmatpush2.msra.mxu0 0.0
    %1104 = vmatprep.subr.mxu0 0.0
    %1105 = vmatpush2.msra.mxu0 0.0
    %1106 = vmatprep.subr.mxu0 0.0
    %1107 = vmatpush2.msra.mxu0 0.0
    %1108 = vmatprep.subr.mxu0 0.0
    %1109 = vmatpush2.msra.mxu0 0.0
    %1110 = vmatprep.subr.mxu0 0.0
    %1111 = vmatpush2.msra.mxu0 0.0
    %1112 = vmatprep.subr.mxu0 0.0
    %1113 = vmatpush2.msra.mxu0 0.0
    %1114 = vmatprep.subr.mxu0 0.0
    %1115 = vmatpush2.msra.mxu0 0.0
    %1116 = vmatprep.subr.mxu0 0.0
    %1117 = vmatpush2.msra.mxu0 0.0
    %1118 = vmatprep.subr.mxu0 0.0
    %1119 = vmatpush2.msra.mxu0 0.0
    %1120 = vmatprep.subr.mxu0 0.0
    %1121 = vmatpush2.msra.mxu0 0.0
    %1122 = vmatprep.subr.mxu0 0.0
    %1123 = vmatpush2.msra.mxu0 0.0
    %1124 = vmatprep.subr.mxu0 0.0
    %1125 = vmatpush2.msra.mxu0 0.0
    %1126 = vmatprep.subr.mxu0 0.0
    %1127 = vmatpush2.msra.mxu0 0.0
    %1128 = vmatprep.mubr.f32.mxu0 0.0
    %1129 = vmatmul.mubr.f32.gmra.mxu0 %v1031
    %v1130 = vpop.f32.mrf.mxu0
    %v1131 = vadd.f32 %v217, %v1130
    %v1132 = vpop.f32.mrf.mxu0
    %v1133 = vadd.f32 %v221, %v1132
    %1134 = vdwg.mxu0
    %1135 = vst [vmem:[%s10] sm:$0xff] %v1131
    %1136 = vst [vmem:[%s10 + $0x8] sm:$0xff] %v1133
    %v1137 = vld [vmem:[#allocation2] sm:$0xff]
    %1138 = vset.pattern.permute.xlu0 1
    %1139 = vperm.xlu0 %1138, %v1137
    %v1140 = vpop.permute.xlu0 %1139
    %vm1141 = vcmp.eq.s32.totalorder %v1140, %v166
    %vm1142 = vcmp.eq.s32.totalorder %v1140, %v167
    %v1143 = vsel %vm1141, 1, 0
    %v1144 = vsel %vm1142, 1, 0
    %v1145 = vcvt.s32.f32 %v1143
    %v1146 = vcvt.s32.f32 %v1144
    %v1147 = vld [vmem:[#allocation7] sm:$0xff]
    %v1148 = vld [vmem:[#allocation7 + $0x8] sm:$0xff]
    %v1149 = vld [vmem:[#allocation7 + $0x10] sm:$0xff]
    %v1150 = vld [vmem:[#allocation7 + $0x18] sm:$0xff]
    %v1151 = vld [vmem:[#allocation7 + $0x20] sm:$0xff]
    %v1152 = vld [vmem:[#allocation7 + $0x28] sm:$0xff]
    %v1153 = vld [vmem:[#allocation7 + $0x30] sm:$0xff]
    %v1154 = vld [vmem:[#allocation7 + $0x38] sm:$0xff]
    %v1155 = vld [vmem:[#allocation7 + $0x40] sm:$0xff]
    %v1156 = vld [vmem:[#allocation7 + $0x48] sm:$0xff]
    %v1157 = vld [vmem:[#allocation7 + $0x50] sm:$0xff]
    %v1158 = vld [vmem:[#allocation7 + $0x58] sm:$0xff]
    %v1159 = vld [vmem:[#allocation7 + $0x60] sm:$0xff]
    %v1160 = vld [vmem:[#allocation7 + $0x68] sm:$0xff]
    %v1161 = vld [vmem:[#allocation7 + $0x70] sm:$0xff]
    %v1162 = vld [vmem:[#allocation7 + $0x78] sm:$0xff]
    %v1163 = vld [vmem:[#allocation7 + $0x80] sm:$0xff]
    %v1164 = vld [vmem:[#allocation7 + $0x88] sm:$0xff]
    %v1165 = vld [vmem:[#allocation7 + $0x90] sm:$0xff]
    %v1166 = vld [vmem:[#allocation7 + $0x98] sm:$0xff]
    %v1167 = vld [vmem:[#allocation7 + $0xa0] sm:$0xff]
    %v1168 = vld [vmem:[#allocation7 + $0xa8] sm:$0xff]
    %v1169 = vld [vmem:[#allocation7 + $0xb0] sm:$0xff]
    %v1170 = vld [vmem:[#allocation7 + $0xb8] sm:$0xff]
    %v1171 = vld [vmem:[#allocation7 + $0xc0] sm:$0xff]
    %v1172 = vld [vmem:[#allocation7 + $0xc8] sm:$0xff]
    %v1173 = vld [vmem:[#allocation7 + $0xd0] sm:$0xff]
    %v1174 = vld [vmem:[#allocation7 + $0xd8] sm:$0xff]
    %v1175 = vld [vmem:[#allocation7 + $0xe0] sm:$0xff]
    %v1176 = vld [vmem:[#allocation7 + $0xe8] sm:$0xff]
    %v1177 = vld [vmem:[#allocation7 + $0xf0] sm:$0xff]
    %v1178 = vld [vmem:[#allocation7 + $0xf8] sm:$0xff]
    %v1179 = vld [vmem:[#allocation7 + $0x100] sm:$0xff]
    %v1180 = vld [vmem:[#allocation7 + $0x108] sm:$0xff]
    %v1181 = vld [vmem:[#allocation7 + $0x110] sm:$0xff]
    %v1182 = vld [vmem:[#allocation7 + $0x118] sm:$0xff]
    %v1183 = vld [vmem:[#allocation7 + $0x120] sm:$0xff]
    %v1184 = vld [vmem:[#allocation7 + $0x128] sm:$0xff]
    %v1185 = vld [vmem:[#allocation7 + $0x130] sm:$0xff]
    %v1186 = vld [vmem:[#allocation7 + $0x138] sm:$0xff]
    %v1187 = vld [vmem:[#allocation7 + $0x140] sm:$0xff]
    %v1188 = vld [vmem:[#allocation7 + $0x148] sm:$0xff]
    %v1189 = vld [vmem:[#allocation7 + $0x150] sm:$0xff]
    %v1190 = vld [vmem:[#allocation7 + $0x158] sm:$0xff]
    %v1191 = vld [vmem:[#allocation7 + $0x160] sm:$0xff]
    %v1192 = vld [vmem:[#allocation7 + $0x168] sm:$0xff]
    %v1193 = vld [vmem:[#allocation7 + $0x170] sm:$0xff]
    %v1194 = vld [vmem:[#allocation7 + $0x178] sm:$0xff]
    %v1195 = vld [vmem:[#allocation7 + $0x180] sm:$0xff]
    %v1196 = vld [vmem:[#allocation7 + $0x188] sm:$0xff]
    %v1197 = vld [vmem:[#allocation7 + $0x190] sm:$0xff]
    %v1198 = vld [vmem:[#allocation7 + $0x198] sm:$0xff]
    %v1199 = vld [vmem:[#allocation7 + $0x1a0] sm:$0xff]
    %v1200 = vld [vmem:[#allocation7 + $0x1a8] sm:$0xff]
    %v1201 = vld [vmem:[#allocation7 + $0x1b0] sm:$0xff]
    %v1202 = vld [vmem:[#allocation7 + $0x1b8] sm:$0xff]
    %v1203 = vld [vmem:[#allocation7 + $0x1c0] sm:$0xff]
    %v1204 = vld [vmem:[#allocation7 + $0x1c8] sm:$0xff]
    %v1205 = vld [vmem:[#allocation7 + $0x1d0] sm:$0xff]
    %v1206 = vld [vmem:[#allocation7 + $0x1d8] sm:$0xff]
    %v1207 = vld [vmem:[#allocation7 + $0x1e0] sm:$0xff]
    %v1208 = vld [vmem:[#allocation7 + $0x1e8] sm:$0xff]
    %v1209 = vld [vmem:[#allocation7 + $0x1f0] sm:$0xff]
    %v1210 = vld [vmem:[#allocation7 + $0x1f8] sm:$0xff]
    %v1211 = vld [vmem:[#allocation7 + $0x200] sm:$0xff]
    %v1212 = vld [vmem:[#allocation7 + $0x208] sm:$0xff]
    %v1213 = vld [vmem:[#allocation7 + $0x210] sm:$0xff]
    %v1214 = vld [vmem:[#allocation7 + $0x218] sm:$0xff]
    %v1215 = vld [vmem:[#allocation7 + $0x220] sm:$0xff]
    %v1216 = vld [vmem:[#allocation7 + $0x228] sm:$0xff]
    %v1217 = vld [vmem:[#allocation7 + $0x230] sm:$0xff]
    %v1218 = vld [vmem:[#allocation7 + $0x238] sm:$0xff]
    %v1219 = vld [vmem:[#allocation7 + $0x240] sm:$0xff]
    %v1220 = vld [vmem:[#allocation7 + $0x248] sm:$0xff]
    %v1221 = vld [vmem:[#allocation7 + $0x250] sm:$0xff]
    %v1222 = vld [vmem:[#allocation7 + $0x258] sm:$0xff]
    %v1223 = vld [vmem:[#allocation7 + $0x260] sm:$0xff]
    %v1224 = vld [vmem:[#allocation7 + $0x268] sm:$0xff]
    %v1225 = vld [vmem:[#allocation7 + $0x270] sm:$0xff]
    %v1226 = vld [vmem:[#allocation7 + $0x278] sm:$0xff]
    %v1227 = vld [vmem:[#allocation7 + $0x280] sm:$0xff]
    %v1228 = vld [vmem:[#allocation7 + $0x288] sm:$0xff]
    %v1229 = vld [vmem:[#allocation7 + $0x290] sm:$0xff]
    %v1230 = vld [vmem:[#allocation7 + $0x298] sm:$0xff]
    %v1231 = vld [vmem:[#allocation7 + $0x2a0] sm:$0xff]
    %v1232 = vld [vmem:[#allocation7 + $0x2a8] sm:$0xff]
    %v1233 = vld [vmem:[#allocation7 + $0x2b0] sm:$0xff]
    %v1234 = vld [vmem:[#allocation7 + $0x2b8] sm:$0xff]
    %v1235 = vld [vmem:[#allocation7 + $0x2c0] sm:$0xff]
    %v1236 = vld [vmem:[#allocation7 + $0x2c8] sm:$0xff]
    %v1237 = vld [vmem:[#allocation7 + $0x2d0] sm:$0xff]
    %v1238 = vld [vmem:[#allocation7 + $0x2d8] sm:$0xff]
    %v1239 = vld [vmem:[#allocation7 + $0x2e0] sm:$0xff]
    %v1240 = vld [vmem:[#allocation7 + $0x2e8] sm:$0xff]
    %v1241 = vld [vmem:[#allocation7 + $0x2f0] sm:$0xff]
    %v1242 = vld [vmem:[#allocation7 + $0x2f8] sm:$0xff]
    %v1243 = vld [vmem:[#allocation7 + $0x300] sm:$0xff]
    %v1244 = vld [vmem:[#allocation7 + $0x308] sm:$0xff]
    %v1245 = vld [vmem:[#allocation7 + $0x310] sm:$0xff]
    %v1246 = vld [vmem:[#allocation7 + $0x318] sm:$0xff]
    %v1247 = vld [vmem:[#allocation7 + $0x320] sm:$0xff]
    %v1248 = vld [vmem:[#allocation7 + $0x328] sm:$0xff]
    %v1249 = vld [vmem:[#allocation7 + $0x330] sm:$0xff]
    %v1250 = vld [vmem:[#allocation7 + $0x338] sm:$0xff]
    %v1251 = vld [vmem:[#allocation7 + $0x340] sm:$0xff]
    %v1252 = vld [vmem:[#allocation7 + $0x348] sm:$0xff]
    %v1253 = vld [vmem:[#allocation7 + $0x350] sm:$0xff]
    %v1254 = vld [vmem:[#allocation7 + $0x358] sm:$0xff]
    %v1255 = vld [vmem:[#allocation7 + $0x360] sm:$0xff]
    %v1256 = vld [vmem:[#allocation7 + $0x368] sm:$0xff]
    %v1257 = vld [vmem:[#allocation7 + $0x370] sm:$0xff]
    %v1258 = vld [vmem:[#allocation7 + $0x378] sm:$0xff]
    %v1259 = vld [vmem:[#allocation7 + $0x380] sm:$0xff]
    %v1260 = vld [vmem:[#allocation7 + $0x388] sm:$0xff]
    %v1261 = vld [vmem:[#allocation7 + $0x390] sm:$0xff]
    %v1262 = vld [vmem:[#allocation7 + $0x398] sm:$0xff]
    %v1263 = vld [vmem:[#allocation7 + $0x3a0] sm:$0xff]
    %v1264 = vld [vmem:[#allocation7 + $0x3a8] sm:$0xff]
    %v1265 = vld [vmem:[#allocation7 + $0x3b0] sm:$0xff]
    %v1266 = vld [vmem:[#allocation7 + $0x3b8] sm:$0xff]
    %v1267 = vld [vmem:[#allocation7 + $0x3c0] sm:$0xff]
    %v1268 = vld [vmem:[#allocation7 + $0x3c8] sm:$0xff]
    %v1269 = vld [vmem:[#allocation7 + $0x3d0] sm:$0xff]
    %v1270 = vld [vmem:[#allocation7 + $0x3d8] sm:$0xff]
    %v1271 = vld [vmem:[#allocation7 + $0x3e0] sm:$0xff]
    %v1272 = vld [vmem:[#allocation7 + $0x3e8] sm:$0xff]
    %v1273 = vld [vmem:[#allocation7 + $0x3f0] sm:$0xff]
    %v1274 = vld [vmem:[#allocation7 + $0x3f8] sm:$0xff]
    %1275 = vmatprep.subr.mxu0 %v1208
    %1276 = vmatpush1.msra.mxu0 %v1207
    %1277 = vmatprep.subr.mxu0 %v1204
    %1278 = vmatpush1.msra.mxu0 %v1203
    %1279 = vmatprep.subr.mxu0 %v1200
    %1280 = vmatpush1.msra.mxu0 %v1199
    %1281 = vmatprep.subr.mxu0 %v1196
    %1282 = vmatpush1.msra.mxu0 %v1195
    %1283 = vmatprep.subr.mxu0 %v1192
    %1284 = vmatpush1.msra.mxu0 %v1191
    %1285 = vmatprep.subr.mxu0 %v1188
    %1286 = vmatpush1.msra.mxu0 %v1187
    %1287 = vmatprep.subr.mxu0 %v1184
    %1288 = vmatpush1.msra.mxu0 %v1183
    %1289 = vmatprep.subr.mxu0 %v1180
    %1290 = vmatpush1.msra.mxu0 %v1179
    %1291 = vmatprep.subr.mxu0 %v1176
    %1292 = vmatpush1.msra.mxu0 %v1175
    %1293 = vmatprep.subr.mxu0 %v1172
    %1294 = vmatpush1.msra.mxu0 %v1171
    %1295 = vmatprep.subr.mxu0 %v1168
    %1296 = vmatpush1.msra.mxu0 %v1167
    %1297 = vmatprep.subr.mxu0 %v1164
    %1298 = vmatpush1.msra.mxu0 %v1163
    %1299 = vmatprep.subr.mxu0 %v1160
    %1300 = vmatpush1.msra.mxu0 %v1159
    %1301 = vmatprep.subr.mxu0 %v1156
    %1302 = vmatpush1.msra.mxu0 %v1155
    %1303 = vmatprep.subr.mxu0 %v1152
    %1304 = vmatpush1.msra.mxu0 %v1151
    %1305 = vmatprep.subr.mxu0 %v1148
    %1306 = vmatpush1.msra.mxu0 %v1147
    %1307 = vmatprep.subr.mxu0 %v1272
    %1308 = vmatpush2.msra.mxu0 %v1271
    %1309 = vmatprep.subr.mxu0 %v1268
    %1310 = vmatpush2.msra.mxu0 %v1267
    %1311 = vmatprep.subr.mxu0 %v1264
    %1312 = vmatpush2.msra.mxu0 %v1263
    %1313 = vmatprep.subr.mxu0 %v1260
    %1314 = vmatpush2.msra.mxu0 %v1259
    %1315 = vmatprep.subr.mxu0 %v1256
    %1316 = vmatpush2.msra.mxu0 %v1255
    %1317 = vmatprep.subr.mxu0 %v1252
    %1318 = vmatpush2.msra.mxu0 %v1251
    %1319 = vmatprep.subr.mxu0 %v1248
    %1320 = vmatpush2.msra.mxu0 %v1247
    %1321 = vmatprep.subr.mxu0 %v1244
    %1322 = vmatpush2.msra.mxu0 %v1243
    %1323 = vmatprep.subr.mxu0 %v1240
    %1324 = vmatpush2.msra.mxu0 %v1239
    %1325 = vmatprep.subr.mxu0 %v1236
    %1326 = vmatpush2.msra.mxu0 %v1235
    %1327 = vmatprep.subr.mxu0 %v1232
    %1328 = vmatpush2.msra.mxu0 %v1231
    %1329 = vmatprep.subr.mxu0 %v1228
    %1330 = vmatpush2.msra.mxu0 %v1227
    %1331 = vmatprep.subr.mxu0 %v1224
    %1332 = vmatpush2.msra.mxu0 %v1223
    %1333 = vmatprep.subr.mxu0 %v1220
    %1334 = vmatpush2.msra.mxu0 %v1219
    %1335 = vmatprep.subr.mxu0 %v1216
    %1336 = vmatpush2.msra.mxu0 %v1215
    %1337 = vmatprep.subr.mxu0 %v1212
    %1338 = vmatpush2.msra.mxu0 %v1211
    %1339 = vmatprep.mubr.f32.mxu0 %v1146
    %1340 = vmatmul.mubr.f32.gmra.mxu0 %v1145
    %v1341 = vpop.f32.mrf.mxu0
    %v1342 = vadd.f32 %v173, %v1341
    %v1343 = vpop.f32.mrf.mxu0
    %v1344 = vadd.f32 %v177, %v1343
    %1345 = vdwg.mxu0
    %1346 = vmatprep.subr.mxu0 %v1210
    %1347 = vmatpush1.msra.mxu0 %v1209
    %1348 = vmatprep.subr.mxu0 %v1206
    %1349 = vmatpush1.msra.mxu0 %v1205
    %1350 = vmatprep.subr.mxu0 %v1202
    %1351 = vmatpush1.msra.mxu0 %v1201
    %1352 = vmatprep.subr.mxu0 %v1198
    %1353 = vmatpush1.msra.mxu0 %v1197
    %1354 = vmatprep.subr.mxu0 %v1194
    %1355 = vmatpush1.msra.mxu0 %v1193
    %1356 = vmatprep.subr.mxu0 %v1190
    %1357 = vmatpush1.msra.mxu0 %v1189
    %1358 = vmatprep.subr.mxu0 %v1186
    %1359 = vmatpush1.msra.mxu0 %v1185
    %1360 = vmatprep.subr.mxu0 %v1182
    %1361 = vmatpush1.msra.mxu0 %v1181
    %1362 = vmatprep.subr.mxu0 %v1178
    %1363 = vmatpush1.msra.mxu0 %v1177
    %1364 = vmatprep.subr.mxu0 %v1174
    %1365 = vmatpush1.msra.mxu0 %v1173
    %1366 = vmatprep.subr.mxu0 %v1170
    %1367 = vmatpush1.msra.mxu0 %v1169
    %1368 = vmatprep.subr.mxu0 %v1166
    %1369 = vmatpush1.msra.mxu0 %v1165
    %1370 = vmatprep.subr.mxu0 %v1162
    %1371 = vmatpush1.msra.mxu0 %v1161
    %1372 = vmatprep.subr.mxu0 %v1158
    %1373 = vmatpush1.msra.mxu0 %v1157
    %1374 = vmatprep.subr.mxu0 %v1154
    %1375 = vmatpush1.msra.mxu0 %v1153
    %1376 = vmatprep.subr.mxu0 %v1150
    %1377 = vmatpush1.msra.mxu0 %v1149
    %1378 = vmatprep.subr.mxu0 %v1274
    %1379 = vmatpush2.msra.mxu0 %v1273
    %1380 = vmatprep.subr.mxu0 %v1270
    %1381 = vmatpush2.msra.mxu0 %v1269
    %1382 = vmatprep.subr.mxu0 %v1266
    %1383 = vmatpush2.msra.mxu0 %v1265
    %1384 = vmatprep.subr.mxu0 %v1262
    %1385 = vmatpush2.msra.mxu0 %v1261
    %1386 = vmatprep.subr.mxu0 %v1258
    %1387 = vmatpush2.msra.mxu0 %v1257
    %1388 = vmatprep.subr.mxu0 %v1254
    %1389 = vmatpush2.msra.mxu0 %v1253
    %1390 = vmatprep.subr.mxu0 %v1250
    %1391 = vmatpush2.msra.mxu0 %v1249
    %1392 = vmatprep.subr.mxu0 %v1246
    %1393 = vmatpush2.msra.mxu0 %v1245
    %1394 = vmatprep.subr.mxu0 %v1242
    %1395 = vmatpush2.msra.mxu0 %v1241
    %1396 = vmatprep.subr.mxu0 %v1238
    %1397 = vmatpush2.msra.mxu0 %v1237
    %1398 = vmatprep.subr.mxu0 %v1234
    %1399 = vmatpush2.msra.mxu0 %v1233
    %1400 = vmatprep.subr.mxu0 %v1230
    %1401 = vmatpush2.msra.mxu0 %v1229
    %1402 = vmatprep.subr.mxu0 %v1226
    %1403 = vmatpush2.msra.mxu0 %v1225
    %1404 = vmatprep.subr.mxu0 %v1222
    %1405 = vmatpush2.msra.mxu0 %v1221
    %1406 = vmatprep.subr.mxu0 %v1218
    %1407 = vmatpush2.msra.mxu0 %v1217
    %1408 = vmatprep.subr.mxu0 %v1214
    %1409 = vmatpush2.msra.mxu0 %v1213
    %1410 = vmatprep.mubr.f32.mxu0 %v1146
    %1411 = vmatmul.mubr.f32.gmra.mxu0 %v1145
    %v1412 = vpop.f32.mrf.mxu0
    %v1413 = vadd.f32 %v181, %v1412
    %v1414 = vpop.f32.mrf.mxu0
    %v1415 = vadd.f32 %v185, %v1414
    %1416 = vdwg.mxu0
    %v1417 = vld [vmem:[#allocation8] sm:$0xff]
    %v1418 = vld [vmem:[#allocation8 + $0x8] sm:$0xff]
    %v1419 = vld [vmem:[#allocation8 + $0x10] sm:$0xff]
    %v1420 = vld [vmem:[#allocation8 + $0x18] sm:$0xff]
    %v1421 = vld [vmem:[#allocation8 + $0x20] sm:$0xff]
    %v1422 = vld [vmem:[#allocation8 + $0x28] sm:$0xff]
    %v1423 = vld [vmem:[#allocation8 + $0x30] sm:$0xff]
    %v1424 = vld [vmem:[#allocation8 + $0x38] sm:$0xff]
    %v1425 = vld [vmem:[#allocation8 + $0x40] sm:$0xff]
    %v1426 = vld [vmem:[#allocation8 + $0x48] sm:$0xff]
    %v1427 = vld [vmem:[#allocation8 + $0x50] sm:$0xff]
    %v1428 = vld [vmem:[#allocation8 + $0x58] sm:$0xff]
    %v1429 = vld [vmem:[#allocation8 + $0x60] sm:$0xff]
    %v1430 = vld [vmem:[#allocation8 + $0x68] sm:$0xff]
    %v1431 = vld [vmem:[#allocation8 + $0x70] sm:$0xff]
    %v1432 = vld [vmem:[#allocation8 + $0x78] sm:$0xff]
    %v1433 = vld [vmem:[#allocation8 + $0x80] sm:$0xff]
    %v1434 = vld [vmem:[#allocation8 + $0x88] sm:$0xff]
    %v1435 = vld [vmem:[#allocation8 + $0x90] sm:$0xff]
    %v1436 = vld [vmem:[#allocation8 + $0x98] sm:$0xff]
    %v1437 = vld [vmem:[#allocation8 + $0xa0] sm:$0xff]
    %v1438 = vld [vmem:[#allocation8 + $0xa8] sm:$0xff]
    %v1439 = vld [vmem:[#allocation8 + $0xb0] sm:$0xff]
    %v1440 = vld [vmem:[#allocation8 + $0xb8] sm:$0xff]
    %v1441 = vld [vmem:[#allocation8 + $0xc0] sm:$0xff]
    %v1442 = vld [vmem:[#allocation8 + $0xc8] sm:$0xff]
    %v1443 = vld [vmem:[#allocation8 + $0xd0] sm:$0xff]
    %v1444 = vld [vmem:[#allocation8 + $0xd8] sm:$0xff]
    %v1445 = vld [vmem:[#allocation8 + $0xe0] sm:$0xff]
    %v1446 = vld [vmem:[#allocation8 + $0xe8] sm:$0xff]
    %v1447 = vld [vmem:[#allocation8 + $0xf0] sm:$0xff]
    %v1448 = vld [vmem:[#allocation8 + $0xf8] sm:$0xff]
    %v1449 = vld [vmem:[#allocation8 + $0x100] sm:$0xff]
    %v1450 = vld [vmem:[#allocation8 + $0x108] sm:$0xff]
    %v1451 = vld [vmem:[#allocation8 + $0x110] sm:$0xff]
    %v1452 = vld [vmem:[#allocation8 + $0x118] sm:$0xff]
    %v1453 = vld [vmem:[#allocation8 + $0x120] sm:$0xff]
    %v1454 = vld [vmem:[#allocation8 + $0x128] sm:$0xff]
    %v1455 = vld [vmem:[#allocation8 + $0x130] sm:$0xff]
    %v1456 = vld [vmem:[#allocation8 + $0x138] sm:$0xff]
    %v1457 = vld [vmem:[#allocation8 + $0x140] sm:$0xff]
    %v1458 = vld [vmem:[#allocation8 + $0x148] sm:$0xff]
    %v1459 = vld [vmem:[#allocation8 + $0x150] sm:$0xff]
    %v1460 = vld [vmem:[#allocation8 + $0x158] sm:$0xff]
    %v1461 = vld [vmem:[#allocation8 + $0x160] sm:$0xff]
    %v1462 = vld [vmem:[#allocation8 + $0x168] sm:$0xff]
    %v1463 = vld [vmem:[#allocation8 + $0x170] sm:$0xff]
    %v1464 = vld [vmem:[#allocation8 + $0x178] sm:$0xff]
    %v1465 = vld [vmem:[#allocation8 + $0x180] sm:$0xff]
    %v1466 = vld [vmem:[#allocation8 + $0x188] sm:$0xff]
    %v1467 = vld [vmem:[#allocation8 + $0x190] sm:$0xff]
    %v1468 = vld [vmem:[#allocation8 + $0x198] sm:$0xff]
    %v1469 = vld [vmem:[#allocation8 + $0x1a0] sm:$0xff]
    %v1470 = vld [vmem:[#allocation8 + $0x1a8] sm:$0xff]
    %v1471 = vld [vmem:[#allocation8 + $0x1b0] sm:$0xff]
    %v1472 = vld [vmem:[#allocation8 + $0x1b8] sm:$0xff]
    %v1473 = vld [vmem:[#allocation8 + $0x1c0] sm:$0xff]
    %v1474 = vld [vmem:[#allocation8 + $0x1c8] sm:$0xff]
    %v1475 = vld [vmem:[#allocation8 + $0x1d0] sm:$0xff]
    %v1476 = vld [vmem:[#allocation8 + $0x1d8] sm:$0xff]
    %v1477 = vld [vmem:[#allocation8 + $0x1e0] sm:$0xff]
    %v1478 = vld [vmem:[#allocation8 + $0x1e8] sm:$0xff]
    %v1479 = vld [vmem:[#allocation8 + $0x1f0] sm:$0xff]
    %v1480 = vld [vmem:[#allocation8 + $0x1f8] sm:$0xff]
    %1481 = vmatprep.subr.mxu0 %v1478
    %1482 = vmatpush1.msra.mxu0 %v1477
    %1483 = vmatprep.subr.mxu0 %v1474
    %1484 = vmatpush1.msra.mxu0 %v1473
    %1485 = vmatprep.subr.mxu0 %v1470
    %1486 = vmatpush1.msra.mxu0 %v1469
    %1487 = vmatprep.subr.mxu0 %v1466
    %1488 = vmatpush1.msra.mxu0 %v1465
    %1489 = vmatprep.subr.mxu0 %v1462
    %1490 = vmatpush1.msra.mxu0 %v1461
    %1491 = vmatprep.subr.mxu0 %v1458
    %1492 = vmatpush1.msra.mxu0 %v1457
    %1493 = vmatprep.subr.mxu0 %v1454
    %1494 = vmatpush1.msra.mxu0 %v1453
    %1495 = vmatprep.subr.mxu0 %v1450
    %1496 = vmatpush1.msra.mxu0 %v1449
    %1497 = vmatprep.subr.mxu0 %v1446
    %1498 = vmatpush1.msra.mxu0 %v1445
    %1499 = vmatprep.subr.mxu0 %v1442
    %1500 = vmatpush1.msra.mxu0 %v1441
    %1501 = vmatprep.subr.mxu0 %v1438
    %1502 = vmatpush1.msra.mxu0 %v1437
    %1503 = vmatprep.subr.mxu0 %v1434
    %1504 = vmatpush1.msra.mxu0 %v1433
    %1505 = vmatprep.subr.mxu0 %v1430
    %1506 = vmatpush1.msra.mxu0 %v1429
    %1507 = vmatprep.subr.mxu0 %v1426
    %1508 = vmatpush1.msra.mxu0 %v1425
    %1509 = vmatprep.subr.mxu0 %v1422
    %1510 = vmatpush1.msra.mxu0 %v1421
    %1511 = vmatprep.subr.mxu0 %v1418
    %1512 = vmatpush1.msra.mxu0 %v1417
    %1513 = vmatprep.subr.mxu0 0.0
    %1514 = vmatpush2.msra.mxu0 0.0
    %1515 = vmatprep.subr.mxu0 0.0
    %1516 = vmatpush2.msra.mxu0 0.0
    %1517 = vmatprep.subr.mxu0 0.0
    %1518 = vmatpush2.msra.mxu0 0.0
    %1519 = vmatprep.subr.mxu0 0.0
    %1520 = vmatpush2.msra.mxu0 0.0
    %1521 = vmatprep.subr.mxu0 0.0
    %1522 = vmatpush2.msra.mxu0 0.0
    %1523 = vmatprep.subr.mxu0 0.0
    %1524 = vmatpush2.msra.mxu0 0.0
    %1525 = vmatprep.subr.mxu0 0.0
    %1526 = vmatpush2.msra.mxu0 0.0
    %1527 = vmatprep.subr.mxu0 0.0
    %1528 = vmatpush2.msra.mxu0 0.0
    %1529 = vmatprep.subr.mxu0 0.0
    %1530 = vmatpush2.msra.mxu0 0.0
    %1531 = vmatprep.subr.mxu0 0.0
    %1532 = vmatpush2.msra.mxu0 0.0
    %1533 = vmatprep.subr.mxu0 0.0
    %1534 = vmatpush2.msra.mxu0 0.0
    %1535 = vmatprep.subr.mxu0 0.0
    %1536 = vmatpush2.msra.mxu0 0.0
    %1537 = vmatprep.subr.mxu0 0.0
    %1538 = vmatpush2.msra.mxu0 0.0
    %1539 = vmatprep.subr.mxu0 0.0
    %1540 = vmatpush2.msra.mxu0 0.0
    %1541 = vmatprep.subr.mxu0 0.0
    %1542 = vmatpush2.msra.mxu0 0.0
    %1543 = vmatprep.subr.mxu0 0.0
    %1544 = vmatpush2.msra.mxu0 0.0
    %1545 = vmatprep.mubr.f32.mxu0 0.0
    %1546 = vmatmul.mubr.f32.gmra.mxu0 %v737
    %v1547 = vpop.f32.mrf.mxu0
    %v1548 = vadd.f32 0.0, %v1547
    %v1549 = vpop.f32.mrf.mxu0
    %v1550 = vadd.f32 0.0, %v1549
    %1551 = vdwg.mxu0
    %1552 = vmatprep.subr.mxu0 %v1480
    %1553 = vmatpush1.msra.mxu0 %v1479
    %1554 = vmatprep.subr.mxu0 %v1476
    %1555 = vmatpush1.msra.mxu0 %v1475
    %1556 = vmatprep.subr.mxu0 %v1472
    %1557 = vmatpush1.msra.mxu0 %v1471
    %1558 = vmatprep.subr.mxu0 %v1468
    %1559 = vmatpush1.msra.mxu0 %v1467
    %1560 = vmatprep.subr.mxu0 %v1464
    %1561 = vmatpush1.msra.mxu0 %v1463
    %1562 = vmatprep.subr.mxu0 %v1460
    %1563 = vmatpush1.msra.mxu0 %v1459
    %1564 = vmatprep.subr.mxu0 %v1456
    %1565 = vmatpush1.msra.mxu0 %v1455
    %1566 = vmatprep.subr.mxu0 %v1452
    %1567 = vmatpush1.msra.mxu0 %v1451
    %1568 = vmatprep.subr.mxu0 %v1448
    %1569 = vmatpush1.msra.mxu0 %v1447
    %1570 = vmatprep.subr.mxu0 %v1444
    %1571 = vmatpush1.msra.mxu0 %v1443
    %1572 = vmatprep.subr.mxu0 %v1440
    %1573 = vmatpush1.msra.mxu0 %v1439
    %1574 = vmatprep.subr.mxu0 %v1436
    %1575 = vmatpush1.msra.mxu0 %v1435
    %1576 = vmatprep.subr.mxu0 %v1432
    %1577 = vmatpush1.msra.mxu0 %v1431
    %1578 = vmatprep.subr.mxu0 %v1428
    %1579 = vmatpush1.msra.mxu0 %v1427
    %1580 = vmatprep.subr.mxu0 %v1424
    %1581 = vmatpush1.msra.mxu0 %v1423
    %1582 = vmatprep.subr.mxu0 %v1420
    %1583 = vmatpush1.msra.mxu0 %v1419
    %1584 = vmatprep.subr.mxu0 0.0
    %1585 = vmatpush2.msra.mxu0 0.0
    %1586 = vmatprep.subr.mxu0 0.0
    %1587 = vmatpush2.msra.mxu0 0.0
    %1588 = vmatprep.subr.mxu0 0.0
    %1589 = vmatpush2.msra.mxu0 0.0
    %1590 = vmatprep.subr.mxu0 0.0
    %1591 = vmatpush2.msra.mxu0 0.0
    %1592 = vmatprep.subr.mxu0 0.0
    %1593 = vmatpush2.msra.mxu0 0.0
    %1594 = vmatprep.subr.mxu0 0.0
    %1595 = vmatpush2.msra.mxu0 0.0
    %1596 = vmatprep.subr.mxu0 0.0
    %1597 = vmatpush2.msra.mxu0 0.0
    %1598 = vmatprep.subr.mxu0 0.0
    %1599 = vmatpush2.msra.mxu0 0.0
    %1600 = vmatprep.subr.mxu0 0.0
    %1601 = vmatpush2.msra.mxu0 0.0
    %1602 = vmatprep.subr.mxu0 0.0
    %1603 = vmatpush2.msra.mxu0 0.0
    %1604 = vmatprep.subr.mxu0 0.0
    %1605 = vmatpush2.msra.mxu0 0.0
    %1606 = vmatprep.subr.mxu0 0.0
    %1607 = vmatpush2.msra.mxu0 0.0
    %1608 = vmatprep.subr.mxu0 0.0
    %1609 = vmatpush2.msra.mxu0 0.0
    %1610 = vmatprep.subr.mxu0 0.0
    %1611 = vmatpush2.msra.mxu0 0.0
    %1612 = vmatprep.subr.mxu0 0.0
    %1613 = vmatpush2.msra.mxu0 0.0
    %1614 = vmatprep.subr.mxu0 0.0
    %1615 = vmatpush2.msra.mxu0 0.0
    %1616 = vmatprep.mubr.f32.mxu0 0.0
    %1617 = vmatmul.mubr.f32.gmra.mxu0 %v737
    %v1618 = vpop.f32.mrf.mxu0
    %v1619 = vadd.f32 0.0, %v1618
    %v1620 = vpop.f32.mrf.mxu0
    %v1621 = vadd.f32 0.0, %v1620
    %1622 = vdwg.mxu0
    %v1623 = vadd.f32 %v1342, %v1548
    %v1624 = vadd.f32 %v1344, %v1550
    %v1625 = vadd.f32 %v1413, %v1619
    %v1626 = vadd.f32 %v1415, %v1621
    %v1627 = vxor.u32 %v1623, 2147483648
    %v1628 = vmul.f32 %v1627, 1.442695
    %v1629 = vpow.pop %v1628
    %v1630 = vadd.f32 %v1629, 1.0
    %v1631 = vrcp.pop %v1630
    %v1632 = vmul.f32 1.0, %v1631
    %v1633 = vxor.u32 %v1624, 2147483648
    %v1634 = vmul.f32 %v1633, 1.442695
    %v1635 = vpow.pop %v1634
    %v1636 = vadd.f32 %v1635, 1.0
    %v1637 = vrcp.pop %v1636
    %v1638 = vmul.f32 1.0, %v1637
    %v1639 = vtanh.pop %v1625
    %v1640 = vxor.u32 %v1626, 2147483648
    %v1641 = vmul.f32 %v1640, 1.442695
    %v1642 = vpow.pop %v1641
    %v1643 = vadd.f32 %v1642, 1.0
    %v1644 = vrcp.pop %v1643
    %v1645 = vmul.f32 1.0, %v1644
    %v1646 = vmul.f32 %v1638, %v735
    %v1647 = vmul.f32 %v1632, %v1639
    %v1648 = vadd.f32 %v1646, %v1647
    %v1649 = vtanh.pop %v1648
    %v1650 = vmul.f32 %v1645, %v1649
    %v1651 = vld [vmem:[#allocation11] sm:$0xff]
    %v1652 = vld [vmem:[#allocation11 + $0x8] sm:$0xff]
    %v1653 = vld [vmem:[#allocation11 + $0x10] sm:$0xff]
    %v1654 = vld [vmem:[#allocation11 + $0x18] sm:$0xff]
    %v1655 = vld [vmem:[#allocation11 + $0x20] sm:$0xff]
    %v1656 = vld [vmem:[#allocation11 + $0x28] sm:$0xff]
    %v1657 = vld [vmem:[#allocation11 + $0x30] sm:$0xff]
    %v1658 = vld [vmem:[#allocation11 + $0x38] sm:$0xff]
    %v1659 = vld [vmem:[#allocation11 + $0x40] sm:$0xff]
    %v1660 = vld [vmem:[#allocation11 + $0x48] sm:$0xff]
    %v1661 = vld [vmem:[#allocation11 + $0x50] sm:$0xff]
    %v1662 = vld [vmem:[#allocation11 + $0x58] sm:$0xff]
    %v1663 = vld [vmem:[#allocation11 + $0x60] sm:$0xff]
    %v1664 = vld [vmem:[#allocation11 + $0x68] sm:$0xff]
    %v1665 = vld [vmem:[#allocation11 + $0x70] sm:$0xff]
    %v1666 = vld [vmem:[#allocation11 + $0x78] sm:$0xff]
    %v1667 = vld [vmem:[#allocation11 + $0x80] sm:$0xff]
    %v1668 = vld [vmem:[#allocation11 + $0x88] sm:$0xff]
    %v1669 = vld [vmem:[#allocation11 + $0x90] sm:$0xff]
    %v1670 = vld [vmem:[#allocation11 + $0x98] sm:$0xff]
    %v1671 = vld [vmem:[#allocation11 + $0xa0] sm:$0xff]
    %v1672 = vld [vmem:[#allocation11 + $0xa8] sm:$0xff]
    %v1673 = vld [vmem:[#allocation11 + $0xb0] sm:$0xff]
    %v1674 = vld [vmem:[#allocation11 + $0xb8] sm:$0xff]
    %v1675 = vld [vmem:[#allocation11 + $0xc0] sm:$0xff]
    %v1676 = vld [vmem:[#allocation11 + $0xc8] sm:$0xff]
    %v1677 = vld [vmem:[#allocation11 + $0xd0] sm:$0xff]
    %v1678 = vld [vmem:[#allocation11 + $0xd8] sm:$0xff]
    %v1679 = vld [vmem:[#allocation11 + $0xe0] sm:$0xff]
    %v1680 = vld [vmem:[#allocation11 + $0xe8] sm:$0xff]
    %v1681 = vld [vmem:[#allocation11 + $0xf0] sm:$0xff]
    %v1682 = vld [vmem:[#allocation11 + $0xf8] sm:$0xff]
    %v1683 = vld [vmem:[#allocation11 + $0x100] sm:$0xff]
    %v1684 = vld [vmem:[#allocation11 + $0x108] sm:$0xff]
    %v1685 = vld [vmem:[#allocation11 + $0x110] sm:$0xff]
    %v1686 = vld [vmem:[#allocation11 + $0x118] sm:$0xff]
    %v1687 = vld [vmem:[#allocation11 + $0x120] sm:$0xff]
    %v1688 = vld [vmem:[#allocation11 + $0x128] sm:$0xff]
    %v1689 = vld [vmem:[#allocation11 + $0x130] sm:$0xff]
    %v1690 = vld [vmem:[#allocation11 + $0x138] sm:$0xff]
    %v1691 = vld [vmem:[#allocation11 + $0x140] sm:$0xff]
    %v1692 = vld [vmem:[#allocation11 + $0x148] sm:$0xff]
    %v1693 = vld [vmem:[#allocation11 + $0x150] sm:$0xff]
    %v1694 = vld [vmem:[#allocation11 + $0x158] sm:$0xff]
    %v1695 = vld [vmem:[#allocation11 + $0x160] sm:$0xff]
    %v1696 = vld [vmem:[#allocation11 + $0x168] sm:$0xff]
    %v1697 = vld [vmem:[#allocation11 + $0x170] sm:$0xff]
    %v1698 = vld [vmem:[#allocation11 + $0x178] sm:$0xff]
    %v1699 = vld [vmem:[#allocation11 + $0x180] sm:$0xff]
    %v1700 = vld [vmem:[#allocation11 + $0x188] sm:$0xff]
    %v1701 = vld [vmem:[#allocation11 + $0x190] sm:$0xff]
    %v1702 = vld [vmem:[#allocation11 + $0x198] sm:$0xff]
    %v1703 = vld [vmem:[#allocation11 + $0x1a0] sm:$0xff]
    %v1704 = vld [vmem:[#allocation11 + $0x1a8] sm:$0xff]
    %v1705 = vld [vmem:[#allocation11 + $0x1b0] sm:$0xff]
    %v1706 = vld [vmem:[#allocation11 + $0x1b8] sm:$0xff]
    %v1707 = vld [vmem:[#allocation11 + $0x1c0] sm:$0xff]
    %v1708 = vld [vmem:[#allocation11 + $0x1c8] sm:$0xff]
    %v1709 = vld [vmem:[#allocation11 + $0x1d0] sm:$0xff]
    %v1710 = vld [vmem:[#allocation11 + $0x1d8] sm:$0xff]
    %v1711 = vld [vmem:[#allocation11 + $0x1e0] sm:$0xff]
    %v1712 = vld [vmem:[#allocation11 + $0x1e8] sm:$0xff]
    %v1713 = vld [vmem:[#allocation11 + $0x1f0] sm:$0xff]
    %v1714 = vld [vmem:[#allocation11 + $0x1f8] sm:$0xff]
    %v1715 = vld [vmem:[#allocation11 + $0x200] sm:$0xff]
    %v1716 = vld [vmem:[#allocation11 + $0x208] sm:$0xff]
    %v1717 = vld [vmem:[#allocation11 + $0x210] sm:$0xff]
    %v1718 = vld [vmem:[#allocation11 + $0x218] sm:$0xff]
    %v1719 = vld [vmem:[#allocation11 + $0x220] sm:$0xff]
    %v1720 = vld [vmem:[#allocation11 + $0x228] sm:$0xff]
    %v1721 = vld [vmem:[#allocation11 + $0x230] sm:$0xff]
    %v1722 = vld [vmem:[#allocation11 + $0x238] sm:$0xff]
    %v1723 = vld [vmem:[#allocation11 + $0x240] sm:$0xff]
    %v1724 = vld [vmem:[#allocation11 + $0x248] sm:$0xff]
    %v1725 = vld [vmem:[#allocation11 + $0x250] sm:$0xff]
    %v1726 = vld [vmem:[#allocation11 + $0x258] sm:$0xff]
    %v1727 = vld [vmem:[#allocation11 + $0x260] sm:$0xff]
    %v1728 = vld [vmem:[#allocation11 + $0x268] sm:$0xff]
    %v1729 = vld [vmem:[#allocation11 + $0x270] sm:$0xff]
    %v1730 = vld [vmem:[#allocation11 + $0x278] sm:$0xff]
    %v1731 = vld [vmem:[#allocation11 + $0x280] sm:$0xff]
    %v1732 = vld [vmem:[#allocation11 + $0x288] sm:$0xff]
    %v1733 = vld [vmem:[#allocation11 + $0x290] sm:$0xff]
    %v1734 = vld [vmem:[#allocation11 + $0x298] sm:$0xff]
    %v1735 = vld [vmem:[#allocation11 + $0x2a0] sm:$0xff]
    %v1736 = vld [vmem:[#allocation11 + $0x2a8] sm:$0xff]
    %v1737 = vld [vmem:[#allocation11 + $0x2b0] sm:$0xff]
    %v1738 = vld [vmem:[#allocation11 + $0x2b8] sm:$0xff]
    %v1739 = vld [vmem:[#allocation11 + $0x2c0] sm:$0xff]
    %v1740 = vld [vmem:[#allocation11 + $0x2c8] sm:$0xff]
    %v1741 = vld [vmem:[#allocation11 + $0x2d0] sm:$0xff]
    %v1742 = vld [vmem:[#allocation11 + $0x2d8] sm:$0xff]
    %v1743 = vld [vmem:[#allocation11 + $0x2e0] sm:$0xff]
    %v1744 = vld [vmem:[#allocation11 + $0x2e8] sm:$0xff]
    %v1745 = vld [vmem:[#allocation11 + $0x2f0] sm:$0xff]
    %v1746 = vld [vmem:[#allocation11 + $0x2f8] sm:$0xff]
    %v1747 = vld [vmem:[#allocation11 + $0x300] sm:$0xff]
    %v1748 = vld [vmem:[#allocation11 + $0x308] sm:$0xff]
    %v1749 = vld [vmem:[#allocation11 + $0x310] sm:$0xff]
    %v1750 = vld [vmem:[#allocation11 + $0x318] sm:$0xff]
    %v1751 = vld [vmem:[#allocation11 + $0x320] sm:$0xff]
    %v1752 = vld [vmem:[#allocation11 + $0x328] sm:$0xff]
    %v1753 = vld [vmem:[#allocation11 + $0x330] sm:$0xff]
    %v1754 = vld [vmem:[#allocation11 + $0x338] sm:$0xff]
    %v1755 = vld [vmem:[#allocation11 + $0x340] sm:$0xff]
    %v1756 = vld [vmem:[#allocation11 + $0x348] sm:$0xff]
    %v1757 = vld [vmem:[#allocation11 + $0x350] sm:$0xff]
    %v1758 = vld [vmem:[#allocation11 + $0x358] sm:$0xff]
    %v1759 = vld [vmem:[#allocation11 + $0x360] sm:$0xff]
    %v1760 = vld [vmem:[#allocation11 + $0x368] sm:$0xff]
    %v1761 = vld [vmem:[#allocation11 + $0x370] sm:$0xff]
    %v1762 = vld [vmem:[#allocation11 + $0x378] sm:$0xff]
    %v1763 = vld [vmem:[#allocation11 + $0x380] sm:$0xff]
    %v1764 = vld [vmem:[#allocation11 + $0x388] sm:$0xff]
    %v1765 = vld [vmem:[#allocation11 + $0x390] sm:$0xff]
    %v1766 = vld [vmem:[#allocation11 + $0x398] sm:$0xff]
    %v1767 = vld [vmem:[#allocation11 + $0x3a0] sm:$0xff]
    %v1768 = vld [vmem:[#allocation11 + $0x3a8] sm:$0xff]
    %v1769 = vld [vmem:[#allocation11 + $0x3b0] sm:$0xff]
    %v1770 = vld [vmem:[#allocation11 + $0x3b8] sm:$0xff]
    %v1771 = vld [vmem:[#allocation11 + $0x3c0] sm:$0xff]
    %v1772 = vld [vmem:[#allocation11 + $0x3c8] sm:$0xff]
    %v1773 = vld [vmem:[#allocation11 + $0x3d0] sm:$0xff]
    %v1774 = vld [vmem:[#allocation11 + $0x3d8] sm:$0xff]
    %v1775 = vld [vmem:[#allocation11 + $0x3e0] sm:$0xff]
    %v1776 = vld [vmem:[#allocation11 + $0x3e8] sm:$0xff]
    %v1777 = vld [vmem:[#allocation11 + $0x3f0] sm:$0xff]
    %v1778 = vld [vmem:[#allocation11 + $0x3f8] sm:$0xff]
    %1779 = vmatprep.subr.mxu0 %v1712
    %1780 = vmatpush1.msra.mxu0 %v1711
    %1781 = vmatprep.subr.mxu0 %v1708
    %1782 = vmatpush1.msra.mxu0 %v1707
    %1783 = vmatprep.subr.mxu0 %v1704
    %1784 = vmatpush1.msra.mxu0 %v1703
    %1785 = vmatprep.subr.mxu0 %v1700
    %1786 = vmatpush1.msra.mxu0 %v1699
    %1787 = vmatprep.subr.mxu0 %v1696
    %1788 = vmatpush1.msra.mxu0 %v1695
    %1789 = vmatprep.subr.mxu0 %v1692
    %1790 = vmatpush1.msra.mxu0 %v1691
    %1791 = vmatprep.subr.mxu0 %v1688
    %1792 = vmatpush1.msra.mxu0 %v1687
    %1793 = vmatprep.subr.mxu0 %v1684
    %1794 = vmatpush1.msra.mxu0 %v1683
    %1795 = vmatprep.subr.mxu0 %v1680
    %1796 = vmatpush1.msra.mxu0 %v1679
    %1797 = vmatprep.subr.mxu0 %v1676
    %1798 = vmatpush1.msra.mxu0 %v1675
    %1799 = vmatprep.subr.mxu0 %v1672
    %1800 = vmatpush1.msra.mxu0 %v1671
    %1801 = vmatprep.subr.mxu0 %v1668
    %1802 = vmatpush1.msra.mxu0 %v1667
    %1803 = vmatprep.subr.mxu0 %v1664
    %1804 = vmatpush1.msra.mxu0 %v1663
    %1805 = vmatprep.subr.mxu0 %v1660
    %1806 = vmatpush1.msra.mxu0 %v1659
    %1807 = vmatprep.subr.mxu0 %v1656
    %1808 = vmatpush1.msra.mxu0 %v1655
    %1809 = vmatprep.subr.mxu0 %v1652
    %1810 = vmatpush1.msra.mxu0 %v1651
    %1811 = vmatprep.subr.mxu0 %v1776
    %1812 = vmatpush2.msra.mxu0 %v1775
    %1813 = vmatprep.subr.mxu0 %v1772
    %1814 = vmatpush2.msra.mxu0 %v1771
    %1815 = vmatprep.subr.mxu0 %v1768
    %1816 = vmatpush2.msra.mxu0 %v1767
    %1817 = vmatprep.subr.mxu0 %v1764
    %1818 = vmatpush2.msra.mxu0 %v1763
    %1819 = vmatprep.subr.mxu0 %v1760
    %1820 = vmatpush2.msra.mxu0 %v1759
    %1821 = vmatprep.subr.mxu0 %v1756
    %1822 = vmatpush2.msra.mxu0 %v1755
    %1823 = vmatprep.subr.mxu0 %v1752
    %1824 = vmatpush2.msra.mxu0 %v1751
    %1825 = vmatprep.subr.mxu0 %v1748
    %1826 = vmatpush2.msra.mxu0 %v1747
    %1827 = vmatprep.subr.mxu0 %v1744
    %1828 = vmatpush2.msra.mxu0 %v1743
    %1829 = vmatprep.subr.mxu0 %v1740
    %1830 = vmatpush2.msra.mxu0 %v1739
    %1831 = vmatprep.subr.mxu0 %v1736
    %1832 = vmatpush2.msra.mxu0 %v1735
    %1833 = vmatprep.subr.mxu0 %v1732
    %1834 = vmatpush2.msra.mxu0 %v1731
    %1835 = vmatprep.subr.mxu0 %v1728
    %1836 = vmatpush2.msra.mxu0 %v1727
    %1837 = vmatprep.subr.mxu0 %v1724
    %1838 = vmatpush2.msra.mxu0 %v1723
    %1839 = vmatprep.subr.mxu0 %v1720
    %1840 = vmatpush2.msra.mxu0 %v1719
    %1841 = vmatprep.subr.mxu0 %v1716
    %1842 = vmatpush2.msra.mxu0 %v1715
    %1843 = vmatprep.mubr.f32.mxu0 %v1031
    %1844 = vmatmul.mubr.f32.gmra.mxu0 %v1650
    %v1845 = vpop.f32.mrf.mxu0
    %v1846 = vadd.f32 %v195, %v1845
    %v1847 = vpop.f32.mrf.mxu0
    %v1848 = vadd.f32 %v199, %v1847
    %1849 = vdwg.mxu0
    %1850 = vmatprep.subr.mxu0 %v1714
    %1851 = vmatpush1.msra.mxu0 %v1713
    %1852 = vmatprep.subr.mxu0 %v1710
    %1853 = vmatpush1.msra.mxu0 %v1709
    %1854 = vmatprep.subr.mxu0 %v1706
    %1855 = vmatpush1.msra.mxu0 %v1705
    %1856 = vmatprep.subr.mxu0 %v1702
    %1857 = vmatpush1.msra.mxu0 %v1701
    %1858 = vmatprep.subr.mxu0 %v1698
    %1859 = vmatpush1.msra.mxu0 %v1697
    %1860 = vmatprep.subr.mxu0 %v1694
    %1861 = vmatpush1.msra.mxu0 %v1693
    %1862 = vmatprep.subr.mxu0 %v1690
    %1863 = vmatpush1.msra.mxu0 %v1689
    %1864 = vmatprep.subr.mxu0 %v1686
    %1865 = vmatpush1.msra.mxu0 %v1685
    %1866 = vmatprep.subr.mxu0 %v1682
    %1867 = vmatpush1.msra.mxu0 %v1681
    %1868 = vmatprep.subr.mxu0 %v1678
    %1869 = vmatpush1.msra.mxu0 %v1677
    %1870 = vmatprep.subr.mxu0 %v1674
    %1871 = vmatpush1.msra.mxu0 %v1673
    %1872 = vmatprep.subr.mxu0 %v1670
    %1873 = vmatpush1.msra.mxu0 %v1669
    %1874 = vmatprep.subr.mxu0 %v1666
    %1875 = vmatpush1.msra.mxu0 %v1665
    %1876 = vmatprep.subr.mxu0 %v1662
    %1877 = vmatpush1.msra.mxu0 %v1661
    %1878 = vmatprep.subr.mxu0 %v1658
    %1879 = vmatpush1.msra.mxu0 %v1657
    %1880 = vmatprep.subr.mxu0 %v1654
    %1881 = vmatpush1.msra.mxu0 %v1653
    %1882 = vmatprep.subr.mxu0 %v1778
    %1883 = vmatpush2.msra.mxu0 %v1777
    %1884 = vmatprep.subr.mxu0 %v1774
    %1885 = vmatpush2.msra.mxu0 %v1773
    %1886 = vmatprep.subr.mxu0 %v1770
    %1887 = vmatpush2.msra.mxu0 %v1769
    %1888 = vmatprep.subr.mxu0 %v1766
    %1889 = vmatpush2.msra.mxu0 %v1765
    %1890 = vmatprep.subr.mxu0 %v1762
    %1891 = vmatpush2.msra.mxu0 %v1761
    %1892 = vmatprep.subr.mxu0 %v1758
    %1893 = vmatpush2.msra.mxu0 %v1757
    %1894 = vmatprep.subr.mxu0 %v1754
    %1895 = vmatpush2.msra.mxu0 %v1753
    %1896 = vmatprep.subr.mxu0 %v1750
    %1897 = vmatpush2.msra.mxu0 %v1749
    %1898 = vmatprep.subr.mxu0 %v1746
    %1899 = vmatpush2.msra.mxu0 %v1745
    %1900 = vmatprep.subr.mxu0 %v1742
    %1901 = vmatpush2.msra.mxu0 %v1741
    %1902 = vmatprep.subr.mxu0 %v1738
    %1903 = vmatpush2.msra.mxu0 %v1737
    %1904 = vmatprep.subr.mxu0 %v1734
    %1905 = vmatpush2.msra.mxu0 %v1733
    %1906 = vmatprep.subr.mxu0 %v1730
    %1907 = vmatpush2.msra.mxu0 %v1729
    %1908 = vmatprep.subr.mxu0 %v1726
    %1909 = vmatpush2.msra.mxu0 %v1725
    %1910 = vmatprep.subr.mxu0 %v1722
    %1911 = vmatpush2.msra.mxu0 %v1721
    %1912 = vmatprep.subr.mxu0 %v1718
    %1913 = vmatpush2.msra.mxu0 %v1717
    %1914 = vmatprep.mubr.f32.mxu0 %v1031
    %1915 = vmatmul.mubr.f32.gmra.mxu0 %v1650
    %v1916 = vpop.f32.mrf.mxu0
    %v1917 = vadd.f32 %v203, %v1916
    %v1918 = vpop.f32.mrf.mxu0
    %v1919 = vadd.f32 %v207, %v1918
    %1920 = vdwg.mxu0
    %v1921 = vxor.u32 %v1846, 2147483648
    %v1922 = vmul.f32 %v1921, 1.442695
    %v1923 = vpow.pop %v1922
    %v1924 = vadd.f32 %v1923, 1.0
    %v1925 = vrcp.pop %v1924
    %v1926 = vmul.f32 1.0, %v1925
    %v1927 = vxor.u32 %v1848, 2147483648
    %v1928 = vmul.f32 %v1927, 1.442695
    %v1929 = vpow.pop %v1928
    %v1930 = vadd.f32 %v1929, 1.0
    %v1931 = vrcp.pop %v1930
    %v1932 = vmul.f32 1.0, %v1931
    %v1933 = vtanh.pop %v1917
    %v1934 = vxor.u32 %v1919, 2147483648
    %v1935 = vmul.f32 %v1934, 1.442695
    %v1936 = vpow.pop %v1935
    %v1937 = vadd.f32 %v1936, 1.0
    %v1938 = vrcp.pop %v1937
    %v1939 = vmul.f32 1.0, %v1938
    %v1940 = vmul.f32 %v1932, %v1029
    %v1941 = vmul.f32 %v1926, %v1933
    %v1942 = vadd.f32 %v1940, %v1941
    %v1943 = vtanh.pop %v1942
    %v1944 = vmul.f32 %v1939, %v1943
    %v1945 = vld [vmem:[#allocation14] sm:$0xff]
    %v1946 = vld [vmem:[#allocation14 + $0x8] sm:$0xff]
    %v1947 = vld [vmem:[#allocation14 + $0x10] sm:$0xff]
    %v1948 = vld [vmem:[#allocation14 + $0x18] sm:$0xff]
    %v1949 = vld [vmem:[#allocation14 + $0x20] sm:$0xff]
    %v1950 = vld [vmem:[#allocation14 + $0x28] sm:$0xff]
    %v1951 = vld [vmem:[#allocation14 + $0x30] sm:$0xff]
    %v1952 = vld [vmem:[#allocation14 + $0x38] sm:$0xff]
    %v1953 = vld [vmem:[#allocation14 + $0x40] sm:$0xff]
    %v1954 = vld [vmem:[#allocation14 + $0x48] sm:$0xff]
    %v1955 = vld [vmem:[#allocation14 + $0x50] sm:$0xff]
    %v1956 = vld [vmem:[#allocation14 + $0x58] sm:$0xff]
    %v1957 = vld [vmem:[#allocation14 + $0x60] sm:$0xff]
    %v1958 = vld [vmem:[#allocation14 + $0x68] sm:$0xff]
    %v1959 = vld [vmem:[#allocation14 + $0x70] sm:$0xff]
    %v1960 = vld [vmem:[#allocation14 + $0x78] sm:$0xff]
    %v1961 = vld [vmem:[#allocation14 + $0x80] sm:$0xff]
    %v1962 = vld [vmem:[#allocation14 + $0x88] sm:$0xff]
    %v1963 = vld [vmem:[#allocation14 + $0x90] sm:$0xff]
    %v1964 = vld [vmem:[#allocation14 + $0x98] sm:$0xff]
    %v1965 = vld [vmem:[#allocation14 + $0xa0] sm:$0xff]
    %v1966 = vld [vmem:[#allocation14 + $0xa8] sm:$0xff]
    %v1967 = vld [vmem:[#allocation14 + $0xb0] sm:$0xff]
    %v1968 = vld [vmem:[#allocation14 + $0xb8] sm:$0xff]
    %v1969 = vld [vmem:[#allocation14 + $0xc0] sm:$0xff]
    %v1970 = vld [vmem:[#allocation14 + $0xc8] sm:$0xff]
    %v1971 = vld [vmem:[#allocation14 + $0xd0] sm:$0xff]
    %v1972 = vld [vmem:[#allocation14 + $0xd8] sm:$0xff]
    %v1973 = vld [vmem:[#allocation14 + $0xe0] sm:$0xff]
    %v1974 = vld [vmem:[#allocation14 + $0xe8] sm:$0xff]
    %v1975 = vld [vmem:[#allocation14 + $0xf0] sm:$0xff]
    %v1976 = vld [vmem:[#allocation14 + $0xf8] sm:$0xff]
    %1977 = vmatprep.subr.mxu0 %v1976
    %1978 = vmatpush1.msra.mxu0 %v1975
    %1979 = vmatprep.subr.mxu0 %v1974
    %1980 = vmatpush1.msra.mxu0 %v1973
    %1981 = vmatprep.subr.mxu0 %v1972
    %1982 = vmatpush1.msra.mxu0 %v1971
    %1983 = vmatprep.subr.mxu0 %v1970
    %1984 = vmatpush1.msra.mxu0 %v1969
    %1985 = vmatprep.subr.mxu0 %v1968
    %1986 = vmatpush1.msra.mxu0 %v1967
    %1987 = vmatprep.subr.mxu0 %v1966
    %1988 = vmatpush1.msra.mxu0 %v1965
    %1989 = vmatprep.subr.mxu0 %v1964
    %1990 = vmatpush1.msra.mxu0 %v1963
    %1991 = vmatprep.subr.mxu0 %v1962
    %1992 = vmatpush1.msra.mxu0 %v1961
    %1993 = vmatprep.subr.mxu0 %v1960
    %1994 = vmatpush1.msra.mxu0 %v1959
    %1995 = vmatprep.subr.mxu0 %v1958
    %1996 = vmatpush1.msra.mxu0 %v1957
    %1997 = vmatprep.subr.mxu0 %v1956
    %1998 = vmatpush1.msra.mxu0 %v1955
    %1999 = vmatprep.subr.mxu0 %v1954
    %2000 = vmatpush1.msra.mxu0 %v1953
    %2001 = vmatprep.subr.mxu0 %v1952
    %2002 = vmatpush1.msra.mxu0 %v1951
    %2003 = vmatprep.subr.mxu0 %v1950
    %2004 = vmatpush1.msra.mxu0 %v1949
    %2005 = vmatprep.subr.mxu0 %v1948
    %2006 = vmatpush1.msra.mxu0 %v1947
    %2007 = vmatprep.subr.mxu0 %v1946
    %2008 = vmatpush1.msra.mxu0 %v1945
    %2009 = vmatprep.subr.mxu0 0.0
    %2010 = vmatpush2.msra.mxu0 0.0
    %2011 = vmatprep.subr.mxu0 0.0
    %2012 = vmatpush2.msra.mxu0 0.0
    %2013 = vmatprep.subr.mxu0 0.0
    %2014 = vmatpush2.msra.mxu0 0.0
    %2015 = vmatprep.subr.mxu0 0.0
    %2016 = vmatpush2.msra.mxu0 0.0
    %2017 = vmatprep.subr.mxu0 0.0
    %2018 = vmatpush2.msra.mxu0 0.0
    %2019 = vmatprep.subr.mxu0 0.0
    %2020 = vmatpush2.msra.mxu0 0.0
    %2021 = vmatprep.subr.mxu0 0.0
    %2022 = vmatpush2.msra.mxu0 0.0
    %2023 = vmatprep.subr.mxu0 0.0
    %2024 = vmatpush2.msra.mxu0 0.0
    %2025 = vmatprep.subr.mxu0 0.0
    %2026 = vmatpush2.msra.mxu0 0.0
    %2027 = vmatprep.subr.mxu0 0.0
    %2028 = vmatpush2.msra.mxu0 0.0
    %2029 = vmatprep.subr.mxu0 0.0
    %2030 = vmatpush2.msra.mxu0 0.0
    %2031 = vmatprep.subr.mxu0 0.0
    %2032 = vmatpush2.msra.mxu0 0.0
    %2033 = vmatprep.subr.mxu0 0.0
    %2034 = vmatpush2.msra.mxu0 0.0
    %2035 = vmatprep.subr.mxu0 0.0
    %2036 = vmatpush2.msra.mxu0 0.0
    %2037 = vmatprep.subr.mxu0 0.0
    %2038 = vmatpush2.msra.mxu0 0.0
    %2039 = vmatprep.subr.mxu0 0.0
    %2040 = vmatpush2.msra.mxu0 0.0
    %2041 = vmatprep.mubr.f32.mxu0 0.0
    %2042 = vmatmul.mubr.f32.gmra.mxu0 %v1944
    %v2043 = vpop.f32.mrf.mxu0
    %v2044 = vadd.f32 %v217, %v2043
    %v2045 = vpop.f32.mrf.mxu0
    %v2046 = vadd.f32 %v221, %v2045
    %2047 = vdwg.mxu0
    %2048 = vst [vmem:[%s10 + $0x10] sm:$0xff] %v2044
    %2049 = vst [vmem:[%s10 + $0x18] sm:$0xff] %v2046
    %v2050 = vld [vmem:[#allocation2] sm:$0xff]
    %2051 = vset.pattern.permute.xlu0 2
    %2052 = vperm.xlu0 %2051, %v2050
    %v2053 = vpop.permute.xlu0 %2052
    %vm2054 = vcmp.eq.s32.totalorder %v2053, %v166
    %vm2055 = vcmp.eq.s32.totalorder %v2053, %v167
    %v2056 = vsel %vm2054, 1, 0
    %v2057 = vsel %vm2055, 1, 0
    %v2058 = vcvt.s32.f32 %v2056
    %v2059 = vcvt.s32.f32 %v2057
    %v2060 = vld [vmem:[#allocation7] sm:$0xff]
    %v2061 = vld [vmem:[#allocation7 + $0x8] sm:$0xff]
    %v2062 = vld [vmem:[#allocation7 + $0x10] sm:$0xff]
    %v2063 = vld [vmem:[#allocation7 + $0x18] sm:$0xff]
    %v2064 = vld [vmem:[#allocation7 + $0x20] sm:$0xff]
    %v2065 = vld [vmem:[#allocation7 + $0x28] sm:$0xff]
    %v2066 = vld [vmem:[#allocation7 + $0x30] sm:$0xff]
    %v2067 = vld [vmem:[#allocation7 + $0x38] sm:$0xff]
    %v2068 = vld [vmem:[#allocation7 + $0x40] sm:$0xff]
    %v2069 = vld [vmem:[#allocation7 + $0x48] sm:$0xff]
    %v2070 = vld [vmem:[#allocation7 + $0x50] sm:$0xff]
    %v2071 = vld [vmem:[#allocation7 + $0x58] sm:$0xff]
    %v2072 = vld [vmem:[#allocation7 + $0x60] sm:$0xff]
    %v2073 = vld [vmem:[#allocation7 + $0x68] sm:$0xff]
    %v2074 = vld [vmem:[#allocation7 + $0x70] sm:$0xff]
    %v2075 = vld [vmem:[#allocation7 + $0x78] sm:$0xff]
    %v2076 = vld [vmem:[#allocation7 + $0x80] sm:$0xff]
    %v2077 = vld [vmem:[#allocation7 + $0x88] sm:$0xff]
    %v2078 = vld [vmem:[#allocation7 + $0x90] sm:$0xff]
    %v2079 = vld [vmem:[#allocation7 + $0x98] sm:$0xff]
    %v2080 = vld [vmem:[#allocation7 + $0xa0] sm:$0xff]
    %v2081 = vld [vmem:[#allocation7 + $0xa8] sm:$0xff]
    %v2082 = vld [vmem:[#allocation7 + $0xb0] sm:$0xff]
    %v2083 = vld [vmem:[#allocation7 + $0xb8] sm:$0xff]
    %v2084 = vld [vmem:[#allocation7 + $0xc0] sm:$0xff]
    %v2085 = vld [vmem:[#allocation7 + $0xc8] sm:$0xff]
    %v2086 = vld [vmem:[#allocation7 + $0xd0] sm:$0xff]
    %v2087 = vld [vmem:[#allocation7 + $0xd8] sm:$0xff]
    %v2088 = vld [vmem:[#allocation7 + $0xe0] sm:$0xff]
    %v2089 = vld [vmem:[#allocation7 + $0xe8] sm:$0xff]
    %v2090 = vld [vmem:[#allocation7 + $0xf0] sm:$0xff]
    %v2091 = vld [vmem:[#allocation7 + $0xf8] sm:$0xff]
    %v2092 = vld [vmem:[#allocation7 + $0x100] sm:$0xff]
    %v2093 = vld [vmem:[#allocation7 + $0x108] sm:$0xff]
    %v2094 = vld [vmem:[#allocation7 + $0x110] sm:$0xff]
    %v2095 = vld [vmem:[#allocation7 + $0x118] sm:$0xff]
    %v2096 = vld [vmem:[#allocation7 + $0x120] sm:$0xff]
    %v2097 = vld [vmem:[#allocation7 + $0x128] sm:$0xff]
    %v2098 = vld [vmem:[#allocation7 + $0x130] sm:$0xff]
    %v2099 = vld [vmem:[#allocation7 + $0x138] sm:$0xff]
    %v2100 = vld [vmem:[#allocation7 + $0x140] sm:$0xff]
    %v2101 = vld [vmem:[#allocation7 + $0x148] sm:$0xff]
    %v2102 = vld [vmem:[#allocation7 + $0x150] sm:$0xff]
    %v2103 = vld [vmem:[#allocation7 + $0x158] sm:$0xff]
    %v2104 = vld [vmem:[#allocation7 + $0x160] sm:$0xff]
    %v2105 = vld [vmem:[#allocation7 + $0x168] sm:$0xff]
    %v2106 = vld [vmem:[#allocation7 + $0x170] sm:$0xff]
    %v2107 = vld [vmem:[#allocation7 + $0x178] sm:$0xff]
    %v2108 = vld [vmem:[#allocation7 + $0x180] sm:$0xff]
    %v2109 = vld [vmem:[#allocation7 + $0x188] sm:$0xff]
    %v2110 = vld [vmem:[#allocation7 + $0x190] sm:$0xff]
    %v2111 = vld [vmem:[#allocation7 + $0x198] sm:$0xff]
    %v2112 = vld [vmem:[#allocation7 + $0x1a0] sm:$0xff]
    %v2113 = vld [vmem:[#allocation7 + $0x1a8] sm:$0xff]
    %v2114 = vld [vmem:[#allocation7 + $0x1b0] sm:$0xff]
    %v2115 = vld [vmem:[#allocation7 + $0x1b8] sm:$0xff]
    %v2116 = vld [vmem:[#allocation7 + $0x1c0] sm:$0xff]
    %v2117 = vld [vmem:[#allocation7 + $0x1c8] sm:$0xff]
    %v2118 = vld [vmem:[#allocation7 + $0x1d0] sm:$0xff]
    %v2119 = vld [vmem:[#allocation7 + $0x1d8] sm:$0xff]
    %v2120 = vld [vmem:[#allocation7 + $0x1e0] sm:$0xff]
    %v2121 = vld [vmem:[#allocation7 + $0x1e8] sm:$0xff]
    %v2122 = vld [vmem:[#allocation7 + $0x1f0] sm:$0xff]
    %v2123 = vld [vmem:[#allocation7 + $0x1f8] sm:$0xff]
    %v2124 = vld [vmem:[#allocation7 + $0x200] sm:$0xff]
    %v2125 = vld [vmem:[#allocation7 + $0x208] sm:$0xff]
    %v2126 = vld [vmem:[#allocation7 + $0x210] sm:$0xff]
    %v2127 = vld [vmem:[#allocation7 + $0x218] sm:$0xff]
    %v2128 = vld [vmem:[#allocation7 + $0x220] sm:$0xff]
    %v2129 = vld [vmem:[#allocation7 + $0x228] sm:$0xff]
    %v2130 = vld [vmem:[#allocation7 + $0x230] sm:$0xff]
    %v2131 = vld [vmem:[#allocation7 + $0x238] sm:$0xff]
    %v2132 = vld [vmem:[#allocation7 + $0x240] sm:$0xff]
    %v2133 = vld [vmem:[#allocation7 + $0x248] sm:$0xff]
    %v2134 = vld [vmem:[#allocation7 + $0x250] sm:$0xff]
    %v2135 = vld [vmem:[#allocation7 + $0x258] sm:$0xff]
    %v2136 = vld [vmem:[#allocation7 + $0x260] sm:$0xff]
    %v2137 = vld [vmem:[#allocation7 + $0x268] sm:$0xff]
    %v2138 = vld [vmem:[#allocation7 + $0x270] sm:$0xff]
    %v2139 = vld [vmem:[#allocation7 + $0x278] sm:$0xff]
    %v2140 = vld [vmem:[#allocation7 + $0x280] sm:$0xff]
    %v2141 = vld [vmem:[#allocation7 + $0x288] sm:$0xff]
    %v2142 = vld [vmem:[#allocation7 + $0x290] sm:$0xff]
    %v2143 = vld [vmem:[#allocation7 + $0x298] sm:$0xff]
    %v2144 = vld [vmem:[#allocation7 + $0x2a0] sm:$0xff]
    %v2145 = vld [vmem:[#allocation7 + $0x2a8] sm:$0xff]
    %v2146 = vld [vmem:[#allocation7 + $0x2b0] sm:$0xff]
    %v2147 = vld [vmem:[#allocation7 + $0x2b8] sm:$0xff]
    %v2148 = vld [vmem:[#allocation7 + $0x2c0] sm:$0xff]
    %v2149 = vld [vmem:[#allocation7 + $0x2c8] sm:$0xff]
    %v2150 = vld [vmem:[#allocation7 + $0x2d0] sm:$0xff]
    %v2151 = vld [vmem:[#allocation7 + $0x2d8] sm:$0xff]
    %v2152 = vld [vmem:[#allocation7 + $0x2e0] sm:$0xff]
    %v2153 = vld [vmem:[#allocation7 + $0x2e8] sm:$0xff]
    %v2154 = vld [vmem:[#allocation7 + $0x2f0] sm:$0xff]
    %v2155 = vld [vmem:[#allocation7 + $0x2f8] sm:$0xff]
    %v2156 = vld [vmem:[#allocation7 + $0x300] sm:$0xff]
    %v2157 = vld [vmem:[#allocation7 + $0x308] sm:$0xff]
    %v2158 = vld [vmem:[#allocation7 + $0x310] sm:$0xff]
    %v2159 = vld [vmem:[#allocation7 + $0x318] sm:$0xff]
    %v2160 = vld [vmem:[#allocation7 + $0x320] sm:$0xff]
    %v2161 = vld [vmem:[#allocation7 + $0x328] sm:$0xff]
    %v2162 = vld [vmem:[#allocation7 + $0x330] sm:$0xff]
    %v2163 = vld [vmem:[#allocation7 + $0x338] sm:$0xff]
    %v2164 = vld [vmem:[#allocation7 + $0x340] sm:$0xff]
    %v2165 = vld [vmem:[#allocation7 + $0x348] sm:$0xff]
    %v2166 = vld [vmem:[#allocation7 + $0x350] sm:$0xff]
    %v2167 = vld [vmem:[#allocation7 + $0x358] sm:$0xff]
    %v2168 = vld [vmem:[#allocation7 + $0x360] sm:$0xff]
    %v2169 = vld [vmem:[#allocation7 + $0x368] sm:$0xff]
    %v2170 = vld [vmem:[#allocation7 + $0x370] sm:$0xff]
    %v2171 = vld [vmem:[#allocation7 + $0x378] sm:$0xff]
    %v2172 = vld [vmem:[#allocation7 + $0x380] sm:$0xff]
    %v2173 = vld [vmem:[#allocation7 + $0x388] sm:$0xff]
    %v2174 = vld [vmem:[#allocation7 + $0x390] sm:$0xff]
    %v2175 = vld [vmem:[#allocation7 + $0x398] sm:$0xff]
    %v2176 = vld [vmem:[#allocation7 + $0x3a0] sm:$0xff]
    %v2177 = vld [vmem:[#allocation7 + $0x3a8] sm:$0xff]
    %v2178 = vld [vmem:[#allocation7 + $0x3b0] sm:$0xff]
    %v2179 = vld [vmem:[#allocation7 + $0x3b8] sm:$0xff]
    %v2180 = vld [vmem:[#allocation7 + $0x3c0] sm:$0xff]
    %v2181 = vld [vmem:[#allocation7 + $0x3c8] sm:$0xff]
    %v2182 = vld [vmem:[#allocation7 + $0x3d0] sm:$0xff]
    %v2183 = vld [vmem:[#allocation7 + $0x3d8] sm:$0xff]
    %v2184 = vld [vmem:[#allocation7 + $0x3e0] sm:$0xff]
    %v2185 = vld [vmem:[#allocation7 + $0x3e8] sm:$0xff]
    %v2186 = vld [vmem:[#allocation7 + $0x3f0] sm:$0xff]
    %v2187 = vld [vmem:[#allocation7 + $0x3f8] sm:$0xff]
    %2188 = vmatprep.subr.mxu0 %v2121
    %2189 = vmatpush1.msra.mxu0 %v2120
    %2190 = vmatprep.subr.mxu0 %v2117
    %2191 = vmatpush1.msra.mxu0 %v2116
    %2192 = vmatprep.subr.mxu0 %v2113
    %2193 = vmatpush1.msra.mxu0 %v2112
    %2194 = vmatprep.subr.mxu0 %v2109
    %2195 = vmatpush1.msra.mxu0 %v2108
    %2196 = vmatprep.subr.mxu0 %v2105
    %2197 = vmatpush1.msra.mxu0 %v2104
    %2198 = vmatprep.subr.mxu0 %v2101
    %2199 = vmatpush1.msra.mxu0 %v2100
    %2200 = vmatprep.subr.mxu0 %v2097
    %2201 = vmatpush1.msra.mxu0 %v2096
    %2202 = vmatprep.subr.mxu0 %v2093
    %2203 = vmatpush1.msra.mxu0 %v2092
    %2204 = vmatprep.subr.mxu0 %v2089
    %2205 = vmatpush1.msra.mxu0 %v2088
    %2206 = vmatprep.subr.mxu0 %v2085
    %2207 = vmatpush1.msra.mxu0 %v2084
    %2208 = vmatprep.subr.mxu0 %v2081
    %2209 = vmatpush1.msra.mxu0 %v2080
    %2210 = vmatprep.subr.mxu0 %v2077
    %2211 = vmatpush1.msra.mxu0 %v2076
    %2212 = vmatprep.subr.mxu0 %v2073
    %2213 = vmatpush1.msra.mxu0 %v2072
    %2214 = vmatprep.subr.mxu0 %v2069
    %2215 = vmatpush1.msra.mxu0 %v2068
    %2216 = vmatprep.subr.mxu0 %v2065
    %2217 = vmatpush1.msra.mxu0 %v2064
    %2218 = vmatprep.subr.mxu0 %v2061
    %2219 = vmatpush1.msra.mxu0 %v2060
    %2220 = vmatprep.subr.mxu0 %v2185
    %2221 = vmatpush2.msra.mxu0 %v2184
    %2222 = vmatprep.subr.mxu0 %v2181
    %2223 = vmatpush2.msra.mxu0 %v2180
    %2224 = vmatprep.subr.mxu0 %v2177
    %2225 = vmatpush2.msra.mxu0 %v2176
    %2226 = vmatprep.subr.mxu0 %v2173
    %2227 = vmatpush2.msra.mxu0 %v2172
    %2228 = vmatprep.subr.mxu0 %v2169
    %2229 = vmatpush2.msra.mxu0 %v2168
    %2230 = vmatprep.subr.mxu0 %v2165
    %2231 = vmatpush2.msra.mxu0 %v2164
    %2232 = vmatprep.subr.mxu0 %v2161
    %2233 = vmatpush2.msra.mxu0 %v2160
    %2234 = vmatprep.subr.mxu0 %v2157
    %2235 = vmatpush2.msra.mxu0 %v2156
    %2236 = vmatprep.subr.mxu0 %v2153
    %2237 = vmatpush2.msra.mxu0 %v2152
    %2238 = vmatprep.subr.mxu0 %v2149
    %2239 = vmatpush2.msra.mxu0 %v2148
    %2240 = vmatprep.subr.mxu0 %v2145
    %2241 = vmatpush2.msra.mxu0 %v2144
    %2242 = vmatprep.subr.mxu0 %v2141
    %2243 = vmatpush2.msra.mxu0 %v2140
    %2244 = vmatprep.subr.mxu0 %v2137
    %2245 = vmatpush2.msra.mxu0 %v2136
    %2246 = vmatprep.subr.mxu0 %v2133
    %2247 = vmatpush2.msra.mxu0 %v2132
    %2248 = vmatprep.subr.mxu0 %v2129
    %2249 = vmatpush2.msra.mxu0 %v2128
    %2250 = vmatprep.subr.mxu0 %v2125
    %2251 = vmatpush2.msra.mxu0 %v2124
    %2252 = vmatprep.mubr.f32.mxu0 %v2059
    %2253 = vmatmul.mubr.f32.gmra.mxu0 %v2058
    %v2254 = vpop.f32.mrf.mxu0
    %v2255 = vadd.f32 %v173, %v2254
    %v2256 = vpop.f32.mrf.mxu0
    %v2257 = vadd.f32 %v177, %v2256
    %2258 = vdwg.mxu0
    %2259 = vmatprep.subr.mxu0 %v2123
    %2260 = vmatpush1.msra.mxu0 %v2122
    %2261 = vmatprep.subr.mxu0 %v2119
    %2262 = vmatpush1.msra.mxu0 %v2118
    %2263 = vmatprep.subr.mxu0 %v2115
    %2264 = vmatpush1.msra.mxu0 %v2114
    %2265 = vmatprep.subr.mxu0 %v2111
    %2266 = vmatpush1.msra.mxu0 %v2110
    %2267 = vmatprep.subr.mxu0 %v2107
    %2268 = vmatpush1.msra.mxu0 %v2106
    %2269 = vmatprep.subr.mxu0 %v2103
    %2270 = vmatpush1.msra.mxu0 %v2102
    %2271 = vmatprep.subr.mxu0 %v2099
    %2272 = vmatpush1.msra.mxu0 %v2098
    %2273 = vmatprep.subr.mxu0 %v2095
    %2274 = vmatpush1.msra.mxu0 %v2094
    %2275 = vmatprep.subr.mxu0 %v2091
    %2276 = vmatpush1.msra.mxu0 %v2090
    %2277 = vmatprep.subr.mxu0 %v2087
    %2278 = vmatpush1.msra.mxu0 %v2086
    %2279 = vmatprep.subr.mxu0 %v2083
    %2280 = vmatpush1.msra.mxu0 %v2082
    %2281 = vmatprep.subr.mxu0 %v2079
    %2282 = vmatpush1.msra.mxu0 %v2078
    %2283 = vmatprep.subr.mxu0 %v2075
    %2284 = vmatpush1.msra.mxu0 %v2074
    %2285 = vmatprep.subr.mxu0 %v2071
    %2286 = vmatpush1.msra.mxu0 %v2070
    %2287 = vmatprep.subr.mxu0 %v2067
    %2288 = vmatpush1.msra.mxu0 %v2066
    %2289 = vmatprep.subr.mxu0 %v2063
    %2290 = vmatpush1.msra.mxu0 %v2062
    %2291 = vmatprep.subr.mxu0 %v2187
    %2292 = vmatpush2.msra.mxu0 %v2186
    %2293 = vmatprep.subr.mxu0 %v2183
    %2294 = vmatpush2.msra.mxu0 %v2182
    %2295 = vmatprep.subr.mxu0 %v2179
    %2296 = vmatpush2.msra.mxu0 %v2178
    %2297 = vmatprep.subr.mxu0 %v2175
    %2298 = vmatpush2.msra.mxu0 %v2174
    %2299 = vmatprep.subr.mxu0 %v2171
    %2300 = vmatpush2.msra.mxu0 %v2170
    %2301 = vmatprep.subr.mxu0 %v2167
    %2302 = vmatpush2.msra.mxu0 %v2166
    %2303 = vmatprep.subr.mxu0 %v2163
    %2304 = vmatpush2.msra.mxu0 %v2162
    %2305 = vmatprep.subr.mxu0 %v2159
    %2306 = vmatpush2.msra.mxu0 %v2158
    %2307 = vmatprep.subr.mxu0 %v2155
    %2308 = vmatpush2.msra.mxu0 %v2154
    %2309 = vmatprep.subr.mxu0 %v2151
    %2310 = vmatpush2.msra.mxu0 %v2150
    %2311 = vmatprep.subr.mxu0 %v2147
    %2312 = vmatpush2.msra.mxu0 %v2146
    %2313 = vmatprep.subr.mxu0 %v2143
    %2314 = vmatpush2.msra.mxu0 %v2142
    %2315 = vmatprep.subr.mxu0 %v2139
    %2316 = vmatpush2.msra.mxu0 %v2138
    %2317 = vmatprep.subr.mxu0 %v2135
    %2318 = vmatpush2.msra.mxu0 %v2134
    %2319 = vmatprep.subr.mxu0 %v2131
    %2320 = vmatpush2.msra.mxu0 %v2130
    %2321 = vmatprep.subr.mxu0 %v2127
    %2322 = vmatpush2.msra.mxu0 %v2126
    %2323 = vmatprep.mubr.f32.mxu0 %v2059
    %2324 = vmatmul.mubr.f32.gmra.mxu0 %v2058
    %v2325 = vpop.f32.mrf.mxu0
    %v2326 = vadd.f32 %v181, %v2325
    %v2327 = vpop.f32.mrf.mxu0
    %v2328 = vadd.f32 %v185, %v2327
    %2329 = vdwg.mxu0
    %v2330 = vld [vmem:[#allocation8] sm:$0xff]
    %v2331 = vld [vmem:[#allocation8 + $0x8] sm:$0xff]
    %v2332 = vld [vmem:[#allocation8 + $0x10] sm:$0xff]
    %v2333 = vld [vmem:[#allocation8 + $0x18] sm:$0xff]
    %v2334 = vld [vmem:[#allocation8 + $0x20] sm:$0xff]
    %v2335 = vld [vmem:[#allocation8 + $0x28] sm:$0xff]
    %v2336 = vld [vmem:[#allocation8 + $0x30] sm:$0xff]
    %v2337 = vld [vmem:[#allocation8 + $0x38] sm:$0xff]
    %v2338 = vld [vmem:[#allocation8 + $0x40] sm:$0xff]
    %v2339 = vld [vmem:[#allocation8 + $0x48] sm:$0xff]
    %v2340 = vld [vmem:[#allocation8 + $0x50] sm:$0xff]
    %v2341 = vld [vmem:[#allocation8 + $0x58] sm:$0xff]
    %v2342 = vld [vmem:[#allocation8 + $0x60] sm:$0xff]
    %v2343 = vld [vmem:[#allocation8 + $0x68] sm:$0xff]
    %v2344 = vld [vmem:[#allocation8 + $0x70] sm:$0xff]
    %v2345 = vld [vmem:[#allocation8 + $0x78] sm:$0xff]
    %v2346 = vld [vmem:[#allocation8 + $0x80] sm:$0xff]
    %v2347 = vld [vmem:[#allocation8 + $0x88] sm:$0xff]
    %v2348 = vld [vmem:[#allocation8 + $0x90] sm:$0xff]
    %v2349 = vld [vmem:[#allocation8 + $0x98] sm:$0xff]
    %v2350 = vld [vmem:[#allocation8 + $0xa0] sm:$0xff]
    %v2351 = vld [vmem:[#allocation8 + $0xa8] sm:$0xff]
    %v2352 = vld [vmem:[#allocation8 + $0xb0] sm:$0xff]
    %v2353 = vld [vmem:[#allocation8 + $0xb8] sm:$0xff]
    %v2354 = vld [vmem:[#allocation8 + $0xc0] sm:$0xff]
    %v2355 = vld [vmem:[#allocation8 + $0xc8] sm:$0xff]
    %v2356 = vld [vmem:[#allocation8 + $0xd0] sm:$0xff]
    %v2357 = vld [vmem:[#allocation8 + $0xd8] sm:$0xff]
    %v2358 = vld [vmem:[#allocation8 + $0xe0] sm:$0xff]
    %v2359 = vld [vmem:[#allocation8 + $0xe8] sm:$0xff]
    %v2360 = vld [vmem:[#allocation8 + $0xf0] sm:$0xff]
    %v2361 = vld [vmem:[#allocation8 + $0xf8] sm:$0xff]
    %v2362 = vld [vmem:[#allocation8 + $0x100] sm:$0xff]
    %v2363 = vld [vmem:[#allocation8 + $0x108] sm:$0xff]
    %v2364 = vld [vmem:[#allocation8 + $0x110] sm:$0xff]
    %v2365 = vld [vmem:[#allocation8 + $0x118] sm:$0xff]
    %v2366 = vld [vmem:[#allocation8 + $0x120] sm:$0xff]
    %v2367 = vld [vmem:[#allocation8 + $0x128] sm:$0xff]
    %v2368 = vld [vmem:[#allocation8 + $0x130] sm:$0xff]
    %v2369 = vld [vmem:[#allocation8 + $0x138] sm:$0xff]
    %v2370 = vld [vmem:[#allocation8 + $0x140] sm:$0xff]
    %v2371 = vld [vmem:[#allocation8 + $0x148] sm:$0xff]
    %v2372 = vld [vmem:[#allocation8 + $0x150] sm:$0xff]
    %v2373 = vld [vmem:[#allocation8 + $0x158] sm:$0xff]
    %v2374 = vld [vmem:[#allocation8 + $0x160] sm:$0xff]
    %v2375 = vld [vmem:[#allocation8 + $0x168] sm:$0xff]
    %v2376 = vld [vmem:[#allocation8 + $0x170] sm:$0xff]
    %v2377 = vld [vmem:[#allocation8 + $0x178] sm:$0xff]
    %v2378 = vld [vmem:[#allocation8 + $0x180] sm:$0xff]
    %v2379 = vld [vmem:[#allocation8 + $0x188] sm:$0xff]
    %v2380 = vld [vmem:[#allocation8 + $0x190] sm:$0xff]
    %v2381 = vld [vmem:[#allocation8 + $0x198] sm:$0xff]
    %v2382 = vld [vmem:[#allocation8 + $0x1a0] sm:$0xff]
    %v2383 = vld [vmem:[#allocation8 + $0x1a8] sm:$0xff]
    %v2384 = vld [vmem:[#allocation8 + $0x1b0] sm:$0xff]
    %v2385 = vld [vmem:[#allocation8 + $0x1b8] sm:$0xff]
    %v2386 = vld [vmem:[#allocation8 + $0x1c0] sm:$0xff]
    %v2387 = vld [vmem:[#allocation8 + $0x1c8] sm:$0xff]
    %v2388 = vld [vmem:[#allocation8 + $0x1d0] sm:$0xff]
    %v2389 = vld [vmem:[#allocation8 + $0x1d8] sm:$0xff]
    %v2390 = vld [vmem:[#allocation8 + $0x1e0] sm:$0xff]
    %v2391 = vld [vmem:[#allocation8 + $0x1e8] sm:$0xff]
    %v2392 = vld [vmem:[#allocation8 + $0x1f0] sm:$0xff]
    %v2393 = vld [vmem:[#allocation8 + $0x1f8] sm:$0xff]
    %2394 = vmatprep.subr.mxu0 %v2391
    %2395 = vmatpush1.msra.mxu0 %v2390
    %2396 = vmatprep.subr.mxu0 %v2387
    %2397 = vmatpush1.msra.mxu0 %v2386
    %2398 = vmatprep.subr.mxu0 %v2383
    %2399 = vmatpush1.msra.mxu0 %v2382
    %2400 = vmatprep.subr.mxu0 %v2379
    %2401 = vmatpush1.msra.mxu0 %v2378
    %2402 = vmatprep.subr.mxu0 %v2375
    %2403 = vmatpush1.msra.mxu0 %v2374
    %2404 = vmatprep.subr.mxu0 %v2371
    %2405 = vmatpush1.msra.mxu0 %v2370
    %2406 = vmatprep.subr.mxu0 %v2367
    %2407 = vmatpush1.msra.mxu0 %v2366
    %2408 = vmatprep.subr.mxu0 %v2363
    %2409 = vmatpush1.msra.mxu0 %v2362
    %2410 = vmatprep.subr.mxu0 %v2359
    %2411 = vmatpush1.msra.mxu0 %v2358
    %2412 = vmatprep.subr.mxu0 %v2355
    %2413 = vmatpush1.msra.mxu0 %v2354
    %2414 = vmatprep.subr.mxu0 %v2351
    %2415 = vmatpush1.msra.mxu0 %v2350
    %2416 = vmatprep.subr.mxu0 %v2347
    %2417 = vmatpush1.msra.mxu0 %v2346
    %2418 = vmatprep.subr.mxu0 %v2343
    %2419 = vmatpush1.msra.mxu0 %v2342
    %2420 = vmatprep.subr.mxu0 %v2339
    %2421 = vmatpush1.msra.mxu0 %v2338
    %2422 = vmatprep.subr.mxu0 %v2335
    %2423 = vmatpush1.msra.mxu0 %v2334
    %2424 = vmatprep.subr.mxu0 %v2331
    %2425 = vmatpush1.msra.mxu0 %v2330
    %2426 = vmatprep.subr.mxu0 0.0
    %2427 = vmatpush2.msra.mxu0 0.0
    %2428 = vmatprep.subr.mxu0 0.0
    %2429 = vmatpush2.msra.mxu0 0.0
    %2430 = vmatprep.subr.mxu0 0.0
    %2431 = vmatpush2.msra.mxu0 0.0
    %2432 = vmatprep.subr.mxu0 0.0
    %2433 = vmatpush2.msra.mxu0 0.0
    %2434 = vmatprep.subr.mxu0 0.0
    %2435 = vmatpush2.msra.mxu0 0.0
    %2436 = vmatprep.subr.mxu0 0.0
    %2437 = vmatpush2.msra.mxu0 0.0
    %2438 = vmatprep.subr.mxu0 0.0
    %2439 = vmatpush2.msra.mxu0 0.0
    %2440 = vmatprep.subr.mxu0 0.0
    %2441 = vmatpush2.msra.mxu0 0.0
    %2442 = vmatprep.subr.mxu0 0.0
    %2443 = vmatpush2.msra.mxu0 0.0
    %2444 = vmatprep.subr.mxu0 0.0
    %2445 = vmatpush2.msra.mxu0 0.0
    %2446 = vmatprep.subr.mxu0 0.0
    %2447 = vmatpush2.msra.mxu0 0.0
    %2448 = vmatprep.subr.mxu0 0.0
    %2449 = vmatpush2.msra.mxu0 0.0
    %2450 = vmatprep.subr.mxu0 0.0
    %2451 = vmatpush2.msra.mxu0 0.0
    %2452 = vmatprep.subr.mxu0 0.0
    %2453 = vmatpush2.msra.mxu0 0.0
    %2454 = vmatprep.subr.mxu0 0.0
    %2455 = vmatpush2.msra.mxu0 0.0
    %2456 = vmatprep.subr.mxu0 0.0
    %2457 = vmatpush2.msra.mxu0 0.0
    %2458 = vmatprep.mubr.f32.mxu0 0.0
    %2459 = vmatmul.mubr.f32.gmra.mxu0 %v1650
    %v2460 = vpop.f32.mrf.mxu0
    %v2461 = vadd.f32 0.0, %v2460
    %v2462 = vpop.f32.mrf.mxu0
    %v2463 = vadd.f32 0.0, %v2462
    %2464 = vdwg.mxu0
    %2465 = vmatprep.subr.mxu0 %v2393
    %2466 = vmatpush1.msra.mxu0 %v2392
    %2467 = vmatprep.subr.mxu0 %v2389
    %2468 = vmatpush1.msra.mxu0 %v2388
    %2469 = vmatprep.subr.mxu0 %v2385
    %2470 = vmatpush1.msra.mxu0 %v2384
    %2471 = vmatprep.subr.mxu0 %v2381
    %2472 = vmatpush1.msra.mxu0 %v2380
    %2473 = vmatprep.subr.mxu0 %v2377
    %2474 = vmatpush1.msra.mxu0 %v2376
    %2475 = vmatprep.subr.mxu0 %v2373
    %2476 = vmatpush1.msra.mxu0 %v2372
    %2477 = vmatprep.subr.mxu0 %v2369
    %2478 = vmatpush1.msra.mxu0 %v2368
    %2479 = vmatprep.subr.mxu0 %v2365
    %2480 = vmatpush1.msra.mxu0 %v2364
    %2481 = vmatprep.subr.mxu0 %v2361
    %2482 = vmatpush1.msra.mxu0 %v2360
    %2483 = vmatprep.subr.mxu0 %v2357
    %2484 = vmatpush1.msra.mxu0 %v2356
    %2485 = vmatprep.subr.mxu0 %v2353
    %2486 = vmatpush1.msra.mxu0 %v2352
    %2487 = vmatprep.subr.mxu0 %v2349
    %2488 = vmatpush1.msra.mxu0 %v2348
    %2489 = vmatprep.subr.mxu0 %v2345
    %2490 = vmatpush1.msra.mxu0 %v2344
    %2491 = vmatprep.subr.mxu0 %v2341
    %2492 = vmatpush1.msra.mxu0 %v2340
    %2493 = vmatprep.subr.mxu0 %v2337
    %2494 = vmatpush1.msra.mxu0 %v2336
    %2495 = vmatprep.subr.mxu0 %v2333
    %2496 = vmatpush1.msra.mxu0 %v2332
    %2497 = vmatprep.subr.mxu0 0.0
    %2498 = vmatpush2.msra.mxu0 0.0
    %2499 = vmatprep.subr.mxu0 0.0
    %2500 = vmatpush2.msra.mxu0 0.0
    %2501 = vmatprep.subr.mxu0 0.0
    %2502 = vmatpush2.msra.mxu0 0.0
    %2503 = vmatprep.subr.mxu0 0.0
    %2504 = vmatpush2.msra.mxu0 0.0
    %2505 = vmatprep.subr.mxu0 0.0
    %2506 = vmatpush2.msra.mxu0 0.0
    %2507 = vmatprep.subr.mxu0 0.0
    %2508 = vmatpush2.msra.mxu0 0.0
    %2509 = vmatprep.subr.mxu0 0.0
    %2510 = vmatpush2.msra.mxu0 0.0
    %2511 = vmatprep.subr.mxu0 0.0
    %2512 = vmatpush2.msra.mxu0 0.0
    %2513 = vmatprep.subr.mxu0 0.0
    %2514 = vmatpush2.msra.mxu0 0.0
    %2515 = vmatprep.subr.mxu0 0.0
    %2516 = vmatpush2.msra.mxu0 0.0
    %2517 = vmatprep.subr.mxu0 0.0
    %2518 = vmatpush2.msra.mxu0 0.0
    %2519 = vmatprep.subr.mxu0 0.0
    %2520 = vmatpush2.msra.mxu0 0.0
    %2521 = vmatprep.subr.mxu0 0.0
    %2522 = vmatpush2.msra.mxu0 0.0
    %2523 = vmatprep.subr.mxu0 0.0
    %2524 = vmatpush2.msra.mxu0 0.0
    %2525 = vmatprep.subr.mxu0 0.0
    %2526 = vmatpush2.msra.mxu0 0.0
    %2527 = vmatprep.subr.mxu0 0.0
    %2528 = vmatpush2.msra.mxu0 0.0
    %2529 = vmatprep.mubr.f32.mxu0 0.0
    %2530 = vmatmul.mubr.f32.gmra.mxu0 %v1650
    %v2531 = vpop.f32.mrf.mxu0
    %v2532 = vadd.f32 0.0, %v2531
    %v2533 = vpop.f32.mrf.mxu0
    %v2534 = vadd.f32 0.0, %v2533
    %2535 = vdwg.mxu0
    %v2536 = vadd.f32 %v2255, %v2461
    %v2537 = vadd.f32 %v2257, %v2463
    %v2538 = vadd.f32 %v2326, %v2532
    %v2539 = vadd.f32 %v2328, %v2534
    %v2540 = vxor.u32 %v2536, 2147483648
    %v2541 = vmul.f32 %v2540, 1.442695
    %v2542 = vpow.pop %v2541
    %v2543 = vadd.f32 %v2542, 1.0
    %v2544 = vrcp.pop %v2543
    %v2545 = vmul.f32 1.0, %v2544
    %v2546 = vxor.u32 %v2537, 2147483648
    %v2547 = vmul.f32 %v2546, 1.442695
    %v2548 = vpow.pop %v2547
    %v2549 = vadd.f32 %v2548, 1.0
    %v2550 = vrcp.pop %v2549
    %v2551 = vmul.f32 1.0, %v2550
    %v2552 = vtanh.pop %v2538
    %v2553 = vxor.u32 %v2539, 2147483648
    %v2554 = vmul.f32 %v2553, 1.442695
    %v2555 = vpow.pop %v2554
    %v2556 = vadd.f32 %v2555, 1.0
    %v2557 = vrcp.pop %v2556
    %v2558 = vmul.f32 1.0, %v2557
    %v2559 = vmul.f32 %v2551, %v1648
    %v2560 = vmul.f32 %v2545, %v2552
    %v2561 = vadd.f32 %v2559, %v2560
    %v2562 = vtanh.pop %v2561
    %v2563 = vmul.f32 %v2558, %v2562
    %v2564 = vld [vmem:[#allocation11] sm:$0xff]
    %v2565 = vld [vmem:[#allocation11 + $0x8] sm:$0xff]
    %v2566 = vld [vmem:[#allocation11 + $0x10] sm:$0xff]
    %v2567 = vld [vmem:[#allocation11 + $0x18] sm:$0xff]
    %v2568 = vld [vmem:[#allocation11 + $0x20] sm:$0xff]
    %v2569 = vld [vmem:[#allocation11 + $0x28] sm:$0xff]
    %v2570 = vld [vmem:[#allocation11 + $0x30] sm:$0xff]
    %v2571 = vld [vmem:[#allocation11 + $0x38] sm:$0xff]
    %v2572 = vld [vmem:[#allocation11 + $0x40] sm:$0xff]
    %v2573 = vld [vmem:[#allocation11 + $0x48] sm:$0xff]
    %v2574 = vld [vmem:[#allocation11 + $0x50] sm:$0xff]
    %v2575 = vld [vmem:[#allocation11 + $0x58] sm:$0xff]
    %v2576 = vld [vmem:[#allocation11 + $0x60] sm:$0xff]
    %v2577 = vld [vmem:[#allocation11 + $0x68] sm:$0xff]
    %v2578 = vld [vmem:[#allocation11 + $0x70] sm:$0xff]
    %v2579 = vld [vmem:[#allocation11 + $0x78] sm:$0xff]
    %v2580 = vld [vmem:[#allocation11 + $0x80] sm:$0xff]
    %v2581 = vld [vmem:[#allocation11 + $0x88] sm:$0xff]
    %v2582 = vld [vmem:[#allocation11 + $0x90] sm:$0xff]
    %v2583 = vld [vmem:[#allocation11 + $0x98] sm:$0xff]
    %v2584 = vld [vmem:[#allocation11 + $0xa0] sm:$0xff]
    %v2585 = vld [vmem:[#allocation11 + $0xa8] sm:$0xff]
    %v2586 = vld [vmem:[#allocation11 + $0xb0] sm:$0xff]
    %v2587 = vld [vmem:[#allocation11 + $0xb8] sm:$0xff]
    %v2588 = vld [vmem:[#allocation11 + $0xc0] sm:$0xff]
    %v2589 = vld [vmem:[#allocation11 + $0xc8] sm:$0xff]
    %v2590 = vld [vmem:[#allocation11 + $0xd0] sm:$0xff]
    %v2591 = vld [vmem:[#allocation11 + $0xd8] sm:$0xff]
    %v2592 = vld [vmem:[#allocation11 + $0xe0] sm:$0xff]
    %v2593 = vld [vmem:[#allocation11 + $0xe8] sm:$0xff]
    %v2594 = vld [vmem:[#allocation11 + $0xf0] sm:$0xff]
    %v2595 = vld [vmem:[#allocation11 + $0xf8] sm:$0xff]
    %v2596 = vld [vmem:[#allocation11 + $0x100] sm:$0xff]
    %v2597 = vld [vmem:[#allocation11 + $0x108] sm:$0xff]
    %v2598 = vld [vmem:[#allocation11 + $0x110] sm:$0xff]
    %v2599 = vld [vmem:[#allocation11 + $0x118] sm:$0xff]
    %v2600 = vld [vmem:[#allocation11 + $0x120] sm:$0xff]
    %v2601 = vld [vmem:[#allocation11 + $0x128] sm:$0xff]
    %v2602 = vld [vmem:[#allocation11 + $0x130] sm:$0xff]
    %v2603 = vld [vmem:[#allocation11 + $0x138] sm:$0xff]
    %v2604 = vld [vmem:[#allocation11 + $0x140] sm:$0xff]
    %v2605 = vld [vmem:[#allocation11 + $0x148] sm:$0xff]
    %v2606 = vld [vmem:[#allocation11 + $0x150] sm:$0xff]
    %v2607 = vld [vmem:[#allocation11 + $0x158] sm:$0xff]
    %v2608 = vld [vmem:[#allocation11 + $0x160] sm:$0xff]
    %v2609 = vld [vmem:[#allocation11 + $0x168] sm:$0xff]
    %v2610 = vld [vmem:[#allocation11 + $0x170] sm:$0xff]
    %v2611 = vld [vmem:[#allocation11 + $0x178] sm:$0xff]
    %v2612 = vld [vmem:[#allocation11 + $0x180] sm:$0xff]
    %v2613 = vld [vmem:[#allocation11 + $0x188] sm:$0xff]
    %v2614 = vld [vmem:[#allocation11 + $0x190] sm:$0xff]
    %v2615 = vld [vmem:[#allocation11 + $0x198] sm:$0xff]
    %v2616 = vld [vmem:[#allocation11 + $0x1a0] sm:$0xff]
    %v2617 = vld [vmem:[#allocation11 + $0x1a8] sm:$0xff]
    %v2618 = vld [vmem:[#allocation11 + $0x1b0] sm:$0xff]
    %v2619 = vld [vmem:[#allocation11 + $0x1b8] sm:$0xff]
    %v2620 = vld [vmem:[#allocation11 + $0x1c0] sm:$0xff]
    %v2621 = vld [vmem:[#allocation11 + $0x1c8] sm:$0xff]
    %v2622 = vld [vmem:[#allocation11 + $0x1d0] sm:$0xff]
    %v2623 = vld [vmem:[#allocation11 + $0x1d8] sm:$0xff]
    %v2624 = vld [vmem:[#allocation11 + $0x1e0] sm:$0xff]
    %v2625 = vld [vmem:[#allocation11 + $0x1e8] sm:$0xff]
    %v2626 = vld [vmem:[#allocation11 + $0x1f0] sm:$0xff]
    %v2627 = vld [vmem:[#allocation11 + $0x1f8] sm:$0xff]
    %v2628 = vld [vmem:[#allocation11 + $0x200] sm:$0xff]
    %v2629 = vld [vmem:[#allocation11 + $0x208] sm:$0xff]
    %v2630 = vld [vmem:[#allocation11 + $0x210] sm:$0xff]
    %v2631 = vld [vmem:[#allocation11 + $0x218] sm:$0xff]
    %v2632 = vld [vmem:[#allocation11 + $0x220] sm:$0xff]
    %v2633 = vld [vmem:[#allocation11 + $0x228] sm:$0xff]
    %v2634 = vld [vmem:[#allocation11 + $0x230] sm:$0xff]
    %v2635 = vld [vmem:[#allocation11 + $0x238] sm:$0xff]
    %v2636 = vld [vmem:[#allocation11 + $0x240] sm:$0xff]
    %v2637 = vld [vmem:[#allocation11 + $0x248] sm:$0xff]
    %v2638 = vld [vmem:[#allocation11 + $0x250] sm:$0xff]
    %v2639 = vld [vmem:[#allocation11 + $0x258] sm:$0xff]
    %v2640 = vld [vmem:[#allocation11 + $0x260] sm:$0xff]
    %v2641 = vld [vmem:[#allocation11 + $0x268] sm:$0xff]
    %v2642 = vld [vmem:[#allocation11 + $0x270] sm:$0xff]
    %v2643 = vld [vmem:[#allocation11 + $0x278] sm:$0xff]
    %v2644 = vld [vmem:[#allocation11 + $0x280] sm:$0xff]
    %v2645 = vld [vmem:[#allocation11 + $0x288] sm:$0xff]
    %v2646 = vld [vmem:[#allocation11 + $0x290] sm:$0xff]
    %v2647 = vld [vmem:[#allocation11 + $0x298] sm:$0xff]
    %v2648 = vld [vmem:[#allocation11 + $0x2a0] sm:$0xff]
    %v2649 = vld [vmem:[#allocation11 + $0x2a8] sm:$0xff]
    %v2650 = vld [vmem:[#allocation11 + $0x2b0] sm:$0xff]
    %v2651 = vld [vmem:[#allocation11 + $0x2b8] sm:$0xff]
    %v2652 = vld [vmem:[#allocation11 + $0x2c0] sm:$0xff]
    %v2653 = vld [vmem:[#allocation11 + $0x2c8] sm:$0xff]
    %v2654 = vld [vmem:[#allocation11 + $0x2d0] sm:$0xff]
    %v2655 = vld [vmem:[#allocation11 + $0x2d8] sm:$0xff]
    %v2656 = vld [vmem:[#allocation11 + $0x2e0] sm:$0xff]
    %v2657 = vld [vmem:[#allocation11 + $0x2e8] sm:$0xff]
    %v2658 = vld [vmem:[#allocation11 + $0x2f0] sm:$0xff]
    %v2659 = vld [vmem:[#allocation11 + $0x2f8] sm:$0xff]
    %v2660 = vld [vmem:[#allocation11 + $0x300] sm:$0xff]
    %v2661 = vld [vmem:[#allocation11 + $0x308] sm:$0xff]
    %v2662 = vld [vmem:[#allocation11 + $0x310] sm:$0xff]
    %v2663 = vld [vmem:[#allocation11 + $0x318] sm:$0xff]
    %v2664 = vld [vmem:[#allocation11 + $0x320] sm:$0xff]
    %v2665 = vld [vmem:[#allocation11 + $0x328] sm:$0xff]
    %v2666 = vld [vmem:[#allocation11 + $0x330] sm:$0xff]
    %v2667 = vld [vmem:[#allocation11 + $0x338] sm:$0xff]
    %v2668 = vld [vmem:[#allocation11 + $0x340] sm:$0xff]
    %v2669 = vld [vmem:[#allocation11 + $0x348] sm:$0xff]
    %v2670 = vld [vmem:[#allocation11 + $0x350] sm:$0xff]
    %v2671 = vld [vmem:[#allocation11 + $0x358] sm:$0xff]
    %v2672 = vld [vmem:[#allocation11 + $0x360] sm:$0xff]
    %v2673 = vld [vmem:[#allocation11 + $0x368] sm:$0xff]
    %v2674 = vld [vmem:[#allocation11 + $0x370] sm:$0xff]
    %v2675 = vld [vmem:[#allocation11 + $0x378] sm:$0xff]
    %v2676 = vld [vmem:[#allocation11 + $0x380] sm:$0xff]
    %v2677 = vld [vmem:[#allocation11 + $0x388] sm:$0xff]
    %v2678 = vld [vmem:[#allocation11 + $0x390] sm:$0xff]
    %v2679 = vld [vmem:[#allocation11 + $0x398] sm:$0xff]
    %v2680 = vld [vmem:[#allocation11 + $0x3a0] sm:$0xff]
    %v2681 = vld [vmem:[#allocation11 + $0x3a8] sm:$0xff]
    %v2682 = vld [vmem:[#allocation11 + $0x3b0] sm:$0xff]
    %v2683 = vld [vmem:[#allocation11 + $0x3b8] sm:$0xff]
    %v2684 = vld [vmem:[#allocation11 + $0x3c0] sm:$0xff]
    %v2685 = vld [vmem:[#allocation11 + $0x3c8] sm:$0xff]
    %v2686 = vld [vmem:[#allocation11 + $0x3d0] sm:$0xff]
    %v2687 = vld [vmem:[#allocation11 + $0x3d8] sm:$0xff]
    %v2688 = vld [vmem:[#allocation11 + $0x3e0] sm:$0xff]
    %v2689 = vld [vmem:[#allocation11 + $0x3e8] sm:$0xff]
    %v2690 = vld [vmem:[#allocation11 + $0x3f0] sm:$0xff]
    %v2691 = vld [vmem:[#allocation11 + $0x3f8] sm:$0xff]
    %2692 = vmatprep.subr.mxu0 %v2625
    %2693 = vmatpush1.msra.mxu0 %v2624
    %2694 = vmatprep.subr.mxu0 %v2621
    %2695 = vmatpush1.msra.mxu0 %v2620
    %2696 = vmatprep.subr.mxu0 %v2617
    %2697 = vmatpush1.msra.mxu0 %v2616
    %2698 = vmatprep.subr.mxu0 %v2613
    %2699 = vmatpush1.msra.mxu0 %v2612
    %2700 = vmatprep.subr.mxu0 %v2609
    %2701 = vmatpush1.msra.mxu0 %v2608
    %2702 = vmatprep.subr.mxu0 %v2605
    %2703 = vmatpush1.msra.mxu0 %v2604
    %2704 = vmatprep.subr.mxu0 %v2601
    %2705 = vmatpush1.msra.mxu0 %v2600
    %2706 = vmatprep.subr.mxu0 %v2597
    %2707 = vmatpush1.msra.mxu0 %v2596
    %2708 = vmatprep.subr.mxu0 %v2593
    %2709 = vmatpush1.msra.mxu0 %v2592
    %2710 = vmatprep.subr.mxu0 %v2589
    %2711 = vmatpush1.msra.mxu0 %v2588
    %2712 = vmatprep.subr.mxu0 %v2585
    %2713 = vmatpush1.msra.mxu0 %v2584
    %2714 = vmatprep.subr.mxu0 %v2581
    %2715 = vmatpush1.msra.mxu0 %v2580
    %2716 = vmatprep.subr.mxu0 %v2577
    %2717 = vmatpush1.msra.mxu0 %v2576
    %2718 = vmatprep.subr.mxu0 %v2573
    %2719 = vmatpush1.msra.mxu0 %v2572
    %2720 = vmatprep.subr.mxu0 %v2569
    %2721 = vmatpush1.msra.mxu0 %v2568
    %2722 = vmatprep.subr.mxu0 %v2565
    %2723 = vmatpush1.msra.mxu0 %v2564
    %2724 = vmatprep.subr.mxu0 %v2689
    %2725 = vmatpush2.msra.mxu0 %v2688
    %2726 = vmatprep.subr.mxu0 %v2685
    %2727 = vmatpush2.msra.mxu0 %v2684
    %2728 = vmatprep.subr.mxu0 %v2681
    %2729 = vmatpush2.msra.mxu0 %v2680
    %2730 = vmatprep.subr.mxu0 %v2677
    %2731 = vmatpush2.msra.mxu0 %v2676
    %2732 = vmatprep.subr.mxu0 %v2673
    %2733 = vmatpush2.msra.mxu0 %v2672
    %2734 = vmatprep.subr.mxu0 %v2669
    %2735 = vmatpush2.msra.mxu0 %v2668
    %2736 = vmatprep.subr.mxu0 %v2665
    %2737 = vmatpush2.msra.mxu0 %v2664
    %2738 = vmatprep.subr.mxu0 %v2661
    %2739 = vmatpush2.msra.mxu0 %v2660
    %2740 = vmatprep.subr.mxu0 %v2657
    %2741 = vmatpush2.msra.mxu0 %v2656
    %2742 = vmatprep.subr.mxu0 %v2653
    %2743 = vmatpush2.msra.mxu0 %v2652
    %2744 = vmatprep.subr.mxu0 %v2649
    %2745 = vmatpush2.msra.mxu0 %v2648
    %2746 = vmatprep.subr.mxu0 %v2645
    %2747 = vmatpush2.msra.mxu0 %v2644
    %2748 = vmatprep.subr.mxu0 %v2641
    %2749 = vmatpush2.msra.mxu0 %v2640
    %2750 = vmatprep.subr.mxu0 %v2637
    %2751 = vmatpush2.msra.mxu0 %v2636
    %2752 = vmatprep.subr.mxu0 %v2633
    %2753 = vmatpush2.msra.mxu0 %v2632
    %2754 = vmatprep.subr.mxu0 %v2629
    %2755 = vmatpush2.msra.mxu0 %v2628
    %2756 = vmatprep.mubr.f32.mxu0 %v1944
    %2757 = vmatmul.mubr.f32.gmra.mxu0 %v2563
    %v2758 = vpop.f32.mrf.mxu0
    %v2759 = vadd.f32 %v195, %v2758
    %v2760 = vpop.f32.mrf.mxu0
    %v2761 = vadd.f32 %v199, %v2760
    %2762 = vdwg.mxu0
    %2763 = vmatprep.subr.mxu0 %v2627
    %2764 = vmatpush1.msra.mxu0 %v2626
    %2765 = vmatprep.subr.mxu0 %v2623
    %2766 = vmatpush1.msra.mxu0 %v2622
    %2767 = vmatprep.subr.mxu0 %v2619
    %2768 = vmatpush1.msra.mxu0 %v2618
    %2769 = vmatprep.subr.mxu0 %v2615
    %2770 = vmatpush1.msra.mxu0 %v2614
    %2771 = vmatprep.subr.mxu0 %v2611
    %2772 = vmatpush1.msra.mxu0 %v2610
    %2773 = vmatprep.subr.mxu0 %v2607
    %2774 = vmatpush1.msra.mxu0 %v2606
    %2775 = vmatprep.subr.mxu0 %v2603
    %2776 = vmatpush1.msra.mxu0 %v2602
    %2777 = vmatprep.subr.mxu0 %v2599
    %2778 = vmatpush1.msra.mxu0 %v2598
    %2779 = vmatprep.subr.mxu0 %v2595
    %2780 = vmatpush1.msra.mxu0 %v2594
    %2781 = vmatprep.subr.mxu0 %v2591
    %2782 = vmatpush1.msra.mxu0 %v2590
    %2783 = vmatprep.subr.mxu0 %v2587
    %2784 = vmatpush1.msra.mxu0 %v2586
    %2785 = vmatprep.subr.mxu0 %v2583
    %2786 = vmatpush1.msra.mxu0 %v2582
    %2787 = vmatprep.subr.mxu0 %v2579
    %2788 = vmatpush1.msra.mxu0 %v2578
    %2789 = vmatprep.subr.mxu0 %v2575
    %2790 = vmatpush1.msra.mxu0 %v2574
    %2791 = vmatprep.subr.mxu0 %v2571
    %2792 = vmatpush1.msra.mxu0 %v2570
    %2793 = vmatprep.subr.mxu0 %v2567
    %2794 = vmatpush1.msra.mxu0 %v2566
    %2795 = vmatprep.subr.mxu0 %v2691
    %2796 = vmatpush2.msra.mxu0 %v2690
    %2797 = vmatprep.subr.mxu0 %v2687
    %2798 = vmatpush2.msra.mxu0 %v2686
    %2799 = vmatprep.subr.mxu0 %v2683
    %2800 = vmatpush2.msra.mxu0 %v2682
    %2801 = vmatprep.subr.mxu0 %v2679
    %2802 = vmatpush2.msra.mxu0 %v2678
    %2803 = vmatprep.subr.mxu0 %v2675
    %2804 = vmatpush2.msra.mxu0 %v2674
    %2805 = vmatprep.subr.mxu0 %v2671
    %2806 = vmatpush2.msra.mxu0 %v2670
    %2807 = vmatprep.subr.mxu0 %v2667
    %2808 = vmatpush2.msra.mxu0 %v2666
    %2809 = vmatprep.subr.mxu0 %v2663
    %2810 = vmatpush2.msra.mxu0 %v2662
    %2811 = vmatprep.subr.mxu0 %v2659
    %2812 = vmatpush2.msra.mxu0 %v2658
    %2813 = vmatprep.subr.mxu0 %v2655
    %2814 = vmatpush2.msra.mxu0 %v2654
    %2815 = vmatprep.subr.mxu0 %v2651
    %2816 = vmatpush2.msra.mxu0 %v2650
    %2817 = vmatprep.subr.mxu0 %v2647
    %2818 = vmatpush2.msra.mxu0 %v2646
    %2819 = vmatprep.subr.mxu0 %v2643
    %2820 = vmatpush2.msra.mxu0 %v2642
    %2821 = vmatprep.subr.mxu0 %v2639
    %2822 = vmatpush2.msra.mxu0 %v2638
    %2823 = vmatprep.subr.mxu0 %v2635
    %2824 = vmatpush2.msra.mxu0 %v2634
    %2825 = vmatprep.subr.mxu0 %v2631
    %2826 = vmatpush2.msra.mxu0 %v2630
    %2827 = vmatprep.mubr.f32.mxu0 %v1944
    %2828 = vmatmul.mubr.f32.gmra.mxu0 %v2563
    %v2829 = vpop.f32.mrf.mxu0
    %v2830 = vadd.f32 %v203, %v2829
    %v2831 = vpop.f32.mrf.mxu0
    %v2832 = vadd.f32 %v207, %v2831
    %2833 = vdwg.mxu0
    %v2834 = vxor.u32 %v2759, 2147483648
    %v2835 = vmul.f32 %v2834, 1.442695
    %v2836 = vpow.pop %v2835
    %v2837 = vadd.f32 %v2836, 1.0
    %v2838 = vrcp.pop %v2837
    %v2839 = vmul.f32 1.0, %v2838
    %v2840 = vxor.u32 %v2761, 2147483648
    %v2841 = vmul.f32 %v2840, 1.442695
    %v2842 = vpow.pop %v2841
    %v2843 = vadd.f32 %v2842, 1.0
    %v2844 = vrcp.pop %v2843
    %v2845 = vmul.f32 1.0, %v2844
    %v2846 = vtanh.pop %v2830
    %v2847 = vxor.u32 %v2832, 2147483648
    %v2848 = vmul.f32 %v2847, 1.442695
    %v2849 = vpow.pop %v2848
    %v2850 = vadd.f32 %v2849, 1.0
    %v2851 = vrcp.pop %v2850
    %v2852 = vmul.f32 1.0, %v2851
    %v2853 = vmul.f32 %v2845, %v1942
    %v2854 = vmul.f32 %v2839, %v2846
    %v2855 = vadd.f32 %v2853, %v2854
    %v2856 = vtanh.pop %v2855
    %v2857 = vmul.f32 %v2852, %v2856
    %v2858 = vld [vmem:[#allocation14] sm:$0xff]
    %v2859 = vld [vmem:[#allocation14 + $0x8] sm:$0xff]
    %v2860 = vld [vmem:[#allocation14 + $0x10] sm:$0xff]
    %v2861 = vld [vmem:[#allocation14 + $0x18] sm:$0xff]
    %v2862 = vld [vmem:[#allocation14 + $0x20] sm:$0xff]
    %v2863 = vld [vmem:[#allocation14 + $0x28] sm:$0xff]
    %v2864 = vld [vmem:[#allocation14 + $0x30] sm:$0xff]
    %v2865 = vld [vmem:[#allocation14 + $0x38] sm:$0xff]
    %v2866 = vld [vmem:[#allocation14 + $0x40] sm:$0xff]
    %v2867 = vld [vmem:[#allocation14 + $0x48] sm:$0xff]
    %v2868 = vld [vmem:[#allocation14 + $0x50] sm:$0xff]
    %v2869 = vld [vmem:[#allocation14 + $0x58] sm:$0xff]
    %v2870 = vld [vmem:[#allocation14 + $0x60] sm:$0xff]
    %v2871 = vld [vmem:[#allocation14 + $0x68] sm:$0xff]
    %v2872 = vld [vmem:[#allocation14 + $0x70] sm:$0xff]
    %v2873 = vld [vmem:[#allocation14 + $0x78] sm:$0xff]
    %v2874 = vld [vmem:[#allocation14 + $0x80] sm:$0xff]
    %v2875 = vld [vmem:[#allocation14 + $0x88] sm:$0xff]
    %v2876 = vld [vmem:[#allocation14 + $0x90] sm:$0xff]
    %v2877 = vld [vmem:[#allocation14 + $0x98] sm:$0xff]
    %v2878 = vld [vmem:[#allocation14 + $0xa0] sm:$0xff]
    %v2879 = vld [vmem:[#allocation14 + $0xa8] sm:$0xff]
    %v2880 = vld [vmem:[#allocation14 + $0xb0] sm:$0xff]
    %v2881 = vld [vmem:[#allocation14 + $0xb8] sm:$0xff]
    %v2882 = vld [vmem:[#allocation14 + $0xc0] sm:$0xff]
    %v2883 = vld [vmem:[#allocation14 + $0xc8] sm:$0xff]
    %v2884 = vld [vmem:[#allocation14 + $0xd0] sm:$0xff]
    %v2885 = vld [vmem:[#allocation14 + $0xd8] sm:$0xff]
    %v2886 = vld [vmem:[#allocation14 + $0xe0] sm:$0xff]
    %v2887 = vld [vmem:[#allocation14 + $0xe8] sm:$0xff]
    %v2888 = vld [vmem:[#allocation14 + $0xf0] sm:$0xff]
    %v2889 = vld [vmem:[#allocation14 + $0xf8] sm:$0xff]
    %2890 = vmatprep.subr.mxu0 %v2889
    %2891 = vmatpush1.msra.mxu0 %v2888
    %2892 = vmatprep.subr.mxu0 %v2887
    %2893 = vmatpush1.msra.mxu0 %v2886
    %2894 = vmatprep.subr.mxu0 %v2885
    %2895 = vmatpush1.msra.mxu0 %v2884
    %2896 = vmatprep.subr.mxu0 %v2883
    %2897 = vmatpush1.msra.mxu0 %v2882
    %2898 = vmatprep.subr.mxu0 %v2881
    %2899 = vmatpush1.msra.mxu0 %v2880
    %2900 = vmatprep.subr.mxu0 %v2879
    %2901 = vmatpush1.msra.mxu0 %v2878
    %2902 = vmatprep.subr.mxu0 %v2877
    %2903 = vmatpush1.msra.mxu0 %v2876
    %2904 = vmatprep.subr.mxu0 %v2875
    %2905 = vmatpush1.msra.mxu0 %v2874
    %2906 = vmatprep.subr.mxu0 %v2873
    %2907 = vmatpush1.msra.mxu0 %v2872
    %2908 = vmatprep.subr.mxu0 %v2871
    %2909 = vmatpush1.msra.mxu0 %v2870
    %2910 = vmatprep.subr.mxu0 %v2869
    %2911 = vmatpush1.msra.mxu0 %v2868
    %2912 = vmatprep.subr.mxu0 %v2867
    %2913 = vmatpush1.msra.mxu0 %v2866
    %2914 = vmatprep.subr.mxu0 %v2865
    %2915 = vmatpush1.msra.mxu0 %v2864
    %2916 = vmatprep.subr.mxu0 %v2863
    %2917 = vmatpush1.msra.mxu0 %v2862
    %2918 = vmatprep.subr.mxu0 %v2861
    %2919 = vmatpush1.msra.mxu0 %v2860
    %2920 = vmatprep.subr.mxu0 %v2859
    %2921 = vmatpush1.msra.mxu0 %v2858
    %2922 = vmatprep.subr.mxu0 0.0
    %2923 = vmatpush2.msra.mxu0 0.0
    %2924 = vmatprep.subr.mxu0 0.0
    %2925 = vmatpush2.msra.mxu0 0.0
    %2926 = vmatprep.subr.mxu0 0.0
    %2927 = vmatpush2.msra.mxu0 0.0
    %2928 = vmatprep.subr.mxu0 0.0
    %2929 = vmatpush2.msra.mxu0 0.0
    %2930 = vmatprep.subr.mxu0 0.0
    %2931 = vmatpush2.msra.mxu0 0.0
    %2932 = vmatprep.subr.mxu0 0.0
    %2933 = vmatpush2.msra.mxu0 0.0
    %2934 = vmatprep.subr.mxu0 0.0
    %2935 = vmatpush2.msra.mxu0 0.0
    %2936 = vmatprep.subr.mxu0 0.0
    %2937 = vmatpush2.msra.mxu0 0.0
    %2938 = vmatprep.subr.mxu0 0.0
    %2939 = vmatpush2.msra.mxu0 0.0
    %2940 = vmatprep.subr.mxu0 0.0
    %2941 = vmatpush2.msra.mxu0 0.0
    %2942 = vmatprep.subr.mxu0 0.0
    %2943 = vmatpush2.msra.mxu0 0.0
    %2944 = vmatprep.subr.mxu0 0.0
    %2945 = vmatpush2.msra.mxu0 0.0
    %2946 = vmatprep.subr.mxu0 0.0
    %2947 = vmatpush2.msra.mxu0 0.0
    %2948 = vmatprep.subr.mxu0 0.0
    %2949 = vmatpush2.msra.mxu0 0.0
    %2950 = vmatprep.subr.mxu0 0.0
    %2951 = vmatpush2.msra.mxu0 0.0
    %2952 = vmatprep.subr.mxu0 0.0
    %2953 = vmatpush2.msra.mxu0 0.0
    %2954 = vmatprep.mubr.f32.mxu0 0.0
    %2955 = vmatmul.mubr.f32.gmra.mxu0 %v2857
    %v2956 = vpop.f32.mrf.mxu0
    %v2957 = vadd.f32 %v217, %v2956
    %v2958 = vpop.f32.mrf.mxu0
    %v2959 = vadd.f32 %v221, %v2958
    %2960 = vdwg.mxu0
    %2961 = vst [vmem:[%s10 + $0x20] sm:$0xff] %v2957
    %2962 = vst [vmem:[%s10 + $0x28] sm:$0xff] %v2959
    %v2963 = vld [vmem:[#allocation2] sm:$0xff]
    %2964 = vset.pattern.permute.xlu0 3
    %2965 = vperm.xlu0 %2964, %v2963
    %v2966 = vpop.permute.xlu0 %2965
    %vm2967 = vcmp.eq.s32.totalorder %v2966, %v166
    %vm2968 = vcmp.eq.s32.totalorder %v2966, %v167
    %v2969 = vsel %vm2967, 1, 0
    %v2970 = vsel %vm2968, 1, 0
    %v2971 = vcvt.s32.f32 %v2969
    %v2972 = vcvt.s32.f32 %v2970
    %v2973 = vld [vmem:[#allocation7] sm:$0xff]
    %v2974 = vld [vmem:[#allocation7 + $0x8] sm:$0xff]
    %v2975 = vld [vmem:[#allocation7 + $0x10] sm:$0xff]
    %v2976 = vld [vmem:[#allocation7 + $0x18] sm:$0xff]
    %v2977 = vld [vmem:[#allocation7 + $0x20] sm:$0xff]
    %v2978 = vld [vmem:[#allocation7 + $0x28] sm:$0xff]
    %v2979 = vld [vmem:[#allocation7 + $0x30] sm:$0xff]
    %v2980 = vld [vmem:[#allocation7 + $0x38] sm:$0xff]
    %v2981 = vld [vmem:[#allocation7 + $0x40] sm:$0xff]
    %v2982 = vld [vmem:[#allocation7 + $0x48] sm:$0xff]
    %v2983 = vld [vmem:[#allocation7 + $0x50] sm:$0xff]
    %v2984 = vld [vmem:[#allocation7 + $0x58] sm:$0xff]
    %v2985 = vld [vmem:[#allocation7 + $0x60] sm:$0xff]
    %v2986 = vld [vmem:[#allocation7 + $0x68] sm:$0xff]
    %v2987 = vld [vmem:[#allocation7 + $0x70] sm:$0xff]
    %v2988 = vld [vmem:[#allocation7 + $0x78] sm:$0xff]
    %v2989 = vld [vmem:[#allocation7 + $0x80] sm:$0xff]
    %v2990 = vld [vmem:[#allocation7 + $0x88] sm:$0xff]
    %v2991 = vld [vmem:[#allocation7 + $0x90] sm:$0xff]
    %v2992 = vld [vmem:[#allocation7 + $0x98] sm:$0xff]
    %v2993 = vld [vmem:[#allocation7 + $0xa0] sm:$0xff]
    %v2994 = vld [vmem:[#allocation7 + $0xa8] sm:$0xff]
    %v2995 = vld [vmem:[#allocation7 + $0xb0] sm:$0xff]
    %v2996 = vld [vmem:[#allocation7 + $0xb8] sm:$0xff]
    %v2997 = vld [vmem:[#allocation7 + $0xc0] sm:$0xff]
    %v2998 = vld [vmem:[#allocation7 + $0xc8] sm:$0xff]
    %v2999 = vld [vmem:[#allocation7 + $0xd0] sm:$0xff]
    %v3000 = vld [vmem:[#allocation7 + $0xd8] sm:$0xff]
    %v3001 = vld [vmem:[#allocation7 + $0xe0] sm:$0xff]
    %v3002 = vld [vmem:[#allocation7 + $0xe8] sm:$0xff]
    %v3003 = vld [vmem:[#allocation7 + $0xf0] sm:$0xff]
    %v3004 = vld [vmem:[#allocation7 + $0xf8] sm:$0xff]
    %v3005 = vld [vmem:[#allocation7 + $0x100] sm:$0xff]
    %v3006 = vld [vmem:[#allocation7 + $0x108] sm:$0xff]
    %v3007 = vld [vmem:[#allocation7 + $0x110] sm:$0xff]
    %v3008 = vld [vmem:[#allocation7 + $0x118] sm:$0xff]
    %v3009 = vld [vmem:[#allocation7 + $0x120] sm:$0xff]
    %v3010 = vld [vmem:[#allocation7 + $0x128] sm:$0xff]
    %v3011 = vld [vmem:[#allocation7 + $0x130] sm:$0xff]
    %v3012 = vld [vmem:[#allocation7 + $0x138] sm:$0xff]
    %v3013 = vld [vmem:[#allocation7 + $0x140] sm:$0xff]
    %v3014 = vld [vmem:[#allocation7 + $0x148] sm:$0xff]
    %v3015 = vld [vmem:[#allocation7 + $0x150] sm:$0xff]
    %v3016 = vld [vmem:[#allocation7 + $0x158] sm:$0xff]
    %v3017 = vld [vmem:[#allocation7 + $0x160] sm:$0xff]
    %v3018 = vld [vmem:[#allocation7 + $0x168] sm:$0xff]
    %v3019 = vld [vmem:[#allocation7 + $0x170] sm:$0xff]
    %v3020 = vld [vmem:[#allocation7 + $0x178] sm:$0xff]
    %v3021 = vld [vmem:[#allocation7 + $0x180] sm:$0xff]
    %v3022 = vld [vmem:[#allocation7 + $0x188] sm:$0xff]
    %v3023 = vld [vmem:[#allocation7 + $0x190] sm:$0xff]
    %v3024 = vld [vmem:[#allocation7 + $0x198] sm:$0xff]
    %v3025 = vld [vmem:[#allocation7 + $0x1a0] sm:$0xff]
    %v3026 = vld [vmem:[#allocation7 + $0x1a8] sm:$0xff]
    %v3027 = vld [vmem:[#allocation7 + $0x1b0] sm:$0xff]
    %v3028 = vld [vmem:[#allocation7 + $0x1b8] sm:$0xff]
    %v3029 = vld [vmem:[#allocation7 + $0x1c0] sm:$0xff]
    %v3030 = vld [vmem:[#allocation7 + $0x1c8] sm:$0xff]
    %v3031 = vld [vmem:[#allocation7 + $0x1d0] sm:$0xff]
    %v3032 = vld [vmem:[#allocation7 + $0x1d8] sm:$0xff]
    %v3033 = vld [vmem:[#allocation7 + $0x1e0] sm:$0xff]
    %v3034 = vld [vmem:[#allocation7 + $0x1e8] sm:$0xff]
    %v3035 = vld [vmem:[#allocation7 + $0x1f0] sm:$0xff]
    %v3036 = vld [vmem:[#allocation7 + $0x1f8] sm:$0xff]
    %v3037 = vld [vmem:[#allocation7 + $0x200] sm:$0xff]
    %v3038 = vld [vmem:[#allocation7 + $0x208] sm:$0xff]
    %v3039 = vld [vmem:[#allocation7 + $0x210] sm:$0xff]
    %v3040 = vld [vmem:[#allocation7 + $0x218] sm:$0xff]
    %v3041 = vld [vmem:[#allocation7 + $0x220] sm:$0xff]
    %v3042 = vld [vmem:[#allocation7 + $0x228] sm:$0xff]
    %v3043 = vld [vmem:[#allocation7 + $0x230] sm:$0xff]
    %v3044 = vld [vmem:[#allocation7 + $0x238] sm:$0xff]
    %v3045 = vld [vmem:[#allocation7 + $0x240] sm:$0xff]
    %v3046 = vld [vmem:[#allocation7 + $0x248] sm:$0xff]
    %v3047 = vld [vmem:[#allocation7 + $0x250] sm:$0xff]
    %v3048 = vld [vmem:[#allocation7 + $0x258] sm:$0xff]
    %v3049 = vld [vmem:[#allocation7 + $0x260] sm:$0xff]
    %v3050 = vld [vmem:[#allocation7 + $0x268] sm:$0xff]
    %v3051 = vld [vmem:[#allocation7 + $0x270] sm:$0xff]
    %v3052 = vld [vmem:[#allocation7 + $0x278] sm:$0xff]
    %v3053 = vld [vmem:[#allocation7 + $0x280] sm:$0xff]
    %v3054 = vld [vmem:[#allocation7 + $0x288] sm:$0xff]
    %v3055 = vld [vmem:[#allocation7 + $0x290] sm:$0xff]
    %v3056 = vld [vmem:[#allocation7 + $0x298] sm:$0xff]
    %v3057 = vld [vmem:[#allocation7 + $0x2a0] sm:$0xff]
    %v3058 = vld [vmem:[#allocation7 + $0x2a8] sm:$0xff]
    %v3059 = vld [vmem:[#allocation7 + $0x2b0] sm:$0xff]
    %v3060 = vld [vmem:[#allocation7 + $0x2b8] sm:$0xff]
    %v3061 = vld [vmem:[#allocation7 + $0x2c0] sm:$0xff]
    %v3062 = vld [vmem:[#allocation7 + $0x2c8] sm:$0xff]
    %v3063 = vld [vmem:[#allocation7 + $0x2d0] sm:$0xff]
    %v3064 = vld [vmem:[#allocation7 + $0x2d8] sm:$0xff]
    %v3065 = vld [vmem:[#allocation7 + $0x2e0] sm:$0xff]
    %v3066 = vld [vmem:[#allocation7 + $0x2e8] sm:$0xff]
    %v3067 = vld [vmem:[#allocation7 + $0x2f0] sm:$0xff]
    %v3068 = vld [vmem:[#allocation7 + $0x2f8] sm:$0xff]
    %v3069 = vld [vmem:[#allocation7 + $0x300] sm:$0xff]
    %v3070 = vld [vmem:[#allocation7 + $0x308] sm:$0xff]
    %v3071 = vld [vmem:[#allocation7 + $0x310] sm:$0xff]
    %v3072 = vld [vmem:[#allocation7 + $0x318] sm:$0xff]
    %v3073 = vld [vmem:[#allocation7 + $0x320] sm:$0xff]
    %v3074 = vld [vmem:[#allocation7 + $0x328] sm:$0xff]
    %v3075 = vld [vmem:[#allocation7 + $0x330] sm:$0xff]
    %v3076 = vld [vmem:[#allocation7 + $0x338] sm:$0xff]
    %v3077 = vld [vmem:[#allocation7 + $0x340] sm:$0xff]
    %v3078 = vld [vmem:[#allocation7 + $0x348] sm:$0xff]
    %v3079 = vld [vmem:[#allocation7 + $0x350] sm:$0xff]
    %v3080 = vld [vmem:[#allocation7 + $0x358] sm:$0xff]
    %v3081 = vld [vmem:[#allocation7 + $0x360] sm:$0xff]
    %v3082 = vld [vmem:[#allocation7 + $0x368] sm:$0xff]
    %v3083 = vld [vmem:[#allocation7 + $0x370] sm:$0xff]
    %v3084 = vld [vmem:[#allocation7 + $0x378] sm:$0xff]
    %v3085 = vld [vmem:[#allocation7 + $0x380] sm:$0xff]
    %v3086 = vld [vmem:[#allocation7 + $0x388] sm:$0xff]
    %v3087 = vld [vmem:[#allocation7 + $0x390] sm:$0xff]
    %v3088 = vld [vmem:[#allocation7 + $0x398] sm:$0xff]
    %v3089 = vld [vmem:[#allocation7 + $0x3a0] sm:$0xff]
    %v3090 = vld [vmem:[#allocation7 + $0x3a8] sm:$0xff]
    %v3091 = vld [vmem:[#allocation7 + $0x3b0] sm:$0xff]
    %v3092 = vld [vmem:[#allocation7 + $0x3b8] sm:$0xff]
    %v3093 = vld [vmem:[#allocation7 + $0x3c0] sm:$0xff]
    %v3094 = vld [vmem:[#allocation7 + $0x3c8] sm:$0xff]
    %v3095 = vld [vmem:[#allocation7 + $0x3d0] sm:$0xff]
    %v3096 = vld [vmem:[#allocation7 + $0x3d8] sm:$0xff]
    %v3097 = vld [vmem:[#allocation7 + $0x3e0] sm:$0xff]
    %v3098 = vld [vmem:[#allocation7 + $0x3e8] sm:$0xff]
    %v3099 = vld [vmem:[#allocation7 + $0x3f0] sm:$0xff]
    %v3100 = vld [vmem:[#allocation7 + $0x3f8] sm:$0xff]
    %3101 = vmatprep.subr.mxu0 %v3034
    %3102 = vmatpush1.msra.mxu0 %v3033
    %3103 = vmatprep.subr.mxu0 %v3030
    %3104 = vmatpush1.msra.mxu0 %v3029
    %3105 = vmatprep.subr.mxu0 %v3026
    %3106 = vmatpush1.msra.mxu0 %v3025
    %3107 = vmatprep.subr.mxu0 %v3022
    %3108 = vmatpush1.msra.mxu0 %v3021
    %3109 = vmatprep.subr.mxu0 %v3018
    %3110 = vmatpush1.msra.mxu0 %v3017
    %3111 = vmatprep.subr.mxu0 %v3014
    %3112 = vmatpush1.msra.mxu0 %v3013
    %3113 = vmatprep.subr.mxu0 %v3010
    %3114 = vmatpush1.msra.mxu0 %v3009
    %3115 = vmatprep.subr.mxu0 %v3006
    %3116 = vmatpush1.msra.mxu0 %v3005
    %3117 = vmatprep.subr.mxu0 %v3002
    %3118 = vmatpush1.msra.mxu0 %v3001
    %3119 = vmatprep.subr.mxu0 %v2998
    %3120 = vmatpush1.msra.mxu0 %v2997
    %3121 = vmatprep.subr.mxu0 %v2994
    %3122 = vmatpush1.msra.mxu0 %v2993
    %3123 = vmatprep.subr.mxu0 %v2990
    %3124 = vmatpush1.msra.mxu0 %v2989
    %3125 = vmatprep.subr.mxu0 %v2986
    %3126 = vmatpush1.msra.mxu0 %v2985
    %3127 = vmatprep.subr.mxu0 %v2982
    %3128 = vmatpush1.msra.mxu0 %v2981
    %3129 = vmatprep.subr.mxu0 %v2978
    %3130 = vmatpush1.msra.mxu0 %v2977
    %3131 = vmatprep.subr.mxu0 %v2974
    %3132 = vmatpush1.msra.mxu0 %v2973
    %3133 = vmatprep.subr.mxu0 %v3098
    %3134 = vmatpush2.msra.mxu0 %v3097
    %3135 = vmatprep.subr.mxu0 %v3094
    %3136 = vmatpush2.msra.mxu0 %v3093
    %3137 = vmatprep.subr.mxu0 %v3090
    %3138 = vmatpush2.msra.mxu0 %v3089
    %3139 = vmatprep.subr.mxu0 %v3086
    %3140 = vmatpush2.msra.mxu0 %v3085
    %3141 = vmatprep.subr.mxu0 %v3082
    %3142 = vmatpush2.msra.mxu0 %v3081
    %3143 = vmatprep.subr.mxu0 %v3078
    %3144 = vmatpush2.msra.mxu0 %v3077
    %3145 = vmatprep.subr.mxu0 %v3074
    %3146 = vmatpush2.msra.mxu0 %v3073
    %3147 = vmatprep.subr.mxu0 %v3070
    %3148 = vmatpush2.msra.mxu0 %v3069
    %3149 = vmatprep.subr.mxu0 %v3066
    %3150 = vmatpush2.msra.mxu0 %v3065
    %3151 = vmatprep.subr.mxu0 %v3062
    %3152 = vmatpush2.msra.mxu0 %v3061
    %3153 = vmatprep.subr.mxu0 %v3058
    %3154 = vmatpush2.msra.mxu0 %v3057
    %3155 = vmatprep.subr.mxu0 %v3054
    %3156 = vmatpush2.msra.mxu0 %v3053
    %3157 = vmatprep.subr.mxu0 %v3050
    %3158 = vmatpush2.msra.mxu0 %v3049
    %3159 = vmatprep.subr.mxu0 %v3046
    %3160 = vmatpush2.msra.mxu0 %v3045
    %3161 = vmatprep.subr.mxu0 %v3042
    %3162 = vmatpush2.msra.mxu0 %v3041
    %3163 = vmatprep.subr.mxu0 %v3038
    %3164 = vmatpush2.msra.mxu0 %v3037
    %3165 = vmatprep.mubr.f32.mxu0 %v2972
    %3166 = vmatmul.mubr.f32.gmra.mxu0 %v2971
    %v3167 = vpop.f32.mrf.mxu0
    %v3168 = vadd.f32 %v173, %v3167
    %v3169 = vpop.f32.mrf.mxu0
    %v3170 = vadd.f32 %v177, %v3169
    %3171 = vdwg.mxu0
    %3172 = vmatprep.subr.mxu0 %v3036
    %3173 = vmatpush1.msra.mxu0 %v3035
    %3174 = vmatprep.subr.mxu0 %v3032
    %3175 = vmatpush1.msra.mxu0 %v3031
    %3176 = vmatprep.subr.mxu0 %v3028
    %3177 = vmatpush1.msra.mxu0 %v3027
    %3178 = vmatprep.subr.mxu0 %v3024
    %3179 = vmatpush1.msra.mxu0 %v3023
    %3180 = vmatprep.subr.mxu0 %v3020
    %3181 = vmatpush1.msra.mxu0 %v3019
    %3182 = vmatprep.subr.mxu0 %v3016
    %3183 = vmatpush1.msra.mxu0 %v3015
    %3184 = vmatprep.subr.mxu0 %v3012
    %3185 = vmatpush1.msra.mxu0 %v3011
    %3186 = vmatprep.subr.mxu0 %v3008
    %3187 = vmatpush1.msra.mxu0 %v3007
    %3188 = vmatprep.subr.mxu0 %v3004
    %3189 = vmatpush1.msra.mxu0 %v3003
    %3190 = vmatprep.subr.mxu0 %v3000
    %3191 = vmatpush1.msra.mxu0 %v2999
    %3192 = vmatprep.subr.mxu0 %v2996
    %3193 = vmatpush1.msra.mxu0 %v2995
    %3194 = vmatprep.subr.mxu0 %v2992
    %3195 = vmatpush1.msra.mxu0 %v2991
    %3196 = vmatprep.subr.mxu0 %v2988
    %3197 = vmatpush1.msra.mxu0 %v2987
    %3198 = vmatprep.subr.mxu0 %v2984
    %3199 = vmatpush1.msra.mxu0 %v2983
    %3200 = vmatprep.subr.mxu0 %v2980
    %3201 = vmatpush1.msra.mxu0 %v2979
    %3202 = vmatprep.subr.mxu0 %v2976
    %3203 = vmatpush1.msra.mxu0 %v2975
    %3204 = vmatprep.subr.mxu0 %v3100
    %3205 = vmatpush2.msra.mxu0 %v3099
    %3206 = vmatprep.subr.mxu0 %v3096
    %3207 = vmatpush2.msra.mxu0 %v3095
    %3208 = vmatprep.subr.mxu0 %v3092
    %3209 = vmatpush2.msra.mxu0 %v3091
    %3210 = vmatprep.subr.mxu0 %v3088
    %3211 = vmatpush2.msra.mxu0 %v3087
    %3212 = vmatprep.subr.mxu0 %v3084
    %3213 = vmatpush2.msra.mxu0 %v3083
    %3214 = vmatprep.subr.mxu0 %v3080
    %3215 = vmatpush2.msra.mxu0 %v3079
    %3216 = vmatprep.subr.mxu0 %v3076
    %3217 = vmatpush2.msra.mxu0 %v3075
    %3218 = vmatprep.subr.mxu0 %v3072
    %3219 = vmatpush2.msra.mxu0 %v3071
    %3220 = vmatprep.subr.mxu0 %v3068
    %3221 = vmatpush2.msra.mxu0 %v3067
    %3222 = vmatprep.subr.mxu0 %v3064
    %3223 = vmatpush2.msra.mxu0 %v3063
    %3224 = vmatprep.subr.mxu0 %v3060
    %3225 = vmatpush2.msra.mxu0 %v3059
    %3226 = vmatprep.subr.mxu0 %v3056
    %3227 = vmatpush2.msra.mxu0 %v3055
    %3228 = vmatprep.subr.mxu0 %v3052
    %3229 = vmatpush2.msra.mxu0 %v3051
    %3230 = vmatprep.subr.mxu0 %v3048
    %3231 = vmatpush2.msra.mxu0 %v3047
    %3232 = vmatprep.subr.mxu0 %v3044
    %3233 = vmatpush2.msra.mxu0 %v3043
    %3234 = vmatprep.subr.mxu0 %v3040
    %3235 = vmatpush2.msra.mxu0 %v3039
    %3236 = vmatprep.mubr.f32.mxu0 %v2972
    %3237 = vmatmul.mubr.f32.gmra.mxu0 %v2971
    %v3238 = vpop.f32.mrf.mxu0
    %v3239 = vadd.f32 %v181, %v3238
    %v3240 = vpop.f32.mrf.mxu0
    %v3241 = vadd.f32 %v185, %v3240
    %3242 = vdwg.mxu0
    %v3243 = vld [vmem:[#allocation8] sm:$0xff]
    %v3244 = vld [vmem:[#allocation8 + $0x8] sm:$0xff]
    %v3245 = vld [vmem:[#allocation8 + $0x10] sm:$0xff]
    %v3246 = vld [vmem:[#allocation8 + $0x18] sm:$0xff]
    %v3247 = vld [vmem:[#allocation8 + $0x20] sm:$0xff]
    %v3248 = vld [vmem:[#allocation8 + $0x28] sm:$0xff]
    %v3249 = vld [vmem:[#allocation8 + $0x30] sm:$0xff]
    %v3250 = vld [vmem:[#allocation8 + $0x38] sm:$0xff]
    %v3251 = vld [vmem:[#allocation8 + $0x40] sm:$0xff]
    %v3252 = vld [vmem:[#allocation8 + $0x48] sm:$0xff]
    %v3253 = vld [vmem:[#allocation8 + $0x50] sm:$0xff]
    %v3254 = vld [vmem:[#allocation8 + $0x58] sm:$0xff]
    %v3255 = vld [vmem:[#allocation8 + $0x60] sm:$0xff]
    %v3256 = vld [vmem:[#allocation8 + $0x68] sm:$0xff]
    %v3257 = vld [vmem:[#allocation8 + $0x70] sm:$0xff]
    %v3258 = vld [vmem:[#allocation8 + $0x78] sm:$0xff]
    %v3259 = vld [vmem:[#allocation8 + $0x80] sm:$0xff]
    %v3260 = vld [vmem:[#allocation8 + $0x88] sm:$0xff]
    %v3261 = vld [vmem:[#allocation8 + $0x90] sm:$0xff]
    %v3262 = vld [vmem:[#allocation8 + $0x98] sm:$0xff]
    %v3263 = vld [vmem:[#allocation8 + $0xa0] sm:$0xff]
    %v3264 = vld [vmem:[#allocation8 + $0xa8] sm:$0xff]
    %v3265 = vld [vmem:[#allocation8 + $0xb0] sm:$0xff]
    %v3266 = vld [vmem:[#allocation8 + $0xb8] sm:$0xff]
    %v3267 = vld [vmem:[#allocation8 + $0xc0] sm:$0xff]
    %v3268 = vld [vmem:[#allocation8 + $0xc8] sm:$0xff]
    %v3269 = vld [vmem:[#allocation8 + $0xd0] sm:$0xff]
    %v3270 = vld [vmem:[#allocation8 + $0xd8] sm:$0xff]
    %v3271 = vld [vmem:[#allocation8 + $0xe0] sm:$0xff]
    %v3272 = vld [vmem:[#allocation8 + $0xe8] sm:$0xff]
    %v3273 = vld [vmem:[#allocation8 + $0xf0] sm:$0xff]
    %v3274 = vld [vmem:[#allocation8 + $0xf8] sm:$0xff]
    %v3275 = vld [vmem:[#allocation8 + $0x100] sm:$0xff]
    %v3276 = vld [vmem:[#allocation8 + $0x108] sm:$0xff]
    %v3277 = vld [vmem:[#allocation8 + $0x110] sm:$0xff]
    %v3278 = vld [vmem:[#allocation8 + $0x118] sm:$0xff]
    %v3279 = vld [vmem:[#allocation8 + $0x120] sm:$0xff]
    %v3280 = vld [vmem:[#allocation8 + $0x128] sm:$0xff]
    %v3281 = vld [vmem:[#allocation8 + $0x130] sm:$0xff]
    %v3282 = vld [vmem:[#allocation8 + $0x138] sm:$0xff]
    %v3283 = vld [vmem:[#allocation8 + $0x140] sm:$0xff]
    %v3284 = vld [vmem:[#allocation8 + $0x148] sm:$0xff]
    %v3285 = vld [vmem:[#allocation8 + $0x150] sm:$0xff]
    %v3286 = vld [vmem:[#allocation8 + $0x158] sm:$0xff]
    %v3287 = vld [vmem:[#allocation8 + $0x160] sm:$0xff]
    %v3288 = vld [vmem:[#allocation8 + $0x168] sm:$0xff]
    %v3289 = vld [vmem:[#allocation8 + $0x170] sm:$0xff]
    %v3290 = vld [vmem:[#allocation8 + $0x178] sm:$0xff]
    %v3291 = vld [vmem:[#allocation8 + $0x180] sm:$0xff]
    %v3292 = vld [vmem:[#allocation8 + $0x188] sm:$0xff]
    %v3293 = vld [vmem:[#allocation8 + $0x190] sm:$0xff]
    %v3294 = vld [vmem:[#allocation8 + $0x198] sm:$0xff]
    %v3295 = vld [vmem:[#allocation8 + $0x1a0] sm:$0xff]
    %v3296 = vld [vmem:[#allocation8 + $0x1a8] sm:$0xff]
    %v3297 = vld [vmem:[#allocation8 + $0x1b0] sm:$0xff]
    %v3298 = vld [vmem:[#allocation8 + $0x1b8] sm:$0xff]
    %v3299 = vld [vmem:[#allocation8 + $0x1c0] sm:$0xff]
    %v3300 = vld [vmem:[#allocation8 + $0x1c8] sm:$0xff]
    %v3301 = vld [vmem:[#allocation8 + $0x1d0] sm:$0xff]
    %v3302 = vld [vmem:[#allocation8 + $0x1d8] sm:$0xff]
    %v3303 = vld [vmem:[#allocation8 + $0x1e0] sm:$0xff]
    %v3304 = vld [vmem:[#allocation8 + $0x1e8] sm:$0xff]
    %v3305 = vld [vmem:[#allocation8 + $0x1f0] sm:$0xff]
    %v3306 = vld [vmem:[#allocation8 + $0x1f8] sm:$0xff]
    %3307 = vmatprep.subr.mxu0 %v3304
    %3308 = vmatpush1.msra.mxu0 %v3303
    %3309 = vmatprep.subr.mxu0 %v3300
    %3310 = vmatpush1.msra.mxu0 %v3299
    %3311 = vmatprep.subr.mxu0 %v3296
    %3312 = vmatpush1.msra.mxu0 %v3295
    %3313 = vmatprep.subr.mxu0 %v3292
    %3314 = vmatpush1.msra.mxu0 %v3291
    %3315 = vmatprep.subr.mxu0 %v3288
    %3316 = vmatpush1.msra.mxu0 %v3287
    %3317 = vmatprep.subr.mxu0 %v3284
    %3318 = vmatpush1.msra.mxu0 %v3283
    %3319 = vmatprep.subr.mxu0 %v3280
    %3320 = vmatpush1.msra.mxu0 %v3279
    %3321 = vmatprep.subr.mxu0 %v3276
    %3322 = vmatpush1.msra.mxu0 %v3275
    %3323 = vmatprep.subr.mxu0 %v3272
    %3324 = vmatpush1.msra.mxu0 %v3271
    %3325 = vmatprep.subr.mxu0 %v3268
    %3326 = vmatpush1.msra.mxu0 %v3267
    %3327 = vmatprep.subr.mxu0 %v3264
    %3328 = vmatpush1.msra.mxu0 %v3263
    %3329 = vmatprep.subr.mxu0 %v3260
    %3330 = vmatpush1.msra.mxu0 %v3259
    %3331 = vmatprep.subr.mxu0 %v3256
    %3332 = vmatpush1.msra.mxu0 %v3255
    %3333 = vmatprep.subr.mxu0 %v3252
    %3334 = vmatpush1.msra.mxu0 %v3251
    %3335 = vmatprep.subr.mxu0 %v3248
    %3336 = vmatpush1.msra.mxu0 %v3247
    %3337 = vmatprep.subr.mxu0 %v3244
    %3338 = vmatpush1.msra.mxu0 %v3243
    %3339 = vmatprep.subr.mxu0 0.0
    %3340 = vmatpush2.msra.mxu0 0.0
    %3341 = vmatprep.subr.mxu0 0.0
    %3342 = vmatpush2.msra.mxu0 0.0
    %3343 = vmatprep.subr.mxu0 0.0
    %3344 = vmatpush2.msra.mxu0 0.0
    %3345 = vmatprep.subr.mxu0 0.0
    %3346 = vmatpush2.msra.mxu0 0.0
    %3347 = vmatprep.subr.mxu0 0.0
    %3348 = vmatpush2.msra.mxu0 0.0
    %3349 = vmatprep.subr.mxu0 0.0
    %3350 = vmatpush2.msra.mxu0 0.0
    %3351 = vmatprep.subr.mxu0 0.0
    %3352 = vmatpush2.msra.mxu0 0.0
    %3353 = vmatprep.subr.mxu0 0.0
    %3354 = vmatpush2.msra.mxu0 0.0
    %3355 = vmatprep.subr.mxu0 0.0
    %3356 = vmatpush2.msra.mxu0 0.0
    %3357 = vmatprep.subr.mxu0 0.0
    %3358 = vmatpush2.msra.mxu0 0.0
    %3359 = vmatprep.subr.mxu0 0.0
    %3360 = vmatpush2.msra.mxu0 0.0
    %3361 = vmatprep.subr.mxu0 0.0
    %3362 = vmatpush2.msra.mxu0 0.0
    %3363 = vmatprep.subr.mxu0 0.0
    %3364 = vmatpush2.msra.mxu0 0.0
    %3365 = vmatprep.subr.mxu0 0.0
    %3366 = vmatpush2.msra.mxu0 0.0
    %3367 = vmatprep.subr.mxu0 0.0
    %3368 = vmatpush2.msra.mxu0 0.0
    %3369 = vmatprep.subr.mxu0 0.0
    %3370 = vmatpush2.msra.mxu0 0.0
    %3371 = vmatprep.mubr.f32.mxu0 0.0
    %3372 = vmatmul.mubr.f32.gmra.mxu0 %v2563
    %v3373 = vpop.f32.mrf.mxu0
    %v3374 = vadd.f32 0.0, %v3373
    %v3375 = vpop.f32.mrf.mxu0
    %v3376 = vadd.f32 0.0, %v3375
    %3377 = vdwg.mxu0
    %3378 = vmatprep.subr.mxu0 %v3306
    %3379 = vmatpush1.msra.mxu0 %v3305
    %3380 = vmatprep.subr.mxu0 %v3302
    %3381 = vmatpush1.msra.mxu0 %v3301
    %3382 = vmatprep.subr.mxu0 %v3298
    %3383 = vmatpush1.msra.mxu0 %v3297
    %3384 = vmatprep.subr.mxu0 %v3294
    %3385 = vmatpush1.msra.mxu0 %v3293
    %3386 = vmatprep.subr.mxu0 %v3290
    %3387 = vmatpush1.msra.mxu0 %v3289
    %3388 = vmatprep.subr.mxu0 %v3286
    %3389 = vmatpush1.msra.mxu0 %v3285
    %3390 = vmatprep.subr.mxu0 %v3282
    %3391 = vmatpush1.msra.mxu0 %v3281
    %3392 = vmatprep.subr.mxu0 %v3278
    %3393 = vmatpush1.msra.mxu0 %v3277
    %3394 = vmatprep.subr.mxu0 %v3274
    %3395 = vmatpush1.msra.mxu0 %v3273
    %3396 = vmatprep.subr.mxu0 %v3270
    %3397 = vmatpush1.msra.mxu0 %v3269
    %3398 = vmatprep.subr.mxu0 %v3266
    %3399 = vmatpush1.msra.mxu0 %v3265
    %3400 = vmatprep.subr.mxu0 %v3262
    %3401 = vmatpush1.msra.mxu0 %v3261
    %3402 = vmatprep.subr.mxu0 %v3258
    %3403 = vmatpush1.msra.mxu0 %v3257
    %3404 = vmatprep.subr.mxu0 %v3254
    %3405 = vmatpush1.msra.mxu0 %v3253
    %3406 = vmatprep.subr.mxu0 %v3250
    %3407 = vmatpush1.msra.mxu0 %v3249
    %3408 = vmatprep.subr.mxu0 %v3246
    %3409 = vmatpush1.msra.mxu0 %v3245
    %3410 = vmatprep.subr.mxu0 0.0
    %3411 = vmatpush2.msra.mxu0 0.0
    %3412 = vmatprep.subr.mxu0 0.0
    %3413 = vmatpush2.msra.mxu0 0.0
    %3414 = vmatprep.subr.mxu0 0.0
    %3415 = vmatpush2.msra.mxu0 0.0
    %3416 = vmatprep.subr.mxu0 0.0
    %3417 = vmatpush2.msra.mxu0 0.0
    %3418 = vmatprep.subr.mxu0 0.0
    %3419 = vmatpush2.msra.mxu0 0.0
    %3420 = vmatprep.subr.mxu0 0.0
    %3421 = vmatpush2.msra.mxu0 0.0
    %3422 = vmatprep.subr.mxu0 0.0
    %3423 = vmatpush2.msra.mxu0 0.0
    %3424 = vmatprep.subr.mxu0 0.0
    %3425 = vmatpush2.msra.mxu0 0.0
    %3426 = vmatprep.subr.mxu0 0.0
    %3427 = vmatpush2.msra.mxu0 0.0
    %3428 = vmatprep.subr.mxu0 0.0
    %3429 = vmatpush2.msra.mxu0 0.0
    %3430 = vmatprep.subr.mxu0 0.0
    %3431 = vmatpush2.msra.mxu0 0.0
    %3432 = vmatprep.subr.mxu0 0.0
    %3433 = vmatpush2.msra.mxu0 0.0
    %3434 = vmatprep.subr.mxu0 0.0
    %3435 = vmatpush2.msra.mxu0 0.0
    %3436 = vmatprep.subr.mxu0 0.0
    %3437 = vmatpush2.msra.mxu0 0.0
    %3438 = vmatprep.subr.mxu0 0.0
    %3439 = vmatpush2.msra.mxu0 0.0
    %3440 = vmatprep.subr.mxu0 0.0
    %3441 = vmatpush2.msra.mxu0 0.0
    %3442 = vmatprep.mubr.f32.mxu0 0.0
    %3443 = vmatmul.mubr.f32.gmra.mxu0 %v2563
    %v3444 = vpop.f32.mrf.mxu0
    %v3445 = vadd.f32 0.0, %v3444
    %v3446 = vpop.f32.mrf.mxu0
    %v3447 = vadd.f32 0.0, %v3446
    %3448 = vdwg.mxu0
    %v3449 = vadd.f32 %v3168, %v3374
    %v3450 = vadd.f32 %v3170, %v3376
    %v3451 = vadd.f32 %v3239, %v3445
    %v3452 = vadd.f32 %v3241, %v3447
    %v3453 = vxor.u32 %v3449, 2147483648
    %v3454 = vmul.f32 %v3453, 1.442695
    %v3455 = vpow.pop %v3454
    %v3456 = vadd.f32 %v3455, 1.0
    %v3457 = vrcp.pop %v3456
    %v3458 = vmul.f32 1.0, %v3457
    %v3459 = vxor.u32 %v3450, 2147483648
    %v3460 = vmul.f32 %v3459, 1.442695
    %v3461 = vpow.pop %v3460
    %v3462 = vadd.f32 %v3461, 1.0
    %v3463 = vrcp.pop %v3462
    %v3464 = vmul.f32 1.0, %v3463
    %v3465 = vtanh.pop %v3451
    %v3466 = vxor.u32 %v3452, 2147483648
    %v3467 = vmul.f32 %v3466, 1.442695
    %v3468 = vpow.pop %v3467
    %v3469 = vadd.f32 %v3468, 1.0
    %v3470 = vrcp.pop %v3469
    %v3471 = vmul.f32 1.0, %v3470
    %v3472 = vmul.f32 %v3464, %v2561
    %v3473 = vmul.f32 %v3458, %v3465
    %v3474 = vadd.f32 %v3472, %v3473
    %v3475 = vtanh.pop %v3474
    %v3476 = vmul.f32 %v3471, %v3475
    %v3477 = vld [vmem:[#allocation11] sm:$0xff]
    %v3478 = vld [vmem:[#allocation11 + $0x8] sm:$0xff]
    %v3479 = vld [vmem:[#allocation11 + $0x10] sm:$0xff]
    %v3480 = vld [vmem:[#allocation11 + $0x18] sm:$0xff]
    %v3481 = vld [vmem:[#allocation11 + $0x20] sm:$0xff]
    %v3482 = vld [vmem:[#allocation11 + $0x28] sm:$0xff]
    %v3483 = vld [vmem:[#allocation11 + $0x30] sm:$0xff]
    %v3484 = vld [vmem:[#allocation11 + $0x38] sm:$0xff]
    %v3485 = vld [vmem:[#allocation11 + $0x40] sm:$0xff]
    %v3486 = vld [vmem:[#allocation11 + $0x48] sm:$0xff]
    %v3487 = vld [vmem:[#allocation11 + $0x50] sm:$0xff]
    %v3488 = vld [vmem:[#allocation11 + $0x58] sm:$0xff]
    %v3489 = vld [vmem:[#allocation11 + $0x60] sm:$0xff]
    %v3490 = vld [vmem:[#allocation11 + $0x68] sm:$0xff]
    %v3491 = vld [vmem:[#allocation11 + $0x70] sm:$0xff]
    %v3492 = vld [vmem:[#allocation11 + $0x78] sm:$0xff]
    %v3493 = vld [vmem:[#allocation11 + $0x80] sm:$0xff]
    %v3494 = vld [vmem:[#allocation11 + $0x88] sm:$0xff]
    %v3495 = vld [vmem:[#allocation11 + $0x90] sm:$0xff]
    %v3496 = vld [vmem:[#allocation11 + $0x98] sm:$0xff]
    %v3497 = vld [vmem:[#allocation11 + $0xa0] sm:$0xff]
    %v3498 = vld [vmem:[#allocation11 + $0xa8] sm:$0xff]
    %v3499 = vld [vmem:[#allocation11 + $0xb0] sm:$0xff]
    %v3500 = vld [vmem:[#allocation11 + $0xb8] sm:$0xff]
    %v3501 = vld [vmem:[#allocation11 + $0xc0] sm:$0xff]
    %v3502 = vld [vmem:[#allocation11 + $0xc8] sm:$0xff]
    %v3503 = vld [vmem:[#allocation11 + $0xd0] sm:$0xff]
    %v3504 = vld [vmem:[#allocation11 + $0xd8] sm:$0xff]
    %v3505 = vld [vmem:[#allocation11 + $0xe0] sm:$0xff]
    %v3506 = vld [vmem:[#allocation11 + $0xe8] sm:$0xff]
    %v3507 = vld [vmem:[#allocation11 + $0xf0] sm:$0xff]
    %v3508 = vld [vmem:[#allocation11 + $0xf8] sm:$0xff]
    %v3509 = vld [vmem:[#allocation11 + $0x100] sm:$0xff]
    %v3510 = vld [vmem:[#allocation11 + $0x108] sm:$0xff]
    %v3511 = vld [vmem:[#allocation11 + $0x110] sm:$0xff]
    %v3512 = vld [vmem:[#allocation11 + $0x118] sm:$0xff]
    %v3513 = vld [vmem:[#allocation11 + $0x120] sm:$0xff]
    %v3514 = vld [vmem:[#allocation11 + $0x128] sm:$0xff]
    %v3515 = vld [vmem:[#allocation11 + $0x130] sm:$0xff]
    %v3516 = vld [vmem:[#allocation11 + $0x138] sm:$0xff]
    %v3517 = vld [vmem:[#allocation11 + $0x140] sm:$0xff]
    %v3518 = vld [vmem:[#allocation11 + $0x148] sm:$0xff]
    %v3519 = vld [vmem:[#allocation11 + $0x150] sm:$0xff]
    %v3520 = vld [vmem:[#allocation11 + $0x158] sm:$0xff]
    %v3521 = vld [vmem:[#allocation11 + $0x160] sm:$0xff]
    %v3522 = vld [vmem:[#allocation11 + $0x168] sm:$0xff]
    %v3523 = vld [vmem:[#allocation11 + $0x170] sm:$0xff]
    %v3524 = vld [vmem:[#allocation11 + $0x178] sm:$0xff]
    %v3525 = vld [vmem:[#allocation11 + $0x180] sm:$0xff]
    %v3526 = vld [vmem:[#allocation11 + $0x188] sm:$0xff]
    %v3527 = vld [vmem:[#allocation11 + $0x190] sm:$0xff]
    %v3528 = vld [vmem:[#allocation11 + $0x198] sm:$0xff]
    %v3529 = vld [vmem:[#allocation11 + $0x1a0] sm:$0xff]
    %v3530 = vld [vmem:[#allocation11 + $0x1a8] sm:$0xff]
    %v3531 = vld [vmem:[#allocation11 + $0x1b0] sm:$0xff]
    %v3532 = vld [vmem:[#allocation11 + $0x1b8] sm:$0xff]
    %v3533 = vld [vmem:[#allocation11 + $0x1c0] sm:$0xff]
    %v3534 = vld [vmem:[#allocation11 + $0x1c8] sm:$0xff]
    %v3535 = vld [vmem:[#allocation11 + $0x1d0] sm:$0xff]
    %v3536 = vld [vmem:[#allocation11 + $0x1d8] sm:$0xff]
    %v3537 = vld [vmem:[#allocation11 + $0x1e0] sm:$0xff]
    %v3538 = vld [vmem:[#allocation11 + $0x1e8] sm:$0xff]
    %v3539 = vld [vmem:[#allocation11 + $0x1f0] sm:$0xff]
    %v3540 = vld [vmem:[#allocation11 + $0x1f8] sm:$0xff]
    %v3541 = vld [vmem:[#allocation11 + $0x200] sm:$0xff]
    %v3542 = vld [vmem:[#allocation11 + $0x208] sm:$0xff]
    %v3543 = vld [vmem:[#allocation11 + $0x210] sm:$0xff]
    %v3544 = vld [vmem:[#allocation11 + $0x218] sm:$0xff]
    %v3545 = vld [vmem:[#allocation11 + $0x220] sm:$0xff]
    %v3546 = vld [vmem:[#allocation11 + $0x228] sm:$0xff]
    %v3547 = vld [vmem:[#allocation11 + $0x230] sm:$0xff]
    %v3548 = vld [vmem:[#allocation11 + $0x238] sm:$0xff]
    %v3549 = vld [vmem:[#allocation11 + $0x240] sm:$0xff]
    %v3550 = vld [vmem:[#allocation11 + $0x248] sm:$0xff]
    %v3551 = vld [vmem:[#allocation11 + $0x250] sm:$0xff]
    %v3552 = vld [vmem:[#allocation11 + $0x258] sm:$0xff]
    %v3553 = vld [vmem:[#allocation11 + $0x260] sm:$0xff]
    %v3554 = vld [vmem:[#allocation11 + $0x268] sm:$0xff]
    %v3555 = vld [vmem:[#allocation11 + $0x270] sm:$0xff]
    %v3556 = vld [vmem:[#allocation11 + $0x278] sm:$0xff]
    %v3557 = vld [vmem:[#allocation11 + $0x280] sm:$0xff]
    %v3558 = vld [vmem:[#allocation11 + $0x288] sm:$0xff]
    %v3559 = vld [vmem:[#allocation11 + $0x290] sm:$0xff]
    %v3560 = vld [vmem:[#allocation11 + $0x298] sm:$0xff]
    %v3561 = vld [vmem:[#allocation11 + $0x2a0] sm:$0xff]
    %v3562 = vld [vmem:[#allocation11 + $0x2a8] sm:$0xff]
    %v3563 = vld [vmem:[#allocation11 + $0x2b0] sm:$0xff]
    %v3564 = vld [vmem:[#allocation11 + $0x2b8] sm:$0xff]
    %v3565 = vld [vmem:[#allocation11 + $0x2c0] sm:$0xff]
    %v3566 = vld [vmem:[#allocation11 + $0x2c8] sm:$0xff]
    %v3567 = vld [vmem:[#allocation11 + $0x2d0] sm:$0xff]
    %v3568 = vld [vmem:[#allocation11 + $0x2d8] sm:$0xff]
    %v3569 = vld [vmem:[#allocation11 + $0x2e0] sm:$0xff]
    %v3570 = vld [vmem:[#allocation11 + $0x2e8] sm:$0xff]
    %v3571 = vld [vmem:[#allocation11 + $0x2f0] sm:$0xff]
    %v3572 = vld [vmem:[#allocation11 + $0x2f8] sm:$0xff]
    %v3573 = vld [vmem:[#allocation11 + $0x300] sm:$0xff]
    %v3574 = vld [vmem:[#allocation11 + $0x308] sm:$0xff]
    %v3575 = vld [vmem:[#allocation11 + $0x310] sm:$0xff]
    %v3576 = vld [vmem:[#allocation11 + $0x318] sm:$0xff]
    %v3577 = vld [vmem:[#allocation11 + $0x320] sm:$0xff]
    %v3578 = vld [vmem:[#allocation11 + $0x328] sm:$0xff]
    %v3579 = vld [vmem:[#allocation11 + $0x330] sm:$0xff]
    %v3580 = vld [vmem:[#allocation11 + $0x338] sm:$0xff]
    %v3581 = vld [vmem:[#allocation11 + $0x340] sm:$0xff]
    %v3582 = vld [vmem:[#allocation11 + $0x348] sm:$0xff]
    %v3583 = vld [vmem:[#allocation11 + $0x350] sm:$0xff]
    %v3584 = vld [vmem:[#allocation11 + $0x358] sm:$0xff]
    %v3585 = vld [vmem:[#allocation11 + $0x360] sm:$0xff]
    %v3586 = vld [vmem:[#allocation11 + $0x368] sm:$0xff]
    %v3587 = vld [vmem:[#allocation11 + $0x370] sm:$0xff]
    %v3588 = vld [vmem:[#allocation11 + $0x378] sm:$0xff]
    %v3589 = vld [vmem:[#allocation11 + $0x380] sm:$0xff]
    %v3590 = vld [vmem:[#allocation11 + $0x388] sm:$0xff]
    %v3591 = vld [vmem:[#allocation11 + $0x390] sm:$0xff]
    %v3592 = vld [vmem:[#allocation11 + $0x398] sm:$0xff]
    %v3593 = vld [vmem:[#allocation11 + $0x3a0] sm:$0xff]
    %v3594 = vld [vmem:[#allocation11 + $0x3a8] sm:$0xff]
    %v3595 = vld [vmem:[#allocation11 + $0x3b0] sm:$0xff]
    %v3596 = vld [vmem:[#allocation11 + $0x3b8] sm:$0xff]
    %v3597 = vld [vmem:[#allocation11 + $0x3c0] sm:$0xff]
    %v3598 = vld [vmem:[#allocation11 + $0x3c8] sm:$0xff]
    %v3599 = vld [vmem:[#allocation11 + $0x3d0] sm:$0xff]
    %v3600 = vld [vmem:[#allocation11 + $0x3d8] sm:$0xff]
    %v3601 = vld [vmem:[#allocation11 + $0x3e0] sm:$0xff]
    %v3602 = vld [vmem:[#allocation11 + $0x3e8] sm:$0xff]
    %v3603 = vld [vmem:[#allocation11 + $0x3f0] sm:$0xff]
    %v3604 = vld [vmem:[#allocation11 + $0x3f8] sm:$0xff]
    %3605 = vmatprep.subr.mxu0 %v3538
    %3606 = vmatpush1.msra.mxu0 %v3537
    %3607 = vmatprep.subr.mxu0 %v3534
    %3608 = vmatpush1.msra.mxu0 %v3533
    %3609 = vmatprep.subr.mxu0 %v3530
    %3610 = vmatpush1.msra.mxu0 %v3529
    %3611 = vmatprep.subr.mxu0 %v3526
    %3612 = vmatpush1.msra.mxu0 %v3525
    %3613 = vmatprep.subr.mxu0 %v3522
    %3614 = vmatpush1.msra.mxu0 %v3521
    %3615 = vmatprep.subr.mxu0 %v3518
    %3616 = vmatpush1.msra.mxu0 %v3517
    %3617 = vmatprep.subr.mxu0 %v3514
    %3618 = vmatpush1.msra.mxu0 %v3513
    %3619 = vmatprep.subr.mxu0 %v3510
    %3620 = vmatpush1.msra.mxu0 %v3509
    %3621 = vmatprep.subr.mxu0 %v3506
    %3622 = vmatpush1.msra.mxu0 %v3505
    %3623 = vmatprep.subr.mxu0 %v3502
    %3624 = vmatpush1.msra.mxu0 %v3501
    %3625 = vmatprep.subr.mxu0 %v3498
    %3626 = vmatpush1.msra.mxu0 %v3497
    %3627 = vmatprep.subr.mxu0 %v3494
    %3628 = vmatpush1.msra.mxu0 %v3493
    %3629 = vmatprep.subr.mxu0 %v3490
    %3630 = vmatpush1.msra.mxu0 %v3489
    %3631 = vmatprep.subr.mxu0 %v3486
    %3632 = vmatpush1.msra.mxu0 %v3485
    %3633 = vmatprep.subr.mxu0 %v3482
    %3634 = vmatpush1.msra.mxu0 %v3481
    %3635 = vmatprep.subr.mxu0 %v3478
    %3636 = vmatpush1.msra.mxu0 %v3477
    %3637 = vmatprep.subr.mxu0 %v3602
    %3638 = vmatpush2.msra.mxu0 %v3601
    %3639 = vmatprep.subr.mxu0 %v3598
    %3640 = vmatpush2.msra.mxu0 %v3597
    %3641 = vmatprep.subr.mxu0 %v3594
    %3642 = vmatpush2.msra.mxu0 %v3593
    %3643 = vmatprep.subr.mxu0 %v3590
    %3644 = vmatpush2.msra.mxu0 %v3589
    %3645 = vmatprep.subr.mxu0 %v3586
    %3646 = vmatpush2.msra.mxu0 %v3585
    %3647 = vmatprep.subr.mxu0 %v3582
    %3648 = vmatpush2.msra.mxu0 %v3581
    %3649 = vmatprep.subr.mxu0 %v3578
    %3650 = vmatpush2.msra.mxu0 %v3577
    %3651 = vmatprep.subr.mxu0 %v3574
    %3652 = vmatpush2.msra.mxu0 %v3573
    %3653 = vmatprep.subr.mxu0 %v3570
    %3654 = vmatpush2.msra.mxu0 %v3569
    %3655 = vmatprep.subr.mxu0 %v3566
    %3656 = vmatpush2.msra.mxu0 %v3565
    %3657 = vmatprep.subr.mxu0 %v3562
    %3658 = vmatpush2.msra.mxu0 %v3561
    %3659 = vmatprep.subr.mxu0 %v3558
    %3660 = vmatpush2.msra.mxu0 %v3557
    %3661 = vmatprep.subr.mxu0 %v3554
    %3662 = vmatpush2.msra.mxu0 %v3553
    %3663 = vmatprep.subr.mxu0 %v3550
    %3664 = vmatpush2.msra.mxu0 %v3549
    %3665 = vmatprep.subr.mxu0 %v3546
    %3666 = vmatpush2.msra.mxu0 %v3545
    %3667 = vmatprep.subr.mxu0 %v3542
    %3668 = vmatpush2.msra.mxu0 %v3541
    %3669 = vmatprep.mubr.f32.mxu0 %v2857
    %3670 = vmatmul.mubr.f32.gmra.mxu0 %v3476
    %v3671 = vpop.f32.mrf.mxu0
    %v3672 = vadd.f32 %v195, %v3671
    %v3673 = vpop.f32.mrf.mxu0
    %v3674 = vadd.f32 %v199, %v3673
    %3675 = vdwg.mxu0
    %3676 = vmatprep.subr.mxu0 %v3540
    %3677 = vmatpush1.msra.mxu0 %v3539
    %3678 = vmatprep.subr.mxu0 %v3536
    %3679 = vmatpush1.msra.mxu0 %v3535
    %3680 = vmatprep.subr.mxu0 %v3532
    %3681 = vmatpush1.msra.mxu0 %v3531
    %3682 = vmatprep.subr.mxu0 %v3528
    %3683 = vmatpush1.msra.mxu0 %v3527
    %3684 = vmatprep.subr.mxu0 %v3524
    %3685 = vmatpush1.msra.mxu0 %v3523
    %3686 = vmatprep.subr.mxu0 %v3520
    %3687 = vmatpush1.msra.mxu0 %v3519
    %3688 = vmatprep.subr.mxu0 %v3516
    %3689 = vmatpush1.msra.mxu0 %v3515
    %3690 = vmatprep.subr.mxu0 %v3512
    %3691 = vmatpush1.msra.mxu0 %v3511
    %3692 = vmatprep.subr.mxu0 %v3508
    %3693 = vmatpush1.msra.mxu0 %v3507
    %3694 = vmatprep.subr.mxu0 %v3504
    %3695 = vmatpush1.msra.mxu0 %v3503
    %3696 = vmatprep.subr.mxu0 %v3500
    %3697 = vmatpush1.msra.mxu0 %v3499
    %3698 = vmatprep.subr.mxu0 %v3496
    %3699 = vmatpush1.msra.mxu0 %v3495
    %3700 = vmatprep.subr.mxu0 %v3492
    %3701 = vmatpush1.msra.mxu0 %v3491
    %3702 = vmatprep.subr.mxu0 %v3488
    %3703 = vmatpush1.msra.mxu0 %v3487
    %3704 = vmatprep.subr.mxu0 %v3484
    %3705 = vmatpush1.msra.mxu0 %v3483
    %3706 = vmatprep.subr.mxu0 %v3480
    %3707 = vmatpush1.msra.mxu0 %v3479
    %3708 = vmatprep.subr.mxu0 %v3604
    %3709 = vmatpush2.msra.mxu0 %v3603
    %3710 = vmatprep.subr.mxu0 %v3600
    %3711 = vmatpush2.msra.mxu0 %v3599
    %3712 = vmatprep.subr.mxu0 %v3596
    %3713 = vmatpush2.msra.mxu0 %v3595
    %3714 = vmatprep.subr.mxu0 %v3592
    %3715 = vmatpush2.msra.mxu0 %v3591
    %3716 = vmatprep.subr.mxu0 %v3588
    %3717 = vmatpush2.msra.mxu0 %v3587
    %3718 = vmatprep.subr.mxu0 %v3584
    %3719 = vmatpush2.msra.mxu0 %v3583
    %3720 = vmatprep.subr.mxu0 %v3580
    %3721 = vmatpush2.msra.mxu0 %v3579
    %3722 = vmatprep.subr.mxu0 %v3576
    %3723 = vmatpush2.msra.mxu0 %v3575
    %3724 = vmatprep.subr.mxu0 %v3572
    %3725 = vmatpush2.msra.mxu0 %v3571
    %3726 = vmatprep.subr.mxu0 %v3568
    %3727 = vmatpush2.msra.mxu0 %v3567
    %3728 = vmatprep.subr.mxu0 %v3564
    %3729 = vmatpush2.msra.mxu0 %v3563
    %3730 = vmatprep.subr.mxu0 %v3560
    %3731 = vmatpush2.msra.mxu0 %v3559
    %3732 = vmatprep.subr.mxu0 %v3556
    %3733 = vmatpush2.msra.mxu0 %v3555
    %3734 = vmatprep.subr.mxu0 %v3552
    %3735 = vmatpush2.msra.mxu0 %v3551
    %3736 = vmatprep.subr.mxu0 %v3548
    %3737 = vmatpush2.msra.mxu0 %v3547
    %3738 = vmatprep.subr.mxu0 %v3544
    %3739 = vmatpush2.msra.mxu0 %v3543
    %3740 = vmatprep.mubr.f32.mxu0 %v2857
    %3741 = vmatmul.mubr.f32.gmra.mxu0 %v3476
    %v3742 = vpop.f32.mrf.mxu0
    %v3743 = vadd.f32 %v203, %v3742
    %v3744 = vpop.f32.mrf.mxu0
    %v3745 = vadd.f32 %v207, %v3744
    %3746 = vdwg.mxu0
    %v3747 = vxor.u32 %v3672, 2147483648
    %v3748 = vmul.f32 %v3747, 1.442695
    %v3749 = vpow.pop %v3748
    %v3750 = vadd.f32 %v3749, 1.0
    %v3751 = vrcp.pop %v3750
    %v3752 = vmul.f32 1.0, %v3751
    %v3753 = vxor.u32 %v3674, 2147483648
    %v3754 = vmul.f32 %v3753, 1.442695
    %v3755 = vpow.pop %v3754
    %v3756 = vadd.f32 %v3755, 1.0
    %v3757 = vrcp.pop %v3756
    %v3758 = vmul.f32 1.0, %v3757
    %v3759 = vtanh.pop %v3743
    %v3760 = vxor.u32 %v3745, 2147483648
    %v3761 = vmul.f32 %v3760, 1.442695
    %v3762 = vpow.pop %v3761
    %v3763 = vadd.f32 %v3762, 1.0
    %v3764 = vrcp.pop %v3763
    %v3765 = vmul.f32 1.0, %v3764
    %v3766 = vmul.f32 %v3758, %v2855
    %v3767 = vmul.f32 %v3752, %v3759
    %v3768 = vadd.f32 %v3766, %v3767
    %v3769 = vtanh.pop %v3768
    %v3770 = vmul.f32 %v3765, %v3769
    %v3771 = vld [vmem:[#allocation14] sm:$0xff]
    %v3772 = vld [vmem:[#allocation14 + $0x8] sm:$0xff]
    %v3773 = vld [vmem:[#allocation14 + $0x10] sm:$0xff]
    %v3774 = vld [vmem:[#allocation14 + $0x18] sm:$0xff]
    %v3775 = vld [vmem:[#allocation14 + $0x20] sm:$0xff]
    %v3776 = vld [vmem:[#allocation14 + $0x28] sm:$0xff]
    %v3777 = vld [vmem:[#allocation14 + $0x30] sm:$0xff]
    %v3778 = vld [vmem:[#allocation14 + $0x38] sm:$0xff]
    %v3779 = vld [vmem:[#allocation14 + $0x40] sm:$0xff]
    %v3780 = vld [vmem:[#allocation14 + $0x48] sm:$0xff]
    %v3781 = vld [vmem:[#allocation14 + $0x50] sm:$0xff]
    %v3782 = vld [vmem:[#allocation14 + $0x58] sm:$0xff]
    %v3783 = vld [vmem:[#allocation14 + $0x60] sm:$0xff]
    %v3784 = vld [vmem:[#allocation14 + $0x68] sm:$0xff]
    %v3785 = vld [vmem:[#allocation14 + $0x70] sm:$0xff]
    %v3786 = vld [vmem:[#allocation14 + $0x78] sm:$0xff]
    %v3787 = vld [vmem:[#allocation14 + $0x80] sm:$0xff]
    %v3788 = vld [vmem:[#allocation14 + $0x88] sm:$0xff]
    %v3789 = vld [vmem:[#allocation14 + $0x90] sm:$0xff]
    %v3790 = vld [vmem:[#allocation14 + $0x98] sm:$0xff]
    %v3791 = vld [vmem:[#allocation14 + $0xa0] sm:$0xff]
    %v3792 = vld [vmem:[#allocation14 + $0xa8] sm:$0xff]
    %v3793 = vld [vmem:[#allocation14 + $0xb0] sm:$0xff]
    %v3794 = vld [vmem:[#allocation14 + $0xb8] sm:$0xff]
    %v3795 = vld [vmem:[#allocation14 + $0xc0] sm:$0xff]
    %v3796 = vld [vmem:[#allocation14 + $0xc8] sm:$0xff]
    %v3797 = vld [vmem:[#allocation14 + $0xd0] sm:$0xff]
    %v3798 = vld [vmem:[#allocation14 + $0xd8] sm:$0xff]
    %v3799 = vld [vmem:[#allocation14 + $0xe0] sm:$0xff]
    %v3800 = vld [vmem:[#allocation14 + $0xe8] sm:$0xff]
    %v3801 = vld [vmem:[#allocation14 + $0xf0] sm:$0xff]
    %v3802 = vld [vmem:[#allocation14 + $0xf8] sm:$0xff]
    %3803 = vmatprep.subr.mxu0 %v3802
    %3804 = vmatpush1.msra.mxu0 %v3801
    %3805 = vmatprep.subr.mxu0 %v3800
    %3806 = vmatpush1.msra.mxu0 %v3799
    %3807 = vmatprep.subr.mxu0 %v3798
    %3808 = vmatpush1.msra.mxu0 %v3797
    %3809 = vmatprep.subr.mxu0 %v3796
    %3810 = vmatpush1.msra.mxu0 %v3795
    %3811 = vmatprep.subr.mxu0 %v3794
    %3812 = vmatpush1.msra.mxu0 %v3793
    %3813 = vmatprep.subr.mxu0 %v3792
    %3814 = vmatpush1.msra.mxu0 %v3791
    %3815 = vmatprep.subr.mxu0 %v3790
    %3816 = vmatpush1.msra.mxu0 %v3789
    %3817 = vmatprep.subr.mxu0 %v3788
    %3818 = vmatpush1.msra.mxu0 %v3787
    %3819 = vmatprep.subr.mxu0 %v3786
    %3820 = vmatpush1.msra.mxu0 %v3785
    %3821 = vmatprep.subr.mxu0 %v3784
    %3822 = vmatpush1.msra.mxu0 %v3783
    %3823 = vmatprep.subr.mxu0 %v3782
    %3824 = vmatpush1.msra.mxu0 %v3781
    %3825 = vmatprep.subr.mxu0 %v3780
    %3826 = vmatpush1.msra.mxu0 %v3779
    %3827 = vmatprep.subr.mxu0 %v3778
    %3828 = vmatpush1.msra.mxu0 %v3777
    %3829 = vmatprep.subr.mxu0 %v3776
    %3830 = vmatpush1.msra.mxu0 %v3775
    %3831 = vmatprep.subr.mxu0 %v3774
    %3832 = vmatpush1.msra.mxu0 %v3773
    %3833 = vmatprep.subr.mxu0 %v3772
    %3834 = vmatpush1.msra.mxu0 %v3771
    %3835 = vmatprep.subr.mxu0 0.0
    %3836 = vmatpush2.msra.mxu0 0.0
    %3837 = vmatprep.subr.mxu0 0.0
    %3838 = vmatpush2.msra.mxu0 0.0
    %3839 = vmatprep.subr.mxu0 0.0
    %3840 = vmatpush2.msra.mxu0 0.0
    %3841 = vmatprep.subr.mxu0 0.0
    %3842 = vmatpush2.msra.mxu0 0.0
    %3843 = vmatprep.subr.mxu0 0.0
    %3844 = vmatpush2.msra.mxu0 0.0
    %3845 = vmatprep.subr.mxu0 0.0
    %3846 = vmatpush2.msra.mxu0 0.0
    %3847 = vmatprep.subr.mxu0 0.0
    %3848 = vmatpush2.msra.mxu0 0.0
    %3849 = vmatprep.subr.mxu0 0.0
    %3850 = vmatpush2.msra.mxu0 0.0
    %3851 = vmatprep.subr.mxu0 0.0
    %3852 = vmatpush2.msra.mxu0 0.0
    %3853 = vmatprep.subr.mxu0 0.0
    %3854 = vmatpush2.msra.mxu0 0.0
    %3855 = vmatprep.subr.mxu0 0.0
    %3856 = vmatpush2.msra.mxu0 0.0
    %3857 = vmatprep.subr.mxu0 0.0
    %3858 = vmatpush2.msra.mxu0 0.0
    %3859 = vmatprep.subr.mxu0 0.0
    %3860 = vmatpush2.msra.mxu0 0.0
    %3861 = vmatprep.subr.mxu0 0.0
    %3862 = vmatpush2.msra.mxu0 0.0
    %3863 = vmatprep.subr.mxu0 0.0
    %3864 = vmatpush2.msra.mxu0 0.0
    %3865 = vmatprep.subr.mxu0 0.0
    %3866 = vmatpush2.msra.mxu0 0.0
    %3867 = vmatprep.mubr.f32.mxu0 0.0
    %3868 = vmatmul.mubr.f32.gmra.mxu0 %v3770
    %v3869 = vpop.f32.mrf.mxu0
    %v3870 = vadd.f32 %v217, %v3869
    %v3871 = vpop.f32.mrf.mxu0
    %v3872 = vadd.f32 %v221, %v3871
    %3873 = vdwg.mxu0
    %3874 = vst [vmem:[%s10 + $0x30] sm:$0xff] %v3870
    %3875 = vst [vmem:[%s10 + $0x38] sm:$0xff] %v3872
    %v3876 = vld [vmem:[#allocation2] sm:$0xff]
    %3877 = vset.pattern.permute.xlu0 4
    %3878 = vperm.xlu0 %3877, %v3876
    %v3879 = vpop.permute.xlu0 %3878
    %vm3880 = vcmp.eq.s32.totalorder %v3879, %v166
    %vm3881 = vcmp.eq.s32.totalorder %v3879, %v167
    %v3882 = vsel %vm3880, 1, 0
    %v3883 = vsel %vm3881, 1, 0
    %v3884 = vcvt.s32.f32 %v3882
    %v3885 = vcvt.s32.f32 %v3883
    %v3886 = vld [vmem:[#allocation7] sm:$0xff]
    %v3887 = vld [vmem:[#allocation7 + $0x8] sm:$0xff]
    %v3888 = vld [vmem:[#allocation7 + $0x10] sm:$0xff]
    %v3889 = vld [vmem:[#allocation7 + $0x18] sm:$0xff]
    %v3890 = vld [vmem:[#allocation7 + $0x20] sm:$0xff]
    %v3891 = vld [vmem:[#allocation7 + $0x28] sm:$0xff]
    %v3892 = vld [vmem:[#allocation7 + $0x30] sm:$0xff]
    %v3893 = vld [vmem:[#allocation7 + $0x38] sm:$0xff]
    %v3894 = vld [vmem:[#allocation7 + $0x40] sm:$0xff]
    %v3895 = vld [vmem:[#allocation7 + $0x48] sm:$0xff]
    %v3896 = vld [vmem:[#allocation7 + $0x50] sm:$0xff]
    %v3897 = vld [vmem:[#allocation7 + $0x58] sm:$0xff]
    %v3898 = vld [vmem:[#allocation7 + $0x60] sm:$0xff]
    %v3899 = vld [vmem:[#allocation7 + $0x68] sm:$0xff]
    %v3900 = vld [vmem:[#allocation7 + $0x70] sm:$0xff]
    %v3901 = vld [vmem:[#allocation7 + $0x78] sm:$0xff]
    %v3902 = vld [vmem:[#allocation7 + $0x80] sm:$0xff]
    %v3903 = vld [vmem:[#allocation7 + $0x88] sm:$0xff]
    %v3904 = vld [vmem:[#allocation7 + $0x90] sm:$0xff]
    %v3905 = vld [vmem:[#allocation7 + $0x98] sm:$0xff]
    %v3906 = vld [vmem:[#allocation7 + $0xa0] sm:$0xff]
    %v3907 = vld [vmem:[#allocation7 + $0xa8] sm:$0xff]
    %v3908 = vld [vmem:[#allocation7 + $0xb0] sm:$0xff]
    %v3909 = vld [vmem:[#allocation7 + $0xb8] sm:$0xff]
    %v3910 = vld [vmem:[#allocation7 + $0xc0] sm:$0xff]
    %v3911 = vld [vmem:[#allocation7 + $0xc8] sm:$0xff]
    %v3912 = vld [vmem:[#allocation7 + $0xd0] sm:$0xff]
    %v3913 = vld [vmem:[#allocation7 + $0xd8] sm:$0xff]
    %v3914 = vld [vmem:[#allocation7 + $0xe0] sm:$0xff]
    %v3915 = vld [vmem:[#allocation7 + $0xe8] sm:$0xff]
    %v3916 = vld [vmem:[#allocation7 + $0xf0] sm:$0xff]
    %v3917 = vld [vmem:[#allocation7 + $0xf8] sm:$0xff]
    %v3918 = vld [vmem:[#allocation7 + $0x100] sm:$0xff]
    %v3919 = vld [vmem:[#allocation7 + $0x108] sm:$0xff]
    %v3920 = vld [vmem:[#allocation7 + $0x110] sm:$0xff]
    %v3921 = vld [vmem:[#allocation7 + $0x118] sm:$0xff]
    %v3922 = vld [vmem:[#allocation7 + $0x120] sm:$0xff]
    %v3923 = vld [vmem:[#allocation7 + $0x128] sm:$0xff]
    %v3924 = vld [vmem:[#allocation7 + $0x130] sm:$0xff]
    %v3925 = vld [vmem:[#allocation7 + $0x138] sm:$0xff]
    %v3926 = vld [vmem:[#allocation7 + $0x140] sm:$0xff]
    %v3927 = vld [vmem:[#allocation7 + $0x148] sm:$0xff]
    %v3928 = vld [vmem:[#allocation7 + $0x150] sm:$0xff]
    %v3929 = vld [vmem:[#allocation7 + $0x158] sm:$0xff]
    %v3930 = vld [vmem:[#allocation7 + $0x160] sm:$0xff]
    %v3931 = vld [vmem:[#allocation7 + $0x168] sm:$0xff]
    %v3932 = vld [vmem:[#allocation7 + $0x170] sm:$0xff]
    %v3933 = vld [vmem:[#allocation7 + $0x178] sm:$0xff]
    %v3934 = vld [vmem:[#allocation7 + $0x180] sm:$0xff]
    %v3935 = vld [vmem:[#allocation7 + $0x188] sm:$0xff]
    %v3936 = vld [vmem:[#allocation7 + $0x190] sm:$0xff]
    %v3937 = vld [vmem:[#allocation7 + $0x198] sm:$0xff]
    %v3938 = vld [vmem:[#allocation7 + $0x1a0] sm:$0xff]
    %v3939 = vld [vmem:[#allocation7 + $0x1a8] sm:$0xff]
    %v3940 = vld [vmem:[#allocation7 + $0x1b0] sm:$0xff]
    %v3941 = vld [vmem:[#allocation7 + $0x1b8] sm:$0xff]
    %v3942 = vld [vmem:[#allocation7 + $0x1c0] sm:$0xff]
    %v3943 = vld [vmem:[#allocation7 + $0x1c8] sm:$0xff]
    %v3944 = vld [vmem:[#allocation7 + $0x1d0] sm:$0xff]
    %v3945 = vld [vmem:[#allocation7 + $0x1d8] sm:$0xff]
    %v3946 = vld [vmem:[#allocation7 + $0x1e0] sm:$0xff]
    %v3947 = vld [vmem:[#allocation7 + $0x1e8] sm:$0xff]
    %v3948 = vld [vmem:[#allocation7 + $0x1f0] sm:$0xff]
    %v3949 = vld [vmem:[#allocation7 + $0x1f8] sm:$0xff]
    %v3950 = vld [vmem:[#allocation7 + $0x200] sm:$0xff]
    %v3951 = vld [vmem:[#allocation7 + $0x208] sm:$0xff]
    %v3952 = vld [vmem:[#allocation7 + $0x210] sm:$0xff]
    %v3953 = vld [vmem:[#allocation7 + $0x218] sm:$0xff]
    %v3954 = vld [vmem:[#allocation7 + $0x220] sm:$0xff]
    %v3955 = vld [vmem:[#allocation7 + $0x228] sm:$0xff]
    %v3956 = vld [vmem:[#allocation7 + $0x230] sm:$0xff]
    %v3957 = vld [vmem:[#allocation7 + $0x238] sm:$0xff]
    %v3958 = vld [vmem:[#allocation7 + $0x240] sm:$0xff]
    %v3959 = vld [vmem:[#allocation7 + $0x248] sm:$0xff]
    %v3960 = vld [vmem:[#allocation7 + $0x250] sm:$0xff]
    %v3961 = vld [vmem:[#allocation7 + $0x258] sm:$0xff]
    %v3962 = vld [vmem:[#allocation7 + $0x260] sm:$0xff]
    %v3963 = vld [vmem:[#allocation7 + $0x268] sm:$0xff]
    %v3964 = vld [vmem:[#allocation7 + $0x270] sm:$0xff]
    %v3965 = vld [vmem:[#allocation7 + $0x278] sm:$0xff]
    %v3966 = vld [vmem:[#allocation7 + $0x280] sm:$0xff]
    %v3967 = vld [vmem:[#allocation7 + $0x288] sm:$0xff]
    %v3968 = vld [vmem:[#allocation7 + $0x290] sm:$0xff]
    %v3969 = vld [vmem:[#allocation7 + $0x298] sm:$0xff]
    %v3970 = vld [vmem:[#allocation7 + $0x2a0] sm:$0xff]
    %v3971 = vld [vmem:[#allocation7 + $0x2a8] sm:$0xff]
    %v3972 = vld [vmem:[#allocation7 + $0x2b0] sm:$0xff]
    %v3973 = vld [vmem:[#allocation7 + $0x2b8] sm:$0xff]
    %v3974 = vld [vmem:[#allocation7 + $0x2c0] sm:$0xff]
    %v3975 = vld [vmem:[#allocation7 + $0x2c8] sm:$0xff]
    %v3976 = vld [vmem:[#allocation7 + $0x2d0] sm:$0xff]
    %v3977 = vld [vmem:[#allocation7 + $0x2d8] sm:$0xff]
    %v3978 = vld [vmem:[#allocation7 + $0x2e0] sm:$0xff]
    %v3979 = vld [vmem:[#allocation7 + $0x2e8] sm:$0xff]
    %v3980 = vld [vmem:[#allocation7 + $0x2f0] sm:$0xff]
    %v3981 = vld [vmem:[#allocation7 + $0x2f8] sm:$0xff]
    %v3982 = vld [vmem:[#allocation7 + $0x300] sm:$0xff]
    %v3983 = vld [vmem:[#allocation7 + $0x308] sm:$0xff]
    %v3984 = vld [vmem:[#allocation7 + $0x310] sm:$0xff]
    %v3985 = vld [vmem:[#allocation7 + $0x318] sm:$0xff]
    %v3986 = vld [vmem:[#allocation7 + $0x320] sm:$0xff]
    %v3987 = vld [vmem:[#allocation7 + $0x328] sm:$0xff]
    %v3988 = vld [vmem:[#allocation7 + $0x330] sm:$0xff]
    %v3989 = vld [vmem:[#allocation7 + $0x338] sm:$0xff]
    %v3990 = vld [vmem:[#allocation7 + $0x340] sm:$0xff]
    %v3991 = vld [vmem:[#allocation7 + $0x348] sm:$0xff]
    %v3992 = vld [vmem:[#allocation7 + $0x350] sm:$0xff]
    %v3993 = vld [vmem:[#allocation7 + $0x358] sm:$0xff]
    %v3994 = vld [vmem:[#allocation7 + $0x360] sm:$0xff]
    %v3995 = vld [vmem:[#allocation7 + $0x368] sm:$0xff]
    %v3996 = vld [vmem:[#allocation7 + $0x370] sm:$0xff]
    %v3997 = vld [vmem:[#allocation7 + $0x378] sm:$0xff]
    %v3998 = vld [vmem:[#allocation7 + $0x380] sm:$0xff]
    %v3999 = vld [vmem:[#allocation7 + $0x388] sm:$0xff]
    %v4000 = vld [vmem:[#allocation7 + $0x390] sm:$0xff]
    %v4001 = vld [vmem:[#allocation7 + $0x398] sm:$0xff]
    %v4002 = vld [vmem:[#allocation7 + $0x3a0] sm:$0xff]
    %v4003 = vld [vmem:[#allocation7 + $0x3a8] sm:$0xff]
    %v4004 = vld [vmem:[#allocation7 + $0x3b0] sm:$0xff]
    %v4005 = vld [vmem:[#allocation7 + $0x3b8] sm:$0xff]
    %v4006 = vld [vmem:[#allocation7 + $0x3c0] sm:$0xff]
    %v4007 = vld [vmem:[#allocation7 + $0x3c8] sm:$0xff]
    %v4008 = vld [vmem:[#allocation7 + $0x3d0] sm:$0xff]
    %v4009 = vld [vmem:[#allocation7 + $0x3d8] sm:$0xff]
    %v4010 = vld [vmem:[#allocation7 + $0x3e0] sm:$0xff]
    %v4011 = vld [vmem:[#allocation7 + $0x3e8] sm:$0xff]
    %v4012 = vld [vmem:[#allocation7 + $0x3f0] sm:$0xff]
    %v4013 = vld [vmem:[#allocation7 + $0x3f8] sm:$0xff]
    %4014 = vmatprep.subr.mxu0 %v3947
    %4015 = vmatpush1.msra.mxu0 %v3946
    %4016 = vmatprep.subr.mxu0 %v3943
    %4017 = vmatpush1.msra.mxu0 %v3942
    %4018 = vmatprep.subr.mxu0 %v3939
    %4019 = vmatpush1.msra.mxu0 %v3938
    %4020 = vmatprep.subr.mxu0 %v3935
    %4021 = vmatpush1.msra.mxu0 %v3934
    %4022 = vmatprep.subr.mxu0 %v3931
    %4023 = vmatpush1.msra.mxu0 %v3930
    %4024 = vmatprep.subr.mxu0 %v3927
    %4025 = vmatpush1.msra.mxu0 %v3926
    %4026 = vmatprep.subr.mxu0 %v3923
    %4027 = vmatpush1.msra.mxu0 %v3922
    %4028 = vmatprep.subr.mxu0 %v3919
    %4029 = vmatpush1.msra.mxu0 %v3918
    %4030 = vmatprep.subr.mxu0 %v3915
    %4031 = vmatpush1.msra.mxu0 %v3914
    %4032 = vmatprep.subr.mxu0 %v3911
    %4033 = vmatpush1.msra.mxu0 %v3910
    %4034 = vmatprep.subr.mxu0 %v3907
    %4035 = vmatpush1.msra.mxu0 %v3906
    %4036 = vmatprep.subr.mxu0 %v3903
    %4037 = vmatpush1.msra.mxu0 %v3902
    %4038 = vmatprep.subr.mxu0 %v3899
    %4039 = vmatpush1.msra.mxu0 %v3898
    %4040 = vmatprep.subr.mxu0 %v3895
    %4041 = vmatpush1.msra.mxu0 %v3894
    %4042 = vmatprep.subr.mxu0 %v3891
    %4043 = vmatpush1.msra.mxu0 %v3890
    %4044 = vmatprep.subr.mxu0 %v3887
    %4045 = vmatpush1.msra.mxu0 %v3886
    %4046 = vmatprep.subr.mxu0 %v4011
    %4047 = vmatpush2.msra.mxu0 %v4010
    %4048 = vmatprep.subr.mxu0 %v4007
    %4049 = vmatpush2.msra.mxu0 %v4006
    %4050 = vmatprep.subr.mxu0 %v4003
    %4051 = vmatpush2.msra.mxu0 %v4002
    %4052 = vmatprep.subr.mxu0 %v3999
    %4053 = vmatpush2.msra.mxu0 %v3998
    %4054 = vmatprep.subr.mxu0 %v3995
    %4055 = vmatpush2.msra.mxu0 %v3994
    %4056 = vmatprep.subr.mxu0 %v3991
    %4057 = vmatpush2.msra.mxu0 %v3990
    %4058 = vmatprep.subr.mxu0 %v3987
    %4059 = vmatpush2.msra.mxu0 %v3986
    %4060 = vmatprep.subr.mxu0 %v3983
    %4061 = vmatpush2.msra.mxu0 %v3982
    %4062 = vmatprep.subr.mxu0 %v3979
    %4063 = vmatpush2.msra.mxu0 %v3978
    %4064 = vmatprep.subr.mxu0 %v3975
    %4065 = vmatpush2.msra.mxu0 %v3974
    %4066 = vmatprep.subr.mxu0 %v3971
    %4067 = vmatpush2.msra.mxu0 %v3970
    %4068 = vmatprep.subr.mxu0 %v3967
    %4069 = vmatpush2.msra.mxu0 %v3966
    %4070 = vmatprep.subr.mxu0 %v3963
    %4071 = vmatpush2.msra.mxu0 %v3962
    %4072 = vmatprep.subr.mxu0 %v3959
    %4073 = vmatpush2.msra.mxu0 %v3958
    %4074 = vmatprep.subr.mxu0 %v3955
    %4075 = vmatpush2.msra.mxu0 %v3954
    %4076 = vmatprep.subr.mxu0 %v3951
    %4077 = vmatpush2.msra.mxu0 %v3950
    %4078 = vmatprep.mubr.f32.mxu0 %v3885
    %4079 = vmatmul.mubr.f32.gmra.mxu0 %v3884
    %v4080 = vpop.f32.mrf.mxu0
    %v4081 = vadd.f32 %v173, %v4080
    %v4082 = vpop.f32.mrf.mxu0
    %v4083 = vadd.f32 %v177, %v4082
    %4084 = vdwg.mxu0
    %4085 = vmatprep.subr.mxu0 %v3949
    %4086 = vmatpush1.msra.mxu0 %v3948
    %4087 = vmatprep.subr.mxu0 %v3945
    %4088 = vmatpush1.msra.mxu0 %v3944
    %4089 = vmatprep.subr.mxu0 %v3941
    %4090 = vmatpush1.msra.mxu0 %v3940
    %4091 = vmatprep.subr.mxu0 %v3937
    %4092 = vmatpush1.msra.mxu0 %v3936
    %4093 = vmatprep.subr.mxu0 %v3933
    %4094 = vmatpush1.msra.mxu0 %v3932
    %4095 = vmatprep.subr.mxu0 %v3929
    %4096 = vmatpush1.msra.mxu0 %v3928
    %4097 = vmatprep.subr.mxu0 %v3925
    %4098 = vmatpush1.msra.mxu0 %v3924
    %4099 = vmatprep.subr.mxu0 %v3921
    %4100 = vmatpush1.msra.mxu0 %v3920
    %4101 = vmatprep.subr.mxu0 %v3917
    %4102 = vmatpush1.msra.mxu0 %v3916
    %4103 = vmatprep.subr.mxu0 %v3913
    %4104 = vmatpush1.msra.mxu0 %v3912
    %4105 = vmatprep.subr.mxu0 %v3909
    %4106 = vmatpush1.msra.mxu0 %v3908
    %4107 = vmatprep.subr.mxu0 %v3905
    %4108 = vmatpush1.msra.mxu0 %v3904
    %4109 = vmatprep.subr.mxu0 %v3901
    %4110 = vmatpush1.msra.mxu0 %v3900
    %4111 = vmatprep.subr.mxu0 %v3897
    %4112 = vmatpush1.msra.mxu0 %v3896
    %4113 = vmatprep.subr.mxu0 %v3893
    %4114 = vmatpush1.msra.mxu0 %v3892
    %4115 = vmatprep.subr.mxu0 %v3889
    %4116 = vmatpush1.msra.mxu0 %v3888
    %4117 = vmatprep.subr.mxu0 %v4013
    %4118 = vmatpush2.msra.mxu0 %v4012
    %4119 = vmatprep.subr.mxu0 %v4009
    %4120 = vmatpush2.msra.mxu0 %v4008
    %4121 = vmatprep.subr.mxu0 %v4005
    %4122 = vmatpush2.msra.mxu0 %v4004
    %4123 = vmatprep.subr.mxu0 %v4001
    %4124 = vmatpush2.msra.mxu0 %v4000
    %4125 = vmatprep.subr.mxu0 %v3997
    %4126 = vmatpush2.msra.mxu0 %v3996
    %4127 = vmatprep.subr.mxu0 %v3993
    %4128 = vmatpush2.msra.mxu0 %v3992
    %4129 = vmatprep.subr.mxu0 %v3989
    %4130 = vmatpush2.msra.mxu0 %v3988
    %4131 = vmatprep.subr.mxu0 %v3985
    %4132 = vmatpush2.msra.mxu0 %v3984
    %4133 = vmatprep.subr.mxu0 %v3981
    %4134 = vmatpush2.msra.mxu0 %v3980
    %4135 = vmatprep.subr.mxu0 %v3977
    %4136 = vmatpush2.msra.mxu0 %v3976
    %4137 = vmatprep.subr.mxu0 %v3973
    %4138 = vmatpush2.msra.mxu0 %v3972
    %4139 = vmatprep.subr.mxu0 %v3969
    %4140 = vmatpush2.msra.mxu0 %v3968
    %4141 = vmatprep.subr.mxu0 %v3965
    %4142 = vmatpush2.msra.mxu0 %v3964
    %4143 = vmatprep.subr.mxu0 %v3961
    %4144 = vmatpush2.msra.mxu0 %v3960
    %4145 = vmatprep.subr.mxu0 %v3957
    %4146 = vmatpush2.msra.mxu0 %v3956
    %4147 = vmatprep.subr.mxu0 %v3953
    %4148 = vmatpush2.msra.mxu0 %v3952
    %4149 = vmatprep.mubr.f32.mxu0 %v3885
    %4150 = vmatmul.mubr.f32.gmra.mxu0 %v3884
    %v4151 = vpop.f32.mrf.mxu0
    %v4152 = vadd.f32 %v181, %v4151
    %v4153 = vpop.f32.mrf.mxu0
    %v4154 = vadd.f32 %v185, %v4153
    %4155 = vdwg.mxu0
    %v4156 = vld [vmem:[#allocation8] sm:$0xff]
    %v4157 = vld [vmem:[#allocation8 + $0x8] sm:$0xff]
    %v4158 = vld [vmem:[#allocation8 + $0x10] sm:$0xff]
    %v4159 = vld [vmem:[#allocation8 + $0x18] sm:$0xff]
    %v4160 = vld [vmem:[#allocation8 + $0x20] sm:$0xff]
    %v4161 = vld [vmem:[#allocation8 + $0x28] sm:$0xff]
    %v4162 = vld [vmem:[#allocation8 + $0x30] sm:$0xff]
    %v4163 = vld [vmem:[#allocation8 + $0x38] sm:$0xff]
    %v4164 = vld [vmem:[#allocation8 + $0x40] sm:$0xff]
    %v4165 = vld [vmem:[#allocation8 + $0x48] sm:$0xff]
    %v4166 = vld [vmem:[#allocation8 + $0x50] sm:$0xff]
    %v4167 = vld [vmem:[#allocation8 + $0x58] sm:$0xff]
    %v4168 = vld [vmem:[#allocation8 + $0x60] sm:$0xff]
    %v4169 = vld [vmem:[#allocation8 + $0x68] sm:$0xff]
    %v4170 = vld [vmem:[#allocation8 + $0x70] sm:$0xff]
    %v4171 = vld [vmem:[#allocation8 + $0x78] sm:$0xff]
    %v4172 = vld [vmem:[#allocation8 + $0x80] sm:$0xff]
    %v4173 = vld [vmem:[#allocation8 + $0x88] sm:$0xff]
    %v4174 = vld [vmem:[#allocation8 + $0x90] sm:$0xff]
    %v4175 = vld [vmem:[#allocation8 + $0x98] sm:$0xff]
    %v4176 = vld [vmem:[#allocation8 + $0xa0] sm:$0xff]
    %v4177 = vld [vmem:[#allocation8 + $0xa8] sm:$0xff]
    %v4178 = vld [vmem:[#allocation8 + $0xb0] sm:$0xff]
    %v4179 = vld [vmem:[#allocation8 + $0xb8] sm:$0xff]
    %v4180 = vld [vmem:[#allocation8 + $0xc0] sm:$0xff]
    %v4181 = vld [vmem:[#allocation8 + $0xc8] sm:$0xff]
    %v4182 = vld [vmem:[#allocation8 + $0xd0] sm:$0xff]
    %v4183 = vld [vmem:[#allocation8 + $0xd8] sm:$0xff]
    %v4184 = vld [vmem:[#allocation8 + $0xe0] sm:$0xff]
    %v4185 = vld [vmem:[#allocation8 + $0xe8] sm:$0xff]
    %v4186 = vld [vmem:[#allocation8 + $0xf0] sm:$0xff]
    %v4187 = vld [vmem:[#allocation8 + $0xf8] sm:$0xff]
    %v4188 = vld [vmem:[#allocation8 + $0x100] sm:$0xff]
    %v4189 = vld [vmem:[#allocation8 + $0x108] sm:$0xff]
    %v4190 = vld [vmem:[#allocation8 + $0x110] sm:$0xff]
    %v4191 = vld [vmem:[#allocation8 + $0x118] sm:$0xff]
    %v4192 = vld [vmem:[#allocation8 + $0x120] sm:$0xff]
    %v4193 = vld [vmem:[#allocation8 + $0x128] sm:$0xff]
    %v4194 = vld [vmem:[#allocation8 + $0x130] sm:$0xff]
    %v4195 = vld [vmem:[#allocation8 + $0x138] sm:$0xff]
    %v4196 = vld [vmem:[#allocation8 + $0x140] sm:$0xff]
    %v4197 = vld [vmem:[#allocation8 + $0x148] sm:$0xff]
    %v4198 = vld [vmem:[#allocation8 + $0x150] sm:$0xff]
    %v4199 = vld [vmem:[#allocation8 + $0x158] sm:$0xff]
    %v4200 = vld [vmem:[#allocation8 + $0x160] sm:$0xff]
    %v4201 = vld [vmem:[#allocation8 + $0x168] sm:$0xff]
    %v4202 = vld [vmem:[#allocation8 + $0x170] sm:$0xff]
    %v4203 = vld [vmem:[#allocation8 + $0x178] sm:$0xff]
    %v4204 = vld [vmem:[#allocation8 + $0x180] sm:$0xff]
    %v4205 = vld [vmem:[#allocation8 + $0x188] sm:$0xff]
    %v4206 = vld [vmem:[#allocation8 + $0x190] sm:$0xff]
    %v4207 = vld [vmem:[#allocation8 + $0x198] sm:$0xff]
    %v4208 = vld [vmem:[#allocation8 + $0x1a0] sm:$0xff]
    %v4209 = vld [vmem:[#allocation8 + $0x1a8] sm:$0xff]
    %v4210 = vld [vmem:[#allocation8 + $0x1b0] sm:$0xff]
    %v4211 = vld [vmem:[#allocation8 + $0x1b8] sm:$0xff]
    %v4212 = vld [vmem:[#allocation8 + $0x1c0] sm:$0xff]
    %v4213 = vld [vmem:[#allocation8 + $0x1c8] sm:$0xff]
    %v4214 = vld [vmem:[#allocation8 + $0x1d0] sm:$0xff]
    %v4215 = vld [vmem:[#allocation8 + $0x1d8] sm:$0xff]
    %v4216 = vld [vmem:[#allocation8 + $0x1e0] sm:$0xff]
    %v4217 = vld [vmem:[#allocation8 + $0x1e8] sm:$0xff]
    %v4218 = vld [vmem:[#allocation8 + $0x1f0] sm:$0xff]
    %v4219 = vld [vmem:[#allocation8 + $0x1f8] sm:$0xff]
    %4220 = vmatprep.subr.mxu0 %v4217
    %4221 = vmatpush1.msra.mxu0 %v4216
    %4222 = vmatprep.subr.mxu0 %v4213
    %4223 = vmatpush1.msra.mxu0 %v4212
    %4224 = vmatprep.subr.mxu0 %v4209
    %4225 = vmatpush1.msra.mxu0 %v4208
    %4226 = vmatprep.subr.mxu0 %v4205
    %4227 = vmatpush1.msra.mxu0 %v4204
    %4228 = vmatprep.subr.mxu0 %v4201
    %4229 = vmatpush1.msra.mxu0 %v4200
    %4230 = vmatprep.subr.mxu0 %v4197
    %4231 = vmatpush1.msra.mxu0 %v4196
    %4232 = vmatprep.subr.mxu0 %v4193
    %4233 = vmatpush1.msra.mxu0 %v4192
    %4234 = vmatprep.subr.mxu0 %v4189
    %4235 = vmatpush1.msra.mxu0 %v4188
    %4236 = vmatprep.subr.mxu0 %v4185
    %4237 = vmatpush1.msra.mxu0 %v4184
    %4238 = vmatprep.subr.mxu0 %v4181
    %4239 = vmatpush1.msra.mxu0 %v4180
    %4240 = vmatprep.subr.mxu0 %v4177
    %4241 = vmatpush1.msra.mxu0 %v4176
    %4242 = vmatprep.subr.mxu0 %v4173
    %4243 = vmatpush1.msra.mxu0 %v4172
    %4244 = vmatprep.subr.mxu0 %v4169
    %4245 = vmatpush1.msra.mxu0 %v4168
    %4246 = vmatprep.subr.mxu0 %v4165
    %4247 = vmatpush1.msra.mxu0 %v4164
    %4248 = vmatprep.subr.mxu0 %v4161
    %4249 = vmatpush1.msra.mxu0 %v4160
    %4250 = vmatprep.subr.mxu0 %v4157
    %4251 = vmatpush1.msra.mxu0 %v4156
    %4252 = vmatprep.subr.mxu0 0.0
    %4253 = vmatpush2.msra.mxu0 0.0
    %4254 = vmatprep.subr.mxu0 0.0
    %4255 = vmatpush2.msra.mxu0 0.0
    %4256 = vmatprep.subr.mxu0 0.0
    %4257 = vmatpush2.msra.mxu0 0.0
    %4258 = vmatprep.subr.mxu0 0.0
    %4259 = vmatpush2.msra.mxu0 0.0
    %4260 = vmatprep.subr.mxu0 0.0
    %4261 = vmatpush2.msra.mxu0 0.0
    %4262 = vmatprep.subr.mxu0 0.0
    %4263 = vmatpush2.msra.mxu0 0.0
    %4264 = vmatprep.subr.mxu0 0.0
    %4265 = vmatpush2.msra.mxu0 0.0
    %4266 = vmatprep.subr.mxu0 0.0
    %4267 = vmatpush2.msra.mxu0 0.0
    %4268 = vmatprep.subr.mxu0 0.0
    %4269 = vmatpush2.msra.mxu0 0.0
    %4270 = vmatprep.subr.mxu0 0.0
    %4271 = vmatpush2.msra.mxu0 0.0
    %4272 = vmatprep.subr.mxu0 0.0
    %4273 = vmatpush2.msra.mxu0 0.0
    %4274 = vmatprep.subr.mxu0 0.0
    %4275 = vmatpush2.msra.mxu0 0.0
    %4276 = vmatprep.subr.mxu0 0.0
    %4277 = vmatpush2.msra.mxu0 0.0
    %4278 = vmatprep.subr.mxu0 0.0
    %4279 = vmatpush2.msra.mxu0 0.0
    %4280 = vmatprep.subr.mxu0 0.0
    %4281 = vmatpush2.msra.mxu0 0.0
    %4282 = vmatprep.subr.mxu0 0.0
    %4283 = vmatpush2.msra.mxu0 0.0
    %4284 = vmatprep.mubr.f32.mxu0 0.0
    %4285 = vmatmul.mubr.f32.gmra.mxu0 %v3476
    %v4286 = vpop.f32.mrf.mxu0
    %v4287 = vadd.f32 0.0, %v4286
    %v4288 = vpop.f32.mrf.mxu0
    %v4289 = vadd.f32 0.0, %v4288
    %4290 = vdwg.mxu0
    %4291 = vmatprep.subr.mxu0 %v4219
    %4292 = vmatpush1.msra.mxu0 %v4218
    %4293 = vmatprep.subr.mxu0 %v4215
    %4294 = vmatpush1.msra.mxu0 %v4214
    %4295 = vmatprep.subr.mxu0 %v4211
    %4296 = vmatpush1.msra.mxu0 %v4210
    %4297 = vmatprep.subr.mxu0 %v4207
    %4298 = vmatpush1.msra.mxu0 %v4206
    %4299 = vmatprep.subr.mxu0 %v4203
    %4300 = vmatpush1.msra.mxu0 %v4202
    %4301 = vmatprep.subr.mxu0 %v4199
    %4302 = vmatpush1.msra.mxu0 %v4198
    %4303 = vmatprep.subr.mxu0 %v4195
    %4304 = vmatpush1.msra.mxu0 %v4194
    %4305 = vmatprep.subr.mxu0 %v4191
    %4306 = vmatpush1.msra.mxu0 %v4190
    %4307 = vmatprep.subr.mxu0 %v4187
    %4308 = vmatpush1.msra.mxu0 %v4186
    %4309 = vmatprep.subr.mxu0 %v4183
    %4310 = vmatpush1.msra.mxu0 %v4182
    %4311 = vmatprep.subr.mxu0 %v4179
    %4312 = vmatpush1.msra.mxu0 %v4178
    %4313 = vmatprep.subr.mxu0 %v4175
    %4314 = vmatpush1.msra.mxu0 %v4174
    %4315 = vmatprep.subr.mxu0 %v4171
    %4316 = vmatpush1.msra.mxu0 %v4170
    %4317 = vmatprep.subr.mxu0 %v4167
    %4318 = vmatpush1.msra.mxu0 %v4166
    %4319 = vmatprep.subr.mxu0 %v4163
    %4320 = vmatpush1.msra.mxu0 %v4162
    %4321 = vmatprep.subr.mxu0 %v4159
    %4322 = vmatpush1.msra.mxu0 %v4158
    %4323 = vmatprep.subr.mxu0 0.0
    %4324 = vmatpush2.msra.mxu0 0.0
    %4325 = vmatprep.subr.mxu0 0.0
    %4326 = vmatpush2.msra.mxu0 0.0
    %4327 = vmatprep.subr.mxu0 0.0
    %4328 = vmatpush2.msra.mxu0 0.0
    %4329 = vmatprep.subr.mxu0 0.0
    %4330 = vmatpush2.msra.mxu0 0.0
    %4331 = vmatprep.subr.mxu0 0.0
    %4332 = vmatpush2.msra.mxu0 0.0
    %4333 = vmatprep.subr.mxu0 0.0
    %4334 = vmatpush2.msra.mxu0 0.0
    %4335 = vmatprep.subr.mxu0 0.0
    %4336 = vmatpush2.msra.mxu0 0.0
    %4337 = vmatprep.subr.mxu0 0.0
    %4338 = vmatpush2.msra.mxu0 0.0
    %4339 = vmatprep.subr.mxu0 0.0
    %4340 = vmatpush2.msra.mxu0 0.0
    %4341 = vmatprep.subr.mxu0 0.0
    %4342 = vmatpush2.msra.mxu0 0.0
    %4343 = vmatprep.subr.mxu0 0.0
    %4344 = vmatpush2.msra.mxu0 0.0
    %4345 = vmatprep.subr.mxu0 0.0
    %4346 = vmatpush2.msra.mxu0 0.0
    %4347 = vmatprep.subr.mxu0 0.0
    %4348 = vmatpush2.msra.mxu0 0.0
    %4349 = vmatprep.subr.mxu0 0.0
    %4350 = vmatpush2.msra.mxu0 0.0
    %4351 = vmatprep.subr.mxu0 0.0
    %4352 = vmatpush2.msra.mxu0 0.0
    %4353 = vmatprep.subr.mxu0 0.0
    %4354 = vmatpush2.msra.mxu0 0.0
    %4355 = vmatprep.mubr.f32.mxu0 0.0
    %4356 = vmatmul.mubr.f32.gmra.mxu0 %v3476
    %v4357 = vpop.f32.mrf.mxu0
    %v4358 = vadd.f32 0.0, %v4357
    %v4359 = vpop.f32.mrf.mxu0
    %v4360 = vadd.f32 0.0, %v4359
    %4361 = vdwg.mxu0
    %v4362 = vadd.f32 %v4081, %v4287
    %v4363 = vadd.f32 %v4083, %v4289
    %v4364 = vadd.f32 %v4152, %v4358
    %v4365 = vadd.f32 %v4154, %v4360
    %v4366 = vxor.u32 %v4362, 2147483648
    %v4367 = vmul.f32 %v4366, 1.442695
    %v4368 = vpow.pop %v4367
    %v4369 = vadd.f32 %v4368, 1.0
    %v4370 = vrcp.pop %v4369
    %v4371 = vmul.f32 1.0, %v4370
    %v4372 = vxor.u32 %v4363, 2147483648
    %v4373 = vmul.f32 %v4372, 1.442695
    %v4374 = vpow.pop %v4373
    %v4375 = vadd.f32 %v4374, 1.0
    %v4376 = vrcp.pop %v4375
    %v4377 = vmul.f32 1.0, %v4376
    %v4378 = vtanh.pop %v4364
    %v4379 = vxor.u32 %v4365, 2147483648
    %v4380 = vmul.f32 %v4379, 1.442695
    %v4381 = vpow.pop %v4380
    %v4382 = vadd.f32 %v4381, 1.0
    %v4383 = vrcp.pop %v4382
    %v4384 = vmul.f32 1.0, %v4383
    %v4385 = vmul.f32 %v4377, %v3474
    %v4386 = vmul.f32 %v4371, %v4378
    %v4387 = vadd.f32 %v4385, %v4386
    %v4388 = vtanh.pop %v4387
    %v4389 = vmul.f32 %v4384, %v4388
    %v4390 = vld [vmem:[#allocation11] sm:$0xff]
    %v4391 = vld [vmem:[#allocation11 + $0x8] sm:$0xff]
    %v4392 = vld [vmem:[#allocation11 + $0x10] sm:$0xff]
    %v4393 = vld [vmem:[#allocation11 + $0x18] sm:$0xff]
    %v4394 = vld [vmem:[#allocation11 + $0x20] sm:$0xff]
    %v4395 = vld [vmem:[#allocation11 + $0x28] sm:$0xff]
    %v4396 = vld [vmem:[#allocation11 + $0x30] sm:$0xff]
    %v4397 = vld [vmem:[#allocation11 + $0x38] sm:$0xff]
    %v4398 = vld [vmem:[#allocation11 + $0x40] sm:$0xff]
    %v4399 = vld [vmem:[#allocation11 + $0x48] sm:$0xff]
    %v4400 = vld [vmem:[#allocation11 + $0x50] sm:$0xff]
    %v4401 = vld [vmem:[#allocation11 + $0x58] sm:$0xff]
    %v4402 = vld [vmem:[#allocation11 + $0x60] sm:$0xff]
    %v4403 = vld [vmem:[#allocation11 + $0x68] sm:$0xff]
    %v4404 = vld [vmem:[#allocation11 + $0x70] sm:$0xff]
    %v4405 = vld [vmem:[#allocation11 + $0x78] sm:$0xff]
    %v4406 = vld [vmem:[#allocation11 + $0x80] sm:$0xff]
    %v4407 = vld [vmem:[#allocation11 + $0x88] sm:$0xff]
    %v4408 = vld [vmem:[#allocation11 + $0x90] sm:$0xff]
    %v4409 = vld [vmem:[#allocation11 + $0x98] sm:$0xff]
    %v4410 = vld [vmem:[#allocation11 + $0xa0] sm:$0xff]
    %v4411 = vld [vmem:[#allocation11 + $0xa8] sm:$0xff]
    %v4412 = vld [vmem:[#allocation11 + $0xb0] sm:$0xff]
    %v4413 = vld [vmem:[#allocation11 + $0xb8] sm:$0xff]
    %v4414 = vld [vmem:[#allocation11 + $0xc0] sm:$0xff]
    %v4415 = vld [vmem:[#allocation11 + $0xc8] sm:$0xff]
    %v4416 = vld [vmem:[#allocation11 + $0xd0] sm:$0xff]
    %v4417 = vld [vmem:[#allocation11 + $0xd8] sm:$0xff]
    %v4418 = vld [vmem:[#allocation11 + $0xe0] sm:$0xff]
    %v4419 = vld [vmem:[#allocation11 + $0xe8] sm:$0xff]
    %v4420 = vld [vmem:[#allocation11 + $0xf0] sm:$0xff]
    %v4421 = vld [vmem:[#allocation11 + $0xf8] sm:$0xff]
    %v4422 = vld [vmem:[#allocation11 + $0x100] sm:$0xff]
    %v4423 = vld [vmem:[#allocation11 + $0x108] sm:$0xff]
    %v4424 = vld [vmem:[#allocation11 + $0x110] sm:$0xff]
    %v4425 = vld [vmem:[#allocation11 + $0x118] sm:$0xff]
    %v4426 = vld [vmem:[#allocation11 + $0x120] sm:$0xff]
    %v4427 = vld [vmem:[#allocation11 + $0x128] sm:$0xff]
    %v4428 = vld [vmem:[#allocation11 + $0x130] sm:$0xff]
    %v4429 = vld [vmem:[#allocation11 + $0x138] sm:$0xff]
    %v4430 = vld [vmem:[#allocation11 + $0x140] sm:$0xff]
    %v4431 = vld [vmem:[#allocation11 + $0x148] sm:$0xff]
    %v4432 = vld [vmem:[#allocation11 + $0x150] sm:$0xff]
    %v4433 = vld [vmem:[#allocation11 + $0x158] sm:$0xff]
    %v4434 = vld [vmem:[#allocation11 + $0x160] sm:$0xff]
    %v4435 = vld [vmem:[#allocation11 + $0x168] sm:$0xff]
    %v4436 = vld [vmem:[#allocation11 + $0x170] sm:$0xff]
    %v4437 = vld [vmem:[#allocation11 + $0x178] sm:$0xff]
    %v4438 = vld [vmem:[#allocation11 + $0x180] sm:$0xff]
    %v4439 = vld [vmem:[#allocation11 + $0x188] sm:$0xff]
    %v4440 = vld [vmem:[#allocation11 + $0x190] sm:$0xff]
    %v4441 = vld [vmem:[#allocation11 + $0x198] sm:$0xff]
    %v4442 = vld [vmem:[#allocation11 + $0x1a0] sm:$0xff]
    %v4443 = vld [vmem:[#allocation11 + $0x1a8] sm:$0xff]
    %v4444 = vld [vmem:[#allocation11 + $0x1b0] sm:$0xff]
    %v4445 = vld [vmem:[#allocation11 + $0x1b8] sm:$0xff]
    %v4446 = vld [vmem:[#allocation11 + $0x1c0] sm:$0xff]
    %v4447 = vld [vmem:[#allocation11 + $0x1c8] sm:$0xff]
    %v4448 = vld [vmem:[#allocation11 + $0x1d0] sm:$0xff]
    %v4449 = vld [vmem:[#allocation11 + $0x1d8] sm:$0xff]
    %v4450 = vld [vmem:[#allocation11 + $0x1e0] sm:$0xff]
    %v4451 = vld [vmem:[#allocation11 + $0x1e8] sm:$0xff]
    %v4452 = vld [vmem:[#allocation11 + $0x1f0] sm:$0xff]
    %v4453 = vld [vmem:[#allocation11 + $0x1f8] sm:$0xff]
    %v4454 = vld [vmem:[#allocation11 + $0x200] sm:$0xff]
    %v4455 = vld [vmem:[#allocation11 + $0x208] sm:$0xff]
    %v4456 = vld [vmem:[#allocation11 + $0x210] sm:$0xff]
    %v4457 = vld [vmem:[#allocation11 + $0x218] sm:$0xff]
    %v4458 = vld [vmem:[#allocation11 + $0x220] sm:$0xff]
    %v4459 = vld [vmem:[#allocation11 + $0x228] sm:$0xff]
    %v4460 = vld [vmem:[#allocation11 + $0x230] sm:$0xff]
    %v4461 = vld [vmem:[#allocation11 + $0x238] sm:$0xff]
    %v4462 = vld [vmem:[#allocation11 + $0x240] sm:$0xff]
    %v4463 = vld [vmem:[#allocation11 + $0x248] sm:$0xff]
    %v4464 = vld [vmem:[#allocation11 + $0x250] sm:$0xff]
    %v4465 = vld [vmem:[#allocation11 + $0x258] sm:$0xff]
    %v4466 = vld [vmem:[#allocation11 + $0x260] sm:$0xff]
    %v4467 = vld [vmem:[#allocation11 + $0x268] sm:$0xff]
    %v4468 = vld [vmem:[#allocation11 + $0x270] sm:$0xff]
    %v4469 = vld [vmem:[#allocation11 + $0x278] sm:$0xff]
    %v4470 = vld [vmem:[#allocation11 + $0x280] sm:$0xff]
    %v4471 = vld [vmem:[#allocation11 + $0x288] sm:$0xff]
    %v4472 = vld [vmem:[#allocation11 + $0x290] sm:$0xff]
    %v4473 = vld [vmem:[#allocation11 + $0x298] sm:$0xff]
    %v4474 = vld [vmem:[#allocation11 + $0x2a0] sm:$0xff]
    %v4475 = vld [vmem:[#allocation11 + $0x2a8] sm:$0xff]
    %v4476 = vld [vmem:[#allocation11 + $0x2b0] sm:$0xff]
    %v4477 = vld [vmem:[#allocation11 + $0x2b8] sm:$0xff]
    %v4478 = vld [vmem:[#allocation11 + $0x2c0] sm:$0xff]
    %v4479 = vld [vmem:[#allocation11 + $0x2c8] sm:$0xff]
    %v4480 = vld [vmem:[#allocation11 + $0x2d0] sm:$0xff]
    %v4481 = vld [vmem:[#allocation11 + $0x2d8] sm:$0xff]
    %v4482 = vld [vmem:[#allocation11 + $0x2e0] sm:$0xff]
    %v4483 = vld [vmem:[#allocation11 + $0x2e8] sm:$0xff]
    %v4484 = vld [vmem:[#allocation11 + $0x2f0] sm:$0xff]
    %v4485 = vld [vmem:[#allocation11 + $0x2f8] sm:$0xff]
    %v4486 = vld [vmem:[#allocation11 + $0x300] sm:$0xff]
    %v4487 = vld [vmem:[#allocation11 + $0x308] sm:$0xff]
    %v4488 = vld [vmem:[#allocation11 + $0x310] sm:$0xff]
    %v4489 = vld [vmem:[#allocation11 + $0x318] sm:$0xff]
    %v4490 = vld [vmem:[#allocation11 + $0x320] sm:$0xff]
    %v4491 = vld [vmem:[#allocation11 + $0x328] sm:$0xff]
    %v4492 = vld [vmem:[#allocation11 + $0x330] sm:$0xff]
    %v4493 = vld [vmem:[#allocation11 + $0x338] sm:$0xff]
    %v4494 = vld [vmem:[#allocation11 + $0x340] sm:$0xff]
    %v4495 = vld [vmem:[#allocation11 + $0x348] sm:$0xff]
    %v4496 = vld [vmem:[#allocation11 + $0x350] sm:$0xff]
    %v4497 = vld [vmem:[#allocation11 + $0x358] sm:$0xff]
    %v4498 = vld [vmem:[#allocation11 + $0x360] sm:$0xff]
    %v4499 = vld [vmem:[#allocation11 + $0x368] sm:$0xff]
    %v4500 = vld [vmem:[#allocation11 + $0x370] sm:$0xff]
    %v4501 = vld [vmem:[#allocation11 + $0x378] sm:$0xff]
    %v4502 = vld [vmem:[#allocation11 + $0x380] sm:$0xff]
    %v4503 = vld [vmem:[#allocation11 + $0x388] sm:$0xff]
    %v4504 = vld [vmem:[#allocation11 + $0x390] sm:$0xff]
    %v4505 = vld [vmem:[#allocation11 + $0x398] sm:$0xff]
    %v4506 = vld [vmem:[#allocation11 + $0x3a0] sm:$0xff]
    %v4507 = vld [vmem:[#allocation11 + $0x3a8] sm:$0xff]
    %v4508 = vld [vmem:[#allocation11 + $0x3b0] sm:$0xff]
    %v4509 = vld [vmem:[#allocation11 + $0x3b8] sm:$0xff]
    %v4510 = vld [vmem:[#allocation11 + $0x3c0] sm:$0xff]
    %v4511 = vld [vmem:[#allocation11 + $0x3c8] sm:$0xff]
    %v4512 = vld [vmem:[#allocation11 + $0x3d0] sm:$0xff]
    %v4513 = vld [vmem:[#allocation11 + $0x3d8] sm:$0xff]
    %v4514 = vld [vmem:[#allocation11 + $0x3e0] sm:$0xff]
    %v4515 = vld [vmem:[#allocation11 + $0x3e8] sm:$0xff]
    %v4516 = vld [vmem:[#allocation11 + $0x3f0] sm:$0xff]
    %v4517 = vld [vmem:[#allocation11 + $0x3f8] sm:$0xff]
    %4518 = vmatprep.subr.mxu0 %v4451
    %4519 = vmatpush1.msra.mxu0 %v4450
    %4520 = vmatprep.subr.mxu0 %v4447
    %4521 = vmatpush1.msra.mxu0 %v4446
    %4522 = vmatprep.subr.mxu0 %v4443
    %4523 = vmatpush1.msra.mxu0 %v4442
    %4524 = vmatprep.subr.mxu0 %v4439
    %4525 = vmatpush1.msra.mxu0 %v4438
    %4526 = vmatprep.subr.mxu0 %v4435
    %4527 = vmatpush1.msra.mxu0 %v4434
    %4528 = vmatprep.subr.mxu0 %v4431
    %4529 = vmatpush1.msra.mxu0 %v4430
    %4530 = vmatprep.subr.mxu0 %v4427
    %4531 = vmatpush1.msra.mxu0 %v4426
    %4532 = vmatprep.subr.mxu0 %v4423
    %4533 = vmatpush1.msra.mxu0 %v4422
    %4534 = vmatprep.subr.mxu0 %v4419
    %4535 = vmatpush1.msra.mxu0 %v4418
    %4536 = vmatprep.subr.mxu0 %v4415
    %4537 = vmatpush1.msra.mxu0 %v4414
    %4538 = vmatprep.subr.mxu0 %v4411
    %4539 = vmatpush1.msra.mxu0 %v4410
    %4540 = vmatprep.subr.mxu0 %v4407
    %4541 = vmatpush1.msra.mxu0 %v4406
    %4542 = vmatprep.subr.mxu0 %v4403
    %4543 = vmatpush1.msra.mxu0 %v4402
    %4544 = vmatprep.subr.mxu0 %v4399
    %4545 = vmatpush1.msra.mxu0 %v4398
    %4546 = vmatprep.subr.mxu0 %v4395
    %4547 = vmatpush1.msra.mxu0 %v4394
    %4548 = vmatprep.subr.mxu0 %v4391
    %4549 = vmatpush1.msra.mxu0 %v4390
    %4550 = vmatprep.subr.mxu0 %v4515
    %4551 = vmatpush2.msra.mxu0 %v4514
    %4552 = vmatprep.subr.mxu0 %v4511
    %4553 = vmatpush2.msra.mxu0 %v4510
    %4554 = vmatprep.subr.mxu0 %v4507
    %4555 = vmatpush2.msra.mxu0 %v4506
    %4556 = vmatprep.subr.mxu0 %v4503
    %4557 = vmatpush2.msra.mxu0 %v4502
    %4558 = vmatprep.subr.mxu0 %v4499
    %4559 = vmatpush2.msra.mxu0 %v4498
    %4560 = vmatprep.subr.mxu0 %v4495
    %4561 = vmatpush2.msra.mxu0 %v4494
    %4562 = vmatprep.subr.mxu0 %v4491
    %4563 = vmatpush2.msra.mxu0 %v4490
    %4564 = vmatprep.subr.mxu0 %v4487
    %4565 = vmatpush2.msra.mxu0 %v4486
    %4566 = vmatprep.subr.mxu0 %v4483
    %4567 = vmatpush2.msra.mxu0 %v4482
    %4568 = vmatprep.subr.mxu0 %v4479
    %4569 = vmatpush2.msra.mxu0 %v4478
    %4570 = vmatprep.subr.mxu0 %v4475
    %4571 = vmatpush2.msra.mxu0 %v4474
    %4572 = vmatprep.subr.mxu0 %v4471
    %4573 = vmatpush2.msra.mxu0 %v4470
    %4574 = vmatprep.subr.mxu0 %v4467
    %4575 = vmatpush2.msra.mxu0 %v4466
    %4576 = vmatprep.subr.mxu0 %v4463
    %4577 = vmatpush2.msra.mxu0 %v4462
    %4578 = vmatprep.subr.mxu0 %v4459
    %4579 = vmatpush2.msra.mxu0 %v4458
    %4580 = vmatprep.subr.mxu0 %v4455
    %4581 = vmatpush2.msra.mxu0 %v4454
    %4582 = vmatprep.mubr.f32.mxu0 %v3770
    %4583 = vmatmul.mubr.f32.gmra.mxu0 %v4389
    %v4584 = vpop.f32.mrf.mxu0
    %v4585 = vadd.f32 %v195, %v4584
    %v4586 = vpop.f32.mrf.mxu0
    %v4587 = vadd.f32 %v199, %v4586
    %4588 = vdwg.mxu0
    %4589 = vmatprep.subr.mxu0 %v4453
    %4590 = vmatpush1.msra.mxu0 %v4452
    %4591 = vmatprep.subr.mxu0 %v4449
    %4592 = vmatpush1.msra.mxu0 %v4448
    %4593 = vmatprep.subr.mxu0 %v4445
    %4594 = vmatpush1.msra.mxu0 %v4444
    %4595 = vmatprep.subr.mxu0 %v4441
    %4596 = vmatpush1.msra.mxu0 %v4440
    %4597 = vmatprep.subr.mxu0 %v4437
    %4598 = vmatpush1.msra.mxu0 %v4436
    %4599 = vmatprep.subr.mxu0 %v4433
    %4600 = vmatpush1.msra.mxu0 %v4432
    %4601 = vmatprep.subr.mxu0 %v4429
    %4602 = vmatpush1.msra.mxu0 %v4428
    %4603 = vmatprep.subr.mxu0 %v4425
    %4604 = vmatpush1.msra.mxu0 %v4424
    %4605 = vmatprep.subr.mxu0 %v4421
    %4606 = vmatpush1.msra.mxu0 %v4420
    %4607 = vmatprep.subr.mxu0 %v4417
    %4608 = vmatpush1.msra.mxu0 %v4416
    %4609 = vmatprep.subr.mxu0 %v4413
    %4610 = vmatpush1.msra.mxu0 %v4412
    %4611 = vmatprep.subr.mxu0 %v4409
    %4612 = vmatpush1.msra.mxu0 %v4408
    %4613 = vmatprep.subr.mxu0 %v4405
    %4614 = vmatpush1.msra.mxu0 %v4404
    %4615 = vmatprep.subr.mxu0 %v4401
    %4616 = vmatpush1.msra.mxu0 %v4400
    %4617 = vmatprep.subr.mxu0 %v4397
    %4618 = vmatpush1.msra.mxu0 %v4396
    %4619 = vmatprep.subr.mxu0 %v4393
    %4620 = vmatpush1.msra.mxu0 %v4392
    %4621 = vmatprep.subr.mxu0 %v4517
    %4622 = vmatpush2.msra.mxu0 %v4516
    %4623 = vmatprep.subr.mxu0 %v4513
    %4624 = vmatpush2.msra.mxu0 %v4512
    %4625 = vmatprep.subr.mxu0 %v4509
    %4626 = vmatpush2.msra.mxu0 %v4508
    %4627 = vmatprep.subr.mxu0 %v4505
    %4628 = vmatpush2.msra.mxu0 %v4504
    %4629 = vmatprep.subr.mxu0 %v4501
    %4630 = vmatpush2.msra.mxu0 %v4500
    %4631 = vmatprep.subr.mxu0 %v4497
    %4632 = vmatpush2.msra.mxu0 %v4496
    %4633 = vmatprep.subr.mxu0 %v4493
    %4634 = vmatpush2.msra.mxu0 %v4492
    %4635 = vmatprep.subr.mxu0 %v4489
    %4636 = vmatpush2.msra.mxu0 %v4488
    %4637 = vmatprep.subr.mxu0 %v4485
    %4638 = vmatpush2.msra.mxu0 %v4484
    %4639 = vmatprep.subr.mxu0 %v4481
    %4640 = vmatpush2.msra.mxu0 %v4480
    %4641 = vmatprep.subr.mxu0 %v4477
    %4642 = vmatpush2.msra.mxu0 %v4476
    %4643 = vmatprep.subr.mxu0 %v4473
    %4644 = vmatpush2.msra.mxu0 %v4472
    %4645 = vmatprep.subr.mxu0 %v4469
    %4646 = vmatpush2.msra.mxu0 %v4468
    %4647 = vmatprep.subr.mxu0 %v4465
    %4648 = vmatpush2.msra.mxu0 %v4464
    %4649 = vmatprep.subr.mxu0 %v4461
    %4650 = vmatpush2.msra.mxu0 %v4460
    %4651 = vmatprep.subr.mxu0 %v4457
    %4652 = vmatpush2.msra.mxu0 %v4456
    %4653 = vmatprep.mubr.f32.mxu0 %v3770
    %4654 = vmatmul.mubr.f32.gmra.mxu0 %v4389
    %v4655 = vpop.f32.mrf.mxu0
    %v4656 = vadd.f32 %v203, %v4655
    %v4657 = vpop.f32.mrf.mxu0
    %v4658 = vadd.f32 %v207, %v4657
    %4659 = vdwg.mxu0
    %v4660 = vxor.u32 %v4585, 2147483648
    %v4661 = vmul.f32 %v4660, 1.442695
    %v4662 = vpow.pop %v4661
    %v4663 = vadd.f32 %v4662, 1.0
    %v4664 = vrcp.pop %v4663
    %v4665 = vmul.f32 1.0, %v4664
    %v4666 = vxor.u32 %v4587, 2147483648
    %v4667 = vmul.f32 %v4666, 1.442695
    %v4668 = vpow.pop %v4667
    %v4669 = vadd.f32 %v4668, 1.0
    %v4670 = vrcp.pop %v4669
    %v4671 = vmul.f32 1.0, %v4670
    %v4672 = vtanh.pop %v4656
    %v4673 = vxor.u32 %v4658, 2147483648
    %v4674 = vmul.f32 %v4673, 1.442695
    %v4675 = vpow.pop %v4674
    %v4676 = vadd.f32 %v4675, 1.0
    %v4677 = vrcp.pop %v4676
    %v4678 = vmul.f32 1.0, %v4677
    %v4679 = vmul.f32 %v4671, %v3768
    %v4680 = vmul.f32 %v4665, %v4672
    %v4681 = vadd.f32 %v4679, %v4680
    %v4682 = vtanh.pop %v4681
    %v4683 = vmul.f32 %v4678, %v4682
    %v4684 = vld [vmem:[#allocation14] sm:$0xff]
    %v4685 = vld [vmem:[#allocation14 + $0x8] sm:$0xff]
    %v4686 = vld [vmem:[#allocation14 + $0x10] sm:$0xff]
    %v4687 = vld [vmem:[#allocation14 + $0x18] sm:$0xff]
    %v4688 = vld [vmem:[#allocation14 + $0x20] sm:$0xff]
    %v4689 = vld [vmem:[#allocation14 + $0x28] sm:$0xff]
    %v4690 = vld [vmem:[#allocation14 + $0x30] sm:$0xff]
    %v4691 = vld [vmem:[#allocation14 + $0x38] sm:$0xff]
    %v4692 = vld [vmem:[#allocation14 + $0x40] sm:$0xff]
    %v4693 = vld [vmem:[#allocation14 + $0x48] sm:$0xff]
    %v4694 = vld [vmem:[#allocation14 + $0x50] sm:$0xff]
    %v4695 = vld [vmem:[#allocation14 + $0x58] sm:$0xff]
    %v4696 = vld [vmem:[#allocation14 + $0x60] sm:$0xff]
    %v4697 = vld [vmem:[#allocation14 + $0x68] sm:$0xff]
    %v4698 = vld [vmem:[#allocation14 + $0x70] sm:$0xff]
    %v4699 = vld [vmem:[#allocation14 + $0x78] sm:$0xff]
    %v4700 = vld [vmem:[#allocation14 + $0x80] sm:$0xff]
    %v4701 = vld [vmem:[#allocation14 + $0x88] sm:$0xff]
    %v4702 = vld [vmem:[#allocation14 + $0x90] sm:$0xff]
    %v4703 = vld [vmem:[#allocation14 + $0x98] sm:$0xff]
    %v4704 = vld [vmem:[#allocation14 + $0xa0] sm:$0xff]
    %v4705 = vld [vmem:[#allocation14 + $0xa8] sm:$0xff]
    %v4706 = vld [vmem:[#allocation14 + $0xb0] sm:$0xff]
    %v4707 = vld [vmem:[#allocation14 + $0xb8] sm:$0xff]
    %v4708 = vld [vmem:[#allocation14 + $0xc0] sm:$0xff]
    %v4709 = vld [vmem:[#allocation14 + $0xc8] sm:$0xff]
    %v4710 = vld [vmem:[#allocation14 + $0xd0] sm:$0xff]
    %v4711 = vld [vmem:[#allocation14 + $0xd8] sm:$0xff]
    %v4712 = vld [vmem:[#allocation14 + $0xe0] sm:$0xff]
    %v4713 = vld [vmem:[#allocation14 + $0xe8] sm:$0xff]
    %v4714 = vld [vmem:[#allocation14 + $0xf0] sm:$0xff]
    %v4715 = vld [vmem:[#allocation14 + $0xf8] sm:$0xff]
    %4716 = vmatprep.subr.mxu0 %v4715
    %4717 = vmatpush1.msra.mxu0 %v4714
    %4718 = vmatprep.subr.mxu0 %v4713
    %4719 = vmatpush1.msra.mxu0 %v4712
    %4720 = vmatprep.subr.mxu0 %v4711
    %4721 = vmatpush1.msra.mxu0 %v4710
    %4722 = vmatprep.subr.mxu0 %v4709
    %4723 = vmatpush1.msra.mxu0 %v4708
    %4724 = vmatprep.subr.mxu0 %v4707
    %4725 = vmatpush1.msra.mxu0 %v4706
    %4726 = vmatprep.subr.mxu0 %v4705
    %4727 = vmatpush1.msra.mxu0 %v4704
    %4728 = vmatprep.subr.mxu0 %v4703
    %4729 = vmatpush1.msra.mxu0 %v4702
    %4730 = vmatprep.subr.mxu0 %v4701
    %4731 = vmatpush1.msra.mxu0 %v4700
    %4732 = vmatprep.subr.mxu0 %v4699
    %4733 = vmatpush1.msra.mxu0 %v4698
    %4734 = vmatprep.subr.mxu0 %v4697
    %4735 = vmatpush1.msra.mxu0 %v4696
    %4736 = vmatprep.subr.mxu0 %v4695
    %4737 = vmatpush1.msra.mxu0 %v4694
    %4738 = vmatprep.subr.mxu0 %v4693
    %4739 = vmatpush1.msra.mxu0 %v4692
    %4740 = vmatprep.subr.mxu0 %v4691
    %4741 = vmatpush1.msra.mxu0 %v4690
    %4742 = vmatprep.subr.mxu0 %v4689
    %4743 = vmatpush1.msra.mxu0 %v4688
    %4744 = vmatprep.subr.mxu0 %v4687
    %4745 = vmatpush1.msra.mxu0 %v4686
    %4746 = vmatprep.subr.mxu0 %v4685
    %4747 = vmatpush1.msra.mxu0 %v4684
    %4748 = vmatprep.subr.mxu0 0.0
    %4749 = vmatpush2.msra.mxu0 0.0
    %4750 = vmatprep.subr.mxu0 0.0
    %4751 = vmatpush2.msra.mxu0 0.0
    %4752 = vmatprep.subr.mxu0 0.0
    %4753 = vmatpush2.msra.mxu0 0.0
    %4754 = vmatprep.subr.mxu0 0.0
    %4755 = vmatpush2.msra.mxu0 0.0
    %4756 = vmatprep.subr.mxu0 0.0
    %4757 = vmatpush2.msra.mxu0 0.0
    %4758 = vmatprep.subr.mxu0 0.0
    %4759 = vmatpush2.msra.mxu0 0.0
    %4760 = vmatprep.subr.mxu0 0.0
    %4761 = vmatpush2.msra.mxu0 0.0
    %4762 = vmatprep.subr.mxu0 0.0
    %4763 = vmatpush2.msra.mxu0 0.0
    %4764 = vmatprep.subr.mxu0 0.0
    %4765 = vmatpush2.msra.mxu0 0.0
    %4766 = vmatprep.subr.mxu0 0.0
    %4767 = vmatpush2.msra.mxu0 0.0
    %4768 = vmatprep.subr.mxu0 0.0
    %4769 = vmatpush2.msra.mxu0 0.0
    %4770 = vmatprep.subr.mxu0 0.0
    %4771 = vmatpush2.msra.mxu0 0.0
    %4772 = vmatprep.subr.mxu0 0.0
    %4773 = vmatpush2.msra.mxu0 0.0
    %4774 = vmatprep.subr.mxu0 0.0
    %4775 = vmatpush2.msra.mxu0 0.0
    %4776 = vmatprep.subr.mxu0 0.0
    %4777 = vmatpush2.msra.mxu0 0.0
    %4778 = vmatprep.subr.mxu0 0.0
    %4779 = vmatpush2.msra.mxu0 0.0
    %4780 = vmatprep.mubr.f32.mxu0 0.0
    %4781 = vmatmul.mubr.f32.gmra.mxu0 %v4683
    %v4782 = vpop.f32.mrf.mxu0
    %v4783 = vadd.f32 %v217, %v4782
    %v4784 = vpop.f32.mrf.mxu0
    %v4785 = vadd.f32 %v221, %v4784
    %4786 = vdwg.mxu0
    %4787 = vst [vmem:[%s10 + $0x40] sm:$0xff] %v4783
    %4788 = vst [vmem:[%s10 + $0x48] sm:$0xff] %v4785
    %v4789 = vld [vmem:[#allocation2] sm:$0xff]
    %4790 = vset.pattern.permute.xlu0 5
    %4791 = vperm.xlu0 %4790, %v4789
    %v4792 = vpop.permute.xlu0 %4791
    %vm4793 = vcmp.eq.s32.totalorder %v4792, %v166
    %vm4794 = vcmp.eq.s32.totalorder %v4792, %v167
    %v4795 = vsel %vm4793, 1, 0
    %v4796 = vsel %vm4794, 1, 0
    %v4797 = vcvt.s32.f32 %v4795
    %v4798 = vcvt.s32.f32 %v4796
    %v4799 = vld [vmem:[#allocation7] sm:$0xff]
    %v4800 = vld [vmem:[#allocation7 + $0x8] sm:$0xff]
    %v4801 = vld [vmem:[#allocation7 + $0x10] sm:$0xff]
    %v4802 = vld [vmem:[#allocation7 + $0x18] sm:$0xff]
    %v4803 = vld [vmem:[#allocation7 + $0x20] sm:$0xff]
    %v4804 = vld [vmem:[#allocation7 + $0x28] sm:$0xff]
    %v4805 = vld [vmem:[#allocation7 + $0x30] sm:$0xff]
    %v4806 = vld [vmem:[#allocation7 + $0x38] sm:$0xff]
    %v4807 = vld [vmem:[#allocation7 + $0x40] sm:$0xff]
    %v4808 = vld [vmem:[#allocation7 + $0x48] sm:$0xff]
    %v4809 = vld [vmem:[#allocation7 + $0x50] sm:$0xff]
    %v4810 = vld [vmem:[#allocation7 + $0x58] sm:$0xff]
    %v4811 = vld [vmem:[#allocation7 + $0x60] sm:$0xff]
    %v4812 = vld [vmem:[#allocation7 + $0x68] sm:$0xff]
    %v4813 = vld [vmem:[#allocation7 + $0x70] sm:$0xff]
    %v4814 = vld [vmem:[#allocation7 + $0x78] sm:$0xff]
    %v4815 = vld [vmem:[#allocation7 + $0x80] sm:$0xff]
    %v4816 = vld [vmem:[#allocation7 + $0x88] sm:$0xff]
    %v4817 = vld [vmem:[#allocation7 + $0x90] sm:$0xff]
    %v4818 = vld [vmem:[#allocation7 + $0x98] sm:$0xff]
    %v4819 = vld [vmem:[#allocation7 + $0xa0] sm:$0xff]
    %v4820 = vld [vmem:[#allocation7 + $0xa8] sm:$0xff]
    %v4821 = vld [vmem:[#allocation7 + $0xb0] sm:$0xff]
    %v4822 = vld [vmem:[#allocation7 + $0xb8] sm:$0xff]
    %v4823 = vld [vmem:[#allocation7 + $0xc0] sm:$0xff]
    %v4824 = vld [vmem:[#allocation7 + $0xc8] sm:$0xff]
    %v4825 = vld [vmem:[#allocation7 + $0xd0] sm:$0xff]
    %v4826 = vld [vmem:[#allocation7 + $0xd8] sm:$0xff]
    %v4827 = vld [vmem:[#allocation7 + $0xe0] sm:$0xff]
    %v4828 = vld [vmem:[#allocation7 + $0xe8] sm:$0xff]
    %v4829 = vld [vmem:[#allocation7 + $0xf0] sm:$0xff]
    %v4830 = vld [vmem:[#allocation7 + $0xf8] sm:$0xff]
    %v4831 = vld [vmem:[#allocation7 + $0x100] sm:$0xff]
    %v4832 = vld [vmem:[#allocation7 + $0x108] sm:$0xff]
    %v4833 = vld [vmem:[#allocation7 + $0x110] sm:$0xff]
    %v4834 = vld [vmem:[#allocation7 + $0x118] sm:$0xff]
    %v4835 = vld [vmem:[#allocation7 + $0x120] sm:$0xff]
    %v4836 = vld [vmem:[#allocation7 + $0x128] sm:$0xff]
    %v4837 = vld [vmem:[#allocation7 + $0x130] sm:$0xff]
    %v4838 = vld [vmem:[#allocation7 + $0x138] sm:$0xff]
    %v4839 = vld [vmem:[#allocation7 + $0x140] sm:$0xff]
    %v4840 = vld [vmem:[#allocation7 + $0x148] sm:$0xff]
    %v4841 = vld [vmem:[#allocation7 + $0x150] sm:$0xff]
    %v4842 = vld [vmem:[#allocation7 + $0x158] sm:$0xff]
    %v4843 = vld [vmem:[#allocation7 + $0x160] sm:$0xff]
    %v4844 = vld [vmem:[#allocation7 + $0x168] sm:$0xff]
    %v4845 = vld [vmem:[#allocation7 + $0x170] sm:$0xff]
    %v4846 = vld [vmem:[#allocation7 + $0x178] sm:$0xff]
    %v4847 = vld [vmem:[#allocation7 + $0x180] sm:$0xff]
    %v4848 = vld [vmem:[#allocation7 + $0x188] sm:$0xff]
    %v4849 = vld [vmem:[#allocation7 + $0x190] sm:$0xff]
    %v4850 = vld [vmem:[#allocation7 + $0x198] sm:$0xff]
    %v4851 = vld [vmem:[#allocation7 + $0x1a0] sm:$0xff]
    %v4852 = vld [vmem:[#allocation7 + $0x1a8] sm:$0xff]
    %v4853 = vld [vmem:[#allocation7 + $0x1b0] sm:$0xff]
    %v4854 = vld [vmem:[#allocation7 + $0x1b8] sm:$0xff]
    %v4855 = vld [vmem:[#allocation7 + $0x1c0] sm:$0xff]
    %v4856 = vld [vmem:[#allocation7 + $0x1c8] sm:$0xff]
    %v4857 = vld [vmem:[#allocation7 + $0x1d0] sm:$0xff]
    %v4858 = vld [vmem:[#allocation7 + $0x1d8] sm:$0xff]
    %v4859 = vld [vmem:[#allocation7 + $0x1e0] sm:$0xff]
    %v4860 = vld [vmem:[#allocation7 + $0x1e8] sm:$0xff]
    %v4861 = vld [vmem:[#allocation7 + $0x1f0] sm:$0xff]
    %v4862 = vld [vmem:[#allocation7 + $0x1f8] sm:$0xff]
    %v4863 = vld [vmem:[#allocation7 + $0x200] sm:$0xff]
    %v4864 = vld [vmem:[#allocation7 + $0x208] sm:$0xff]
    %v4865 = vld [vmem:[#allocation7 + $0x210] sm:$0xff]
    %v4866 = vld [vmem:[#allocation7 + $0x218] sm:$0xff]
    %v4867 = vld [vmem:[#allocation7 + $0x220] sm:$0xff]
    %v4868 = vld [vmem:[#allocation7 + $0x228] sm:$0xff]
    %v4869 = vld [vmem:[#allocation7 + $0x230] sm:$0xff]
    %v4870 = vld [vmem:[#allocation7 + $0x238] sm:$0xff]
    %v4871 = vld [vmem:[#allocation7 + $0x240] sm:$0xff]
    %v4872 = vld [vmem:[#allocation7 + $0x248] sm:$0xff]
    %v4873 = vld [vmem:[#allocation7 + $0x250] sm:$0xff]
    %v4874 = vld [vmem:[#allocation7 + $0x258] sm:$0xff]
    %v4875 = vld [vmem:[#allocation7 + $0x260] sm:$0xff]
    %v4876 = vld [vmem:[#allocation7 + $0x268] sm:$0xff]
    %v4877 = vld [vmem:[#allocation7 + $0x270] sm:$0xff]
    %v4878 = vld [vmem:[#allocation7 + $0x278] sm:$0xff]
    %v4879 = vld [vmem:[#allocation7 + $0x280] sm:$0xff]
    %v4880 = vld [vmem:[#allocation7 + $0x288] sm:$0xff]
    %v4881 = vld [vmem:[#allocation7 + $0x290] sm:$0xff]
    %v4882 = vld [vmem:[#allocation7 + $0x298] sm:$0xff]
    %v4883 = vld [vmem:[#allocation7 + $0x2a0] sm:$0xff]
    %v4884 = vld [vmem:[#allocation7 + $0x2a8] sm:$0xff]
    %v4885 = vld [vmem:[#allocation7 + $0x2b0] sm:$0xff]
    %v4886 = vld [vmem:[#allocation7 + $0x2b8] sm:$0xff]
    %v4887 = vld [vmem:[#allocation7 + $0x2c0] sm:$0xff]
    %v4888 = vld [vmem:[#allocation7 + $0x2c8] sm:$0xff]
    %v4889 = vld [vmem:[#allocation7 + $0x2d0] sm:$0xff]
    %v4890 = vld [vmem:[#allocation7 + $0x2d8] sm:$0xff]
    %v4891 = vld [vmem:[#allocation7 + $0x2e0] sm:$0xff]
    %v4892 = vld [vmem:[#allocation7 + $0x2e8] sm:$0xff]
    %v4893 = vld [vmem:[#allocation7 + $0x2f0] sm:$0xff]
    %v4894 = vld [vmem:[#allocation7 + $0x2f8] sm:$0xff]
    %v4895 = vld [vmem:[#allocation7 + $0x300] sm:$0xff]
    %v4896 = vld [vmem:[#allocation7 + $0x308] sm:$0xff]
    %v4897 = vld [vmem:[#allocation7 + $0x310] sm:$0xff]
    %v4898 = vld [vmem:[#allocation7 + $0x318] sm:$0xff]
    %v4899 = vld [vmem:[#allocation7 + $0x320] sm:$0xff]
    %v4900 = vld [vmem:[#allocation7 + $0x328] sm:$0xff]
    %v4901 = vld [vmem:[#allocation7 + $0x330] sm:$0xff]
    %v4902 = vld [vmem:[#allocation7 + $0x338] sm:$0xff]
    %v4903 = vld [vmem:[#allocation7 + $0x340] sm:$0xff]
    %v4904 = vld [vmem:[#allocation7 + $0x348] sm:$0xff]
    %v4905 = vld [vmem:[#allocation7 + $0x350] sm:$0xff]
    %v4906 = vld [vmem:[#allocation7 + $0x358] sm:$0xff]
    %v4907 = vld [vmem:[#allocation7 + $0x360] sm:$0xff]
    %v4908 = vld [vmem:[#allocation7 + $0x368] sm:$0xff]
    %v4909 = vld [vmem:[#allocation7 + $0x370] sm:$0xff]
    %v4910 = vld [vmem:[#allocation7 + $0x378] sm:$0xff]
    %v4911 = vld [vmem:[#allocation7 + $0x380] sm:$0xff]
    %v4912 = vld [vmem:[#allocation7 + $0x388] sm:$0xff]
    %v4913 = vld [vmem:[#allocation7 + $0x390] sm:$0xff]
    %v4914 = vld [vmem:[#allocation7 + $0x398] sm:$0xff]
    %v4915 = vld [vmem:[#allocation7 + $0x3a0] sm:$0xff]
    %v4916 = vld [vmem:[#allocation7 + $0x3a8] sm:$0xff]
    %v4917 = vld [vmem:[#allocation7 + $0x3b0] sm:$0xff]
    %v4918 = vld [vmem:[#allocation7 + $0x3b8] sm:$0xff]
    %v4919 = vld [vmem:[#allocation7 + $0x3c0] sm:$0xff]
    %v4920 = vld [vmem:[#allocation7 + $0x3c8] sm:$0xff]
    %v4921 = vld [vmem:[#allocation7 + $0x3d0] sm:$0xff]
    %v4922 = vld [vmem:[#allocation7 + $0x3d8] sm:$0xff]
    %v4923 = vld [vmem:[#allocation7 + $0x3e0] sm:$0xff]
    %v4924 = vld [vmem:[#allocation7 + $0x3e8] sm:$0xff]
    %v4925 = vld [vmem:[#allocation7 + $0x3f0] sm:$0xff]
    %v4926 = vld [vmem:[#allocation7 + $0x3f8] sm:$0xff]
    %4927 = vmatprep.subr.mxu0 %v4860
    %4928 = vmatpush1.msra.mxu0 %v4859
    %4929 = vmatprep.subr.mxu0 %v4856
    %4930 = vmatpush1.msra.mxu0 %v4855
    %4931 = vmatprep.subr.mxu0 %v4852
    %4932 = vmatpush1.msra.mxu0 %v4851
    %4933 = vmatprep.subr.mxu0 %v4848
    %4934 = vmatpush1.msra.mxu0 %v4847
    %4935 = vmatprep.subr.mxu0 %v4844
    %4936 = vmatpush1.msra.mxu0 %v4843
    %4937 = vmatprep.subr.mxu0 %v4840
    %4938 = vmatpush1.msra.mxu0 %v4839
    %4939 = vmatprep.subr.mxu0 %v4836
    %4940 = vmatpush1.msra.mxu0 %v4835
    %4941 = vmatprep.subr.mxu0 %v4832
    %4942 = vmatpush1.msra.mxu0 %v4831
    %4943 = vmatprep.subr.mxu0 %v4828
    %4944 = vmatpush1.msra.mxu0 %v4827
    %4945 = vmatprep.subr.mxu0 %v4824
    %4946 = vmatpush1.msra.mxu0 %v4823
    %4947 = vmatprep.subr.mxu0 %v4820
    %4948 = vmatpush1.msra.mxu0 %v4819
    %4949 = vmatprep.subr.mxu0 %v4816
    %4950 = vmatpush1.msra.mxu0 %v4815
    %4951 = vmatprep.subr.mxu0 %v4812
    %4952 = vmatpush1.msra.mxu0 %v4811
    %4953 = vmatprep.subr.mxu0 %v4808
    %4954 = vmatpush1.msra.mxu0 %v4807
    %4955 = vmatprep.subr.mxu0 %v4804
    %4956 = vmatpush1.msra.mxu0 %v4803
    %4957 = vmatprep.subr.mxu0 %v4800
    %4958 = vmatpush1.msra.mxu0 %v4799
    %4959 = vmatprep.subr.mxu0 %v4924
    %4960 = vmatpush2.msra.mxu0 %v4923
    %4961 = vmatprep.subr.mxu0 %v4920
    %4962 = vmatpush2.msra.mxu0 %v4919
    %4963 = vmatprep.subr.mxu0 %v4916
    %4964 = vmatpush2.msra.mxu0 %v4915
    %4965 = vmatprep.subr.mxu0 %v4912
    %4966 = vmatpush2.msra.mxu0 %v4911
    %4967 = vmatprep.subr.mxu0 %v4908
    %4968 = vmatpush2.msra.mxu0 %v4907
    %4969 = vmatprep.subr.mxu0 %v4904
    %4970 = vmatpush2.msra.mxu0 %v4903
    %4971 = vmatprep.subr.mxu0 %v4900
    %4972 = vmatpush2.msra.mxu0 %v4899
    %4973 = vmatprep.subr.mxu0 %v4896
    %4974 = vmatpush2.msra.mxu0 %v4895
    %4975 = vmatprep.subr.mxu0 %v4892
    %4976 = vmatpush2.msra.mxu0 %v4891
    %4977 = vmatprep.subr.mxu0 %v4888
    %4978 = vmatpush2.msra.mxu0 %v4887
    %4979 = vmatprep.subr.mxu0 %v4884
    %4980 = vmatpush2.msra.mxu0 %v4883
    %4981 = vmatprep.subr.mxu0 %v4880
    %4982 = vmatpush2.msra.mxu0 %v4879
    %4983 = vmatprep.subr.mxu0 %v4876
    %4984 = vmatpush2.msra.mxu0 %v4875
    %4985 = vmatprep.subr.mxu0 %v4872
    %4986 = vmatpush2.msra.mxu0 %v4871
    %4987 = vmatprep.subr.mxu0 %v4868
    %4988 = vmatpush2.msra.mxu0 %v4867
    %4989 = vmatprep.subr.mxu0 %v4864
    %4990 = vmatpush2.msra.mxu0 %v4863
    %4991 = vmatprep.mubr.f32.mxu0 %v4798
    %4992 = vmatmul.mubr.f32.gmra.mxu0 %v4797
    %v4993 = vpop.f32.mrf.mxu0
    %v4994 = vadd.f32 %v173, %v4993
    %v4995 = vpop.f32.mrf.mxu0
    %v4996 = vadd.f32 %v177, %v4995
    %4997 = vdwg.mxu0
    %4998 = vmatprep.subr.mxu0 %v4862
    %4999 = vmatpush1.msra.mxu0 %v4861
    %5000 = vmatprep.subr.mxu0 %v4858
    %5001 = vmatpush1.msra.mxu0 %v4857
    %5002 = vmatprep.subr.mxu0 %v4854
    %5003 = vmatpush1.msra.mxu0 %v4853
    %5004 = vmatprep.subr.mxu0 %v4850
    %5005 = vmatpush1.msra.mxu0 %v4849
    %5006 = vmatprep.subr.mxu0 %v4846
    %5007 = vmatpush1.msra.mxu0 %v4845
    %5008 = vmatprep.subr.mxu0 %v4842
    %5009 = vmatpush1.msra.mxu0 %v4841
    %5010 = vmatprep.subr.mxu0 %v4838
    %5011 = vmatpush1.msra.mxu0 %v4837
    %5012 = vmatprep.subr.mxu0 %v4834
    %5013 = vmatpush1.msra.mxu0 %v4833
    %5014 = vmatprep.subr.mxu0 %v4830
    %5015 = vmatpush1.msra.mxu0 %v4829
    %5016 = vmatprep.subr.mxu0 %v4826
    %5017 = vmatpush1.msra.mxu0 %v4825
    %5018 = vmatprep.subr.mxu0 %v4822
    %5019 = vmatpush1.msra.mxu0 %v4821
    %5020 = vmatprep.subr.mxu0 %v4818
    %5021 = vmatpush1.msra.mxu0 %v4817
    %5022 = vmatprep.subr.mxu0 %v4814
    %5023 = vmatpush1.msra.mxu0 %v4813
    %5024 = vmatprep.subr.mxu0 %v4810
    %5025 = vmatpush1.msra.mxu0 %v4809
    %5026 = vmatprep.subr.mxu0 %v4806
    %5027 = vmatpush1.msra.mxu0 %v4805
    %5028 = vmatprep.subr.mxu0 %v4802
    %5029 = vmatpush1.msra.mxu0 %v4801
    %5030 = vmatprep.subr.mxu0 %v4926
    %5031 = vmatpush2.msra.mxu0 %v4925
    %5032 = vmatprep.subr.mxu0 %v4922
    %5033 = vmatpush2.msra.mxu0 %v4921
    %5034 = vmatprep.subr.mxu0 %v4918
    %5035 = vmatpush2.msra.mxu0 %v4917
    %5036 = vmatprep.subr.mxu0 %v4914
    %5037 = vmatpush2.msra.mxu0 %v4913
    %5038 = vmatprep.subr.mxu0 %v4910
    %5039 = vmatpush2.msra.mxu0 %v4909
    %5040 = vmatprep.subr.mxu0 %v4906
    %5041 = vmatpush2.msra.mxu0 %v4905
    %5042 = vmatprep.subr.mxu0 %v4902
    %5043 = vmatpush2.msra.mxu0 %v4901
    %5044 = vmatprep.subr.mxu0 %v4898
    %5045 = vmatpush2.msra.mxu0 %v4897
    %5046 = vmatprep.subr.mxu0 %v4894
    %5047 = vmatpush2.msra.mxu0 %v4893
    %5048 = vmatprep.subr.mxu0 %v4890
    %5049 = vmatpush2.msra.mxu0 %v4889
    %5050 = vmatprep.subr.mxu0 %v4886
    %5051 = vmatpush2.msra.mxu0 %v4885
    %5052 = vmatprep.subr.mxu0 %v4882
    %5053 = vmatpush2.msra.mxu0 %v4881
    %5054 = vmatprep.subr.mxu0 %v4878
    %5055 = vmatpush2.msra.mxu0 %v4877
    %5056 = vmatprep.subr.mxu0 %v4874
    %5057 = vmatpush2.msra.mxu0 %v4873
    %5058 = vmatprep.subr.mxu0 %v4870
    %5059 = vmatpush2.msra.mxu0 %v4869
    %5060 = vmatprep.subr.mxu0 %v4866
    %5061 = vmatpush2.msra.mxu0 %v4865
    %5062 = vmatprep.mubr.f32.mxu0 %v4798
    %5063 = vmatmul.mubr.f32.gmra.mxu0 %v4797
    %v5064 = vpop.f32.mrf.mxu0
    %v5065 = vadd.f32 %v181, %v5064
    %v5066 = vpop.f32.mrf.mxu0
    %v5067 = vadd.f32 %v185, %v5066
    %5068 = vdwg.mxu0
    %v5069 = vld [vmem:[#allocation8] sm:$0xff]
    %v5070 = vld [vmem:[#allocation8 + $0x8] sm:$0xff]
    %v5071 = vld [vmem:[#allocation8 + $0x10] sm:$0xff]
    %v5072 = vld [vmem:[#allocation8 + $0x18] sm:$0xff]
    %v5073 = vld [vmem:[#allocation8 + $0x20] sm:$0xff]
    %v5074 = vld [vmem:[#allocation8 + $0x28] sm:$0xff]
    %v5075 = vld [vmem:[#allocation8 + $0x30] sm:$0xff]
    %v5076 = vld [vmem:[#allocation8 + $0x38] sm:$0xff]
    %v5077 = vld [vmem:[#allocation8 + $0x40] sm:$0xff]
    %v5078 = vld [vmem:[#allocation8 + $0x48] sm:$0xff]
    %v5079 = vld [vmem:[#allocation8 + $0x50] sm:$0xff]
    %v5080 = vld [vmem:[#allocation8 + $0x58] sm:$0xff]
    %v5081 = vld [vmem:[#allocation8 + $0x60] sm:$0xff]
    %v5082 = vld [vmem:[#allocation8 + $0x68] sm:$0xff]
    %v5083 = vld [vmem:[#allocation8 + $0x70] sm:$0xff]
    %v5084 = vld [vmem:[#allocation8 + $0x78] sm:$0xff]
    %v5085 = vld [vmem:[#allocation8 + $0x80] sm:$0xff]
    %v5086 = vld [vmem:[#allocation8 + $0x88] sm:$0xff]
    %v5087 = vld [vmem:[#allocation8 + $0x90] sm:$0xff]
    %v5088 = vld [vmem:[#allocation8 + $0x98] sm:$0xff]
    %v5089 = vld [vmem:[#allocation8 + $0xa0] sm:$0xff]
    %v5090 = vld [vmem:[#allocation8 + $0xa8] sm:$0xff]
    %v5091 = vld [vmem:[#allocation8 + $0xb0] sm:$0xff]
    %v5092 = vld [vmem:[#allocation8 + $0xb8] sm:$0xff]
    %v5093 = vld [vmem:[#allocation8 + $0xc0] sm:$0xff]
    %v5094 = vld [vmem:[#allocation8 + $0xc8] sm:$0xff]
    %v5095 = vld [vmem:[#allocation8 + $0xd0] sm:$0xff]
    %v5096 = vld [vmem:[#allocation8 + $0xd8] sm:$0xff]
    %v5097 = vld [vmem:[#allocation8 + $0xe0] sm:$0xff]
    %v5098 = vld [vmem:[#allocation8 + $0xe8] sm:$0xff]
    %v5099 = vld [vmem:[#allocation8 + $0xf0] sm:$0xff]
    %v5100 = vld [vmem:[#allocation8 + $0xf8] sm:$0xff]
    %v5101 = vld [vmem:[#allocation8 + $0x100] sm:$0xff]
    %v5102 = vld [vmem:[#allocation8 + $0x108] sm:$0xff]
    %v5103 = vld [vmem:[#allocation8 + $0x110] sm:$0xff]
    %v5104 = vld [vmem:[#allocation8 + $0x118] sm:$0xff]
    %v5105 = vld [vmem:[#allocation8 + $0x120] sm:$0xff]
    %v5106 = vld [vmem:[#allocation8 + $0x128] sm:$0xff]
    %v5107 = vld [vmem:[#allocation8 + $0x130] sm:$0xff]
    %v5108 = vld [vmem:[#allocation8 + $0x138] sm:$0xff]
    %v5109 = vld [vmem:[#allocation8 + $0x140] sm:$0xff]
    %v5110 = vld [vmem:[#allocation8 + $0x148] sm:$0xff]
    %v5111 = vld [vmem:[#allocation8 + $0x150] sm:$0xff]
    %v5112 = vld [vmem:[#allocation8 + $0x158] sm:$0xff]
    %v5113 = vld [vmem:[#allocation8 + $0x160] sm:$0xff]
    %v5114 = vld [vmem:[#allocation8 + $0x168] sm:$0xff]
    %v5115 = vld [vmem:[#allocation8 + $0x170] sm:$0xff]
    %v5116 = vld [vmem:[#allocation8 + $0x178] sm:$0xff]
    %v5117 = vld [vmem:[#allocation8 + $0x180] sm:$0xff]
    %v5118 = vld [vmem:[#allocation8 + $0x188] sm:$0xff]
    %v5119 = vld [vmem:[#allocation8 + $0x190] sm:$0xff]
    %v5120 = vld [vmem:[#allocation8 + $0x198] sm:$0xff]
    %v5121 = vld [vmem:[#allocation8 + $0x1a0] sm:$0xff]
    %v5122 = vld [vmem:[#allocation8 + $0x1a8] sm:$0xff]
    %v5123 = vld [vmem:[#allocation8 + $0x1b0] sm:$0xff]
    %v5124 = vld [vmem:[#allocation8 + $0x1b8] sm:$0xff]
    %v5125 = vld [vmem:[#allocation8 + $0x1c0] sm:$0xff]
    %v5126 = vld [vmem:[#allocation8 + $0x1c8] sm:$0xff]
    %v5127 = vld [vmem:[#allocation8 + $0x1d0] sm:$0xff]
    %v5128 = vld [vmem:[#allocation8 + $0x1d8] sm:$0xff]
    %v5129 = vld [vmem:[#allocation8 + $0x1e0] sm:$0xff]
    %v5130 = vld [vmem:[#allocation8 + $0x1e8] sm:$0xff]
    %v5131 = vld [vmem:[#allocation8 + $0x1f0] sm:$0xff]
    %v5132 = vld [vmem:[#allocation8 + $0x1f8] sm:$0xff]
    %5133 = vmatprep.subr.mxu0 %v5130
    %5134 = vmatpush1.msra.mxu0 %v5129
    %5135 = vmatprep.subr.mxu0 %v5126
    %5136 = vmatpush1.msra.mxu0 %v5125
    %5137 = vmatprep.subr.mxu0 %v5122
    %5138 = vmatpush1.msra.mxu0 %v5121
    %5139 = vmatprep.subr.mxu0 %v5118
    %5140 = vmatpush1.msra.mxu0 %v5117
    %5141 = vmatprep.subr.mxu0 %v5114
    %5142 = vmatpush1.msra.mxu0 %v5113
    %5143 = vmatprep.subr.mxu0 %v5110
    %5144 = vmatpush1.msra.mxu0 %v5109
    %5145 = vmatprep.subr.mxu0 %v5106
    %5146 = vmatpush1.msra.mxu0 %v5105
    %5147 = vmatprep.subr.mxu0 %v5102
    %5148 = vmatpush1.msra.mxu0 %v5101
    %5149 = vmatprep.subr.mxu0 %v5098
    %5150 = vmatpush1.msra.mxu0 %v5097
    %5151 = vmatprep.subr.mxu0 %v5094
    %5152 = vmatpush1.msra.mxu0 %v5093
    %5153 = vmatprep.subr.mxu0 %v5090
    %5154 = vmatpush1.msra.mxu0 %v5089
    %5155 = vmatprep.subr.mxu0 %v5086
    %5156 = vmatpush1.msra.mxu0 %v5085
    %5157 = vmatprep.subr.mxu0 %v5082
    %5158 = vmatpush1.msra.mxu0 %v5081
    %5159 = vmatprep.subr.mxu0 %v5078
    %5160 = vmatpush1.msra.mxu0 %v5077
    %5161 = vmatprep.subr.mxu0 %v5074
    %5162 = vmatpush1.msra.mxu0 %v5073
    %5163 = vmatprep.subr.mxu0 %v5070
    %5164 = vmatpush1.msra.mxu0 %v5069
    %5165 = vmatprep.subr.mxu0 0.0
    %5166 = vmatpush2.msra.mxu0 0.0
    %5167 = vmatprep.subr.mxu0 0.0
    %5168 = vmatpush2.msra.mxu0 0.0
    %5169 = vmatprep.subr.mxu0 0.0
    %5170 = vmatpush2.msra.mxu0 0.0
    %5171 = vmatprep.subr.mxu0 0.0
    %5172 = vmatpush2.msra.mxu0 0.0
    %5173 = vmatprep.subr.mxu0 0.0
    %5174 = vmatpush2.msra.mxu0 0.0
    %5175 = vmatprep.subr.mxu0 0.0
    %5176 = vmatpush2.msra.mxu0 0.0
    %5177 = vmatprep.subr.mxu0 0.0
    %5178 = vmatpush2.msra.mxu0 0.0
    %5179 = vmatprep.subr.mxu0 0.0
    %5180 = vmatpush2.msra.mxu0 0.0
    %5181 = vmatprep.subr.mxu0 0.0
    %5182 = vmatpush2.msra.mxu0 0.0
    %5183 = vmatprep.subr.mxu0 0.0
    %5184 = vmatpush2.msra.mxu0 0.0
    %5185 = vmatprep.subr.mxu0 0.0
    %5186 = vmatpush2.msra.mxu0 0.0
    %5187 = vmatprep.subr.mxu0 0.0
    %5188 = vmatpush2.msra.mxu0 0.0
    %5189 = vmatprep.subr.mxu0 0.0
    %5190 = vmatpush2.msra.mxu0 0.0
    %5191 = vmatprep.subr.mxu0 0.0
    %5192 = vmatpush2.msra.mxu0 0.0
    %5193 = vmatprep.subr.mxu0 0.0
    %5194 = vmatpush2.msra.mxu0 0.0
    %5195 = vmatprep.subr.mxu0 0.0
    %5196 = vmatpush2.msra.mxu0 0.0
    %5197 = vmatprep.mubr.f32.mxu0 0.0
    %5198 = vmatmul.mubr.f32.gmra.mxu0 %v4389
    %v5199 = vpop.f32.mrf.mxu0
    %v5200 = vadd.f32 0.0, %v5199
    %v5201 = vpop.f32.mrf.mxu0
    %v5202 = vadd.f32 0.0, %v5201
    %5203 = vdwg.mxu0
    %5204 = vmatprep.subr.mxu0 %v5132
    %5205 = vmatpush1.msra.mxu0 %v5131
    %5206 = vmatprep.subr.mxu0 %v5128
    %5207 = vmatpush1.msra.mxu0 %v5127
    %5208 = vmatprep.subr.mxu0 %v5124
    %5209 = vmatpush1.msra.mxu0 %v5123
    %5210 = vmatprep.subr.mxu0 %v5120
    %5211 = vmatpush1.msra.mxu0 %v5119
    %5212 = vmatprep.subr.mxu0 %v5116
    %5213 = vmatpush1.msra.mxu0 %v5115
    %5214 = vmatprep.subr.mxu0 %v5112
    %5215 = vmatpush1.msra.mxu0 %v5111
    %5216 = vmatprep.subr.mxu0 %v5108
    %5217 = vmatpush1.msra.mxu0 %v5107
    %5218 = vmatprep.subr.mxu0 %v5104
    %5219 = vmatpush1.msra.mxu0 %v5103
    %5220 = vmatprep.subr.mxu0 %v5100
    %5221 = vmatpush1.msra.mxu0 %v5099
    %5222 = vmatprep.subr.mxu0 %v5096
    %5223 = vmatpush1.msra.mxu0 %v5095
    %5224 = vmatprep.subr.mxu0 %v5092
    %5225 = vmatpush1.msra.mxu0 %v5091
    %5226 = vmatprep.subr.mxu0 %v5088
    %5227 = vmatpush1.msra.mxu0 %v5087
    %5228 = vmatprep.subr.mxu0 %v5084
    %5229 = vmatpush1.msra.mxu0 %v5083
    %5230 = vmatprep.subr.mxu0 %v5080
    %5231 = vmatpush1.msra.mxu0 %v5079
    %5232 = vmatprep.subr.mxu0 %v5076
    %5233 = vmatpush1.msra.mxu0 %v5075
    %5234 = vmatprep.subr.mxu0 %v5072
    %5235 = vmatpush1.msra.mxu0 %v5071
    %5236 = vmatprep.subr.mxu0 0.0
    %5237 = vmatpush2.msra.mxu0 0.0
    %5238 = vmatprep.subr.mxu0 0.0
    %5239 = vmatpush2.msra.mxu0 0.0
    %5240 = vmatprep.subr.mxu0 0.0
    %5241 = vmatpush2.msra.mxu0 0.0
    %5242 = vmatprep.subr.mxu0 0.0
    %5243 = vmatpush2.msra.mxu0 0.0
    %5244 = vmatprep.subr.mxu0 0.0
    %5245 = vmatpush2.msra.mxu0 0.0
    %5246 = vmatprep.subr.mxu0 0.0
    %5247 = vmatpush2.msra.mxu0 0.0
    %5248 = vmatprep.subr.mxu0 0.0
    %5249 = vmatpush2.msra.mxu0 0.0
    %5250 = vmatprep.subr.mxu0 0.0
    %5251 = vmatpush2.msra.mxu0 0.0
    %5252 = vmatprep.subr.mxu0 0.0
    %5253 = vmatpush2.msra.mxu0 0.0
    %5254 = vmatprep.subr.mxu0 0.0
    %5255 = vmatpush2.msra.mxu0 0.0
    %5256 = vmatprep.subr.mxu0 0.0
    %5257 = vmatpush2.msra.mxu0 0.0
    %5258 = vmatprep.subr.mxu0 0.0
    %5259 = vmatpush2.msra.mxu0 0.0
    %5260 = vmatprep.subr.mxu0 0.0
    %5261 = vmatpush2.msra.mxu0 0.0
    %5262 = vmatprep.subr.mxu0 0.0
    %5263 = vmatpush2.msra.mxu0 0.0
    %5264 = vmatprep.subr.mxu0 0.0
    %5265 = vmatpush2.msra.mxu0 0.0
    %5266 = vmatprep.subr.mxu0 0.0
    %5267 = vmatpush2.msra.mxu0 0.0
    %5268 = vmatprep.mubr.f32.mxu0 0.0
    %5269 = vmatmul.mubr.f32.gmra.mxu0 %v4389
    %v5270 = vpop.f32.mrf.mxu0
    %v5271 = vadd.f32 0.0, %v5270
    %v5272 = vpop.f32.mrf.mxu0
    %v5273 = vadd.f32 0.0, %v5272
    %5274 = vdwg.mxu0
    %v5275 = vadd.f32 %v4994, %v5200
    %v5276 = vadd.f32 %v4996, %v5202
    %v5277 = vadd.f32 %v5065, %v5271
    %v5278 = vadd.f32 %v5067, %v5273
    %v5279 = vxor.u32 %v5275, 2147483648
    %v5280 = vmul.f32 %v5279, 1.442695
    %v5281 = vpow.pop %v5280
    %v5282 = vadd.f32 %v5281, 1.0
    %v5283 = vrcp.pop %v5282
    %v5284 = vmul.f32 1.0, %v5283
    %v5285 = vxor.u32 %v5276, 2147483648
    %v5286 = vmul.f32 %v5285, 1.442695
    %v5287 = vpow.pop %v5286
    %v5288 = vadd.f32 %v5287, 1.0
    %v5289 = vrcp.pop %v5288
    %v5290 = vmul.f32 1.0, %v5289
    %v5291 = vtanh.pop %v5277
    %v5292 = vxor.u32 %v5278, 2147483648
    %v5293 = vmul.f32 %v5292, 1.442695
    %v5294 = vpow.pop %v5293
    %v5295 = vadd.f32 %v5294, 1.0
    %v5296 = vrcp.pop %v5295
    %v5297 = vmul.f32 1.0, %v5296
    %v5298 = vmul.f32 %v5290, %v4387
    %v5299 = vmul.f32 %v5284, %v5291
    %v5300 = vadd.f32 %v5298, %v5299
    %v5301 = vtanh.pop %v5300
    %v5302 = vmul.f32 %v5297, %v5301
    %v5303 = vld [vmem:[#allocation11] sm:$0xff]
    %v5304 = vld [vmem:[#allocation11 + $0x8] sm:$0xff]
    %v5305 = vld [vmem:[#allocation11 + $0x10] sm:$0xff]
    %v5306 = vld [vmem:[#allocation11 + $0x18] sm:$0xff]
    %v5307 = vld [vmem:[#allocation11 + $0x20] sm:$0xff]
    %v5308 = vld [vmem:[#allocation11 + $0x28] sm:$0xff]
    %v5309 = vld [vmem:[#allocation11 + $0x30] sm:$0xff]
    %v5310 = vld [vmem:[#allocation11 + $0x38] sm:$0xff]
    %v5311 = vld [vmem:[#allocation11 + $0x40] sm:$0xff]
    %v5312 = vld [vmem:[#allocation11 + $0x48] sm:$0xff]
    %v5313 = vld [vmem:[#allocation11 + $0x50] sm:$0xff]
    %v5314 = vld [vmem:[#allocation11 + $0x58] sm:$0xff]
    %v5315 = vld [vmem:[#allocation11 + $0x60] sm:$0xff]
    %v5316 = vld [vmem:[#allocation11 + $0x68] sm:$0xff]
    %v5317 = vld [vmem:[#allocation11 + $0x70] sm:$0xff]
    %v5318 = vld [vmem:[#allocation11 + $0x78] sm:$0xff]
    %v5319 = vld [vmem:[#allocation11 + $0x80] sm:$0xff]
    %v5320 = vld [vmem:[#allocation11 + $0x88] sm:$0xff]
    %v5321 = vld [vmem:[#allocation11 + $0x90] sm:$0xff]
    %v5322 = vld [vmem:[#allocation11 + $0x98] sm:$0xff]
    %v5323 = vld [vmem:[#allocation11 + $0xa0] sm:$0xff]
    %v5324 = vld [vmem:[#allocation11 + $0xa8] sm:$0xff]
    %v5325 = vld [vmem:[#allocation11 + $0xb0] sm:$0xff]
    %v5326 = vld [vmem:[#allocation11 + $0xb8] sm:$0xff]
    %v5327 = vld [vmem:[#allocation11 + $0xc0] sm:$0xff]
    %v5328 = vld [vmem:[#allocation11 + $0xc8] sm:$0xff]
    %v5329 = vld [vmem:[#allocation11 + $0xd0] sm:$0xff]
    %v5330 = vld [vmem:[#allocation11 + $0xd8] sm:$0xff]
    %v5331 = vld [vmem:[#allocation11 + $0xe0] sm:$0xff]
    %v5332 = vld [vmem:[#allocation11 + $0xe8] sm:$0xff]
    %v5333 = vld [vmem:[#allocation11 + $0xf0] sm:$0xff]
    %v5334 = vld [vmem:[#allocation11 + $0xf8] sm:$0xff]
    %v5335 = vld [vmem:[#allocation11 + $0x100] sm:$0xff]
    %v5336 = vld [vmem:[#allocation11 + $0x108] sm:$0xff]
    %v5337 = vld [vmem:[#allocation11 + $0x110] sm:$0xff]
    %v5338 = vld [vmem:[#allocation11 + $0x118] sm:$0xff]
    %v5339 = vld [vmem:[#allocation11 + $0x120] sm:$0xff]
    %v5340 = vld [vmem:[#allocation11 + $0x128] sm:$0xff]
    %v5341 = vld [vmem:[#allocation11 + $0x130] sm:$0xff]
    %v5342 = vld [vmem:[#allocation11 + $0x138] sm:$0xff]
    %v5343 = vld [vmem:[#allocation11 + $0x140] sm:$0xff]
    %v5344 = vld [vmem:[#allocation11 + $0x148] sm:$0xff]
    %v5345 = vld [vmem:[#allocation11 + $0x150] sm:$0xff]
    %v5346 = vld [vmem:[#allocation11 + $0x158] sm:$0xff]
    %v5347 = vld [vmem:[#allocation11 + $0x160] sm:$0xff]
    %v5348 = vld [vmem:[#allocation11 + $0x168] sm:$0xff]
    %v5349 = vld [vmem:[#allocation11 + $0x170] sm:$0xff]
    %v5350 = vld [vmem:[#allocation11 + $0x178] sm:$0xff]
    %v5351 = vld [vmem:[#allocation11 + $0x180] sm:$0xff]
    %v5352 = vld [vmem:[#allocation11 + $0x188] sm:$0xff]
    %v5353 = vld [vmem:[#allocation11 + $0x190] sm:$0xff]
    %v5354 = vld [vmem:[#allocation11 + $0x198] sm:$0xff]
    %v5355 = vld [vmem:[#allocation11 + $0x1a0] sm:$0xff]
    %v5356 = vld [vmem:[#allocation11 + $0x1a8] sm:$0xff]
    %v5357 = vld [vmem:[#allocation11 + $0x1b0] sm:$0xff]
    %v5358 = vld [vmem:[#allocation11 + $0x1b8] sm:$0xff]
    %v5359 = vld [vmem:[#allocation11 + $0x1c0] sm:$0xff]
    %v5360 = vld [vmem:[#allocation11 + $0x1c8] sm:$0xff]
    %v5361 = vld [vmem:[#allocation11 + $0x1d0] sm:$0xff]
    %v5362 = vld [vmem:[#allocation11 + $0x1d8] sm:$0xff]
    %v5363 = vld [vmem:[#allocation11 + $0x1e0] sm:$0xff]
    %v5364 = vld [vmem:[#allocation11 + $0x1e8] sm:$0xff]
    %v5365 = vld [vmem:[#allocation11 + $0x1f0] sm:$0xff]
    %v5366 = vld [vmem:[#allocation11 + $0x1f8] sm:$0xff]
    %v5367 = vld [vmem:[#allocation11 + $0x200] sm:$0xff]
    %v5368 = vld [vmem:[#allocation11 + $0x208] sm:$0xff]
    %v5369 = vld [vmem:[#allocation11 + $0x210] sm:$0xff]
    %v5370 = vld [vmem:[#allocation11 + $0x218] sm:$0xff]
    %v5371 = vld [vmem:[#allocation11 + $0x220] sm:$0xff]
    %v5372 = vld [vmem:[#allocation11 + $0x228] sm:$0xff]
    %v5373 = vld [vmem:[#allocation11 + $0x230] sm:$0xff]
    %v5374 = vld [vmem:[#allocation11 + $0x238] sm:$0xff]
    %v5375 = vld [vmem:[#allocation11 + $0x240] sm:$0xff]
    %v5376 = vld [vmem:[#allocation11 + $0x248] sm:$0xff]
    %v5377 = vld [vmem:[#allocation11 + $0x250] sm:$0xff]
    %v5378 = vld [vmem:[#allocation11 + $0x258] sm:$0xff]
    %v5379 = vld [vmem:[#allocation11 + $0x260] sm:$0xff]
    %v5380 = vld [vmem:[#allocation11 + $0x268] sm:$0xff]
    %v5381 = vld [vmem:[#allocation11 + $0x270] sm:$0xff]
    %v5382 = vld [vmem:[#allocation11 + $0x278] sm:$0xff]
    %v5383 = vld [vmem:[#allocation11 + $0x280] sm:$0xff]
    %v5384 = vld [vmem:[#allocation11 + $0x288] sm:$0xff]
    %v5385 = vld [vmem:[#allocation11 + $0x290] sm:$0xff]
    %v5386 = vld [vmem:[#allocation11 + $0x298] sm:$0xff]
    %v5387 = vld [vmem:[#allocation11 + $0x2a0] sm:$0xff]
    %v5388 = vld [vmem:[#allocation11 + $0x2a8] sm:$0xff]
    %v5389 = vld [vmem:[#allocation11 + $0x2b0] sm:$0xff]
    %v5390 = vld [vmem:[#allocation11 + $0x2b8] sm:$0xff]
    %v5391 = vld [vmem:[#allocation11 + $0x2c0] sm:$0xff]
    %v5392 = vld [vmem:[#allocation11 + $0x2c8] sm:$0xff]
    %v5393 = vld [vmem:[#allocation11 + $0x2d0] sm:$0xff]
    %v5394 = vld [vmem:[#allocation11 + $0x2d8] sm:$0xff]
    %v5395 = vld [vmem:[#allocation11 + $0x2e0] sm:$0xff]
    %v5396 = vld [vmem:[#allocation11 + $0x2e8] sm:$0xff]
    %v5397 = vld [vmem:[#allocation11 + $0x2f0] sm:$0xff]
    %v5398 = vld [vmem:[#allocation11 + $0x2f8] sm:$0xff]
    %v5399 = vld [vmem:[#allocation11 + $0x300] sm:$0xff]
    %v5400 = vld [vmem:[#allocation11 + $0x308] sm:$0xff]
    %v5401 = vld [vmem:[#allocation11 + $0x310] sm:$0xff]
    %v5402 = vld [vmem:[#allocation11 + $0x318] sm:$0xff]
    %v5403 = vld [vmem:[#allocation11 + $0x320] sm:$0xff]
    %v5404 = vld [vmem:[#allocation11 + $0x328] sm:$0xff]
    %v5405 = vld [vmem:[#allocation11 + $0x330] sm:$0xff]
    %v5406 = vld [vmem:[#allocation11 + $0x338] sm:$0xff]
    %v5407 = vld [vmem:[#allocation11 + $0x340] sm:$0xff]
    %v5408 = vld [vmem:[#allocation11 + $0x348] sm:$0xff]
    %v5409 = vld [vmem:[#allocation11 + $0x350] sm:$0xff]
    %v5410 = vld [vmem:[#allocation11 + $0x358] sm:$0xff]
    %v5411 = vld [vmem:[#allocation11 + $0x360] sm:$0xff]
    %v5412 = vld [vmem:[#allocation11 + $0x368] sm:$0xff]
    %v5413 = vld [vmem:[#allocation11 + $0x370] sm:$0xff]
    %v5414 = vld [vmem:[#allocation11 + $0x378] sm:$0xff]
    %v5415 = vld [vmem:[#allocation11 + $0x380] sm:$0xff]
    %v5416 = vld [vmem:[#allocation11 + $0x388] sm:$0xff]
    %v5417 = vld [vmem:[#allocation11 + $0x390] sm:$0xff]
    %v5418 = vld [vmem:[#allocation11 + $0x398] sm:$0xff]
    %v5419 = vld [vmem:[#allocation11 + $0x3a0] sm:$0xff]
    %v5420 = vld [vmem:[#allocation11 + $0x3a8] sm:$0xff]
    %v5421 = vld [vmem:[#allocation11 + $0x3b0] sm:$0xff]
    %v5422 = vld [vmem:[#allocation11 + $0x3b8] sm:$0xff]
    %v5423 = vld [vmem:[#allocation11 + $0x3c0] sm:$0xff]
    %v5424 = vld [vmem:[#allocation11 + $0x3c8] sm:$0xff]
    %v5425 = vld [vmem:[#allocation11 + $0x3d0] sm:$0xff]
    %v5426 = vld [vmem:[#allocation11 + $0x3d8] sm:$0xff]
    %v5427 = vld [vmem:[#allocation11 + $0x3e0] sm:$0xff]
    %v5428 = vld [vmem:[#allocation11 + $0x3e8] sm:$0xff]
    %v5429 = vld [vmem:[#allocation11 + $0x3f0] sm:$0xff]
    %v5430 = vld [vmem:[#allocation11 + $0x3f8] sm:$0xff]
    %5431 = vmatprep.subr.mxu0 %v5364
    %5432 = vmatpush1.msra.mxu0 %v5363
    %5433 = vmatprep.subr.mxu0 %v5360
    %5434 = vmatpush1.msra.mxu0 %v5359
    %5435 = vmatprep.subr.mxu0 %v5356
    %5436 = vmatpush1.msra.mxu0 %v5355
    %5437 = vmatprep.subr.mxu0 %v5352
    %5438 = vmatpush1.msra.mxu0 %v5351
    %5439 = vmatprep.subr.mxu0 %v5348
    %5440 = vmatpush1.msra.mxu0 %v5347
    %5441 = vmatprep.subr.mxu0 %v5344
    %5442 = vmatpush1.msra.mxu0 %v5343
    %5443 = vmatprep.subr.mxu0 %v5340
    %5444 = vmatpush1.msra.mxu0 %v5339
    %5445 = vmatprep.subr.mxu0 %v5336
    %5446 = vmatpush1.msra.mxu0 %v5335
    %5447 = vmatprep.subr.mxu0 %v5332
    %5448 = vmatpush1.msra.mxu0 %v5331
    %5449 = vmatprep.subr.mxu0 %v5328
    %5450 = vmatpush1.msra.mxu0 %v5327
    %5451 = vmatprep.subr.mxu0 %v5324
    %5452 = vmatpush1.msra.mxu0 %v5323
    %5453 = vmatprep.subr.mxu0 %v5320
    %5454 = vmatpush1.msra.mxu0 %v5319
    %5455 = vmatprep.subr.mxu0 %v5316
    %5456 = vmatpush1.msra.mxu0 %v5315
    %5457 = vmatprep.subr.mxu0 %v5312
    %5458 = vmatpush1.msra.mxu0 %v5311
    %5459 = vmatprep.subr.mxu0 %v5308
    %5460 = vmatpush1.msra.mxu0 %v5307
    %5461 = vmatprep.subr.mxu0 %v5304
    %5462 = vmatpush1.msra.mxu0 %v5303
    %5463 = vmatprep.subr.mxu0 %v5428
    %5464 = vmatpush2.msra.mxu0 %v5427
    %5465 = vmatprep.subr.mxu0 %v5424
    %5466 = vmatpush2.msra.mxu0 %v5423
    %5467 = vmatprep.subr.mxu0 %v5420
    %5468 = vmatpush2.msra.mxu0 %v5419
    %5469 = vmatprep.subr.mxu0 %v5416
    %5470 = vmatpush2.msra.mxu0 %v5415
    %5471 = vmatprep.subr.mxu0 %v5412
    %5472 = vmatpush2.msra.mxu0 %v5411
    %5473 = vmatprep.subr.mxu0 %v5408
    %5474 = vmatpush2.msra.mxu0 %v5407
    %5475 = vmatprep.subr.mxu0 %v5404
    %5476 = vmatpush2.msra.mxu0 %v5403
    %5477 = vmatprep.subr.mxu0 %v5400
    %5478 = vmatpush2.msra.mxu0 %v5399
    %5479 = vmatprep.subr.mxu0 %v5396
    %5480 = vmatpush2.msra.mxu0 %v5395
    %5481 = vmatprep.subr.mxu0 %v5392
    %5482 = vmatpush2.msra.mxu0 %v5391
    %5483 = vmatprep.subr.mxu0 %v5388
    %5484 = vmatpush2.msra.mxu0 %v5387
    %5485 = vmatprep.subr.mxu0 %v5384
    %5486 = vmatpush2.msra.mxu0 %v5383
    %5487 = vmatprep.subr.mxu0 %v5380
    %5488 = vmatpush2.msra.mxu0 %v5379
    %5489 = vmatprep.subr.mxu0 %v5376
    %5490 = vmatpush2.msra.mxu0 %v5375
    %5491 = vmatprep.subr.mxu0 %v5372
    %5492 = vmatpush2.msra.mxu0 %v5371
    %5493 = vmatprep.subr.mxu0 %v5368
    %5494 = vmatpush2.msra.mxu0 %v5367
    %5495 = vmatprep.mubr.f32.mxu0 %v4683
    %5496 = vmatmul.mubr.f32.gmra.mxu0 %v5302
    %v5497 = vpop.f32.mrf.mxu0
    %v5498 = vadd.f32 %v195, %v5497
    %v5499 = vpop.f32.mrf.mxu0
    %v5500 = vadd.f32 %v199, %v5499
    %5501 = vdwg.mxu0
    %5502 = vmatprep.subr.mxu0 %v5366
    %5503 = vmatpush1.msra.mxu0 %v5365
    %5504 = vmatprep.subr.mxu0 %v5362
    %5505 = vmatpush1.msra.mxu0 %v5361
    %5506 = vmatprep.subr.mxu0 %v5358
    %5507 = vmatpush1.msra.mxu0 %v5357
    %5508 = vmatprep.subr.mxu0 %v5354
    %5509 = vmatpush1.msra.mxu0 %v5353
    %5510 = vmatprep.subr.mxu0 %v5350
    %5511 = vmatpush1.msra.mxu0 %v5349
    %5512 = vmatprep.subr.mxu0 %v5346
    %5513 = vmatpush1.msra.mxu0 %v5345
    %5514 = vmatprep.subr.mxu0 %v5342
    %5515 = vmatpush1.msra.mxu0 %v5341
    %5516 = vmatprep.subr.mxu0 %v5338
    %5517 = vmatpush1.msra.mxu0 %v5337
    %5518 = vmatprep.subr.mxu0 %v5334
    %5519 = vmatpush1.msra.mxu0 %v5333
    %5520 = vmatprep.subr.mxu0 %v5330
    %5521 = vmatpush1.msra.mxu0 %v5329
    %5522 = vmatprep.subr.mxu0 %v5326
    %5523 = vmatpush1.msra.mxu0 %v5325
    %5524 = vmatprep.subr.mxu0 %v5322
    %5525 = vmatpush1.msra.mxu0 %v5321
    %5526 = vmatprep.subr.mxu0 %v5318
    %5527 = vmatpush1.msra.mxu0 %v5317
    %5528 = vmatprep.subr.mxu0 %v5314
    %5529 = vmatpush1.msra.mxu0 %v5313
    %5530 = vmatprep.subr.mxu0 %v5310
    %5531 = vmatpush1.msra.mxu0 %v5309
    %5532 = vmatprep.subr.mxu0 %v5306
    %5533 = vmatpush1.msra.mxu0 %v5305
    %5534 = vmatprep.subr.mxu0 %v5430
    %5535 = vmatpush2.msra.mxu0 %v5429
    %5536 = vmatprep.subr.mxu0 %v5426
    %5537 = vmatpush2.msra.mxu0 %v5425
    %5538 = vmatprep.subr.mxu0 %v5422
    %5539 = vmatpush2.msra.mxu0 %v5421
    %5540 = vmatprep.subr.mxu0 %v5418
    %5541 = vmatpush2.msra.mxu0 %v5417
    %5542 = vmatprep.subr.mxu0 %v5414
    %5543 = vmatpush2.msra.mxu0 %v5413
    %5544 = vmatprep.subr.mxu0 %v5410
    %5545 = vmatpush2.msra.mxu0 %v5409
    %5546 = vmatprep.subr.mxu0 %v5406
    %5547 = vmatpush2.msra.mxu0 %v5405
    %5548 = vmatprep.subr.mxu0 %v5402
    %5549 = vmatpush2.msra.mxu0 %v5401
    %5550 = vmatprep.subr.mxu0 %v5398
    %5551 = vmatpush2.msra.mxu0 %v5397
    %5552 = vmatprep.subr.mxu0 %v5394
    %5553 = vmatpush2.msra.mxu0 %v5393
    %5554 = vmatprep.subr.mxu0 %v5390
    %5555 = vmatpush2.msra.mxu0 %v5389
    %5556 = vmatprep.subr.mxu0 %v5386
    %5557 = vmatpush2.msra.mxu0 %v5385
    %5558 = vmatprep.subr.mxu0 %v5382
    %5559 = vmatpush2.msra.mxu0 %v5381
    %5560 = vmatprep.subr.mxu0 %v5378
    %5561 = vmatpush2.msra.mxu0 %v5377
    %5562 = vmatprep.subr.mxu0 %v5374
    %5563 = vmatpush2.msra.mxu0 %v5373
    %5564 = vmatprep.subr.mxu0 %v5370
    %5565 = vmatpush2.msra.mxu0 %v5369
    %5566 = vmatprep.mubr.f32.mxu0 %v4683
    %5567 = vmatmul.mubr.f32.gmra.mxu0 %v5302
    %v5568 = vpop.f32.mrf.mxu0
    %v5569 = vadd.f32 %v203, %v5568
    %v5570 = vpop.f32.mrf.mxu0
    %v5571 = vadd.f32 %v207, %v5570
    %5572 = vdwg.mxu0
    %v5573 = vxor.u32 %v5498, 2147483648
    %v5574 = vmul.f32 %v5573, 1.442695
    %v5575 = vpow.pop %v5574
    %v5576 = vadd.f32 %v5575, 1.0
    %v5577 = vrcp.pop %v5576
    %v5578 = vmul.f32 1.0, %v5577
    %v5579 = vxor.u32 %v5500, 2147483648
    %v5580 = vmul.f32 %v5579, 1.442695
    %v5581 = vpow.pop %v5580
    %v5582 = vadd.f32 %v5581, 1.0
    %v5583 = vrcp.pop %v5582
    %v5584 = vmul.f32 1.0, %v5583
    %v5585 = vtanh.pop %v5569
    %v5586 = vxor.u32 %v5571, 2147483648
    %v5587 = vmul.f32 %v5586, 1.442695
    %v5588 = vpow.pop %v5587
    %v5589 = vadd.f32 %v5588, 1.0
    %v5590 = vrcp.pop %v5589
    %v5591 = vmul.f32 1.0, %v5590
    %v5592 = vmul.f32 %v5584, %v4681
    %v5593 = vmul.f32 %v5578, %v5585
    %v5594 = vadd.f32 %v5592, %v5593
    %v5595 = vtanh.pop %v5594
    %v5596 = vmul.f32 %v5591, %v5595
    %v5597 = vld [vmem:[#allocation14] sm:$0xff]
    %v5598 = vld [vmem:[#allocation14 + $0x8] sm:$0xff]
    %v5599 = vld [vmem:[#allocation14 + $0x10] sm:$0xff]
    %v5600 = vld [vmem:[#allocation14 + $0x18] sm:$0xff]
    %v5601 = vld [vmem:[#allocation14 + $0x20] sm:$0xff]
    %v5602 = vld [vmem:[#allocation14 + $0x28] sm:$0xff]
    %v5603 = vld [vmem:[#allocation14 + $0x30] sm:$0xff]
    %v5604 = vld [vmem:[#allocation14 + $0x38] sm:$0xff]
    %v5605 = vld [vmem:[#allocation14 + $0x40] sm:$0xff]
    %v5606 = vld [vmem:[#allocation14 + $0x48] sm:$0xff]
    %v5607 = vld [vmem:[#allocation14 + $0x50] sm:$0xff]
    %v5608 = vld [vmem:[#allocation14 + $0x58] sm:$0xff]
    %v5609 = vld [vmem:[#allocation14 + $0x60] sm:$0xff]
    %v5610 = vld [vmem:[#allocation14 + $0x68] sm:$0xff]
    %v5611 = vld [vmem:[#allocation14 + $0x70] sm:$0xff]
    %v5612 = vld [vmem:[#allocation14 + $0x78] sm:$0xff]
    %v5613 = vld [vmem:[#allocation14 + $0x80] sm:$0xff]
    %v5614 = vld [vmem:[#allocation14 + $0x88] sm:$0xff]
    %v5615 = vld [vmem:[#allocation14 + $0x90] sm:$0xff]
    %v5616 = vld [vmem:[#allocation14 + $0x98] sm:$0xff]
    %v5617 = vld [vmem:[#allocation14 + $0xa0] sm:$0xff]
    %v5618 = vld [vmem:[#allocation14 + $0xa8] sm:$0xff]
    %v5619 = vld [vmem:[#allocation14 + $0xb0] sm:$0xff]
    %v5620 = vld [vmem:[#allocation14 + $0xb8] sm:$0xff]
    %v5621 = vld [vmem:[#allocation14 + $0xc0] sm:$0xff]
    %v5622 = vld [vmem:[#allocation14 + $0xc8] sm:$0xff]
    %v5623 = vld [vmem:[#allocation14 + $0xd0] sm:$0xff]
    %v5624 = vld [vmem:[#allocation14 + $0xd8] sm:$0xff]
    %v5625 = vld [vmem:[#allocation14 + $0xe0] sm:$0xff]
    %v5626 = vld [vmem:[#allocation14 + $0xe8] sm:$0xff]
    %v5627 = vld [vmem:[#allocation14 + $0xf0] sm:$0xff]
    %v5628 = vld [vmem:[#allocation14 + $0xf8] sm:$0xff]
    %5629 = vmatprep.subr.mxu0 %v5628
    %5630 = vmatpush1.msra.mxu0 %v5627
    %5631 = vmatprep.subr.mxu0 %v5626
    %5632 = vmatpush1.msra.mxu0 %v5625
    %5633 = vmatprep.subr.mxu0 %v5624
    %5634 = vmatpush1.msra.mxu0 %v5623
    %5635 = vmatprep.subr.mxu0 %v5622
    %5636 = vmatpush1.msra.mxu0 %v5621
    %5637 = vmatprep.subr.mxu0 %v5620
    %5638 = vmatpush1.msra.mxu0 %v5619
    %5639 = vmatprep.subr.mxu0 %v5618
    %5640 = vmatpush1.msra.mxu0 %v5617
    %5641 = vmatprep.subr.mxu0 %v5616
    %5642 = vmatpush1.msra.mxu0 %v5615
    %5643 = vmatprep.subr.mxu0 %v5614
    %5644 = vmatpush1.msra.mxu0 %v5613
    %5645 = vmatprep.subr.mxu0 %v5612
    %5646 = vmatpush1.msra.mxu0 %v5611
    %5647 = vmatprep.subr.mxu0 %v5610
    %5648 = vmatpush1.msra.mxu0 %v5609
    %5649 = vmatprep.subr.mxu0 %v5608
    %5650 = vmatpush1.msra.mxu0 %v5607
    %5651 = vmatprep.subr.mxu0 %v5606
    %5652 = vmatpush1.msra.mxu0 %v5605
    %5653 = vmatprep.subr.mxu0 %v5604
    %5654 = vmatpush1.msra.mxu0 %v5603
    %5655 = vmatprep.subr.mxu0 %v5602
    %5656 = vmatpush1.msra.mxu0 %v5601
    %5657 = vmatprep.subr.mxu0 %v5600
    %5658 = vmatpush1.msra.mxu0 %v5599
    %5659 = vmatprep.subr.mxu0 %v5598
    %5660 = vmatpush1.msra.mxu0 %v5597
    %5661 = vmatprep.subr.mxu0 0.0
    %5662 = vmatpush2.msra.mxu0 0.0
    %5663 = vmatprep.subr.mxu0 0.0
    %5664 = vmatpush2.msra.mxu0 0.0
    %5665 = vmatprep.subr.mxu0 0.0
    %5666 = vmatpush2.msra.mxu0 0.0
    %5667 = vmatprep.subr.mxu0 0.0
    %5668 = vmatpush2.msra.mxu0 0.0
    %5669 = vmatprep.subr.mxu0 0.0
    %5670 = vmatpush2.msra.mxu0 0.0
    %5671 = vmatprep.subr.mxu0 0.0
    %5672 = vmatpush2.msra.mxu0 0.0
    %5673 = vmatprep.subr.mxu0 0.0
    %5674 = vmatpush2.msra.mxu0 0.0
    %5675 = vmatprep.subr.mxu0 0.0
    %5676 = vmatpush2.msra.mxu0 0.0
    %5677 = vmatprep.subr.mxu0 0.0
    %5678 = vmatpush2.msra.mxu0 0.0
    %5679 = vmatprep.subr.mxu0 0.0
    %5680 = vmatpush2.msra.mxu0 0.0
    %5681 = vmatprep.subr.mxu0 0.0
    %5682 = vmatpush2.msra.mxu0 0.0
    %5683 = vmatprep.subr.mxu0 0.0
    %5684 = vmatpush2.msra.mxu0 0.0
    %5685 = vmatprep.subr.mxu0 0.0
    %5686 = vmatpush2.msra.mxu0 0.0
    %5687 = vmatprep.subr.mxu0 0.0
    %5688 = vmatpush2.msra.mxu0 0.0
    %5689 = vmatprep.subr.mxu0 0.0
    %5690 = vmatpush2.msra.mxu0 0.0
    %5691 = vmatprep.subr.mxu0 0.0
    %5692 = vmatpush2.msra.mxu0 0.0
    %5693 = vmatprep.mubr.f32.mxu0 0.0
    %5694 = vmatmul.mubr.f32.gmra.mxu0 %v5596
    %v5695 = vpop.f32.mrf.mxu0
    %v5696 = vadd.f32 %v217, %v5695
    %v5697 = vpop.f32.mrf.mxu0
    %v5698 = vadd.f32 %v221, %v5697
    %5699 = vdwg.mxu0
    %5700 = vst [vmem:[%s10 + $0x50] sm:$0xff] %v5696
    %5701 = vst [vmem:[%s10 + $0x58] sm:$0xff] %v5698
    %v5702 = vld [vmem:[#allocation2] sm:$0xff]
    %5703 = vset.pattern.permute.xlu0 6
    %5704 = vperm.xlu0 %5703, %v5702
    %v5705 = vpop.permute.xlu0 %5704
    %vm5706 = vcmp.eq.s32.totalorder %v5705, %v166
    %vm5707 = vcmp.eq.s32.totalorder %v5705, %v167
    %v5708 = vsel %vm5706, 1, 0
    %v5709 = vsel %vm5707, 1, 0
    %v5710 = vcvt.s32.f32 %v5708
    %v5711 = vcvt.s32.f32 %v5709
    %v5712 = vld [vmem:[#allocation7] sm:$0xff]
    %v5713 = vld [vmem:[#allocation7 + $0x8] sm:$0xff]
    %v5714 = vld [vmem:[#allocation7 + $0x10] sm:$0xff]
    %v5715 = vld [vmem:[#allocation7 + $0x18] sm:$0xff]
    %v5716 = vld [vmem:[#allocation7 + $0x20] sm:$0xff]
    %v5717 = vld [vmem:[#allocation7 + $0x28] sm:$0xff]
    %v5718 = vld [vmem:[#allocation7 + $0x30] sm:$0xff]
    %v5719 = vld [vmem:[#allocation7 + $0x38] sm:$0xff]
    %v5720 = vld [vmem:[#allocation7 + $0x40] sm:$0xff]
    %v5721 = vld [vmem:[#allocation7 + $0x48] sm:$0xff]
    %v5722 = vld [vmem:[#allocation7 + $0x50] sm:$0xff]
    %v5723 = vld [vmem:[#allocation7 + $0x58] sm:$0xff]
    %v5724 = vld [vmem:[#allocation7 + $0x60] sm:$0xff]
    %v5725 = vld [vmem:[#allocation7 + $0x68] sm:$0xff]
    %v5726 = vld [vmem:[#allocation7 + $0x70] sm:$0xff]
    %v5727 = vld [vmem:[#allocation7 + $0x78] sm:$0xff]
    %v5728 = vld [vmem:[#allocation7 + $0x80] sm:$0xff]
    %v5729 = vld [vmem:[#allocation7 + $0x88] sm:$0xff]
    %v5730 = vld [vmem:[#allocation7 + $0x90] sm:$0xff]
    %v5731 = vld [vmem:[#allocation7 + $0x98] sm:$0xff]
    %v5732 = vld [vmem:[#allocation7 + $0xa0] sm:$0xff]
    %v5733 = vld [vmem:[#allocation7 + $0xa8] sm:$0xff]
    %v5734 = vld [vmem:[#allocation7 + $0xb0] sm:$0xff]
    %v5735 = vld [vmem:[#allocation7 + $0xb8] sm:$0xff]
    %v5736 = vld [vmem:[#allocation7 + $0xc0] sm:$0xff]
    %v5737 = vld [vmem:[#allocation7 + $0xc8] sm:$0xff]
    %v5738 = vld [vmem:[#allocation7 + $0xd0] sm:$0xff]
    %v5739 = vld [vmem:[#allocation7 + $0xd8] sm:$0xff]
    %v5740 = vld [vmem:[#allocation7 + $0xe0] sm:$0xff]
    %v5741 = vld [vmem:[#allocation7 + $0xe8] sm:$0xff]
    %v5742 = vld [vmem:[#allocation7 + $0xf0] sm:$0xff]
    %v5743 = vld [vmem:[#allocation7 + $0xf8] sm:$0xff]
    %v5744 = vld [vmem:[#allocation7 + $0x100] sm:$0xff]
    %v5745 = vld [vmem:[#allocation7 + $0x108] sm:$0xff]
    %v5746 = vld [vmem:[#allocation7 + $0x110] sm:$0xff]
    %v5747 = vld [vmem:[#allocation7 + $0x118] sm:$0xff]
    %v5748 = vld [vmem:[#allocation7 + $0x120] sm:$0xff]
    %v5749 = vld [vmem:[#allocation7 + $0x128] sm:$0xff]
    %v5750 = vld [vmem:[#allocation7 + $0x130] sm:$0xff]
    %v5751 = vld [vmem:[#allocation7 + $0x138] sm:$0xff]
    %v5752 = vld [vmem:[#allocation7 + $0x140] sm:$0xff]
    %v5753 = vld [vmem:[#allocation7 + $0x148] sm:$0xff]
    %v5754 = vld [vmem:[#allocation7 + $0x150] sm:$0xff]
    %v5755 = vld [vmem:[#allocation7 + $0x158] sm:$0xff]
    %v5756 = vld [vmem:[#allocation7 + $0x160] sm:$0xff]
    %v5757 = vld [vmem:[#allocation7 + $0x168] sm:$0xff]
    %v5758 = vld [vmem:[#allocation7 + $0x170] sm:$0xff]
    %v5759 = vld [vmem:[#allocation7 + $0x178] sm:$0xff]
    %v5760 = vld [vmem:[#allocation7 + $0x180] sm:$0xff]
    %v5761 = vld [vmem:[#allocation7 + $0x188] sm:$0xff]
    %v5762 = vld [vmem:[#allocation7 + $0x190] sm:$0xff]
    %v5763 = vld [vmem:[#allocation7 + $0x198] sm:$0xff]
    %v5764 = vld [vmem:[#allocation7 + $0x1a0] sm:$0xff]
    %v5765 = vld [vmem:[#allocation7 + $0x1a8] sm:$0xff]
    %v5766 = vld [vmem:[#allocation7 + $0x1b0] sm:$0xff]
    %v5767 = vld [vmem:[#allocation7 + $0x1b8] sm:$0xff]
    %v5768 = vld [vmem:[#allocation7 + $0x1c0] sm:$0xff]
    %v5769 = vld [vmem:[#allocation7 + $0x1c8] sm:$0xff]
    %v5770 = vld [vmem:[#allocation7 + $0x1d0] sm:$0xff]
    %v5771 = vld [vmem:[#allocation7 + $0x1d8] sm:$0xff]
    %v5772 = vld [vmem:[#allocation7 + $0x1e0] sm:$0xff]
    %v5773 = vld [vmem:[#allocation7 + $0x1e8] sm:$0xff]
    %v5774 = vld [vmem:[#allocation7 + $0x1f0] sm:$0xff]
    %v5775 = vld [vmem:[#allocation7 + $0x1f8] sm:$0xff]
    %v5776 = vld [vmem:[#allocation7 + $0x200] sm:$0xff]
    %v5777 = vld [vmem:[#allocation7 + $0x208] sm:$0xff]
    %v5778 = vld [vmem:[#allocation7 + $0x210] sm:$0xff]
    %v5779 = vld [vmem:[#allocation7 + $0x218] sm:$0xff]
    %v5780 = vld [vmem:[#allocation7 + $0x220] sm:$0xff]
    %v5781 = vld [vmem:[#allocation7 + $0x228] sm:$0xff]
    %v5782 = vld [vmem:[#allocation7 + $0x230] sm:$0xff]
    %v5783 = vld [vmem:[#allocation7 + $0x238] sm:$0xff]
    %v5784 = vld [vmem:[#allocation7 + $0x240] sm:$0xff]
    %v5785 = vld [vmem:[#allocation7 + $0x248] sm:$0xff]
    %v5786 = vld [vmem:[#allocation7 + $0x250] sm:$0xff]
    %v5787 = vld [vmem:[#allocation7 + $0x258] sm:$0xff]
    %v5788 = vld [vmem:[#allocation7 + $0x260] sm:$0xff]
    %v5789 = vld [vmem:[#allocation7 + $0x268] sm:$0xff]
    %v5790 = vld [vmem:[#allocation7 + $0x270] sm:$0xff]
    %v5791 = vld [vmem:[#allocation7 + $0x278] sm:$0xff]
    %v5792 = vld [vmem:[#allocation7 + $0x280] sm:$0xff]
    %v5793 = vld [vmem:[#allocation7 + $0x288] sm:$0xff]
    %v5794 = vld [vmem:[#allocation7 + $0x290] sm:$0xff]
    %v5795 = vld [vmem:[#allocation7 + $0x298] sm:$0xff]
    %v5796 = vld [vmem:[#allocation7 + $0x2a0] sm:$0xff]
    %v5797 = vld [vmem:[#allocation7 + $0x2a8] sm:$0xff]
    %v5798 = vld [vmem:[#allocation7 + $0x2b0] sm:$0xff]
    %v5799 = vld [vmem:[#allocation7 + $0x2b8] sm:$0xff]
    %v5800 = vld [vmem:[#allocation7 + $0x2c0] sm:$0xff]
    %v5801 = vld [vmem:[#allocation7 + $0x2c8] sm:$0xff]
    %v5802 = vld [vmem:[#allocation7 + $0x2d0] sm:$0xff]
    %v5803 = vld [vmem:[#allocation7 + $0x2d8] sm:$0xff]
    %v5804 = vld [vmem:[#allocation7 + $0x2e0] sm:$0xff]
    %v5805 = vld [vmem:[#allocation7 + $0x2e8] sm:$0xff]
    %v5806 = vld [vmem:[#allocation7 + $0x2f0] sm:$0xff]
    %v5807 = vld [vmem:[#allocation7 + $0x2f8] sm:$0xff]
    %v5808 = vld [vmem:[#allocation7 + $0x300] sm:$0xff]
    %v5809 = vld [vmem:[#allocation7 + $0x308] sm:$0xff]
    %v5810 = vld [vmem:[#allocation7 + $0x310] sm:$0xff]
    %v5811 = vld [vmem:[#allocation7 + $0x318] sm:$0xff]
    %v5812 = vld [vmem:[#allocation7 + $0x320] sm:$0xff]
    %v5813 = vld [vmem:[#allocation7 + $0x328] sm:$0xff]
    %v5814 = vld [vmem:[#allocation7 + $0x330] sm:$0xff]
    %v5815 = vld [vmem:[#allocation7 + $0x338] sm:$0xff]
    %v5816 = vld [vmem:[#allocation7 + $0x340] sm:$0xff]
    %v5817 = vld [vmem:[#allocation7 + $0x348] sm:$0xff]
    %v5818 = vld [vmem:[#allocation7 + $0x350] sm:$0xff]
    %v5819 = vld [vmem:[#allocation7 + $0x358] sm:$0xff]
    %v5820 = vld [vmem:[#allocation7 + $0x360] sm:$0xff]
    %v5821 = vld [vmem:[#allocation7 + $0x368] sm:$0xff]
    %v5822 = vld [vmem:[#allocation7 + $0x370] sm:$0xff]
    %v5823 = vld [vmem:[#allocation7 + $0x378] sm:$0xff]
    %v5824 = vld [vmem:[#allocation7 + $0x380] sm:$0xff]
    %v5825 = vld [vmem:[#allocation7 + $0x388] sm:$0xff]
    %v5826 = vld [vmem:[#allocation7 + $0x390] sm:$0xff]
    %v5827 = vld [vmem:[#allocation7 + $0x398] sm:$0xff]
    %v5828 = vld [vmem:[#allocation7 + $0x3a0] sm:$0xff]
    %v5829 = vld [vmem:[#allocation7 + $0x3a8] sm:$0xff]
    %v5830 = vld [vmem:[#allocation7 + $0x3b0] sm:$0xff]
    %v5831 = vld [vmem:[#allocation7 + $0x3b8] sm:$0xff]
    %v5832 = vld [vmem:[#allocation7 + $0x3c0] sm:$0xff]
    %v5833 = vld [vmem:[#allocation7 + $0x3c8] sm:$0xff]
    %v5834 = vld [vmem:[#allocation7 + $0x3d0] sm:$0xff]
    %v5835 = vld [vmem:[#allocation7 + $0x3d8] sm:$0xff]
    %v5836 = vld [vmem:[#allocation7 + $0x3e0] sm:$0xff]
    %v5837 = vld [vmem:[#allocation7 + $0x3e8] sm:$0xff]
    %v5838 = vld [vmem:[#allocation7 + $0x3f0] sm:$0xff]
    %v5839 = vld [vmem:[#allocation7 + $0x3f8] sm:$0xff]
    %5840 = vmatprep.subr.mxu0 %v5773
    %5841 = vmatpush1.msra.mxu0 %v5772
    %5842 = vmatprep.subr.mxu0 %v5769
    %5843 = vmatpush1.msra.mxu0 %v5768
    %5844 = vmatprep.subr.mxu0 %v5765
    %5845 = vmatpush1.msra.mxu0 %v5764
    %5846 = vmatprep.subr.mxu0 %v5761
    %5847 = vmatpush1.msra.mxu0 %v5760
    %5848 = vmatprep.subr.mxu0 %v5757
    %5849 = vmatpush1.msra.mxu0 %v5756
    %5850 = vmatprep.subr.mxu0 %v5753
    %5851 = vmatpush1.msra.mxu0 %v5752
    %5852 = vmatprep.subr.mxu0 %v5749
    %5853 = vmatpush1.msra.mxu0 %v5748
    %5854 = vmatprep.subr.mxu0 %v5745
    %5855 = vmatpush1.msra.mxu0 %v5744
    %5856 = vmatprep.subr.mxu0 %v5741
    %5857 = vmatpush1.msra.mxu0 %v5740
    %5858 = vmatprep.subr.mxu0 %v5737
    %5859 = vmatpush1.msra.mxu0 %v5736
    %5860 = vmatprep.subr.mxu0 %v5733
    %5861 = vmatpush1.msra.mxu0 %v5732
    %5862 = vmatprep.subr.mxu0 %v5729
    %5863 = vmatpush1.msra.mxu0 %v5728
    %5864 = vmatprep.subr.mxu0 %v5725
    %5865 = vmatpush1.msra.mxu0 %v5724
    %5866 = vmatprep.subr.mxu0 %v5721
    %5867 = vmatpush1.msra.mxu0 %v5720
    %5868 = vmatprep.subr.mxu0 %v5717
    %5869 = vmatpush1.msra.mxu0 %v5716
    %5870 = vmatprep.subr.mxu0 %v5713
    %5871 = vmatpush1.msra.mxu0 %v5712
    %5872 = vmatprep.subr.mxu0 %v5837
    %5873 = vmatpush2.msra.mxu0 %v5836
    %5874 = vmatprep.subr.mxu0 %v5833
    %5875 = vmatpush2.msra.mxu0 %v5832
    %5876 = vmatprep.subr.mxu0 %v5829
    %5877 = vmatpush2.msra.mxu0 %v5828
    %5878 = vmatprep.subr.mxu0 %v5825
    %5879 = vmatpush2.msra.mxu0 %v5824
    %5880 = vmatprep.subr.mxu0 %v5821
    %5881 = vmatpush2.msra.mxu0 %v5820
    %5882 = vmatprep.subr.mxu0 %v5817
    %5883 = vmatpush2.msra.mxu0 %v5816
    %5884 = vmatprep.subr.mxu0 %v5813
    %5885 = vmatpush2.msra.mxu0 %v5812
    %5886 = vmatprep.subr.mxu0 %v5809
    %5887 = vmatpush2.msra.mxu0 %v5808
    %5888 = vmatprep.subr.mxu0 %v5805
    %5889 = vmatpush2.msra.mxu0 %v5804
    %5890 = vmatprep.subr.mxu0 %v5801
    %5891 = vmatpush2.msra.mxu0 %v5800
    %5892 = vmatprep.subr.mxu0 %v5797
    %5893 = vmatpush2.msra.mxu0 %v5796
    %5894 = vmatprep.subr.mxu0 %v5793
    %5895 = vmatpush2.msra.mxu0 %v5792
    %5896 = vmatprep.subr.mxu0 %v5789
    %5897 = vmatpush2.msra.mxu0 %v5788
    %5898 = vmatprep.subr.mxu0 %v5785
    %5899 = vmatpush2.msra.mxu0 %v5784
    %5900 = vmatprep.subr.mxu0 %v5781
    %5901 = vmatpush2.msra.mxu0 %v5780
    %5902 = vmatprep.subr.mxu0 %v5777
    %5903 = vmatpush2.msra.mxu0 %v5776
    %5904 = vmatprep.mubr.f32.mxu0 %v5711
    %5905 = vmatmul.mubr.f32.gmra.mxu0 %v5710
    %v5906 = vpop.f32.mrf.mxu0
    %v5907 = vadd.f32 %v173, %v5906
    %v5908 = vpop.f32.mrf.mxu0
    %v5909 = vadd.f32 %v177, %v5908
    %5910 = vdwg.mxu0
    %5911 = vmatprep.subr.mxu0 %v5775
    %5912 = vmatpush1.msra.mxu0 %v5774
    %5913 = vmatprep.subr.mxu0 %v5771
    %5914 = vmatpush1.msra.mxu0 %v5770
    %5915 = vmatprep.subr.mxu0 %v5767
    %5916 = vmatpush1.msra.mxu0 %v5766
    %5917 = vmatprep.subr.mxu0 %v5763
    %5918 = vmatpush1.msra.mxu0 %v5762
    %5919 = vmatprep.subr.mxu0 %v5759
    %5920 = vmatpush1.msra.mxu0 %v5758
    %5921 = vmatprep.subr.mxu0 %v5755
    %5922 = vmatpush1.msra.mxu0 %v5754
    %5923 = vmatprep.subr.mxu0 %v5751
    %5924 = vmatpush1.msra.mxu0 %v5750
    %5925 = vmatprep.subr.mxu0 %v5747
    %5926 = vmatpush1.msra.mxu0 %v5746
    %5927 = vmatprep.subr.mxu0 %v5743
    %5928 = vmatpush1.msra.mxu0 %v5742
    %5929 = vmatprep.subr.mxu0 %v5739
    %5930 = vmatpush1.msra.mxu0 %v5738
    %5931 = vmatprep.subr.mxu0 %v5735
    %5932 = vmatpush1.msra.mxu0 %v5734
    %5933 = vmatprep.subr.mxu0 %v5731
    %5934 = vmatpush1.msra.mxu0 %v5730
    %5935 = vmatprep.subr.mxu0 %v5727
    %5936 = vmatpush1.msra.mxu0 %v5726
    %5937 = vmatprep.subr.mxu0 %v5723
    %5938 = vmatpush1.msra.mxu0 %v5722
    %5939 = vmatprep.subr.mxu0 %v5719
    %5940 = vmatpush1.msra.mxu0 %v5718
    %5941 = vmatprep.subr.mxu0 %v5715
    %5942 = vmatpush1.msra.mxu0 %v5714
    %5943 = vmatprep.subr.mxu0 %v5839
    %5944 = vmatpush2.msra.mxu0 %v5838
    %5945 = vmatprep.subr.mxu0 %v5835
    %5946 = vmatpush2.msra.mxu0 %v5834
    %5947 = vmatprep.subr.mxu0 %v5831
    %5948 = vmatpush2.msra.mxu0 %v5830
    %5949 = vmatprep.subr.mxu0 %v5827
    %5950 = vmatpush2.msra.mxu0 %v5826
    %5951 = vmatprep.subr.mxu0 %v5823
    %5952 = vmatpush2.msra.mxu0 %v5822
    %5953 = vmatprep.subr.mxu0 %v5819
    %5954 = vmatpush2.msra.mxu0 %v5818
    %5955 = vmatprep.subr.mxu0 %v5815
    %5956 = vmatpush2.msra.mxu0 %v5814
    %5957 = vmatprep.subr.mxu0 %v5811
    %5958 = vmatpush2.msra.mxu0 %v5810
    %5959 = vmatprep.subr.mxu0 %v5807
    %5960 = vmatpush2.msra.mxu0 %v5806
    %5961 = vmatprep.subr.mxu0 %v5803
    %5962 = vmatpush2.msra.mxu0 %v5802
    %5963 = vmatprep.subr.mxu0 %v5799
    %5964 = vmatpush2.msra.mxu0 %v5798
    %5965 = vmatprep.subr.mxu0 %v5795
    %5966 = vmatpush2.msra.mxu0 %v5794
    %5967 = vmatprep.subr.mxu0 %v5791
    %5968 = vmatpush2.msra.mxu0 %v5790
    %5969 = vmatprep.subr.mxu0 %v5787
    %5970 = vmatpush2.msra.mxu0 %v5786
    %5971 = vmatprep.subr.mxu0 %v5783
    %5972 = vmatpush2.msra.mxu0 %v5782
    %5973 = vmatprep.subr.mxu0 %v5779
    %5974 = vmatpush2.msra.mxu0 %v5778
    %5975 = vmatprep.mubr.f32.mxu0 %v5711
    %5976 = vmatmul.mubr.f32.gmra.mxu0 %v5710
    %v5977 = vpop.f32.mrf.mxu0
    %v5978 = vadd.f32 %v181, %v5977
    %v5979 = vpop.f32.mrf.mxu0
    %v5980 = vadd.f32 %v185, %v5979
    %5981 = vdwg.mxu0
    %v5982 = vld [vmem:[#allocation8] sm:$0xff]
    %v5983 = vld [vmem:[#allocation8 + $0x8] sm:$0xff]
    %v5984 = vld [vmem:[#allocation8 + $0x10] sm:$0xff]
    %v5985 = vld [vmem:[#allocation8 + $0x18] sm:$0xff]
    %v5986 = vld [vmem:[#allocation8 + $0x20] sm:$0xff]
    %v5987 = vld [vmem:[#allocation8 + $0x28] sm:$0xff]
    %v5988 = vld [vmem:[#allocation8 + $0x30] sm:$0xff]
    %v5989 = vld [vmem:[#allocation8 + $0x38] sm:$0xff]
    %v5990 = vld [vmem:[#allocation8 + $0x40] sm:$0xff]
    %v5991 = vld [vmem:[#allocation8 + $0x48] sm:$0xff]
    %v5992 = vld [vmem:[#allocation8 + $0x50] sm:$0xff]
    %v5993 = vld [vmem:[#allocation8 + $0x58] sm:$0xff]
    %v5994 = vld [vmem:[#allocation8 + $0x60] sm:$0xff]
    %v5995 = vld [vmem:[#allocation8 + $0x68] sm:$0xff]
    %v5996 = vld [vmem:[#allocation8 + $0x70] sm:$0xff]
    %v5997 = vld [vmem:[#allocation8 + $0x78] sm:$0xff]
    %v5998 = vld [vmem:[#allocation8 + $0x80] sm:$0xff]
    %v5999 = vld [vmem:[#allocation8 + $0x88] sm:$0xff]
    %v6000 = vld [vmem:[#allocation8 + $0x90] sm:$0xff]
    %v6001 = vld [vmem:[#allocation8 + $0x98] sm:$0xff]
    %v6002 = vld [vmem:[#allocation8 + $0xa0] sm:$0xff]
    %v6003 = vld [vmem:[#allocation8 + $0xa8] sm:$0xff]
    %v6004 = vld [vmem:[#allocation8 + $0xb0] sm:$0xff]
    %v6005 = vld [vmem:[#allocation8 + $0xb8] sm:$0xff]
    %v6006 = vld [vmem:[#allocation8 + $0xc0] sm:$0xff]
    %v6007 = vld [vmem:[#allocation8 + $0xc8] sm:$0xff]
    %v6008 = vld [vmem:[#allocation8 + $0xd0] sm:$0xff]
    %v6009 = vld [vmem:[#allocation8 + $0xd8] sm:$0xff]
    %v6010 = vld [vmem:[#allocation8 + $0xe0] sm:$0xff]
    %v6011 = vld [vmem:[#allocation8 + $0xe8] sm:$0xff]
    %v6012 = vld [vmem:[#allocation8 + $0xf0] sm:$0xff]
    %v6013 = vld [vmem:[#allocation8 + $0xf8] sm:$0xff]
    %v6014 = vld [vmem:[#allocation8 + $0x100] sm:$0xff]
    %v6015 = vld [vmem:[#allocation8 + $0x108] sm:$0xff]
    %v6016 = vld [vmem:[#allocation8 + $0x110] sm:$0xff]
    %v6017 = vld [vmem:[#allocation8 + $0x118] sm:$0xff]
    %v6018 = vld [vmem:[#allocation8 + $0x120] sm:$0xff]
    %v6019 = vld [vmem:[#allocation8 + $0x128] sm:$0xff]
    %v6020 = vld [vmem:[#allocation8 + $0x130] sm:$0xff]
    %v6021 = vld [vmem:[#allocation8 + $0x138] sm:$0xff]
    %v6022 = vld [vmem:[#allocation8 + $0x140] sm:$0xff]
    %v6023 = vld [vmem:[#allocation8 + $0x148] sm:$0xff]
    %v6024 = vld [vmem:[#allocation8 + $0x150] sm:$0xff]
    %v6025 = vld [vmem:[#allocation8 + $0x158] sm:$0xff]
    %v6026 = vld [vmem:[#allocation8 + $0x160] sm:$0xff]
    %v6027 = vld [vmem:[#allocation8 + $0x168] sm:$0xff]
    %v6028 = vld [vmem:[#allocation8 + $0x170] sm:$0xff]
    %v6029 = vld [vmem:[#allocation8 + $0x178] sm:$0xff]
    %v6030 = vld [vmem:[#allocation8 + $0x180] sm:$0xff]
    %v6031 = vld [vmem:[#allocation8 + $0x188] sm:$0xff]
    %v6032 = vld [vmem:[#allocation8 + $0x190] sm:$0xff]
    %v6033 = vld [vmem:[#allocation8 + $0x198] sm:$0xff]
    %v6034 = vld [vmem:[#allocation8 + $0x1a0] sm:$0xff]
    %v6035 = vld [vmem:[#allocation8 + $0x1a8] sm:$0xff]
    %v6036 = vld [vmem:[#allocation8 + $0x1b0] sm:$0xff]
    %v6037 = vld [vmem:[#allocation8 + $0x1b8] sm:$0xff]
    %v6038 = vld [vmem:[#allocation8 + $0x1c0] sm:$0xff]
    %v6039 = vld [vmem:[#allocation8 + $0x1c8] sm:$0xff]
    %v6040 = vld [vmem:[#allocation8 + $0x1d0] sm:$0xff]
    %v6041 = vld [vmem:[#allocation8 + $0x1d8] sm:$0xff]
    %v6042 = vld [vmem:[#allocation8 + $0x1e0] sm:$0xff]
    %v6043 = vld [vmem:[#allocation8 + $0x1e8] sm:$0xff]
    %v6044 = vld [vmem:[#allocation8 + $0x1f0] sm:$0xff]
    %v6045 = vld [vmem:[#allocation8 + $0x1f8] sm:$0xff]
    %6046 = vmatprep.subr.mxu0 %v6043
    %6047 = vmatpush1.msra.mxu0 %v6042
    %6048 = vmatprep.subr.mxu0 %v6039
    %6049 = vmatpush1.msra.mxu0 %v6038
    %6050 = vmatprep.subr.mxu0 %v6035
    %6051 = vmatpush1.msra.mxu0 %v6034
    %6052 = vmatprep.subr.mxu0 %v6031
    %6053 = vmatpush1.msra.mxu0 %v6030
    %6054 = vmatprep.subr.mxu0 %v6027
    %6055 = vmatpush1.msra.mxu0 %v6026
    %6056 = vmatprep.subr.mxu0 %v6023
    %6057 = vmatpush1.msra.mxu0 %v6022
    %6058 = vmatprep.subr.mxu0 %v6019
    %6059 = vmatpush1.msra.mxu0 %v6018
    %6060 = vmatprep.subr.mxu0 %v6015
    %6061 = vmatpush1.msra.mxu0 %v6014
    %6062 = vmatprep.subr.mxu0 %v6011
    %6063 = vmatpush1.msra.mxu0 %v6010
    %6064 = vmatprep.subr.mxu0 %v6007
    %6065 = vmatpush1.msra.mxu0 %v6006
    %6066 = vmatprep.subr.mxu0 %v6003
    %6067 = vmatpush1.msra.mxu0 %v6002
    %6068 = vmatprep.subr.mxu0 %v5999
    %6069 = vmatpush1.msra.mxu0 %v5998
    %6070 = vmatprep.subr.mxu0 %v5995
    %6071 = vmatpush1.msra.mxu0 %v5994
    %6072 = vmatprep.subr.mxu0 %v5991
    %6073 = vmatpush1.msra.mxu0 %v5990
    %6074 = vmatprep.subr.mxu0 %v5987
    %6075 = vmatpush1.msra.mxu0 %v5986
    %6076 = vmatprep.subr.mxu0 %v5983
    %6077 = vmatpush1.msra.mxu0 %v5982
    %6078 = vmatprep.subr.mxu0 0.0
    %6079 = vmatpush2.msra.mxu0 0.0
    %6080 = vmatprep.subr.mxu0 0.0
    %6081 = vmatpush2.msra.mxu0 0.0
    %6082 = vmatprep.subr.mxu0 0.0
    %6083 = vmatpush2.msra.mxu0 0.0
    %6084 = vmatprep.subr.mxu0 0.0
    %6085 = vmatpush2.msra.mxu0 0.0
    %6086 = vmatprep.subr.mxu0 0.0
    %6087 = vmatpush2.msra.mxu0 0.0
    %6088 = vmatprep.subr.mxu0 0.0
    %6089 = vmatpush2.msra.mxu0 0.0
    %6090 = vmatprep.subr.mxu0 0.0
    %6091 = vmatpush2.msra.mxu0 0.0
    %6092 = vmatprep.subr.mxu0 0.0
    %6093 = vmatpush2.msra.mxu0 0.0
    %6094 = vmatprep.subr.mxu0 0.0
    %6095 = vmatpush2.msra.mxu0 0.0
    %6096 = vmatprep.subr.mxu0 0.0
    %6097 = vmatpush2.msra.mxu0 0.0
    %6098 = vmatprep.subr.mxu0 0.0
    %6099 = vmatpush2.msra.mxu0 0.0
    %6100 = vmatprep.subr.mxu0 0.0
    %6101 = vmatpush2.msra.mxu0 0.0
    %6102 = vmatprep.subr.mxu0 0.0
    %6103 = vmatpush2.msra.mxu0 0.0
    %6104 = vmatprep.subr.mxu0 0.0
    %6105 = vmatpush2.msra.mxu0 0.0
    %6106 = vmatprep.subr.mxu0 0.0
    %6107 = vmatpush2.msra.mxu0 0.0
    %6108 = vmatprep.subr.mxu0 0.0
    %6109 = vmatpush2.msra.mxu0 0.0
    %6110 = vmatprep.mubr.f32.mxu0 0.0
    %6111 = vmatmul.mubr.f32.gmra.mxu0 %v5302
    %v6112 = vpop.f32.mrf.mxu0
    %v6113 = vadd.f32 0.0, %v6112
    %v6114 = vpop.f32.mrf.mxu0
    %v6115 = vadd.f32 0.0, %v6114
    %6116 = vdwg.mxu0
    %6117 = vmatprep.subr.mxu0 %v6045
    %6118 = vmatpush1.msra.mxu0 %v6044
    %6119 = vmatprep.subr.mxu0 %v6041
    %6120 = vmatpush1.msra.mxu0 %v6040
    %6121 = vmatprep.subr.mxu0 %v6037
    %6122 = vmatpush1.msra.mxu0 %v6036
    %6123 = vmatprep.subr.mxu0 %v6033
    %6124 = vmatpush1.msra.mxu0 %v6032
    %6125 = vmatprep.subr.mxu0 %v6029
    %6126 = vmatpush1.msra.mxu0 %v6028
    %6127 = vmatprep.subr.mxu0 %v6025
    %6128 = vmatpush1.msra.mxu0 %v6024
    %6129 = vmatprep.subr.mxu0 %v6021
    %6130 = vmatpush1.msra.mxu0 %v6020
    %6131 = vmatprep.subr.mxu0 %v6017
    %6132 = vmatpush1.msra.mxu0 %v6016
    %6133 = vmatprep.subr.mxu0 %v6013
    %6134 = vmatpush1.msra.mxu0 %v6012
    %6135 = vmatprep.subr.mxu0 %v6009
    %6136 = vmatpush1.msra.mxu0 %v6008
    %6137 = vmatprep.subr.mxu0 %v6005
    %6138 = vmatpush1.msra.mxu0 %v6004
    %6139 = vmatprep.subr.mxu0 %v6001
    %6140 = vmatpush1.msra.mxu0 %v6000
    %6141 = vmatprep.subr.mxu0 %v5997
    %6142 = vmatpush1.msra.mxu0 %v5996
    %6143 = vmatprep.subr.mxu0 %v5993
    %6144 = vmatpush1.msra.mxu0 %v5992
    %6145 = vmatprep.subr.mxu0 %v5989
    %6146 = vmatpush1.msra.mxu0 %v5988
    %6147 = vmatprep.subr.mxu0 %v5985
    %6148 = vmatpush1.msra.mxu0 %v5984
    %6149 = vmatprep.subr.mxu0 0.0
    %6150 = vmatpush2.msra.mxu0 0.0
    %6151 = vmatprep.subr.mxu0 0.0
    %6152 = vmatpush2.msra.mxu0 0.0
    %6153 = vmatprep.subr.mxu0 0.0
    %6154 = vmatpush2.msra.mxu0 0.0
    %6155 = vmatprep.subr.mxu0 0.0
    %6156 = vmatpush2.msra.mxu0 0.0
    %6157 = vmatprep.subr.mxu0 0.0
    %6158 = vmatpush2.msra.mxu0 0.0
    %6159 = vmatprep.subr.mxu0 0.0
    %6160 = vmatpush2.msra.mxu0 0.0
    %6161 = vmatprep.subr.mxu0 0.0
    %6162 = vmatpush2.msra.mxu0 0.0
    %6163 = vmatprep.subr.mxu0 0.0
    %6164 = vmatpush2.msra.mxu0 0.0
    %6165 = vmatprep.subr.mxu0 0.0
    %6166 = vmatpush2.msra.mxu0 0.0
    %6167 = vmatprep.subr.mxu0 0.0
    %6168 = vmatpush2.msra.mxu0 0.0
    %6169 = vmatprep.subr.mxu0 0.0
    %6170 = vmatpush2.msra.mxu0 0.0
    %6171 = vmatprep.subr.mxu0 0.0
    %6172 = vmatpush2.msra.mxu0 0.0
    %6173 = vmatprep.subr.mxu0 0.0
    %6174 = vmatpush2.msra.mxu0 0.0
    %6175 = vmatprep.subr.mxu0 0.0
    %6176 = vmatpush2.msra.mxu0 0.0
    %6177 = vmatprep.subr.mxu0 0.0
    %6178 = vmatpush2.msra.mxu0 0.0
    %6179 = vmatprep.subr.mxu0 0.0
    %6180 = vmatpush2.msra.mxu0 0.0
    %6181 = vmatprep.mubr.f32.mxu0 0.0
    %6182 = vmatmul.mubr.f32.gmra.mxu0 %v5302
    %v6183 = vpop.f32.mrf.mxu0
    %v6184 = vadd.f32 0.0, %v6183
    %v6185 = vpop.f32.mrf.mxu0
    %v6186 = vadd.f32 0.0, %v6185
    %6187 = vdwg.mxu0
    %v6188 = vadd.f32 %v5907, %v6113
    %v6189 = vadd.f32 %v5909, %v6115
    %v6190 = vadd.f32 %v5978, %v6184
    %v6191 = vadd.f32 %v5980, %v6186
    %v6192 = vxor.u32 %v6188, 2147483648
    %v6193 = vmul.f32 %v6192, 1.442695
    %v6194 = vpow.pop %v6193
    %v6195 = vadd.f32 %v6194, 1.0
    %v6196 = vrcp.pop %v6195
    %v6197 = vmul.f32 1.0, %v6196
    %v6198 = vxor.u32 %v6189, 2147483648
    %v6199 = vmul.f32 %v6198, 1.442695
    %v6200 = vpow.pop %v6199
    %v6201 = vadd.f32 %v6200, 1.0
    %v6202 = vrcp.pop %v6201
    %v6203 = vmul.f32 1.0, %v6202
    %v6204 = vtanh.pop %v6190
    %v6205 = vxor.u32 %v6191, 2147483648
    %v6206 = vmul.f32 %v6205, 1.442695
    %v6207 = vpow.pop %v6206
    %v6208 = vadd.f32 %v6207, 1.0
    %v6209 = vrcp.pop %v6208
    %v6210 = vmul.f32 1.0, %v6209
    %v6211 = vmul.f32 %v6203, %v5300
    %v6212 = vmul.f32 %v6197, %v6204
    %v6213 = vadd.f32 %v6211, %v6212
    %v6214 = vtanh.pop %v6213
    %v6215 = vmul.f32 %v6210, %v6214
    %v6216 = vld [vmem:[#allocation11] sm:$0xff]
    %v6217 = vld [vmem:[#allocation11 + $0x8] sm:$0xff]
    %v6218 = vld [vmem:[#allocation11 + $0x10] sm:$0xff]
    %v6219 = vld [vmem:[#allocation11 + $0x18] sm:$0xff]
    %v6220 = vld [vmem:[#allocation11 + $0x20] sm:$0xff]
    %v6221 = vld [vmem:[#allocation11 + $0x28] sm:$0xff]
    %v6222 = vld [vmem:[#allocation11 + $0x30] sm:$0xff]
    %v6223 = vld [vmem:[#allocation11 + $0x38] sm:$0xff]
    %v6224 = vld [vmem:[#allocation11 + $0x40] sm:$0xff]
    %v6225 = vld [vmem:[#allocation11 + $0x48] sm:$0xff]
    %v6226 = vld [vmem:[#allocation11 + $0x50] sm:$0xff]
    %v6227 = vld [vmem:[#allocation11 + $0x58] sm:$0xff]
    %v6228 = vld [vmem:[#allocation11 + $0x60] sm:$0xff]
    %v6229 = vld [vmem:[#allocation11 + $0x68] sm:$0xff]
    %v6230 = vld [vmem:[#allocation11 + $0x70] sm:$0xff]
    %v6231 = vld [vmem:[#allocation11 + $0x78] sm:$0xff]
    %v6232 = vld [vmem:[#allocation11 + $0x80] sm:$0xff]
    %v6233 = vld [vmem:[#allocation11 + $0x88] sm:$0xff]
    %v6234 = vld [vmem:[#allocation11 + $0x90] sm:$0xff]
    %v6235 = vld [vmem:[#allocation11 + $0x98] sm:$0xff]
    %v6236 = vld [vmem:[#allocation11 + $0xa0] sm:$0xff]
    %v6237 = vld [vmem:[#allocation11 + $0xa8] sm:$0xff]
    %v6238 = vld [vmem:[#allocation11 + $0xb0] sm:$0xff]
    %v6239 = vld [vmem:[#allocation11 + $0xb8] sm:$0xff]
    %v6240 = vld [vmem:[#allocation11 + $0xc0] sm:$0xff]
    %v6241 = vld [vmem:[#allocation11 + $0xc8] sm:$0xff]
    %v6242 = vld [vmem:[#allocation11 + $0xd0] sm:$0xff]
    %v6243 = vld [vmem:[#allocation11 + $0xd8] sm:$0xff]
    %v6244 = vld [vmem:[#allocation11 + $0xe0] sm:$0xff]
    %v6245 = vld [vmem:[#allocation11 + $0xe8] sm:$0xff]
    %v6246 = vld [vmem:[#allocation11 + $0xf0] sm:$0xff]
    %v6247 = vld [vmem:[#allocation11 + $0xf8] sm:$0xff]
    %v6248 = vld [vmem:[#allocation11 + $0x100] sm:$0xff]
    %v6249 = vld [vmem:[#allocation11 + $0x108] sm:$0xff]
    %v6250 = vld [vmem:[#allocation11 + $0x110] sm:$0xff]
    %v6251 = vld [vmem:[#allocation11 + $0x118] sm:$0xff]
    %v6252 = vld [vmem:[#allocation11 + $0x120] sm:$0xff]
    %v6253 = vld [vmem:[#allocation11 + $0x128] sm:$0xff]
    %v6254 = vld [vmem:[#allocation11 + $0x130] sm:$0xff]
    %v6255 = vld [vmem:[#allocation11 + $0x138] sm:$0xff]
    %v6256 = vld [vmem:[#allocation11 + $0x140] sm:$0xff]
    %v6257 = vld [vmem:[#allocation11 + $0x148] sm:$0xff]
    %v6258 = vld [vmem:[#allocation11 + $0x150] sm:$0xff]
    %v6259 = vld [vmem:[#allocation11 + $0x158] sm:$0xff]
    %v6260 = vld [vmem:[#allocation11 + $0x160] sm:$0xff]
    %v6261 = vld [vmem:[#allocation11 + $0x168] sm:$0xff]
    %v6262 = vld [vmem:[#allocation11 + $0x170] sm:$0xff]
    %v6263 = vld [vmem:[#allocation11 + $0x178] sm:$0xff]
    %v6264 = vld [vmem:[#allocation11 + $0x180] sm:$0xff]
    %v6265 = vld [vmem:[#allocation11 + $0x188] sm:$0xff]
    %v6266 = vld [vmem:[#allocation11 + $0x190] sm:$0xff]
    %v6267 = vld [vmem:[#allocation11 + $0x198] sm:$0xff]
    %v6268 = vld [vmem:[#allocation11 + $0x1a0] sm:$0xff]
    %v6269 = vld [vmem:[#allocation11 + $0x1a8] sm:$0xff]
    %v6270 = vld [vmem:[#allocation11 + $0x1b0] sm:$0xff]
    %v6271 = vld [vmem:[#allocation11 + $0x1b8] sm:$0xff]
    %v6272 = vld [vmem:[#allocation11 + $0x1c0] sm:$0xff]
    %v6273 = vld [vmem:[#allocation11 + $0x1c8] sm:$0xff]
    %v6274 = vld [vmem:[#allocation11 + $0x1d0] sm:$0xff]
    %v6275 = vld [vmem:[#allocation11 + $0x1d8] sm:$0xff]
    %v6276 = vld [vmem:[#allocation11 + $0x1e0] sm:$0xff]
    %v6277 = vld [vmem:[#allocation11 + $0x1e8] sm:$0xff]
    %v6278 = vld [vmem:[#allocation11 + $0x1f0] sm:$0xff]
    %v6279 = vld [vmem:[#allocation11 + $0x1f8] sm:$0xff]
    %v6280 = vld [vmem:[#allocation11 + $0x200] sm:$0xff]
    %v6281 = vld [vmem:[#allocation11 + $0x208] sm:$0xff]
    %v6282 = vld [vmem:[#allocation11 + $0x210] sm:$0xff]
    %v6283 = vld [vmem:[#allocation11 + $0x218] sm:$0xff]
    %v6284 = vld [vmem:[#allocation11 + $0x220] sm:$0xff]
    %v6285 = vld [vmem:[#allocation11 + $0x228] sm:$0xff]
    %v6286 = vld [vmem:[#allocation11 + $0x230] sm:$0xff]
    %v6287 = vld [vmem:[#allocation11 + $0x238] sm:$0xff]
    %v6288 = vld [vmem:[#allocation11 + $0x240] sm:$0xff]
    %v6289 = vld [vmem:[#allocation11 + $0x248] sm:$0xff]
    %v6290 = vld [vmem:[#allocation11 + $0x250] sm:$0xff]
    %v6291 = vld [vmem:[#allocation11 + $0x258] sm:$0xff]
    %v6292 = vld [vmem:[#allocation11 + $0x260] sm:$0xff]
    %v6293 = vld [vmem:[#allocation11 + $0x268] sm:$0xff]
    %v6294 = vld [vmem:[#allocation11 + $0x270] sm:$0xff]
    %v6295 = vld [vmem:[#allocation11 + $0x278] sm:$0xff]
    %v6296 = vld [vmem:[#allocation11 + $0x280] sm:$0xff]
    %v6297 = vld [vmem:[#allocation11 + $0x288] sm:$0xff]
    %v6298 = vld [vmem:[#allocation11 + $0x290] sm:$0xff]
    %v6299 = vld [vmem:[#allocation11 + $0x298] sm:$0xff]
    %v6300 = vld [vmem:[#allocation11 + $0x2a0] sm:$0xff]
    %v6301 = vld [vmem:[#allocation11 + $0x2a8] sm:$0xff]
    %v6302 = vld [vmem:[#allocation11 + $0x2b0] sm:$0xff]
    %v6303 = vld [vmem:[#allocation11 + $0x2b8] sm:$0xff]
    %v6304 = vld [vmem:[#allocation11 + $0x2c0] sm:$0xff]
    %v6305 = vld [vmem:[#allocation11 + $0x2c8] sm:$0xff]
    %v6306 = vld [vmem:[#allocation11 + $0x2d0] sm:$0xff]
    %v6307 = vld [vmem:[#allocation11 + $0x2d8] sm:$0xff]
    %v6308 = vld [vmem:[#allocation11 + $0x2e0] sm:$0xff]
    %v6309 = vld [vmem:[#allocation11 + $0x2e8] sm:$0xff]
    %v6310 = vld [vmem:[#allocation11 + $0x2f0] sm:$0xff]
    %v6311 = vld [vmem:[#allocation11 + $0x2f8] sm:$0xff]
    %v6312 = vld [vmem:[#allocation11 + $0x300] sm:$0xff]
    %v6313 = vld [vmem:[#allocation11 + $0x308] sm:$0xff]
    %v6314 = vld [vmem:[#allocation11 + $0x310] sm:$0xff]
    %v6315 = vld [vmem:[#allocation11 + $0x318] sm:$0xff]
    %v6316 = vld [vmem:[#allocation11 + $0x320] sm:$0xff]
    %v6317 = vld [vmem:[#allocation11 + $0x328] sm:$0xff]
    %v6318 = vld [vmem:[#allocation11 + $0x330] sm:$0xff]
    %v6319 = vld [vmem:[#allocation11 + $0x338] sm:$0xff]
    %v6320 = vld [vmem:[#allocation11 + $0x340] sm:$0xff]
    %v6321 = vld [vmem:[#allocation11 + $0x348] sm:$0xff]
    %v6322 = vld [vmem:[#allocation11 + $0x350] sm:$0xff]
    %v6323 = vld [vmem:[#allocation11 + $0x358] sm:$0xff]
    %v6324 = vld [vmem:[#allocation11 + $0x360] sm:$0xff]
    %v6325 = vld [vmem:[#allocation11 + $0x368] sm:$0xff]
    %v6326 = vld [vmem:[#allocation11 + $0x370] sm:$0xff]
    %v6327 = vld [vmem:[#allocation11 + $0x378] sm:$0xff]
    %v6328 = vld [vmem:[#allocation11 + $0x380] sm:$0xff]
    %v6329 = vld [vmem:[#allocation11 + $0x388] sm:$0xff]
    %v6330 = vld [vmem:[#allocation11 + $0x390] sm:$0xff]
    %v6331 = vld [vmem:[#allocation11 + $0x398] sm:$0xff]
    %v6332 = vld [vmem:[#allocation11 + $0x3a0] sm:$0xff]
    %v6333 = vld [vmem:[#allocation11 + $0x3a8] sm:$0xff]
    %v6334 = vld [vmem:[#allocation11 + $0x3b0] sm:$0xff]
    %v6335 = vld [vmem:[#allocation11 + $0x3b8] sm:$0xff]
    %v6336 = vld [vmem:[#allocation11 + $0x3c0] sm:$0xff]
    %v6337 = vld [vmem:[#allocation11 + $0x3c8] sm:$0xff]
    %v6338 = vld [vmem:[#allocation11 + $0x3d0] sm:$0xff]
    %v6339 = vld [vmem:[#allocation11 + $0x3d8] sm:$0xff]
    %v6340 = vld [vmem:[#allocation11 + $0x3e0] sm:$0xff]
    %v6341 = vld [vmem:[#allocation11 + $0x3e8] sm:$0xff]
    %v6342 = vld [vmem:[#allocation11 + $0x3f0] sm:$0xff]
    %v6343 = vld [vmem:[#allocation11 + $0x3f8] sm:$0xff]
    %6344 = vmatprep.subr.mxu0 %v6277
    %6345 = vmatpush1.msra.mxu0 %v6276
    %6346 = vmatprep.subr.mxu0 %v6273
    %6347 = vmatpush1.msra.mxu0 %v6272
    %6348 = vmatprep.subr.mxu0 %v6269
    %6349 = vmatpush1.msra.mxu0 %v6268
    %6350 = vmatprep.subr.mxu0 %v6265
    %6351 = vmatpush1.msra.mxu0 %v6264
    %6352 = vmatprep.subr.mxu0 %v6261
    %6353 = vmatpush1.msra.mxu0 %v6260
    %6354 = vmatprep.subr.mxu0 %v6257
    %6355 = vmatpush1.msra.mxu0 %v6256
    %6356 = vmatprep.subr.mxu0 %v6253
    %6357 = vmatpush1.msra.mxu0 %v6252
    %6358 = vmatprep.subr.mxu0 %v6249
    %6359 = vmatpush1.msra.mxu0 %v6248
    %6360 = vmatprep.subr.mxu0 %v6245
    %6361 = vmatpush1.msra.mxu0 %v6244
    %6362 = vmatprep.subr.mxu0 %v6241
    %6363 = vmatpush1.msra.mxu0 %v6240
    %6364 = vmatprep.subr.mxu0 %v6237
    %6365 = vmatpush1.msra.mxu0 %v6236
    %6366 = vmatprep.subr.mxu0 %v6233
    %6367 = vmatpush1.msra.mxu0 %v6232
    %6368 = vmatprep.subr.mxu0 %v6229
    %6369 = vmatpush1.msra.mxu0 %v6228
    %6370 = vmatprep.subr.mxu0 %v6225
    %6371 = vmatpush1.msra.mxu0 %v6224
    %6372 = vmatprep.subr.mxu0 %v6221
    %6373 = vmatpush1.msra.mxu0 %v6220
    %6374 = vmatprep.subr.mxu0 %v6217
    %6375 = vmatpush1.msra.mxu0 %v6216
    %6376 = vmatprep.subr.mxu0 %v6341
    %6377 = vmatpush2.msra.mxu0 %v6340
    %6378 = vmatprep.subr.mxu0 %v6337
    %6379 = vmatpush2.msra.mxu0 %v6336
    %6380 = vmatprep.subr.mxu0 %v6333
    %6381 = vmatpush2.msra.mxu0 %v6332
    %6382 = vmatprep.subr.mxu0 %v6329
    %6383 = vmatpush2.msra.mxu0 %v6328
    %6384 = vmatprep.subr.mxu0 %v6325
    %6385 = vmatpush2.msra.mxu0 %v6324
    %6386 = vmatprep.subr.mxu0 %v6321
    %6387 = vmatpush2.msra.mxu0 %v6320
    %6388 = vmatprep.subr.mxu0 %v6317
    %6389 = vmatpush2.msra.mxu0 %v6316
    %6390 = vmatprep.subr.mxu0 %v6313
    %6391 = vmatpush2.msra.mxu0 %v6312
    %6392 = vmatprep.subr.mxu0 %v6309
    %6393 = vmatpush2.msra.mxu0 %v6308
    %6394 = vmatprep.subr.mxu0 %v6305
    %6395 = vmatpush2.msra.mxu0 %v6304
    %6396 = vmatprep.subr.mxu0 %v6301
    %6397 = vmatpush2.msra.mxu0 %v6300
    %6398 = vmatprep.subr.mxu0 %v6297
    %6399 = vmatpush2.msra.mxu0 %v6296
    %6400 = vmatprep.subr.mxu0 %v6293
    %6401 = vmatpush2.msra.mxu0 %v6292
    %6402 = vmatprep.subr.mxu0 %v6289
    %6403 = vmatpush2.msra.mxu0 %v6288
    %6404 = vmatprep.subr.mxu0 %v6285
    %6405 = vmatpush2.msra.mxu0 %v6284
    %6406 = vmatprep.subr.mxu0 %v6281
    %6407 = vmatpush2.msra.mxu0 %v6280
    %6408 = vmatprep.mubr.f32.mxu0 %v5596
    %6409 = vmatmul.mubr.f32.gmra.mxu0 %v6215
    %v6410 = vpop.f32.mrf.mxu0
    %v6411 = vadd.f32 %v195, %v6410
    %v6412 = vpop.f32.mrf.mxu0
    %v6413 = vadd.f32 %v199, %v6412
    %6414 = vdwg.mxu0
    %6415 = vmatprep.subr.mxu0 %v6279
    %6416 = vmatpush1.msra.mxu0 %v6278
    %6417 = vmatprep.subr.mxu0 %v6275
    %6418 = vmatpush1.msra.mxu0 %v6274
    %6419 = vmatprep.subr.mxu0 %v6271
    %6420 = vmatpush1.msra.mxu0 %v6270
    %6421 = vmatprep.subr.mxu0 %v6267
    %6422 = vmatpush1.msra.mxu0 %v6266
    %6423 = vmatprep.subr.mxu0 %v6263
    %6424 = vmatpush1.msra.mxu0 %v6262
    %6425 = vmatprep.subr.mxu0 %v6259
    %6426 = vmatpush1.msra.mxu0 %v6258
    %6427 = vmatprep.subr.mxu0 %v6255
    %6428 = vmatpush1.msra.mxu0 %v6254
    %6429 = vmatprep.subr.mxu0 %v6251
    %6430 = vmatpush1.msra.mxu0 %v6250
    %6431 = vmatprep.subr.mxu0 %v6247
    %6432 = vmatpush1.msra.mxu0 %v6246
    %6433 = vmatprep.subr.mxu0 %v6243
    %6434 = vmatpush1.msra.mxu0 %v6242
    %6435 = vmatprep.subr.mxu0 %v6239
    %6436 = vmatpush1.msra.mxu0 %v6238
    %6437 = vmatprep.subr.mxu0 %v6235
    %6438 = vmatpush1.msra.mxu0 %v6234
    %6439 = vmatprep.subr.mxu0 %v6231
    %6440 = vmatpush1.msra.mxu0 %v6230
    %6441 = vmatprep.subr.mxu0 %v6227
    %6442 = vmatpush1.msra.mxu0 %v6226
    %6443 = vmatprep.subr.mxu0 %v6223
    %6444 = vmatpush1.msra.mxu0 %v6222
    %6445 = vmatprep.subr.mxu0 %v6219
    %6446 = vmatpush1.msra.mxu0 %v6218
    %6447 = vmatprep.subr.mxu0 %v6343
    %6448 = vmatpush2.msra.mxu0 %v6342
    %6449 = vmatprep.subr.mxu0 %v6339
    %6450 = vmatpush2.msra.mxu0 %v6338
    %6451 = vmatprep.subr.mxu0 %v6335
    %6452 = vmatpush2.msra.mxu0 %v6334
    %6453 = vmatprep.subr.mxu0 %v6331
    %6454 = vmatpush2.msra.mxu0 %v6330
    %6455 = vmatprep.subr.mxu0 %v6327
    %6456 = vmatpush2.msra.mxu0 %v6326
    %6457 = vmatprep.subr.mxu0 %v6323
    %6458 = vmatpush2.msra.mxu0 %v6322
    %6459 = vmatprep.subr.mxu0 %v6319
    %6460 = vmatpush2.msra.mxu0 %v6318
    %6461 = vmatprep.subr.mxu0 %v6315
    %6462 = vmatpush2.msra.mxu0 %v6314
    %6463 = vmatprep.subr.mxu0 %v6311
    %6464 = vmatpush2.msra.mxu0 %v6310
    %6465 = vmatprep.subr.mxu0 %v6307
    %6466 = vmatpush2.msra.mxu0 %v6306
    %6467 = vmatprep.subr.mxu0 %v6303
    %6468 = vmatpush2.msra.mxu0 %v6302
    %6469 = vmatprep.subr.mxu0 %v6299
    %6470 = vmatpush2.msra.mxu0 %v6298
    %6471 = vmatprep.subr.mxu0 %v6295
    %6472 = vmatpush2.msra.mxu0 %v6294
    %6473 = vmatprep.subr.mxu0 %v6291
    %6474 = vmatpush2.msra.mxu0 %v6290
    %6475 = vmatprep.subr.mxu0 %v6287
    %6476 = vmatpush2.msra.mxu0 %v6286
    %6477 = vmatprep.subr.mxu0 %v6283
    %6478 = vmatpush2.msra.mxu0 %v6282
    %6479 = vmatprep.mubr.f32.mxu0 %v5596
    %6480 = vmatmul.mubr.f32.gmra.mxu0 %v6215
    %v6481 = vpop.f32.mrf.mxu0
    %v6482 = vadd.f32 %v203, %v6481
    %v6483 = vpop.f32.mrf.mxu0
    %v6484 = vadd.f32 %v207, %v6483
    %6485 = vdwg.mxu0
    %v6486 = vxor.u32 %v6411, 2147483648
    %v6487 = vmul.f32 %v6486, 1.442695
    %v6488 = vpow.pop %v6487
    %v6489 = vadd.f32 %v6488, 1.0
    %v6490 = vrcp.pop %v6489
    %v6491 = vmul.f32 1.0, %v6490
    %v6492 = vxor.u32 %v6413, 2147483648
    %v6493 = vmul.f32 %v6492, 1.442695
    %v6494 = vpow.pop %v6493
    %v6495 = vadd.f32 %v6494, 1.0
    %v6496 = vrcp.pop %v6495
    %v6497 = vmul.f32 1.0, %v6496
    %v6498 = vtanh.pop %v6482
    %v6499 = vxor.u32 %v6484, 2147483648
    %v6500 = vmul.f32 %v6499, 1.442695
    %v6501 = vpow.pop %v6500
    %v6502 = vadd.f32 %v6501, 1.0
    %v6503 = vrcp.pop %v6502
    %v6504 = vmul.f32 1.0, %v6503
    %v6505 = vmul.f32 %v6497, %v5594
    %v6506 = vmul.f32 %v6491, %v6498
    %v6507 = vadd.f32 %v6505, %v6506
    %v6508 = vtanh.pop %v6507
    %v6509 = vmul.f32 %v6504, %v6508
    %v6510 = vld [vmem:[#allocation14] sm:$0xff]
    %v6511 = vld [vmem:[#allocation14 + $0x8] sm:$0xff]
    %v6512 = vld [vmem:[#allocation14 + $0x10] sm:$0xff]
    %v6513 = vld [vmem:[#allocation14 + $0x18] sm:$0xff]
    %v6514 = vld [vmem:[#allocation14 + $0x20] sm:$0xff]
    %v6515 = vld [vmem:[#allocation14 + $0x28] sm:$0xff]
    %v6516 = vld [vmem:[#allocation14 + $0x30] sm:$0xff]
    %v6517 = vld [vmem:[#allocation14 + $0x38] sm:$0xff]
    %v6518 = vld [vmem:[#allocation14 + $0x40] sm:$0xff]
    %v6519 = vld [vmem:[#allocation14 + $0x48] sm:$0xff]
    %v6520 = vld [vmem:[#allocation14 + $0x50] sm:$0xff]
    %v6521 = vld [vmem:[#allocation14 + $0x58] sm:$0xff]
    %v6522 = vld [vmem:[#allocation14 + $0x60] sm:$0xff]
    %v6523 = vld [vmem:[#allocation14 + $0x68] sm:$0xff]
    %v6524 = vld [vmem:[#allocation14 + $0x70] sm:$0xff]
    %v6525 = vld [vmem:[#allocation14 + $0x78] sm:$0xff]
    %v6526 = vld [vmem:[#allocation14 + $0x80] sm:$0xff]
    %v6527 = vld [vmem:[#allocation14 + $0x88] sm:$0xff]
    %v6528 = vld [vmem:[#allocation14 + $0x90] sm:$0xff]
    %v6529 = vld [vmem:[#allocation14 + $0x98] sm:$0xff]
    %v6530 = vld [vmem:[#allocation14 + $0xa0] sm:$0xff]
    %v6531 = vld [vmem:[#allocation14 + $0xa8] sm:$0xff]
    %v6532 = vld [vmem:[#allocation14 + $0xb0] sm:$0xff]
    %v6533 = vld [vmem:[#allocation14 + $0xb8] sm:$0xff]
    %v6534 = vld [vmem:[#allocation14 + $0xc0] sm:$0xff]
    %v6535 = vld [vmem:[#allocation14 + $0xc8] sm:$0xff]
    %v6536 = vld [vmem:[#allocation14 + $0xd0] sm:$0xff]
    %v6537 = vld [vmem:[#allocation14 + $0xd8] sm:$0xff]
    %v6538 = vld [vmem:[#allocation14 + $0xe0] sm:$0xff]
    %v6539 = vld [vmem:[#allocation14 + $0xe8] sm:$0xff]
    %v6540 = vld [vmem:[#allocation14 + $0xf0] sm:$0xff]
    %v6541 = vld [vmem:[#allocation14 + $0xf8] sm:$0xff]
    %6542 = vmatprep.subr.mxu0 %v6541
    %6543 = vmatpush1.msra.mxu0 %v6540
    %6544 = vmatprep.subr.mxu0 %v6539
    %6545 = vmatpush1.msra.mxu0 %v6538
    %6546 = vmatprep.subr.mxu0 %v6537
    %6547 = vmatpush1.msra.mxu0 %v6536
    %6548 = vmatprep.subr.mxu0 %v6535
    %6549 = vmatpush1.msra.mxu0 %v6534
    %6550 = vmatprep.subr.mxu0 %v6533
    %6551 = vmatpush1.msra.mxu0 %v6532
    %6552 = vmatprep.subr.mxu0 %v6531
    %6553 = vmatpush1.msra.mxu0 %v6530
    %6554 = vmatprep.subr.mxu0 %v6529
    %6555 = vmatpush1.msra.mxu0 %v6528
    %6556 = vmatprep.subr.mxu0 %v6527
    %6557 = vmatpush1.msra.mxu0 %v6526
    %6558 = vmatprep.subr.mxu0 %v6525
    %6559 = vmatpush1.msra.mxu0 %v6524
    %6560 = vmatprep.subr.mxu0 %v6523
    %6561 = vmatpush1.msra.mxu0 %v6522
    %6562 = vmatprep.subr.mxu0 %v6521
    %6563 = vmatpush1.msra.mxu0 %v6520
    %6564 = vmatprep.subr.mxu0 %v6519
    %6565 = vmatpush1.msra.mxu0 %v6518
    %6566 = vmatprep.subr.mxu0 %v6517
    %6567 = vmatpush1.msra.mxu0 %v6516
    %6568 = vmatprep.subr.mxu0 %v6515
    %6569 = vmatpush1.msra.mxu0 %v6514
    %6570 = vmatprep.subr.mxu0 %v6513
    %6571 = vmatpush1.msra.mxu0 %v6512
    %6572 = vmatprep.subr.mxu0 %v6511
    %6573 = vmatpush1.msra.mxu0 %v6510
    %6574 = vmatprep.subr.mxu0 0.0
    %6575 = vmatpush2.msra.mxu0 0.0
    %6576 = vmatprep.subr.mxu0 0.0
    %6577 = vmatpush2.msra.mxu0 0.0
    %6578 = vmatprep.subr.mxu0 0.0
    %6579 = vmatpush2.msra.mxu0 0.0
    %6580 = vmatprep.subr.mxu0 0.0
    %6581 = vmatpush2.msra.mxu0 0.0
    %6582 = vmatprep.subr.mxu0 0.0
    %6583 = vmatpush2.msra.mxu0 0.0
    %6584 = vmatprep.subr.mxu0 0.0
    %6585 = vmatpush2.msra.mxu0 0.0
    %6586 = vmatprep.subr.mxu0 0.0
    %6587 = vmatpush2.msra.mxu0 0.0
    %6588 = vmatprep.subr.mxu0 0.0
    %6589 = vmatpush2.msra.mxu0 0.0
    %6590 = vmatprep.subr.mxu0 0.0
    %6591 = vmatpush2.msra.mxu0 0.0
    %6592 = vmatprep.subr.mxu0 0.0
    %6593 = vmatpush2.msra.mxu0 0.0
    %6594 = vmatprep.subr.mxu0 0.0
    %6595 = vmatpush2.msra.mxu0 0.0
    %6596 = vmatprep.subr.mxu0 0.0
    %6597 = vmatpush2.msra.mxu0 0.0
    %6598 = vmatprep.subr.mxu0 0.0
    %6599 = vmatpush2.msra.mxu0 0.0
    %6600 = vmatprep.subr.mxu0 0.0
    %6601 = vmatpush2.msra.mxu0 0.0
    %6602 = vmatprep.subr.mxu0 0.0
    %6603 = vmatpush2.msra.mxu0 0.0
    %6604 = vmatprep.subr.mxu0 0.0
    %6605 = vmatpush2.msra.mxu0 0.0
    %6606 = vmatprep.mubr.f32.mxu0 0.0
    %6607 = vmatmul.mubr.f32.gmra.mxu0 %v6509
    %v6608 = vpop.f32.mrf.mxu0
    %v6609 = vadd.f32 %v217, %v6608
    %v6610 = vpop.f32.mrf.mxu0
    %v6611 = vadd.f32 %v221, %v6610
    %6612 = vdwg.mxu0
    %6613 = vst [vmem:[%s10 + $0x60] sm:$0xff] %v6609
    %6614 = vst [vmem:[%s10 + $0x68] sm:$0xff] %v6611
    %v6615 = vld [vmem:[#allocation2] sm:$0xff]
    %6616 = vset.pattern.permute.xlu0 7
    %6617 = vperm.xlu0 %6616, %v6615
    %v6618 = vpop.permute.xlu0 %6617
    %vm6619 = vcmp.eq.s32.totalorder %v6618, %v166
    %vm6620 = vcmp.eq.s32.totalorder %v6618, %v167
    %v6621 = vsel %vm6619, 1, 0
    %v6622 = vsel %vm6620, 1, 0
    %v6623 = vcvt.s32.f32 %v6621
    %v6624 = vcvt.s32.f32 %v6622
    %v6625 = vld [vmem:[#allocation7] sm:$0xff]
    %v6626 = vld [vmem:[#allocation7 + $0x8] sm:$0xff]
    %v6627 = vld [vmem:[#allocation7 + $0x10] sm:$0xff]
    %v6628 = vld [vmem:[#allocation7 + $0x18] sm:$0xff]
    %v6629 = vld [vmem:[#allocation7 + $0x20] sm:$0xff]
    %v6630 = vld [vmem:[#allocation7 + $0x28] sm:$0xff]
    %v6631 = vld [vmem:[#allocation7 + $0x30] sm:$0xff]
    %v6632 = vld [vmem:[#allocation7 + $0x38] sm:$0xff]
    %v6633 = vld [vmem:[#allocation7 + $0x40] sm:$0xff]
    %v6634 = vld [vmem:[#allocation7 + $0x48] sm:$0xff]
    %v6635 = vld [vmem:[#allocation7 + $0x50] sm:$0xff]
    %v6636 = vld [vmem:[#allocation7 + $0x58] sm:$0xff]
    %v6637 = vld [vmem:[#allocation7 + $0x60] sm:$0xff]
    %v6638 = vld [vmem:[#allocation7 + $0x68] sm:$0xff]
    %v6639 = vld [vmem:[#allocation7 + $0x70] sm:$0xff]
    %v6640 = vld [vmem:[#allocation7 + $0x78] sm:$0xff]
    %v6641 = vld [vmem:[#allocation7 + $0x80] sm:$0xff]
    %v6642 = vld [vmem:[#allocation7 + $0x88] sm:$0xff]
    %v6643 = vld [vmem:[#allocation7 + $0x90] sm:$0xff]
    %v6644 = vld [vmem:[#allocation7 + $0x98] sm:$0xff]
    %v6645 = vld [vmem:[#allocation7 + $0xa0] sm:$0xff]
    %v6646 = vld [vmem:[#allocation7 + $0xa8] sm:$0xff]
    %v6647 = vld [vmem:[#allocation7 + $0xb0] sm:$0xff]
    %v6648 = vld [vmem:[#allocation7 + $0xb8] sm:$0xff]
    %v6649 = vld [vmem:[#allocation7 + $0xc0] sm:$0xff]
    %v6650 = vld [vmem:[#allocation7 + $0xc8] sm:$0xff]
    %v6651 = vld [vmem:[#allocation7 + $0xd0] sm:$0xff]
    %v6652 = vld [vmem:[#allocation7 + $0xd8] sm:$0xff]
    %v6653 = vld [vmem:[#allocation7 + $0xe0] sm:$0xff]
    %v6654 = vld [vmem:[#allocation7 + $0xe8] sm:$0xff]
    %v6655 = vld [vmem:[#allocation7 + $0xf0] sm:$0xff]
    %v6656 = vld [vmem:[#allocation7 + $0xf8] sm:$0xff]
    %v6657 = vld [vmem:[#allocation7 + $0x100] sm:$0xff]
    %v6658 = vld [vmem:[#allocation7 + $0x108] sm:$0xff]
    %v6659 = vld [vmem:[#allocation7 + $0x110] sm:$0xff]
    %v6660 = vld [vmem:[#allocation7 + $0x118] sm:$0xff]
    %v6661 = vld [vmem:[#allocation7 + $0x120] sm:$0xff]
    %v6662 = vld [vmem:[#allocation7 + $0x128] sm:$0xff]
    %v6663 = vld [vmem:[#allocation7 + $0x130] sm:$0xff]
    %v6664 = vld [vmem:[#allocation7 + $0x138] sm:$0xff]
    %v6665 = vld [vmem:[#allocation7 + $0x140] sm:$0xff]
    %v6666 = vld [vmem:[#allocation7 + $0x148] sm:$0xff]
    %v6667 = vld [vmem:[#allocation7 + $0x150] sm:$0xff]
    %v6668 = vld [vmem:[#allocation7 + $0x158] sm:$0xff]
    %v6669 = vld [vmem:[#allocation7 + $0x160] sm:$0xff]
    %v6670 = vld [vmem:[#allocation7 + $0x168] sm:$0xff]
    %v6671 = vld [vmem:[#allocation7 + $0x170] sm:$0xff]
    %v6672 = vld [vmem:[#allocation7 + $0x178] sm:$0xff]
    %v6673 = vld [vmem:[#allocation7 + $0x180] sm:$0xff]
    %v6674 = vld [vmem:[#allocation7 + $0x188] sm:$0xff]
    %v6675 = vld [vmem:[#allocation7 + $0x190] sm:$0xff]
    %v6676 = vld [vmem:[#allocation7 + $0x198] sm:$0xff]
    %v6677 = vld [vmem:[#allocation7 + $0x1a0] sm:$0xff]
    %v6678 = vld [vmem:[#allocation7 + $0x1a8] sm:$0xff]
    %v6679 = vld [vmem:[#allocation7 + $0x1b0] sm:$0xff]
    %v6680 = vld [vmem:[#allocation7 + $0x1b8] sm:$0xff]
    %v6681 = vld [vmem:[#allocation7 + $0x1c0] sm:$0xff]
    %v6682 = vld [vmem:[#allocation7 + $0x1c8] sm:$0xff]
    %v6683 = vld [vmem:[#allocation7 + $0x1d0] sm:$0xff]
    %v6684 = vld [vmem:[#allocation7 + $0x1d8] sm:$0xff]
    %v6685 = vld [vmem:[#allocation7 + $0x1e0] sm:$0xff]
    %v6686 = vld [vmem:[#allocation7 + $0x1e8] sm:$0xff]
    %v6687 = vld [vmem:[#allocation7 + $0x1f0] sm:$0xff]
    %v6688 = vld [vmem:[#allocation7 + $0x1f8] sm:$0xff]
    %v6689 = vld [vmem:[#allocation7 + $0x200] sm:$0xff]
    %v6690 = vld [vmem:[#allocation7 + $0x208] sm:$0xff]
    %v6691 = vld [vmem:[#allocation7 + $0x210] sm:$0xff]
    %v6692 = vld [vmem:[#allocation7 + $0x218] sm:$0xff]
    %v6693 = vld [vmem:[#allocation7 + $0x220] sm:$0xff]
    %v6694 = vld [vmem:[#allocation7 + $0x228] sm:$0xff]
    %v6695 = vld [vmem:[#allocation7 + $0x230] sm:$0xff]
    %v6696 = vld [vmem:[#allocation7 + $0x238] sm:$0xff]
    %v6697 = vld [vmem:[#allocation7 + $0x240] sm:$0xff]
    %v6698 = vld [vmem:[#allocation7 + $0x248] sm:$0xff]
    %v6699 = vld [vmem:[#allocation7 + $0x250] sm:$0xff]
    %v6700 = vld [vmem:[#allocation7 + $0x258] sm:$0xff]
    %v6701 = vld [vmem:[#allocation7 + $0x260] sm:$0xff]
    %v6702 = vld [vmem:[#allocation7 + $0x268] sm:$0xff]
    %v6703 = vld [vmem:[#allocation7 + $0x270] sm:$0xff]
    %v6704 = vld [vmem:[#allocation7 + $0x278] sm:$0xff]
    %v6705 = vld [vmem:[#allocation7 + $0x280] sm:$0xff]
    %v6706 = vld [vmem:[#allocation7 + $0x288] sm:$0xff]
    %v6707 = vld [vmem:[#allocation7 + $0x290] sm:$0xff]
    %v6708 = vld [vmem:[#allocation7 + $0x298] sm:$0xff]
    %v6709 = vld [vmem:[#allocation7 + $0x2a0] sm:$0xff]
    %v6710 = vld [vmem:[#allocation7 + $0x2a8] sm:$0xff]
    %v6711 = vld [vmem:[#allocation7 + $0x2b0] sm:$0xff]
    %v6712 = vld [vmem:[#allocation7 + $0x2b8] sm:$0xff]
    %v6713 = vld [vmem:[#allocation7 + $0x2c0] sm:$0xff]
    %v6714 = vld [vmem:[#allocation7 + $0x2c8] sm:$0xff]
    %v6715 = vld [vmem:[#allocation7 + $0x2d0] sm:$0xff]
    %v6716 = vld [vmem:[#allocation7 + $0x2d8] sm:$0xff]
    %v6717 = vld [vmem:[#allocation7 + $0x2e0] sm:$0xff]
    %v6718 = vld [vmem:[#allocation7 + $0x2e8] sm:$0xff]
    %v6719 = vld [vmem:[#allocation7 + $0x2f0] sm:$0xff]
    %v6720 = vld [vmem:[#allocation7 + $0x2f8] sm:$0xff]
    %v6721 = vld [vmem:[#allocation7 + $0x300] sm:$0xff]
    %v6722 = vld [vmem:[#allocation7 + $0x308] sm:$0xff]
    %v6723 = vld [vmem:[#allocation7 + $0x310] sm:$0xff]
    %v6724 = vld [vmem:[#allocation7 + $0x318] sm:$0xff]
    %v6725 = vld [vmem:[#allocation7 + $0x320] sm:$0xff]
    %v6726 = vld [vmem:[#allocation7 + $0x328] sm:$0xff]
    %v6727 = vld [vmem:[#allocation7 + $0x330] sm:$0xff]
    %v6728 = vld [vmem:[#allocation7 + $0x338] sm:$0xff]
    %v6729 = vld [vmem:[#allocation7 + $0x340] sm:$0xff]
    %v6730 = vld [vmem:[#allocation7 + $0x348] sm:$0xff]
    %v6731 = vld [vmem:[#allocation7 + $0x350] sm:$0xff]
    %v6732 = vld [vmem:[#allocation7 + $0x358] sm:$0xff]
    %v6733 = vld [vmem:[#allocation7 + $0x360] sm:$0xff]
    %v6734 = vld [vmem:[#allocation7 + $0x368] sm:$0xff]
    %v6735 = vld [vmem:[#allocation7 + $0x370] sm:$0xff]
    %v6736 = vld [vmem:[#allocation7 + $0x378] sm:$0xff]
    %v6737 = vld [vmem:[#allocation7 + $0x380] sm:$0xff]
    %v6738 = vld [vmem:[#allocation7 + $0x388] sm:$0xff]
    %v6739 = vld [vmem:[#allocation7 + $0x390] sm:$0xff]
    %v6740 = vld [vmem:[#allocation7 + $0x398] sm:$0xff]
    %v6741 = vld [vmem:[#allocation7 + $0x3a0] sm:$0xff]
    %v6742 = vld [vmem:[#allocation7 + $0x3a8] sm:$0xff]
    %v6743 = vld [vmem:[#allocation7 + $0x3b0] sm:$0xff]
    %v6744 = vld [vmem:[#allocation7 + $0x3b8] sm:$0xff]
    %v6745 = vld [vmem:[#allocation7 + $0x3c0] sm:$0xff]
    %v6746 = vld [vmem:[#allocation7 + $0x3c8] sm:$0xff]
    %v6747 = vld [vmem:[#allocation7 + $0x3d0] sm:$0xff]
    %v6748 = vld [vmem:[#allocation7 + $0x3d8] sm:$0xff]
    %v6749 = vld [vmem:[#allocation7 + $0x3e0] sm:$0xff]
    %v6750 = vld [vmem:[#allocation7 + $0x3e8] sm:$0xff]
    %v6751 = vld [vmem:[#allocation7 + $0x3f0] sm:$0xff]
    %v6752 = vld [vmem:[#allocation7 + $0x3f8] sm:$0xff]
    %6753 = vmatprep.subr.mxu0 %v6686
    %6754 = vmatpush1.msra.mxu0 %v6685
    %6755 = vmatprep.subr.mxu0 %v6682
    %6756 = vmatpush1.msra.mxu0 %v6681
    %6757 = vmatprep.subr.mxu0 %v6678
    %6758 = vmatpush1.msra.mxu0 %v6677
    %6759 = vmatprep.subr.mxu0 %v6674
    %6760 = vmatpush1.msra.mxu0 %v6673
    %6761 = vmatprep.subr.mxu0 %v6670
    %6762 = vmatpush1.msra.mxu0 %v6669
    %6763 = vmatprep.subr.mxu0 %v6666
    %6764 = vmatpush1.msra.mxu0 %v6665
    %6765 = vmatprep.subr.mxu0 %v6662
    %6766 = vmatpush1.msra.mxu0 %v6661
    %6767 = vmatprep.subr.mxu0 %v6658
    %6768 = vmatpush1.msra.mxu0 %v6657
    %6769 = vmatprep.subr.mxu0 %v6654
    %6770 = vmatpush1.msra.mxu0 %v6653
    %6771 = vmatprep.subr.mxu0 %v6650
    %6772 = vmatpush1.msra.mxu0 %v6649
    %6773 = vmatprep.subr.mxu0 %v6646
    %6774 = vmatpush1.msra.mxu0 %v6645
    %6775 = vmatprep.subr.mxu0 %v6642
    %6776 = vmatpush1.msra.mxu0 %v6641
    %6777 = vmatprep.subr.mxu0 %v6638
    %6778 = vmatpush1.msra.mxu0 %v6637
    %6779 = vmatprep.subr.mxu0 %v6634
    %6780 = vmatpush1.msra.mxu0 %v6633
    %6781 = vmatprep.subr.mxu0 %v6630
    %6782 = vmatpush1.msra.mxu0 %v6629
    %6783 = vmatprep.subr.mxu0 %v6626
    %6784 = vmatpush1.msra.mxu0 %v6625
    %6785 = vmatprep.subr.mxu0 %v6750
    %6786 = vmatpush2.msra.mxu0 %v6749
    %6787 = vmatprep.subr.mxu0 %v6746
    %6788 = vmatpush2.msra.mxu0 %v6745
    %6789 = vmatprep.subr.mxu0 %v6742
    %6790 = vmatpush2.msra.mxu0 %v6741
    %6791 = vmatprep.subr.mxu0 %v6738
    %6792 = vmatpush2.msra.mxu0 %v6737
    %6793 = vmatprep.subr.mxu0 %v6734
    %6794 = vmatpush2.msra.mxu0 %v6733
    %6795 = vmatprep.subr.mxu0 %v6730
    %6796 = vmatpush2.msra.mxu0 %v6729
    %6797 = vmatprep.subr.mxu0 %v6726
    %6798 = vmatpush2.msra.mxu0 %v6725
    %6799 = vmatprep.subr.mxu0 %v6722
    %6800 = vmatpush2.msra.mxu0 %v6721
    %6801 = vmatprep.subr.mxu0 %v6718
    %6802 = vmatpush2.msra.mxu0 %v6717
    %6803 = vmatprep.subr.mxu0 %v6714
    %6804 = vmatpush2.msra.mxu0 %v6713
    %6805 = vmatprep.subr.mxu0 %v6710
    %6806 = vmatpush2.msra.mxu0 %v6709
    %6807 = vmatprep.subr.mxu0 %v6706
    %6808 = vmatpush2.msra.mxu0 %v6705
    %6809 = vmatprep.subr.mxu0 %v6702
    %6810 = vmatpush2.msra.mxu0 %v6701
    %6811 = vmatprep.subr.mxu0 %v6698
    %6812 = vmatpush2.msra.mxu0 %v6697
    %6813 = vmatprep.subr.mxu0 %v6694
    %6814 = vmatpush2.msra.mxu0 %v6693
    %6815 = vmatprep.subr.mxu0 %v6690
    %6816 = vmatpush2.msra.mxu0 %v6689
    %6817 = vmatprep.mubr.f32.mxu0 %v6624
    %6818 = vmatmul.mubr.f32.gmra.mxu0 %v6623
    %v6819 = vpop.f32.mrf.mxu0
    %v6820 = vadd.f32 %v173, %v6819
    %v6821 = vpop.f32.mrf.mxu0
    %v6822 = vadd.f32 %v177, %v6821
    %6823 = vdwg.mxu0
    %6824 = vmatprep.subr.mxu0 %v6688
    %6825 = vmatpush1.msra.mxu0 %v6687
    %6826 = vmatprep.subr.mxu0 %v6684
    %6827 = vmatpush1.msra.mxu0 %v6683
    %6828 = vmatprep.subr.mxu0 %v6680
    %6829 = vmatpush1.msra.mxu0 %v6679
    %6830 = vmatprep.subr.mxu0 %v6676
    %6831 = vmatpush1.msra.mxu0 %v6675
    %6832 = vmatprep.subr.mxu0 %v6672
    %6833 = vmatpush1.msra.mxu0 %v6671
    %6834 = vmatprep.subr.mxu0 %v6668
    %6835 = vmatpush1.msra.mxu0 %v6667
    %6836 = vmatprep.subr.mxu0 %v6664
    %6837 = vmatpush1.msra.mxu0 %v6663
    %6838 = vmatprep.subr.mxu0 %v6660
    %6839 = vmatpush1.msra.mxu0 %v6659
    %6840 = vmatprep.subr.mxu0 %v6656
    %6841 = vmatpush1.msra.mxu0 %v6655
    %6842 = vmatprep.subr.mxu0 %v6652
    %6843 = vmatpush1.msra.mxu0 %v6651
    %6844 = vmatprep.subr.mxu0 %v6648
    %6845 = vmatpush1.msra.mxu0 %v6647
    %6846 = vmatprep.subr.mxu0 %v6644
    %6847 = vmatpush1.msra.mxu0 %v6643
    %6848 = vmatprep.subr.mxu0 %v6640
    %6849 = vmatpush1.msra.mxu0 %v6639
    %6850 = vmatprep.subr.mxu0 %v6636
    %6851 = vmatpush1.msra.mxu0 %v6635
    %6852 = vmatprep.subr.mxu0 %v6632
    %6853 = vmatpush1.msra.mxu0 %v6631
    %6854 = vmatprep.subr.mxu0 %v6628
    %6855 = vmatpush1.msra.mxu0 %v6627
    %6856 = vmatprep.subr.mxu0 %v6752
    %6857 = vmatpush2.msra.mxu0 %v6751
    %6858 = vmatprep.subr.mxu0 %v6748
    %6859 = vmatpush2.msra.mxu0 %v6747
    %6860 = vmatprep.subr.mxu0 %v6744
    %6861 = vmatpush2.msra.mxu0 %v6743
    %6862 = vmatprep.subr.mxu0 %v6740
    %6863 = vmatpush2.msra.mxu0 %v6739
    %6864 = vmatprep.subr.mxu0 %v6736
    %6865 = vmatpush2.msra.mxu0 %v6735
    %6866 = vmatprep.subr.mxu0 %v6732
    %6867 = vmatpush2.msra.mxu0 %v6731
    %6868 = vmatprep.subr.mxu0 %v6728
    %6869 = vmatpush2.msra.mxu0 %v6727
    %6870 = vmatprep.subr.mxu0 %v6724
    %6871 = vmatpush2.msra.mxu0 %v6723
    %6872 = vmatprep.subr.mxu0 %v6720
    %6873 = vmatpush2.msra.mxu0 %v6719
    %6874 = vmatprep.subr.mxu0 %v6716
    %6875 = vmatpush2.msra.mxu0 %v6715
    %6876 = vmatprep.subr.mxu0 %v6712
    %6877 = vmatpush2.msra.mxu0 %v6711
    %6878 = vmatprep.subr.mxu0 %v6708
    %6879 = vmatpush2.msra.mxu0 %v6707
    %6880 = vmatprep.subr.mxu0 %v6704
    %6881 = vmatpush2.msra.mxu0 %v6703
    %6882 = vmatprep.subr.mxu0 %v6700
    %6883 = vmatpush2.msra.mxu0 %v6699
    %6884 = vmatprep.subr.mxu0 %v6696
    %6885 = vmatpush2.msra.mxu0 %v6695
    %6886 = vmatprep.subr.mxu0 %v6692
    %6887 = vmatpush2.msra.mxu0 %v6691
    %6888 = vmatprep.mubr.f32.mxu0 %v6624
    %6889 = vmatmul.mubr.f32.gmra.mxu0 %v6623
    %v6890 = vpop.f32.mrf.mxu0
    %v6891 = vadd.f32 %v181, %v6890
    %v6892 = vpop.f32.mrf.mxu0
    %v6893 = vadd.f32 %v185, %v6892
    %6894 = vdwg.mxu0
    %v6895 = vld [vmem:[#allocation8] sm:$0xff]
    %v6896 = vld [vmem:[#allocation8 + $0x8] sm:$0xff]
    %v6897 = vld [vmem:[#allocation8 + $0x10] sm:$0xff]
    %v6898 = vld [vmem:[#allocation8 + $0x18] sm:$0xff]
    %v6899 = vld [vmem:[#allocation8 + $0x20] sm:$0xff]
    %v6900 = vld [vmem:[#allocation8 + $0x28] sm:$0xff]
    %v6901 = vld [vmem:[#allocation8 + $0x30] sm:$0xff]
    %v6902 = vld [vmem:[#allocation8 + $0x38] sm:$0xff]
    %v6903 = vld [vmem:[#allocation8 + $0x40] sm:$0xff]
    %v6904 = vld [vmem:[#allocation8 + $0x48] sm:$0xff]
    %v6905 = vld [vmem:[#allocation8 + $0x50] sm:$0xff]
    %v6906 = vld [vmem:[#allocation8 + $0x58] sm:$0xff]
    %v6907 = vld [vmem:[#allocation8 + $0x60] sm:$0xff]
    %v6908 = vld [vmem:[#allocation8 + $0x68] sm:$0xff]
    %v6909 = vld [vmem:[#allocation8 + $0x70] sm:$0xff]
    %v6910 = vld [vmem:[#allocation8 + $0x78] sm:$0xff]
    %v6911 = vld [vmem:[#allocation8 + $0x80] sm:$0xff]
    %v6912 = vld [vmem:[#allocation8 + $0x88] sm:$0xff]
    %v6913 = vld [vmem:[#allocation8 + $0x90] sm:$0xff]
    %v6914 = vld [vmem:[#allocation8 + $0x98] sm:$0xff]
    %v6915 = vld [vmem:[#allocation8 + $0xa0] sm:$0xff]
    %v6916 = vld [vmem:[#allocation8 + $0xa8] sm:$0xff]
    %v6917 = vld [vmem:[#allocation8 + $0xb0] sm:$0xff]
    %v6918 = vld [vmem:[#allocation8 + $0xb8] sm:$0xff]
    %v6919 = vld [vmem:[#allocation8 + $0xc0] sm:$0xff]
    %v6920 = vld [vmem:[#allocation8 + $0xc8] sm:$0xff]
    %v6921 = vld [vmem:[#allocation8 + $0xd0] sm:$0xff]
    %v6922 = vld [vmem:[#allocation8 + $0xd8] sm:$0xff]
    %v6923 = vld [vmem:[#allocation8 + $0xe0] sm:$0xff]
    %v6924 = vld [vmem:[#allocation8 + $0xe8] sm:$0xff]
    %v6925 = vld [vmem:[#allocation8 + $0xf0] sm:$0xff]
    %v6926 = vld [vmem:[#allocation8 + $0xf8] sm:$0xff]
    %v6927 = vld [vmem:[#allocation8 + $0x100] sm:$0xff]
    %v6928 = vld [vmem:[#allocation8 + $0x108] sm:$0xff]
    %v6929 = vld [vmem:[#allocation8 + $0x110] sm:$0xff]
    %v6930 = vld [vmem:[#allocation8 + $0x118] sm:$0xff]
    %v6931 = vld [vmem:[#allocation8 + $0x120] sm:$0xff]
    %v6932 = vld [vmem:[#allocation8 + $0x128] sm:$0xff]
    %v6933 = vld [vmem:[#allocation8 + $0x130] sm:$0xff]
    %v6934 = vld [vmem:[#allocation8 + $0x138] sm:$0xff]
    %v6935 = vld [vmem:[#allocation8 + $0x140] sm:$0xff]
    %v6936 = vld [vmem:[#allocation8 + $0x148] sm:$0xff]
    %v6937 = vld [vmem:[#allocation8 + $0x150] sm:$0xff]
    %v6938 = vld [vmem:[#allocation8 + $0x158] sm:$0xff]
    %v6939 = vld [vmem:[#allocation8 + $0x160] sm:$0xff]
    %v6940 = vld [vmem:[#allocation8 + $0x168] sm:$0xff]
    %v6941 = vld [vmem:[#allocation8 + $0x170] sm:$0xff]
    %v6942 = vld [vmem:[#allocation8 + $0x178] sm:$0xff]
    %v6943 = vld [vmem:[#allocation8 + $0x180] sm:$0xff]
    %v6944 = vld [vmem:[#allocation8 + $0x188] sm:$0xff]
    %v6945 = vld [vmem:[#allocation8 + $0x190] sm:$0xff]
    %v6946 = vld [vmem:[#allocation8 + $0x198] sm:$0xff]
    %v6947 = vld [vmem:[#allocation8 + $0x1a0] sm:$0xff]
    %v6948 = vld [vmem:[#allocation8 + $0x1a8] sm:$0xff]
    %v6949 = vld [vmem:[#allocation8 + $0x1b0] sm:$0xff]
    %v6950 = vld [vmem:[#allocation8 + $0x1b8] sm:$0xff]
    %v6951 = vld [vmem:[#allocation8 + $0x1c0] sm:$0xff]
    %v6952 = vld [vmem:[#allocation8 + $0x1c8] sm:$0xff]
    %v6953 = vld [vmem:[#allocation8 + $0x1d0] sm:$0xff]
    %v6954 = vld [vmem:[#allocation8 + $0x1d8] sm:$0xff]
    %v6955 = vld [vmem:[#allocation8 + $0x1e0] sm:$0xff]
    %v6956 = vld [vmem:[#allocation8 + $0x1e8] sm:$0xff]
    %v6957 = vld [vmem:[#allocation8 + $0x1f0] sm:$0xff]
    %v6958 = vld [vmem:[#allocation8 + $0x1f8] sm:$0xff]
    %6959 = vmatprep.subr.mxu0 %v6956
    %6960 = vmatpush1.msra.mxu0 %v6955
    %6961 = vmatprep.subr.mxu0 %v6952
    %6962 = vmatpush1.msra.mxu0 %v6951
    %6963 = vmatprep.subr.mxu0 %v6948
    %6964 = vmatpush1.msra.mxu0 %v6947
    %6965 = vmatprep.subr.mxu0 %v6944
    %6966 = vmatpush1.msra.mxu0 %v6943
    %6967 = vmatprep.subr.mxu0 %v6940
    %6968 = vmatpush1.msra.mxu0 %v6939
    %6969 = vmatprep.subr.mxu0 %v6936
    %6970 = vmatpush1.msra.mxu0 %v6935
    %6971 = vmatprep.subr.mxu0 %v6932
    %6972 = vmatpush1.msra.mxu0 %v6931
    %6973 = vmatprep.subr.mxu0 %v6928
    %6974 = vmatpush1.msra.mxu0 %v6927
    %6975 = vmatprep.subr.mxu0 %v6924
    %6976 = vmatpush1.msra.mxu0 %v6923
    %6977 = vmatprep.subr.mxu0 %v6920
    %6978 = vmatpush1.msra.mxu0 %v6919
    %6979 = vmatprep.subr.mxu0 %v6916
    %6980 = vmatpush1.msra.mxu0 %v6915
    %6981 = vmatprep.subr.mxu0 %v6912
    %6982 = vmatpush1.msra.mxu0 %v6911
    %6983 = vmatprep.subr.mxu0 %v6908
    %6984 = vmatpush1.msra.mxu0 %v6907
    %6985 = vmatprep.subr.mxu0 %v6904
    %6986 = vmatpush1.msra.mxu0 %v6903
    %6987 = vmatprep.subr.mxu0 %v6900
    %6988 = vmatpush1.msra.mxu0 %v6899
    %6989 = vmatprep.subr.mxu0 %v6896
    %6990 = vmatpush1.msra.mxu0 %v6895
    %6991 = vmatprep.subr.mxu0 0.0
    %6992 = vmatpush2.msra.mxu0 0.0
    %6993 = vmatprep.subr.mxu0 0.0
    %6994 = vmatpush2.msra.mxu0 0.0
    %6995 = vmatprep.subr.mxu0 0.0
    %6996 = vmatpush2.msra.mxu0 0.0
    %6997 = vmatprep.subr.mxu0 0.0
    %6998 = vmatpush2.msra.mxu0 0.0
    %6999 = vmatprep.subr.mxu0 0.0
    %7000 = vmatpush2.msra.mxu0 0.0
    %7001 = vmatprep.subr.mxu0 0.0
    %7002 = vmatpush2.msra.mxu0 0.0
    %7003 = vmatprep.subr.mxu0 0.0
    %7004 = vmatpush2.msra.mxu0 0.0
    %7005 = vmatprep.subr.mxu0 0.0
    %7006 = vmatpush2.msra.mxu0 0.0
    %7007 = vmatprep.subr.mxu0 0.0
    %7008 = vmatpush2.msra.mxu0 0.0
    %7009 = vmatprep.subr.mxu0 0.0
    %7010 = vmatpush2.msra.mxu0 0.0
    %7011 = vmatprep.subr.mxu0 0.0
    %7012 = vmatpush2.msra.mxu0 0.0
    %7013 = vmatprep.subr.mxu0 0.0
    %7014 = vmatpush2.msra.mxu0 0.0
    %7015 = vmatprep.subr.mxu0 0.0
    %7016 = vmatpush2.msra.mxu0 0.0
    %7017 = vmatprep.subr.mxu0 0.0
    %7018 = vmatpush2.msra.mxu0 0.0
    %7019 = vmatprep.subr.mxu0 0.0
    %7020 = vmatpush2.msra.mxu0 0.0
    %7021 = vmatprep.subr.mxu0 0.0
    %7022 = vmatpush2.msra.mxu0 0.0
    %7023 = vmatprep.mubr.f32.mxu0 0.0
    %7024 = vmatmul.mubr.f32.gmra.mxu0 %v6215
    %v7025 = vpop.f32.mrf.mxu0
    %v7026 = vadd.f32 0.0, %v7025
    %v7027 = vpop.f32.mrf.mxu0
    %v7028 = vadd.f32 0.0, %v7027
    %7029 = vdwg.mxu0
    %7030 = vmatprep.subr.mxu0 %v6958
    %7031 = vmatpush1.msra.mxu0 %v6957
    %7032 = vmatprep.subr.mxu0 %v6954
    %7033 = vmatpush1.msra.mxu0 %v6953
    %7034 = vmatprep.subr.mxu0 %v6950
    %7035 = vmatpush1.msra.mxu0 %v6949
    %7036 = vmatprep.subr.mxu0 %v6946
    %7037 = vmatpush1.msra.mxu0 %v6945
    %7038 = vmatprep.subr.mxu0 %v6942
    %7039 = vmatpush1.msra.mxu0 %v6941
    %7040 = vmatprep.subr.mxu0 %v6938
    %7041 = vmatpush1.msra.mxu0 %v6937
    %7042 = vmatprep.subr.mxu0 %v6934
    %7043 = vmatpush1.msra.mxu0 %v6933
    %7044 = vmatprep.subr.mxu0 %v6930
    %7045 = vmatpush1.msra.mxu0 %v6929
    %7046 = vmatprep.subr.mxu0 %v6926
    %7047 = vmatpush1.msra.mxu0 %v6925
    %7048 = vmatprep.subr.mxu0 %v6922
    %7049 = vmatpush1.msra.mxu0 %v6921
    %7050 = vmatprep.subr.mxu0 %v6918
    %7051 = vmatpush1.msra.mxu0 %v6917
    %7052 = vmatprep.subr.mxu0 %v6914
    %7053 = vmatpush1.msra.mxu0 %v6913
    %7054 = vmatprep.subr.mxu0 %v6910
    %7055 = vmatpush1.msra.mxu0 %v6909
    %7056 = vmatprep.subr.mxu0 %v6906
    %7057 = vmatpush1.msra.mxu0 %v6905
    %7058 = vmatprep.subr.mxu0 %v6902
    %7059 = vmatpush1.msra.mxu0 %v6901
    %7060 = vmatprep.subr.mxu0 %v6898
    %7061 = vmatpush1.msra.mxu0 %v6897
    %7062 = vmatprep.subr.mxu0 0.0
    %7063 = vmatpush2.msra.mxu0 0.0
    %7064 = vmatprep.subr.mxu0 0.0
    %7065 = vmatpush2.msra.mxu0 0.0
    %7066 = vmatprep.subr.mxu0 0.0
    %7067 = vmatpush2.msra.mxu0 0.0
    %7068 = vmatprep.subr.mxu0 0.0
    %7069 = vmatpush2.msra.mxu0 0.0
    %7070 = vmatprep.subr.mxu0 0.0
    %7071 = vmatpush2.msra.mxu0 0.0
    %7072 = vmatprep.subr.mxu0 0.0
    %7073 = vmatpush2.msra.mxu0 0.0
    %7074 = vmatprep.subr.mxu0 0.0
    %7075 = vmatpush2.msra.mxu0 0.0
    %7076 = vmatprep.subr.mxu0 0.0
    %7077 = vmatpush2.msra.mxu0 0.0
    %7078 = vmatprep.subr.mxu0 0.0
    %7079 = vmatpush2.msra.mxu0 0.0
    %7080 = vmatprep.subr.mxu0 0.0
    %7081 = vmatpush2.msra.mxu0 0.0
    %7082 = vmatprep.subr.mxu0 0.0
    %7083 = vmatpush2.msra.mxu0 0.0
    %7084 = vmatprep.subr.mxu0 0.0
    %7085 = vmatpush2.msra.mxu0 0.0
    %7086 = vmatprep.subr.mxu0 0.0
    %7087 = vmatpush2.msra.mxu0 0.0
    %7088 = vmatprep.subr.mxu0 0.0
    %7089 = vmatpush2.msra.mxu0 0.0
    %7090 = vmatprep.subr.mxu0 0.0
    %7091 = vmatpush2.msra.mxu0 0.0
    %7092 = vmatprep.subr.mxu0 0.0
    %7093 = vmatpush2.msra.mxu0 0.0
    %7094 = vmatprep.mubr.f32.mxu0 0.0
    %7095 = vmatmul.mubr.f32.gmra.mxu0 %v6215
    %v7096 = vpop.f32.mrf.mxu0
    %v7097 = vadd.f32 0.0, %v7096
    %v7098 = vpop.f32.mrf.mxu0
    %v7099 = vadd.f32 0.0, %v7098
    %7100 = vdwg.mxu0
    %v7101 = vadd.f32 %v6820, %v7026
    %v7102 = vadd.f32 %v6822, %v7028
    %v7103 = vadd.f32 %v6891, %v7097
    %v7104 = vadd.f32 %v6893, %v7099
    %v7105 = vxor.u32 %v7101, 2147483648
    %v7106 = vmul.f32 %v7105, 1.442695
    %v7107 = vpow.pop %v7106
    %v7108 = vadd.f32 %v7107, 1.0
    %v7109 = vrcp.pop %v7108
    %v7110 = vmul.f32 1.0, %v7109
    %v7111 = vxor.u32 %v7102, 2147483648
    %v7112 = vmul.f32 %v7111, 1.442695
    %v7113 = vpow.pop %v7112
    %v7114 = vadd.f32 %v7113, 1.0
    %v7115 = vrcp.pop %v7114
    %v7116 = vmul.f32 1.0, %v7115
    %v7117 = vtanh.pop %v7103
    %v7118 = vxor.u32 %v7104, 2147483648
    %v7119 = vmul.f32 %v7118, 1.442695
    %v7120 = vpow.pop %v7119
    %v7121 = vadd.f32 %v7120, 1.0
    %v7122 = vrcp.pop %v7121
    %v7123 = vmul.f32 1.0, %v7122
    %v7124 = vmul.f32 %v7116, %v6213
    %v7125 = vmul.f32 %v7110, %v7117
    %v7126 = vadd.f32 %v7124, %v7125
    %v7127 = vtanh.pop %v7126
    %v7128 = vmul.f32 %v7123, %v7127
    %v7129 = vld [vmem:[#allocation11] sm:$0xff]
    %v7130 = vld [vmem:[#allocation11 + $0x8] sm:$0xff]
    %v7131 = vld [vmem:[#allocation11 + $0x10] sm:$0xff]
    %v7132 = vld [vmem:[#allocation11 + $0x18] sm:$0xff]
    %v7133 = vld [vmem:[#allocation11 + $0x20] sm:$0xff]
    %v7134 = vld [vmem:[#allocation11 + $0x28] sm:$0xff]
    %v7135 = vld [vmem:[#allocation11 + $0x30] sm:$0xff]
    %v7136 = vld [vmem:[#allocation11 + $0x38] sm:$0xff]
    %v7137 = vld [vmem:[#allocation11 + $0x40] sm:$0xff]
    %v7138 = vld [vmem:[#allocation11 + $0x48] sm:$0xff]
    %v7139 = vld [vmem:[#allocation11 + $0x50] sm:$0xff]
    %v7140 = vld [vmem:[#allocation11 + $0x58] sm:$0xff]
    %v7141 = vld [vmem:[#allocation11 + $0x60] sm:$0xff]
    %v7142 = vld [vmem:[#allocation11 + $0x68] sm:$0xff]
    %v7143 = vld [vmem:[#allocation11 + $0x70] sm:$0xff]
    %v7144 = vld [vmem:[#allocation11 + $0x78] sm:$0xff]
    %v7145 = vld [vmem:[#allocation11 + $0x80] sm:$0xff]
    %v7146 = vld [vmem:[#allocation11 + $0x88] sm:$0xff]
    %v7147 = vld [vmem:[#allocation11 + $0x90] sm:$0xff]
    %v7148 = vld [vmem:[#allocation11 + $0x98] sm:$0xff]
    %v7149 = vld [vmem:[#allocation11 + $0xa0] sm:$0xff]
    %v7150 = vld [vmem:[#allocation11 + $0xa8] sm:$0xff]
    %v7151 = vld [vmem:[#allocation11 + $0xb0] sm:$0xff]
    %v7152 = vld [vmem:[#allocation11 + $0xb8] sm:$0xff]
    %v7153 = vld [vmem:[#allocation11 + $0xc0] sm:$0xff]
    %v7154 = vld [vmem:[#allocation11 + $0xc8] sm:$0xff]
    %v7155 = vld [vmem:[#allocation11 + $0xd0] sm:$0xff]
    %v7156 = vld [vmem:[#allocation11 + $0xd8] sm:$0xff]
    %v7157 = vld [vmem:[#allocation11 + $0xe0] sm:$0xff]
    %v7158 = vld [vmem:[#allocation11 + $0xe8] sm:$0xff]
    %v7159 = vld [vmem:[#allocation11 + $0xf0] sm:$0xff]
    %v7160 = vld [vmem:[#allocation11 + $0xf8] sm:$0xff]
    %v7161 = vld [vmem:[#allocation11 + $0x100] sm:$0xff]
    %v7162 = vld [vmem:[#allocation11 + $0x108] sm:$0xff]
    %v7163 = vld [vmem:[#allocation11 + $0x110] sm:$0xff]
    %v7164 = vld [vmem:[#allocation11 + $0x118] sm:$0xff]
    %v7165 = vld [vmem:[#allocation11 + $0x120] sm:$0xff]
    %v7166 = vld [vmem:[#allocation11 + $0x128] sm:$0xff]
    %v7167 = vld [vmem:[#allocation11 + $0x130] sm:$0xff]
    %v7168 = vld [vmem:[#allocation11 + $0x138] sm:$0xff]
    %v7169 = vld [vmem:[#allocation11 + $0x140] sm:$0xff]
    %v7170 = vld [vmem:[#allocation11 + $0x148] sm:$0xff]
    %v7171 = vld [vmem:[#allocation11 + $0x150] sm:$0xff]
    %v7172 = vld [vmem:[#allocation11 + $0x158] sm:$0xff]
    %v7173 = vld [vmem:[#allocation11 + $0x160] sm:$0xff]
    %v7174 = vld [vmem:[#allocation11 + $0x168] sm:$0xff]
    %v7175 = vld [vmem:[#allocation11 + $0x170] sm:$0xff]
    %v7176 = vld [vmem:[#allocation11 + $0x178] sm:$0xff]
    %v7177 = vld [vmem:[#allocation11 + $0x180] sm:$0xff]
    %v7178 = vld [vmem:[#allocation11 + $0x188] sm:$0xff]
    %v7179 = vld [vmem:[#allocation11 + $0x190] sm:$0xff]
    %v7180 = vld [vmem:[#allocation11 + $0x198] sm:$0xff]
    %v7181 = vld [vmem:[#allocation11 + $0x1a0] sm:$0xff]
    %v7182 = vld [vmem:[#allocation11 + $0x1a8] sm:$0xff]
    %v7183 = vld [vmem:[#allocation11 + $0x1b0] sm:$0xff]
    %v7184 = vld [vmem:[#allocation11 + $0x1b8] sm:$0xff]
    %v7185 = vld [vmem:[#allocation11 + $0x1c0] sm:$0xff]
    %v7186 = vld [vmem:[#allocation11 + $0x1c8] sm:$0xff]
    %v7187 = vld [vmem:[#allocation11 + $0x1d0] sm:$0xff]
    %v7188 = vld [vmem:[#allocation11 + $0x1d8] sm:$0xff]
    %v7189 = vld [vmem:[#allocation11 + $0x1e0] sm:$0xff]
    %v7190 = vld [vmem:[#allocation11 + $0x1e8] sm:$0xff]
    %v7191 = vld [vmem:[#allocation11 + $0x1f0] sm:$0xff]
    %v7192 = vld [vmem:[#allocation11 + $0x1f8] sm:$0xff]
    %v7193 = vld [vmem:[#allocation11 + $0x200] sm:$0xff]
    %v7194 = vld [vmem:[#allocation11 + $0x208] sm:$0xff]
    %v7195 = vld [vmem:[#allocation11 + $0x210] sm:$0xff]
    %v7196 = vld [vmem:[#allocation11 + $0x218] sm:$0xff]
    %v7197 = vld [vmem:[#allocation11 + $0x220] sm:$0xff]
    %v7198 = vld [vmem:[#allocation11 + $0x228] sm:$0xff]
    %v7199 = vld [vmem:[#allocation11 + $0x230] sm:$0xff]
    %v7200 = vld [vmem:[#allocation11 + $0x238] sm:$0xff]
    %v7201 = vld [vmem:[#allocation11 + $0x240] sm:$0xff]
    %v7202 = vld [vmem:[#allocation11 + $0x248] sm:$0xff]
    %v7203 = vld [vmem:[#allocation11 + $0x250] sm:$0xff]
    %v7204 = vld [vmem:[#allocation11 + $0x258] sm:$0xff]
    %v7205 = vld [vmem:[#allocation11 + $0x260] sm:$0xff]
    %v7206 = vld [vmem:[#allocation11 + $0x268] sm:$0xff]
    %v7207 = vld [vmem:[#allocation11 + $0x270] sm:$0xff]
    %v7208 = vld [vmem:[#allocation11 + $0x278] sm:$0xff]
    %v7209 = vld [vmem:[#allocation11 + $0x280] sm:$0xff]
    %v7210 = vld [vmem:[#allocation11 + $0x288] sm:$0xff]
    %v7211 = vld [vmem:[#allocation11 + $0x290] sm:$0xff]
    %v7212 = vld [vmem:[#allocation11 + $0x298] sm:$0xff]
    %v7213 = vld [vmem:[#allocation11 + $0x2a0] sm:$0xff]
    %v7214 = vld [vmem:[#allocation11 + $0x2a8] sm:$0xff]
    %v7215 = vld [vmem:[#allocation11 + $0x2b0] sm:$0xff]
    %v7216 = vld [vmem:[#allocation11 + $0x2b8] sm:$0xff]
    %v7217 = vld [vmem:[#allocation11 + $0x2c0] sm:$0xff]
    %v7218 = vld [vmem:[#allocation11 + $0x2c8] sm:$0xff]
    %v7219 = vld [vmem:[#allocation11 + $0x2d0] sm:$0xff]
    %v7220 = vld [vmem:[#allocation11 + $0x2d8] sm:$0xff]
    %v7221 = vld [vmem:[#allocation11 + $0x2e0] sm:$0xff]
    %v7222 = vld [vmem:[#allocation11 + $0x2e8] sm:$0xff]
    %v7223 = vld [vmem:[#allocation11 + $0x2f0] sm:$0xff]
    %v7224 = vld [vmem:[#allocation11 + $0x2f8] sm:$0xff]
    %v7225 = vld [vmem:[#allocation11 + $0x300] sm:$0xff]
    %v7226 = vld [vmem:[#allocation11 + $0x308] sm:$0xff]
    %v7227 = vld [vmem:[#allocation11 + $0x310] sm:$0xff]
    %v7228 = vld [vmem:[#allocation11 + $0x318] sm:$0xff]
    %v7229 = vld [vmem:[#allocation11 + $0x320] sm:$0xff]
    %v7230 = vld [vmem:[#allocation11 + $0x328] sm:$0xff]
    %v7231 = vld [vmem:[#allocation11 + $0x330] sm:$0xff]
    %v7232 = vld [vmem:[#allocation11 + $0x338] sm:$0xff]
    %v7233 = vld [vmem:[#allocation11 + $0x340] sm:$0xff]
    %v7234 = vld [vmem:[#allocation11 + $0x348] sm:$0xff]
    %v7235 = vld [vmem:[#allocation11 + $0x350] sm:$0xff]
    %v7236 = vld [vmem:[#allocation11 + $0x358] sm:$0xff]
    %v7237 = vld [vmem:[#allocation11 + $0x360] sm:$0xff]
    %v7238 = vld [vmem:[#allocation11 + $0x368] sm:$0xff]
    %v7239 = vld [vmem:[#allocation11 + $0x370] sm:$0xff]
    %v7240 = vld [vmem:[#allocation11 + $0x378] sm:$0xff]
    %v7241 = vld [vmem:[#allocation11 + $0x380] sm:$0xff]
    %v7242 = vld [vmem:[#allocation11 + $0x388] sm:$0xff]
    %v7243 = vld [vmem:[#allocation11 + $0x390] sm:$0xff]
    %v7244 = vld [vmem:[#allocation11 + $0x398] sm:$0xff]
    %v7245 = vld [vmem:[#allocation11 + $0x3a0] sm:$0xff]
    %v7246 = vld [vmem:[#allocation11 + $0x3a8] sm:$0xff]
    %v7247 = vld [vmem:[#allocation11 + $0x3b0] sm:$0xff]
    %v7248 = vld [vmem:[#allocation11 + $0x3b8] sm:$0xff]
    %v7249 = vld [vmem:[#allocation11 + $0x3c0] sm:$0xff]
    %v7250 = vld [vmem:[#allocation11 + $0x3c8] sm:$0xff]
    %v7251 = vld [vmem:[#allocation11 + $0x3d0] sm:$0xff]
    %v7252 = vld [vmem:[#allocation11 + $0x3d8] sm:$0xff]
    %v7253 = vld [vmem:[#allocation11 + $0x3e0] sm:$0xff]
    %v7254 = vld [vmem:[#allocation11 + $0x3e8] sm:$0xff]
    %v7255 = vld [vmem:[#allocation11 + $0x3f0] sm:$0xff]
    %v7256 = vld [vmem:[#allocation11 + $0x3f8] sm:$0xff]
    %7257 = vmatprep.subr.mxu0 %v7190
    %7258 = vmatpush1.msra.mxu0 %v7189
    %7259 = vmatprep.subr.mxu0 %v7186
    %7260 = vmatpush1.msra.mxu0 %v7185
    %7261 = vmatprep.subr.mxu0 %v7182
    %7262 = vmatpush1.msra.mxu0 %v7181
    %7263 = vmatprep.subr.mxu0 %v7178
    %7264 = vmatpush1.msra.mxu0 %v7177
    %7265 = vmatprep.subr.mxu0 %v7174
    %7266 = vmatpush1.msra.mxu0 %v7173
    %7267 = vmatprep.subr.mxu0 %v7170
    %7268 = vmatpush1.msra.mxu0 %v7169
    %7269 = vmatprep.subr.mxu0 %v7166
    %7270 = vmatpush1.msra.mxu0 %v7165
    %7271 = vmatprep.subr.mxu0 %v7162
    %7272 = vmatpush1.msra.mxu0 %v7161
    %7273 = vmatprep.subr.mxu0 %v7158
    %7274 = vmatpush1.msra.mxu0 %v7157
    %7275 = vmatprep.subr.mxu0 %v7154
    %7276 = vmatpush1.msra.mxu0 %v7153
    %7277 = vmatprep.subr.mxu0 %v7150
    %7278 = vmatpush1.msra.mxu0 %v7149
    %7279 = vmatprep.subr.mxu0 %v7146
    %7280 = vmatpush1.msra.mxu0 %v7145
    %7281 = vmatprep.subr.mxu0 %v7142
    %7282 = vmatpush1.msra.mxu0 %v7141
    %7283 = vmatprep.subr.mxu0 %v7138
    %7284 = vmatpush1.msra.mxu0 %v7137
    %7285 = vmatprep.subr.mxu0 %v7134
    %7286 = vmatpush1.msra.mxu0 %v7133
    %7287 = vmatprep.subr.mxu0 %v7130
    %7288 = vmatpush1.msra.mxu0 %v7129
    %7289 = vmatprep.subr.mxu0 %v7254
    %7290 = vmatpush2.msra.mxu0 %v7253
    %7291 = vmatprep.subr.mxu0 %v7250
    %7292 = vmatpush2.msra.mxu0 %v7249
    %7293 = vmatprep.subr.mxu0 %v7246
    %7294 = vmatpush2.msra.mxu0 %v7245
    %7295 = vmatprep.subr.mxu0 %v7242
    %7296 = vmatpush2.msra.mxu0 %v7241
    %7297 = vmatprep.subr.mxu0 %v7238
    %7298 = vmatpush2.msra.mxu0 %v7237
    %7299 = vmatprep.subr.mxu0 %v7234
    %7300 = vmatpush2.msra.mxu0 %v7233
    %7301 = vmatprep.subr.mxu0 %v7230
    %7302 = vmatpush2.msra.mxu0 %v7229
    %7303 = vmatprep.subr.mxu0 %v7226
    %7304 = vmatpush2.msra.mxu0 %v7225
    %7305 = vmatprep.subr.mxu0 %v7222
    %7306 = vmatpush2.msra.mxu0 %v7221
    %7307 = vmatprep.subr.mxu0 %v7218
    %7308 = vmatpush2.msra.mxu0 %v7217
    %7309 = vmatprep.subr.mxu0 %v7214
    %7310 = vmatpush2.msra.mxu0 %v7213
    %7311 = vmatprep.subr.mxu0 %v7210
    %7312 = vmatpush2.msra.mxu0 %v7209
    %7313 = vmatprep.subr.mxu0 %v7206
    %7314 = vmatpush2.msra.mxu0 %v7205
    %7315 = vmatprep.subr.mxu0 %v7202
    %7316 = vmatpush2.msra.mxu0 %v7201
    %7317 = vmatprep.subr.mxu0 %v7198
    %7318 = vmatpush2.msra.mxu0 %v7197
    %7319 = vmatprep.subr.mxu0 %v7194
    %7320 = vmatpush2.msra.mxu0 %v7193
    %7321 = vmatprep.mubr.f32.mxu0 %v6509
    %7322 = vmatmul.mubr.f32.gmra.mxu0 %v7128
    %v7323 = vpop.f32.mrf.mxu0
    %v7324 = vadd.f32 %v195, %v7323
    %v7325 = vpop.f32.mrf.mxu0
    %v7326 = vadd.f32 %v199, %v7325
    %7327 = vdwg.mxu0
    %7328 = vmatprep.subr.mxu0 %v7192
    %7329 = vmatpush1.msra.mxu0 %v7191
    %7330 = vmatprep.subr.mxu0 %v7188
    %7331 = vmatpush1.msra.mxu0 %v7187
    %7332 = vmatprep.subr.mxu0 %v7184
    %7333 = vmatpush1.msra.mxu0 %v7183
    %7334 = vmatprep.subr.mxu0 %v7180
    %7335 = vmatpush1.msra.mxu0 %v7179
    %7336 = vmatprep.subr.mxu0 %v7176
    %7337 = vmatpush1.msra.mxu0 %v7175
    %7338 = vmatprep.subr.mxu0 %v7172
    %7339 = vmatpush1.msra.mxu0 %v7171
    %7340 = vmatprep.subr.mxu0 %v7168
    %7341 = vmatpush1.msra.mxu0 %v7167
    %7342 = vmatprep.subr.mxu0 %v7164
    %7343 = vmatpush1.msra.mxu0 %v7163
    %7344 = vmatprep.subr.mxu0 %v7160
    %7345 = vmatpush1.msra.mxu0 %v7159
    %7346 = vmatprep.subr.mxu0 %v7156
    %7347 = vmatpush1.msra.mxu0 %v7155
    %7348 = vmatprep.subr.mxu0 %v7152
    %7349 = vmatpush1.msra.mxu0 %v7151
    %7350 = vmatprep.subr.mxu0 %v7148
    %7351 = vmatpush1.msra.mxu0 %v7147
    %7352 = vmatprep.subr.mxu0 %v7144
    %7353 = vmatpush1.msra.mxu0 %v7143
    %7354 = vmatprep.subr.mxu0 %v7140
    %7355 = vmatpush1.msra.mxu0 %v7139
    %7356 = vmatprep.subr.mxu0 %v7136
    %7357 = vmatpush1.msra.mxu0 %v7135
    %7358 = vmatprep.subr.mxu0 %v7132
    %7359 = vmatpush1.msra.mxu0 %v7131
    %7360 = vmatprep.subr.mxu0 %v7256
    %7361 = vmatpush2.msra.mxu0 %v7255
    %7362 = vmatprep.subr.mxu0 %v7252
    %7363 = vmatpush2.msra.mxu0 %v7251
    %7364 = vmatprep.subr.mxu0 %v7248
    %7365 = vmatpush2.msra.mxu0 %v7247
    %7366 = vmatprep.subr.mxu0 %v7244
    %7367 = vmatpush2.msra.mxu0 %v7243
    %7368 = vmatprep.subr.mxu0 %v7240
    %7369 = vmatpush2.msra.mxu0 %v7239
    %7370 = vmatprep.subr.mxu0 %v7236
    %7371 = vmatpush2.msra.mxu0 %v7235
    %7372 = vmatprep.subr.mxu0 %v7232
    %7373 = vmatpush2.msra.mxu0 %v7231
    %7374 = vmatprep.subr.mxu0 %v7228
    %7375 = vmatpush2.msra.mxu0 %v7227
    %7376 = vmatprep.subr.mxu0 %v7224
    %7377 = vmatpush2.msra.mxu0 %v7223
    %7378 = vmatprep.subr.mxu0 %v7220
    %7379 = vmatpush2.msra.mxu0 %v7219
    %7380 = vmatprep.subr.mxu0 %v7216
    %7381 = vmatpush2.msra.mxu0 %v7215
    %7382 = vmatprep.subr.mxu0 %v7212
    %7383 = vmatpush2.msra.mxu0 %v7211
    %7384 = vmatprep.subr.mxu0 %v7208
    %7385 = vmatpush2.msra.mxu0 %v7207
    %7386 = vmatprep.subr.mxu0 %v7204
    %7387 = vmatpush2.msra.mxu0 %v7203
    %7388 = vmatprep.subr.mxu0 %v7200
    %7389 = vmatpush2.msra.mxu0 %v7199
    %7390 = vmatprep.subr.mxu0 %v7196
    %7391 = vmatpush2.msra.mxu0 %v7195
    %7392 = vmatprep.mubr.f32.mxu0 %v6509
    %7393 = vmatmul.mubr.f32.gmra.mxu0 %v7128
    %v7394 = vpop.f32.mrf.mxu0
    %v7395 = vadd.f32 %v203, %v7394
    %v7396 = vpop.f32.mrf.mxu0
    %v7397 = vadd.f32 %v207, %v7396
    %7398 = vdwg.mxu0
    %v7399 = vxor.u32 %v7324, 2147483648
    %v7400 = vmul.f32 %v7399, 1.442695
    %v7401 = vpow.pop %v7400
    %v7402 = vadd.f32 %v7401, 1.0
    %v7403 = vrcp.pop %v7402
    %v7404 = vmul.f32 1.0, %v7403
    %v7405 = vxor.u32 %v7326, 2147483648
    %v7406 = vmul.f32 %v7405, 1.442695
    %v7407 = vpow.pop %v7406
    %v7408 = vadd.f32 %v7407, 1.0
    %v7409 = vrcp.pop %v7408
    %v7410 = vmul.f32 1.0, %v7409
    %v7411 = vtanh.pop %v7395
    %v7412 = vxor.u32 %v7397, 2147483648
    %v7413 = vmul.f32 %v7412, 1.442695
    %v7414 = vpow.pop %v7413
    %v7415 = vadd.f32 %v7414, 1.0
    %v7416 = vrcp.pop %v7415
    %v7417 = vmul.f32 1.0, %v7416
    %v7418 = vmul.f32 %v7410, %v6507
    %v7419 = vmul.f32 %v7404, %v7411
    %v7420 = vadd.f32 %v7418, %v7419
    %v7421 = vtanh.pop %v7420
    %v7422 = vmul.f32 %v7417, %v7421
    %v7423 = vld [vmem:[#allocation14] sm:$0xff]
    %v7424 = vld [vmem:[#allocation14 + $0x8] sm:$0xff]
    %v7425 = vld [vmem:[#allocation14 + $0x10] sm:$0xff]
    %v7426 = vld [vmem:[#allocation14 + $0x18] sm:$0xff]
    %v7427 = vld [vmem:[#allocation14 + $0x20] sm:$0xff]
    %v7428 = vld [vmem:[#allocation14 + $0x28] sm:$0xff]
    %v7429 = vld [vmem:[#allocation14 + $0x30] sm:$0xff]
    %v7430 = vld [vmem:[#allocation14 + $0x38] sm:$0xff]
    %v7431 = vld [vmem:[#allocation14 + $0x40] sm:$0xff]
    %v7432 = vld [vmem:[#allocation14 + $0x48] sm:$0xff]
    %v7433 = vld [vmem:[#allocation14 + $0x50] sm:$0xff]
    %v7434 = vld [vmem:[#allocation14 + $0x58] sm:$0xff]
    %v7435 = vld [vmem:[#allocation14 + $0x60] sm:$0xff]
    %v7436 = vld [vmem:[#allocation14 + $0x68] sm:$0xff]
    %v7437 = vld [vmem:[#allocation14 + $0x70] sm:$0xff]
    %v7438 = vld [vmem:[#allocation14 + $0x78] sm:$0xff]
    %v7439 = vld [vmem:[#allocation14 + $0x80] sm:$0xff]
    %v7440 = vld [vmem:[#allocation14 + $0x88] sm:$0xff]
    %v7441 = vld [vmem:[#allocation14 + $0x90] sm:$0xff]
    %v7442 = vld [vmem:[#allocation14 + $0x98] sm:$0xff]
    %v7443 = vld [vmem:[#allocation14 + $0xa0] sm:$0xff]
    %v7444 = vld [vmem:[#allocation14 + $0xa8] sm:$0xff]
    %v7445 = vld [vmem:[#allocation14 + $0xb0] sm:$0xff]
    %v7446 = vld [vmem:[#allocation14 + $0xb8] sm:$0xff]
    %v7447 = vld [vmem:[#allocation14 + $0xc0] sm:$0xff]
    %v7448 = vld [vmem:[#allocation14 + $0xc8] sm:$0xff]
    %v7449 = vld [vmem:[#allocation14 + $0xd0] sm:$0xff]
    %v7450 = vld [vmem:[#allocation14 + $0xd8] sm:$0xff]
    %v7451 = vld [vmem:[#allocation14 + $0xe0] sm:$0xff]
    %v7452 = vld [vmem:[#allocation14 + $0xe8] sm:$0xff]
    %v7453 = vld [vmem:[#allocation14 + $0xf0] sm:$0xff]
    %v7454 = vld [vmem:[#allocation14 + $0xf8] sm:$0xff]
    %7455 = vmatprep.subr.mxu0 %v7454
    %7456 = vmatpush1.msra.mxu0 %v7453
    %7457 = vmatprep.subr.mxu0 %v7452
    %7458 = vmatpush1.msra.mxu0 %v7451
    %7459 = vmatprep.subr.mxu0 %v7450
    %7460 = vmatpush1.msra.mxu0 %v7449
    %7461 = vmatprep.subr.mxu0 %v7448
    %7462 = vmatpush1.msra.mxu0 %v7447
    %7463 = vmatprep.subr.mxu0 %v7446
    %7464 = vmatpush1.msra.mxu0 %v7445
    %7465 = vmatprep.subr.mxu0 %v7444
    %7466 = vmatpush1.msra.mxu0 %v7443
    %7467 = vmatprep.subr.mxu0 %v7442
    %7468 = vmatpush1.msra.mxu0 %v7441
    %7469 = vmatprep.subr.mxu0 %v7440
    %7470 = vmatpush1.msra.mxu0 %v7439
    %7471 = vmatprep.subr.mxu0 %v7438
    %7472 = vmatpush1.msra.mxu0 %v7437
    %7473 = vmatprep.subr.mxu0 %v7436
    %7474 = vmatpush1.msra.mxu0 %v7435
    %7475 = vmatprep.subr.mxu0 %v7434
    %7476 = vmatpush1.msra.mxu0 %v7433
    %7477 = vmatprep.subr.mxu0 %v7432
    %7478 = vmatpush1.msra.mxu0 %v7431
    %7479 = vmatprep.subr.mxu0 %v7430
    %7480 = vmatpush1.msra.mxu0 %v7429
    %7481 = vmatprep.subr.mxu0 %v7428
    %7482 = vmatpush1.msra.mxu0 %v7427
    %7483 = vmatprep.subr.mxu0 %v7426
    %7484 = vmatpush1.msra.mxu0 %v7425
    %7485 = vmatprep.subr.mxu0 %v7424
    %7486 = vmatpush1.msra.mxu0 %v7423
    %7487 = vmatprep.subr.mxu0 0.0
    %7488 = vmatpush2.msra.mxu0 0.0
    %7489 = vmatprep.subr.mxu0 0.0
    %7490 = vmatpush2.msra.mxu0 0.0
    %7491 = vmatprep.subr.mxu0 0.0
    %7492 = vmatpush2.msra.mxu0 0.0
    %7493 = vmatprep.subr.mxu0 0.0
    %7494 = vmatpush2.msra.mxu0 0.0
    %7495 = vmatprep.subr.mxu0 0.0
    %7496 = vmatpush2.msra.mxu0 0.0
    %7497 = vmatprep.subr.mxu0 0.0
    %7498 = vmatpush2.msra.mxu0 0.0
    %7499 = vmatprep.subr.mxu0 0.0
    %7500 = vmatpush2.msra.mxu0 0.0
    %7501 = vmatprep.subr.mxu0 0.0
    %7502 = vmatpush2.msra.mxu0 0.0
    %7503 = vmatprep.subr.mxu0 0.0
    %7504 = vmatpush2.msra.mxu0 0.0
    %7505 = vmatprep.subr.mxu0 0.0
    %7506 = vmatpush2.msra.mxu0 0.0
    %7507 = vmatprep.subr.mxu0 0.0
    %7508 = vmatpush2.msra.mxu0 0.0
    %7509 = vmatprep.subr.mxu0 0.0
    %7510 = vmatpush2.msra.mxu0 0.0
    %7511 = vmatprep.subr.mxu0 0.0
    %7512 = vmatpush2.msra.mxu0 0.0
    %7513 = vmatprep.subr.mxu0 0.0
    %7514 = vmatpush2.msra.mxu0 0.0
    %7515 = vmatprep.subr.mxu0 0.0
    %7516 = vmatpush2.msra.mxu0 0.0
    %7517 = vmatprep.subr.mxu0 0.0
    %7518 = vmatpush2.msra.mxu0 0.0
    %7519 = vmatprep.mubr.f32.mxu0 0.0
    %7520 = vmatmul.mubr.f32.gmra.mxu0 %v7422
    %v7521 = vpop.f32.mrf.mxu0
    %v7522 = vadd.f32 %v217, %v7521
    %v7523 = vpop.f32.mrf.mxu0
    %v7524 = vadd.f32 %v221, %v7523
    %7525 = vdwg.mxu0
    %7526 = vst [vmem:[%s10 + $0x70] sm:$0xff] %v7522
    %7527 = vst [vmem:[%s10 + $0x78] sm:$0xff] %v7524
    %7528 = vst.msk [vmem:[#allocation17] sm:$0xff] %vm155, %v7128
    %7529 = vst.msk [vmem:[#allocation18] sm:$0xff] %vm155, %v7126
    %s7530 = scalar_lea.vmem [#allocation17], 8
    %7531 = vst.msk [vmem:[%s7530] sm:$0xff] %vm155, %v7422
    %s7532 = scalar_lea.vmem [#allocation18], 8
    %7533 = vst.msk [vmem:[%s7532] sm:$0xff] %vm155, %v7420
    // Predicated region
    $region78: #{rnn_forward.1} parent=1 // pred_check
      _
    $region79: #{rnn_forward.1} parent=1 // pred_check_branch
      %7535 = sbr.rel (0) target = $region81
    $region80: #{rnn_forward.1} parent=1 // pred_region
      _
    $region81: #{rnn_forward.1} parent=1 // pred_fallthru
      _
    // Predicated region
    $region82: #{rnn_forward.1} parent=1 // pred_check
      _
    $region83: #{rnn_forward.1} parent=1 // pred_check_branch
      %7537 = sbr.rel (0) target = $region85
    $region84: #{rnn_forward.1} parent=1 // pred_region
      %s7539 = ssub.s32 256, 256
      %7540 = vsyncadd [#allocation4], %s7539
      %s7541 = sshll.u32 [#allocation17], 4
      %s7542 = int_to_ptr.vmem [resolvable:$true] %s7541
      %7547 = dma.vmem_to_hbm [thread:$0]  %s7542, 256, %s11, [#allocation4], 128, 128, 8
    $region85: #{rnn_forward.1} parent=1 // pred_fallthru
      _
    // Predicated region
    $region86: #{rnn_forward.1} parent=1 // pred_check
      _
    $region87: #{rnn_forward.1} parent=1 // pred_check_branch
      %7549 = sbr.rel (0) target = $region89
    $region88: #{rnn_forward.1} parent=1 // pred_region
      %s7551 = ssub.s32 256, 256
      %7552 = vsyncadd [#allocation19], %s7551
      %s7553 = sshll.u32 [#allocation18], 4
      %s7554 = int_to_ptr.vmem [resolvable:$true] %s7553
      %7559 = dma.vmem_to_hbm [thread:$0]  %s7554, 256, %s12, [#allocation19], 128, 128, 8
    $region89: #{rnn_forward.1} parent=1 // pred_fallthru
      _
    // Predicated region
    $region90: #{rnn_forward.1} parent=1 // pred_check
      _
    $region91: #{rnn_forward.1} parent=1 // pred_check_branch
      %7561 = sbr.rel (0) target = $region93
    $region92: #{rnn_forward.1} parent=1 // pred_region
      _
    $region93: #{rnn_forward.1} parent=1 // pred_fallthru
      _
    // Predicated region
    $region94: #{rnn_forward.1} parent=1 // pred_check
      _
    $region95: #{rnn_forward.1} parent=1 // pred_check_branch
      %7563 = sbr.rel (0) target = $region97
    $region96: #{rnn_forward.1} parent=1 // pred_region
      %7564 = dma.done [#allocation4], 256
    $region97: #{rnn_forward.1} parent=1 // pred_fallthru
      _
    // Predicated region
    $region98: #{rnn_forward.1} parent=1 // pred_check
      _
    $region99: #{rnn_forward.1} parent=1 // pred_check_branch
      %7566 = sbr.rel (0) target = $region101
    $region100: #{rnn_forward.1} parent=1 // pred_region
      %7567 = dma.done [#allocation19], 256
    $region101: #{rnn_forward.1} parent=1 // pred_fallthru
      _
    %7568 = vsyncpa [#allocation3], 1
    %7569 = vsyncpa [#allocation6], 1
    %7570 = vsyncpa [#allocation9], 1
    %7571 = vsyncpa [#allocation12], 1
    %7572 = vsyncpa [#allocation15], 1
    %7573 = vsyncpa [#allocation4], 1
    %7574 = vsyncpa [#allocation19], 1

</llo_original>
